<compile_context>
chip_gen: v7x
topology: tpu7x:2x2x1
jax: 0.10.0
libtpu: 0.0.40
codegen_flags: <defaults>
</compile_context>

<pallas_src>
import numpy as np

import jax
import jax.numpy as jnp
from jax import lax
from jax.experimental import pallas as pl
from jax.experimental.pallas import tpu as pltpu


# ----------------------------- Pallas kernels ------------------------------ #

def _conv_relu_pool_kernel(x_ref, w_ref, b_ref, rsel_ref, csel_ref, o_ref):
    """Fused 5x5 VALID conv + bias + ReLU + MaxPool2d(3, stride=2).

    Processes a block of NB images per grid step (static Python unroll).
    Layouts (W and C flattened onto the 128-lane axis):
      x_ref   : (NB, H, W*Cin)          activations (f32 or bf16)
      w_ref   : (KH, W*Cin, OW*Cout)    banded conv weights, bf16
      b_ref   : (1, OW*Cout)            bias tiled across OW, f32
      rsel_ref: (3, POH, OH)            0/1 row (window + stride-2) selectors, f32
      csel_ref: (3, OW*Cout, POW*Cout)  0/1 column selectors, f32
      o_ref   : (NB, POH, POW*Cout)     pooled output, bf16
    """
    nb = x_ref.shape[0]
    kh = w_ref.shape[0]
    oh = rsel_ref.shape[2]
    bias = b_ref[...]                                    # hoisted out of the loop

    for b in range(nb):                                  # static unroll over images
        xb = x_ref[b].astype(jnp.bfloat16)               # one cast per image

        # Conv as a sum over KH row shifts of banded matmuls (bf16 x bf16 -> f32).
        acc = jnp.dot(xb[0:oh, :], w_ref[0], preferred_element_type=jnp.float32)
        for di in range(1, kh):
            acc = acc + jnp.dot(xb[di:di + oh, :], w_ref[di],
                                preferred_element_type=jnp.float32)
        y = jnp.maximum(acc + bias, 0.0)                  # (OH, OW*Cout) f32

        # MaxPool(3, 2): row window + stride-2 subsample via exact 0/1 selection
        # matmuls on the left, then the same trick along the lane (W*C) axis on
        # the right.  Everything stays as dots + elementwise max -> lane-dense.
        r = jnp.dot(rsel_ref[0], y, preferred_element_type=jnp.float32)
        for d in range(1, 3):
            r = jnp.maximum(r, jnp.dot(rsel_ref[d], y,
                                       preferred_element_type=jnp.float32))
        p = jnp.dot(r, csel_ref[0], preferred_element_type=jnp.float32)
        for d in range(1, 3):
            p = jnp.maximum(p, jnp.dot(r, csel_ref[d],
                                       preferred_element_type=jnp.float32))

        o_ref[b] = p.astype(o_ref.dtype)


def _fc_head_kernel(x_ref, w1_ref, b1_ref, w2_ref, b2_ref, w3_ref, b3_ref, o_ref):
    """Fused fc1+ReLU -> fc2+ReLU -> fc_logits; bf16 operands, f32 accumulate."""
    h = x_ref[...].astype(jnp.bfloat16)
    h = jnp.dot(h, w1_ref[...], preferred_element_type=jnp.float32) + b1_ref[...]
    h = jnp.maximum(h, 0.0).astype(jnp.bfloat16)
    h = jnp.dot(h, w2_ref[...], preferred_element_type=jnp.float32) + b2_ref[...]
    h = jnp.maximum(h, 0.0).astype(jnp.bfloat16)
    o_ref[...] = (jnp.dot(h, w3_ref[...], preferred_element_type=jnp.float32)
                  + b3_ref[...]).astype(o_ref.dtype)


# ------------------------------ wrappers ----------------------------------- #

def conv_relu_pool_pallas(x2d, wband, brow, rsel, csel, *, images_per_step=8):
    """x2d: (N, H, W*Cin) -> (N, POH, POW*Cout) bf16; grid over image blocks."""
    n, h, wcin = x2d.shape
    kh, wcin2, owcout = wband.shape
    assert wcin == wcin2
    poh = rsel.shape[1]
    powcout = csel.shape[2]
    nb = int(min(images_per_step, n))
    return pl.pallas_call(
        _conv_relu_pool_kernel,
        out_shape=jax.ShapeDtypeStruct((n, poh, powcout), jnp.bfloat16),
        grid=(pl.cdiv(n, nb),),
        in_specs=[
            pl.BlockSpec((nb, h, wcin), lambda i: (i, 0, 0)),
            pl.BlockSpec((kh, wcin, owcout), lambda i: (0, 0, 0)),
            pl.BlockSpec((1, owcout), lambda i: (0, 0)),
            pl.BlockSpec(rsel.shape, lambda i: (0, 0, 0)),
            pl.BlockSpec(csel.shape, lambda i: (0, 0, 0)),
        ],
        out_specs=pl.BlockSpec((nb, poh, powcout), lambda i: (i, 0, 0)),
        compiler_params=pltpu.CompilerParams(
            dimension_semantics=("parallel",),
            vmem_limit_bytes=32 * 1024 * 1024),
    )(x2d, wband, brow, rsel, csel)


def fc_head_pallas(x, w1, b1, w2, b2, w3, b3, *, tm=256):
    """Fused FC head, tiled over the batch axis (bounded VMEM as batch grows)."""
    m, k1 = x.shape
    nout = w3.shape[1]
    tm = min(tm, m)
    return pl.pallas_call(
        _fc_head_kernel,
        out_shape=jax.ShapeDtypeStruct((m, nout), jnp.float32),
        grid=(pl.cdiv(m, tm),),
        in_specs=[
            pl.BlockSpec((tm, k1), lambda i: (i, 0)),
            pl.BlockSpec(w1.shape, lambda i: (0, 0)),
            pl.BlockSpec(b1.shape, lambda i: (0, 0)),
            pl.BlockSpec(w2.shape, lambda i: (0, 0)),
            pl.BlockSpec(b2.shape, lambda i: (0, 0)),
            pl.BlockSpec(w3.shape, lambda i: (0, 0)),
            pl.BlockSpec(b3.shape, lambda i: (0, 0)),
        ],
        out_specs=pl.BlockSpec((tm, nout), lambda i: (i, 0)),
        compiler_params=pltpu.CompilerParams(
            dimension_semantics=("parallel",),
            vmem_limit_bytes=32 * 1024 * 1024),
    )(x, w1, b1, w2, b2, w3, b3)


# --------------------- one-time host-side weight packing ------------------- #

def _banded_conv_weight(w_oihw, width):
    """OIHW conv weight -> (KH, width*Cin, OW*Cout) block-banded matrices (bf16).

    Folds im2col into the weights: conv(x) row i == sum_di x2d[i+di, :] @ band[di].
    """
    w = np.asarray(w_oihw, np.float32)
    cout, cin, kh, kw = w.shape
    ow = width - kw + 1
    w = np.transpose(w, (2, 3, 1, 0))                    # (kh, kw, cin, cout)
    band = np.zeros((kh, width * cin, ow * cout), np.float32)
    for di in range(kh):
        for dj in range(kw):
            for j in range(ow):
                band[di, (j + dj) * cin:(j + dj + 1) * cin,
                     j * cout:(j + 1) * cout] = w[di, dj]
    return jnp.asarray(band, jnp.bfloat16)


def _pool_selectors(oh, ow, cout, k=3, stride=2):
    """0/1 selectors realizing MaxPool2d(k, stride) as exact selection matmuls."""
    poh = (oh - k) // stride + 1
    pow_ = (ow - k) // stride + 1
    rsel = np.zeros((k, poh, oh), np.float32)
    csel = np.zeros((k, ow * cout, pow_ * cout), np.float32)
    for d in range(k):
        for p in range(poh):
            rsel[d, p, stride * p + d] = 1.0
        for p in range(pow_):
            for c in range(cout):
                csel[d, (stride * p + d) * cout + c, p * cout + c] = 1.0
    return jnp.asarray(rsel), jnp.asarray(csel)


def prepare_params(params):
    """Repack the nn.Module parameters for the fused kernels (one-time prep)."""
    prep = {}
    # conv1: 3 -> 16, 5x5 on 32x32 (OH=OW=28, pooled 13x13)
    prep["c1_w"] = _banded_conv_weight(params["conv1_w"], width=32)
    prep["c1_b"] = jnp.asarray(
        np.tile(np.asarray(params["conv1_b"], np.float32), 28)[None, :])
    prep["c1_rsel"], prep["c1_csel"] = _pool_selectors(28, 28, 16)
    # conv2: 16 -> 32, 5x5 on 13x13 (OH=OW=9, pooled 4x4)
    prep["c2_w"] = _banded_conv_weight(params["conv2_w"], width=13)
    prep["c2_b"] = jnp.asarray(
        np.tile(np.asarray(params["conv2_b"], np.float32), 9)[None, :])
    prep["c2_rsel"], prep["c2_csel"] = _pool_selectors(9, 9, 32)
    # fc1: fold the torch NCHW flatten order (c*16 + h*4 + w) into the rows of the
    # pre-transposed (in, out) weight so the activation path needs no permute.
    w1 = np.asarray(params["fc1_w"], np.float32).reshape(256, 32, 4, 4)  # (o,c,h,w)
    w1 = np.transpose(w1, (2, 3, 1, 0)).reshape(4 * 4 * 32, 256)         # (h*w*c, o)
    prep["fc1_w"] = jnp.asarray(w1, jnp.bfloat16)
    prep["fc1_b"] = jnp.asarray(np.asarray(params["fc1_b"], np.float32)[None, :])
    prep["fc2_w"] = jnp.asarray(np.asarray(params["fc2_w"], np.float32).T, jnp.bfloat16)
    prep["fc2_b"] = jnp.asarray(np.asarray(params["fc2_b"], np.float32)[None, :])
    prep["fc3_w"] = jnp.asarray(np.asarray(params["fc3_w"], np.float32).T, jnp.bfloat16)
    prep["fc3_b"] = jnp.asarray(np.asarray(params["fc3_b"], np.float32)[None, :])
    return prep


# ------------------------------- the model --------------------------------- #

def init_params():
    """Deterministic synthetic parameters with the exact nn.Module shapes."""
    def init(key, shape, fan_in):
        return jax.random.normal(key, shape, jnp.float32) / np.sqrt(fan_in)

    keys = jax.random.split(jax.random.PRNGKey(42), 10)
    return {
        "conv1_w": init(keys[0], (16, 3, 5, 5), 3 * 25),
        "conv1_b": init(keys[1], (16,), 3 * 25),
        "conv2_w": init(keys[2], (32, 16, 5, 5), 16 * 25),
        "conv2_b": init(keys[3], (32,), 16 * 25),
        "fc1_w": init(keys[4], (256, 512), 512),
        "fc1_b": init(keys[5], (256,), 512),
        "fc2_w": init(keys[6], (128, 256), 256),
        "fc2_b": init(keys[7], (128,), 256),
        "fc3_w": init(keys[8], (10, 128), 128),
        "fc3_b": init(keys[9], (10,), 128),
    }


def convolutional_model_forward(prep, x_nchw):
    n = x_nchw.shape[0]
    # NCHW -> lane-dense (N, H, W*C).  The reshapes are free (last dims contiguous).
    x = jnp.transpose(x_nchw, (0, 2, 3, 1)).reshape(n, 32, 32 * 3)
    h = conv_relu_pool_pallas(x, prep["c1_w"], prep["c1_b"],
                              prep["c1_rsel"], prep["c1_csel"])      # (N, 13, 13*16)
    h = conv_relu_pool_pallas(h, prep["c2_w"], prep["c2_b"],
                              prep["c2_rsel"], prep["c2_csel"])      # (N, 4, 4*32)
    h = h.reshape(n, 512)                                            # rows: h*128+w*32+c
    return fc_head_pallas(h, prep["fc1_w"], prep["fc1_b"],
                          prep["fc2_w"], prep["fc2_b"],
                          prep["fc3_w"], prep["fc3_b"])              # (N, 10) f32


def reference_forward(params, x):
    """Pure-JAX f32 reference mirroring the PyTorch module (NCHW)."""
    dn = ("NCHW", "OIHW", "NCHW")
    h = lax.conv_general_dilated(x, params["conv1_w"], (1, 1), "VALID",
                                 dimension_numbers=dn)
    h = jnp.maximum(h + params["conv1_b"][None, :, None, None], 0.0)
    h = lax.reduce_window(h, -jnp.inf, lax.max, (1, 1, 3, 3), (1, 1, 2, 2), "VALID")
    h = lax.conv_general_dilated(h, params["conv2_w"], (1, 1), "VALID",
                                 dimension_numbers=dn)
    h = jnp.maximum(h + params["conv2_b"][None, :, None, None], 0.0)
    h = lax.reduce_window(h, -jnp.inf, lax.max, (1, 1, 3, 3), (1, 1, 2, 2), "VALID")
    h = h.reshape(h.shape[0], -1)
    h = jnp.maximum(h @ params["fc1_w"].T + params["fc1_b"], 0.0)
    h = jnp.maximum(h @ params["fc2_w"].T + params["fc2_b"], 0.0)
    return h @ params["fc3_w"].T + params["fc3_b"]


if __name__ == "__main__":
    params = init_params()
    prep = prepare_params(params)
    # The module's fc1 (512 = 32*4*4) implies 3x32x32 inputs (CIFAR-like).
    x = jax.random.normal(jax.random.PRNGKey(0), (2, 3, 32, 32), jnp.float32)

    logits = jax.jit(convolutional_model_forward)(prep, x)
    logits = jax.block_until_ready(logits)
    assert logits.shape == (2, 10) and logits.dtype == jnp.float32

    ref = reference_forward(params, x)
    # bf16 matmul operands (f32 accumulate) => widened tolerance vs f32 reference.
    err = float(np.max(np.abs(np.asarray(logits) - np.asarray(ref))))
    if not np.allclose(np.asarray(logits), np.asarray(ref), rtol=8e-2, atol=8e-2):
        raise AssertionError(f"Pallas forward does not match reference, max|err|={err}")

    print("KERNEL_OK")
</pallas_src>

<mosaic_0001>
module attributes {stable_mosaic.version = 11 : i64} {
  func.func @_conv_relu_pool_kernel(%arg0: i32, %arg1: memref<2x32x96xf32, #tpu.memory_space<vmem>>, %arg2: memref<5x96x448xbf16, #tpu.memory_space<vmem>>, %arg3: memref<1x448xf32, #tpu.memory_space<vmem>>, %arg4: memref<3x13x28xf32, #tpu.memory_space<vmem>>, %arg5: memref<3x448x208xf32, #tpu.memory_space<vmem>>, %arg6: memref<2x13x208xbf16, #tpu.memory_space<vmem>>) attributes {dimension_semantics = [#tpu.dimension_semantics<parallel>], iteration_bounds = array<i64: 1>, scalar_prefetch = 0 : i64, scratch_operands = 0 : i64, tpu.core_type = #tpu.core_type<tc>, window_params = [{transform_indices = @transform_0, window_bounds = array<i64: 2, 32, 96>}, {pipeline_mode = #tpu.pipeline_mode<synchronous>, transform_indices = @transform_1, window_bounds = array<i64: 5, 96, 448>}, {pipeline_mode = #tpu.pipeline_mode<synchronous>, transform_indices = @transform_2, window_bounds = array<i64: 1, 448>}, {pipeline_mode = #tpu.pipeline_mode<synchronous>, transform_indices = @transform_3, window_bounds = array<i64: 3, 13, 28>}, {pipeline_mode = #tpu.pipeline_mode<synchronous>, transform_indices = @transform_4, window_bounds = array<i64: 3, 448, 208>}, {transform_indices = @transform_5, window_bounds = array<i64: 2, 13, 208>}]} {
    %c0 = arith.constant 0 : index
    %c0_0 = arith.constant 0 : index
    %0 = vector.load %arg3[%c0, %c0_0] : memref<1x448xf32, #tpu.memory_space<vmem>>, vector<1x448xf32>
    %c0_1 = arith.constant 0 : index
    %c0_2 = arith.constant 0 : index
    %c0_3 = arith.constant 0 : index
    %1 = vector.load %arg1[%c0_1, %c0_2, %c0_3] : memref<2x32x96xf32, #tpu.memory_space<vmem>>, vector<1x32x96xf32>
    %2 = vector.shape_cast %1 : vector<1x32x96xf32> to vector<32x96xf32>
    %3 = arith.truncf %2 : vector<32x96xf32> to vector<32x96xbf16>
    %4 = vector.extract_strided_slice %3 {offsets = [0, 0], sizes = [28, 96], strides = [1, 1]} : vector<32x96xbf16> to vector<28x96xbf16>
    %c0_4 = arith.constant 0 : index
    %c0_5 = arith.constant 0 : index
    %c0_6 = arith.constant 0 : index
    %5 = vector.load %arg2[%c0_4, %c0_5, %c0_6] : memref<5x96x448xbf16, #tpu.memory_space<vmem>>, vector<1x96x448xbf16>
    %6 = vector.shape_cast %5 : vector<1x96x448xbf16> to vector<96x448xbf16>
    %cst = arith.constant dense<0.000000e+00> : vector<28x448xf32>
    %7 = tpu.matmul %4, %6, %cst {dimension_numbers = #tpu.dot_dimension_numbers<[1], [0], [0], [1], [0, 0, 1, 1], [], []>} : vector<28x96xbf16>, vector<96x448xbf16>, vector<28x448xf32> -> vector<28x448xf32>
    %8 = vector.extract_strided_slice %3 {offsets = [1, 0], sizes = [28, 96], strides = [1, 1]} : vector<32x96xbf16> to vector<28x96xbf16>
    %c1 = arith.constant 1 : index
    %c0_7 = arith.constant 0 : index
    %c0_8 = arith.constant 0 : index
    %9 = vector.load %arg2[%c1, %c0_7, %c0_8] : memref<5x96x448xbf16, #tpu.memory_space<vmem>>, vector<1x96x448xbf16>
    %10 = vector.shape_cast %9 : vector<1x96x448xbf16> to vector<96x448xbf16>
    %cst_9 = arith.constant dense<0.000000e+00> : vector<28x448xf32>
    %11 = tpu.matmul %8, %10, %cst_9 {dimension_numbers = #tpu.dot_dimension_numbers<[1], [0], [0], [1], [0, 0, 1, 1], [], []>} : vector<28x96xbf16>, vector<96x448xbf16>, vector<28x448xf32> -> vector<28x448xf32>
    %12 = arith.addf %7, %11 : vector<28x448xf32>
    %13 = vector.extract_strided_slice %3 {offsets = [2, 0], sizes = [28, 96], strides = [1, 1]} : vector<32x96xbf16> to vector<28x96xbf16>
    %c2 = arith.constant 2 : index
    %c0_10 = arith.constant 0 : index
    %c0_11 = arith.constant 0 : index
    %14 = vector.load %arg2[%c2, %c0_10, %c0_11] : memref<5x96x448xbf16, #tpu.memory_space<vmem>>, vector<1x96x448xbf16>
    %15 = vector.shape_cast %14 : vector<1x96x448xbf16> to vector<96x448xbf16>
    %cst_12 = arith.constant dense<0.000000e+00> : vector<28x448xf32>
    %16 = tpu.matmul %13, %15, %cst_12 {dimension_numbers = #tpu.dot_dimension_numbers<[1], [0], [0], [1], [0, 0, 1, 1], [], []>} : vector<28x96xbf16>, vector<96x448xbf16>, vector<28x448xf32> -> vector<28x448xf32>
    %17 = arith.addf %12, %16 : vector<28x448xf32>
    %18 = vector.extract_strided_slice %3 {offsets = [3, 0], sizes = [28, 96], strides = [1, 1]} : vector<32x96xbf16> to vector<28x96xbf16>
    %c3 = arith.constant 3 : index
    %c0_13 = arith.constant 0 : index
    %c0_14 = arith.constant 0 : index
    %19 = vector.load %arg2[%c3, %c0_13, %c0_14] : memref<5x96x448xbf16, #tpu.memory_space<vmem>>, vector<1x96x448xbf16>
    %20 = vector.shape_cast %19 : vector<1x96x448xbf16> to vector<96x448xbf16>
    %cst_15 = arith.constant dense<0.000000e+00> : vector<28x448xf32>
    %21 = tpu.matmul %18, %20, %cst_15 {dimension_numbers = #tpu.dot_dimension_numbers<[1], [0], [0], [1], [0, 0, 1, 1], [], []>} : vector<28x96xbf16>, vector<96x448xbf16>, vector<28x448xf32> -> vector<28x448xf32>
    %22 = arith.addf %17, %21 : vector<28x448xf32>
    %23 = vector.extract_strided_slice %3 {offsets = [4, 0], sizes = [28, 96], strides = [1, 1]} : vector<32x96xbf16> to vector<28x96xbf16>
    %c4 = arith.constant 4 : index
    %c0_16 = arith.constant 0 : index
    %c0_17 = arith.constant 0 : index
    %24 = vector.load %arg2[%c4, %c0_16, %c0_17] : memref<5x96x448xbf16, #tpu.memory_space<vmem>>, vector<1x96x448xbf16>
    %25 = vector.shape_cast %24 : vector<1x96x448xbf16> to vector<96x448xbf16>
    %cst_18 = arith.constant dense<0.000000e+00> : vector<28x448xf32>
    %26 = tpu.matmul %23, %25, %cst_18 {dimension_numbers = #tpu.dot_dimension_numbers<[1], [0], [0], [1], [0, 0, 1, 1], [], []>} : vector<28x96xbf16>, vector<96x448xbf16>, vector<28x448xf32> -> vector<28x448xf32>
    %27 = arith.addf %22, %26 : vector<28x448xf32>
    %28 = vector.broadcast %0 : vector<1x448xf32> to vector<28x448xf32>
    %29 = arith.addf %27, %28 : vector<28x448xf32>
    %cst_19 = arith.constant 0.000000e+00 : f32
    %30 = vector.broadcast %cst_19 : f32 to vector<28x448xf32>
    %31 = arith.maximumf %29, %30 : vector<28x448xf32>
    %c0_20 = arith.constant 0 : index
    %c0_21 = arith.constant 0 : index
    %c0_22 = arith.constant 0 : index
    %32 = vector.load %arg4[%c0_20, %c0_21, %c0_22] : memref<3x13x28xf32, #tpu.memory_space<vmem>>, vector<1x13x28xf32>
    %33 = vector.shape_cast %32 : vector<1x13x28xf32> to vector<13x28xf32>
    %cst_23 = arith.constant dense<0.000000e+00> : vector<13x448xf32>
    %34 = tpu.matmul %33, %31, %cst_23 {dimension_numbers = #tpu.dot_dimension_numbers<[1], [0], [0], [1], [0, 0, 1, 1], [], []>} : vector<13x28xf32>, vector<28x448xf32>, vector<13x448xf32> -> vector<13x448xf32>
    %c1_24 = arith.constant 1 : index
    %c0_25 = arith.constant 0 : index
    %c0_26 = arith.constant 0 : index
    %35 = vector.load %arg4[%c1_24, %c0_25, %c0_26] : memref<3x13x28xf32, #tpu.memory_space<vmem>>, vector<1x13x28xf32>
    %36 = vector.shape_cast %35 : vector<1x13x28xf32> to vector<13x28xf32>
    %cst_27 = arith.constant dense<0.000000e+00> : vector<13x448xf32>
    %37 = tpu.matmul %36, %31, %cst_27 {dimension_numbers = #tpu.dot_dimension_numbers<[1], [0], [0], [1], [0, 0, 1, 1], [], []>} : vector<13x28xf32>, vector<28x448xf32>, vector<13x448xf32> -> vector<13x448xf32>
    %38 = arith.maximumf %34, %37 : vector<13x448xf32>
    %c2_28 = arith.constant 2 : index
    %c0_29 = arith.constant 0 : index
    %c0_30 = arith.constant 0 : index
    %39 = vector.load %arg4[%c2_28, %c0_29, %c0_30] : memref<3x13x28xf32, #tpu.memory_space<vmem>>, vector<1x13x28xf32>
    %40 = vector.shape_cast %39 : vector<1x13x28xf32> to vector<13x28xf32>
    %cst_31 = arith.constant dense<0.000000e+00> : vector<13x448xf32>
    %41 = tpu.matmul %40, %31, %cst_31 {dimension_numbers = #tpu.dot_dimension_numbers<[1], [0], [0], [1], [0, 0, 1, 1], [], []>} : vector<13x28xf32>, vector<28x448xf32>, vector<13x448xf32> -> vector<13x448xf32>
    %42 = arith.maximumf %38, %41 : vector<13x448xf32>
    %c0_32 = arith.constant 0 : index
    %c0_33 = arith.constant 0 : index
    %c0_34 = arith.constant 0 : index
    %43 = vector.load %arg5[%c0_32, %c0_33, %c0_34] : memref<3x448x208xf32, #tpu.memory_space<vmem>>, vector<1x448x208xf32>
    %44 = vector.shape_cast %43 : vector<1x448x208xf32> to vector<448x208xf32>
    %cst_35 = arith.constant dense<0.000000e+00> : vector<13x208xf32>
    %45 = tpu.matmul %42, %44, %cst_35 {dimension_numbers = #tpu.dot_dimension_numbers<[1], [0], [0], [1], [0, 0, 1, 1], [], []>} : vector<13x448xf32>, vector<448x208xf32>, vector<13x208xf32> -> vector<13x208xf32>
    %c1_36 = arith.constant 1 : index
    %c0_37 = arith.constant 0 : index
    %c0_38 = arith.constant 0 : index
    %46 = vector.load %arg5[%c1_36, %c0_37, %c0_38] : memref<3x448x208xf32, #tpu.memory_space<vmem>>, vector<1x448x208xf32>
    %47 = vector.shape_cast %46 : vector<1x448x208xf32> to vector<448x208xf32>
    %cst_39 = arith.constant dense<0.000000e+00> : vector<13x208xf32>
    %48 = tpu.matmul %42, %47, %cst_39 {dimension_numbers = #tpu.dot_dimension_numbers<[1], [0], [0], [1], [0, 0, 1, 1], [], []>} : vector<13x448xf32>, vector<448x208xf32>, vector<13x208xf32> -> vector<13x208xf32>
    %49 = arith.maximumf %45, %48 : vector<13x208xf32>
    %c2_40 = arith.constant 2 : index
    %c0_41 = arith.constant 0 : index
    %c0_42 = arith.constant 0 : index
    %50 = vector.load %arg5[%c2_40, %c0_41, %c0_42] : memref<3x448x208xf32, #tpu.memory_space<vmem>>, vector<1x448x208xf32>
    %51 = vector.shape_cast %50 : vector<1x448x208xf32> to vector<448x208xf32>
    %cst_43 = arith.constant dense<0.000000e+00> : vector<13x208xf32>
    %52 = tpu.matmul %42, %51, %cst_43 {dimension_numbers = #tpu.dot_dimension_numbers<[1], [0], [0], [1], [0, 0, 1, 1], [], []>} : vector<13x448xf32>, vector<448x208xf32>, vector<13x208xf32> -> vector<13x208xf32>
    %53 = arith.maximumf %49, %52 : vector<13x208xf32>
    %54 = arith.truncf %53 : vector<13x208xf32> to vector<13x208xbf16>
    %c0_44 = arith.constant 0 : index
    %c0_45 = arith.constant 0 : index
    %c0_46 = arith.constant 0 : index
    %55 = vector.load %arg6[%c0_44, %c0_45, %c0_46] : memref<2x13x208xbf16, #tpu.memory_space<vmem>>, vector<1x13x208xbf16>
    %56 = vector.shape_cast %55 : vector<1x13x208xbf16> to vector<13x208xbf16>
    %57 = vector.shape_cast %54 : vector<13x208xbf16> to vector<1x13x208xbf16>
    tpu.vector_store %arg6[%c0_44, %c0_45, %c0_46], %57 {strides = array<i32>} : memref<2x13x208xbf16, #tpu.memory_space<vmem>>, vector<1x13x208xbf16>,
    %c1_47 = arith.constant 1 : index
    %c0_48 = arith.constant 0 : index
    %c0_49 = arith.constant 0 : index
    %58 = vector.load %arg1[%c1_47, %c0_48, %c0_49] : memref<2x32x96xf32, #tpu.memory_space<vmem>>, vector<1x32x96xf32>
    %59 = vector.shape_cast %58 : vector<1x32x96xf32> to vector<32x96xf32>
    %60 = arith.truncf %59 : vector<32x96xf32> to vector<32x96xbf16>
    %61 = vector.extract_strided_slice %60 {offsets = [0, 0], sizes = [28, 96], strides = [1, 1]} : vector<32x96xbf16> to vector<28x96xbf16>
    %c0_50 = arith.constant 0 : index
    %c0_51 = arith.constant 0 : index
    %c0_52 = arith.constant 0 : index
    %62 = vector.load %arg2[%c0_50, %c0_51, %c0_52] : memref<5x96x448xbf16, #tpu.memory_space<vmem>>, vector<1x96x448xbf16>
    %63 = vector.shape_cast %62 : vector<1x96x448xbf16> to vector<96x448xbf16>
    %cst_53 = arith.constant dense<0.000000e+00> : vector<28x448xf32>
    %64 = tpu.matmul %61, %63, %cst_53 {dimension_numbers = #tpu.dot_dimension_numbers<[1], [0], [0], [1], [0, 0, 1, 1], [], []>} : vector<28x96xbf16>, vector<96x448xbf16>, vector<28x448xf32> -> vector<28x448xf32>
    %65 = vector.extract_strided_slice %60 {offsets = [1, 0], sizes = [28, 96], strides = [1, 1]} : vector<32x96xbf16> to vector<28x96xbf16>
    %c1_54 = arith.constant 1 : index
    %c0_55 = arith.constant 0 : index
    %c0_56 = arith.constant 0 : index
    %66 = vector.load %arg2[%c1_54, %c0_55, %c0_56] : memref<5x96x448xbf16, #tpu.memory_space<vmem>>, vector<1x96x448xbf16>
    %67 = vector.shape_cast %66 : vector<1x96x448xbf16> to vector<96x448xbf16>
    %cst_57 = arith.constant dense<0.000000e+00> : vector<28x448xf32>
    %68 = tpu.matmul %65, %67, %cst_57 {dimension_numbers = #tpu.dot_dimension_numbers<[1], [0], [0], [1], [0, 0, 1, 1], [], []>} : vector<28x96xbf16>, vector<96x448xbf16>, vector<28x448xf32> -> vector<28x448xf32>
    %69 = arith.addf %64, %68 : vector<28x448xf32>
    %70 = vector.extract_strided_slice %60 {offsets = [2, 0], sizes = [28, 96], strides = [1, 1]} : vector<32x96xbf16> to vector<28x96xbf16>
    %c2_58 = arith.constant 2 : index
    %c0_59 = arith.constant 0 : index
    %c0_60 = arith.constant 0 : index
    %71 = vector.load %arg2[%c2_58, %c0_59, %c0_60] : memref<5x96x448xbf16, #tpu.memory_space<vmem>>, vector<1x96x448xbf16>
    %72 = vector.shape_cast %71 : vector<1x96x448xbf16> to vector<96x448xbf16>
    %cst_61 = arith.constant dense<0.000000e+00> : vector<28x448xf32>
    %73 = tpu.matmul %70, %72, %cst_61 {dimension_numbers = #tpu.dot_dimension_numbers<[1], [0], [0], [1], [0, 0, 1, 1], [], []>} : vector<28x96xbf16>, vector<96x448xbf16>, vector<28x448xf32> -> vector<28x448xf32>
    %74 = arith.addf %69, %73 : vector<28x448xf32>
    %75 = vector.extract_strided_slice %60 {offsets = [3, 0], sizes = [28, 96], strides = [1, 1]} : vector<32x96xbf16> to vector<28x96xbf16>
    %c3_62 = arith.constant 3 : index
    %c0_63 = arith.constant 0 : index
    %c0_64 = arith.constant 0 : index
    %76 = vector.load %arg2[%c3_62, %c0_63, %c0_64] : memref<5x96x448xbf16, #tpu.memory_space<vmem>>, vector<1x96x448xbf16>
    %77 = vector.shape_cast %76 : vector<1x96x448xbf16> to vector<96x448xbf16>
    %cst_65 = arith.constant dense<0.000000e+00> : vector<28x448xf32>
    %78 = tpu.matmul %75, %77, %cst_65 {dimension_numbers = #tpu.dot_dimension_numbers<[1], [0], [0], [1], [0, 0, 1, 1], [], []>} : vector<28x96xbf16>, vector<96x448xbf16>, vector<28x448xf32> -> vector<28x448xf32>
    %79 = arith.addf %74, %78 : vector<28x448xf32>
    %80 = vector.extract_strided_slice %60 {offsets = [4, 0], sizes = [28, 96], strides = [1, 1]} : vector<32x96xbf16> to vector<28x96xbf16>
    %c4_66 = arith.constant 4 : index
    %c0_67 = arith.constant 0 : index
    %c0_68 = arith.constant 0 : index
    %81 = vector.load %arg2[%c4_66, %c0_67, %c0_68] : memref<5x96x448xbf16, #tpu.memory_space<vmem>>, vector<1x96x448xbf16>
    %82 = vector.shape_cast %81 : vector<1x96x448xbf16> to vector<96x448xbf16>
    %cst_69 = arith.constant dense<0.000000e+00> : vector<28x448xf32>
    %83 = tpu.matmul %80, %82, %cst_69 {dimension_numbers = #tpu.dot_dimension_numbers<[1], [0], [0], [1], [0, 0, 1, 1], [], []>} : vector<28x96xbf16>, vector<96x448xbf16>, vector<28x448xf32> -> vector<28x448xf32>
    %84 = arith.addf %79, %83 : vector<28x448xf32>
    %85 = vector.broadcast %0 : vector<1x448xf32> to vector<28x448xf32>
    %86 = arith.addf %84, %85 : vector<28x448xf32>
    %cst_70 = arith.constant 0.000000e+00 : f32
    %87 = vector.broadcast %cst_70 : f32 to vector<28x448xf32>
    %88 = arith.maximumf %86, %87 : vector<28x448xf32>
    %c0_71 = arith.constant 0 : index
    %c0_72 = arith.constant 0 : index
    %c0_73 = arith.constant 0 : index
    %89 = vector.load %arg4[%c0_71, %c0_72, %c0_73] : memref<3x13x28xf32, #tpu.memory_space<vmem>>, vector<1x13x28xf32>
    %90 = vector.shape_cast %89 : vector<1x13x28xf32> to vector<13x28xf32>
    %cst_74 = arith.constant dense<0.000000e+00> : vector<13x448xf32>
    %91 = tpu.matmul %90, %88, %cst_74 {dimension_numbers = #tpu.dot_dimension_numbers<[1], [0], [0], [1], [0, 0, 1, 1], [], []>} : vector<13x28xf32>, vector<28x448xf32>, vector<13x448xf32> -> vector<13x448xf32>
    %c1_75 = arith.constant 1 : index
    %c0_76 = arith.constant 0 : index
    %c0_77 = arith.constant 0 : index
    %92 = vector.load %arg4[%c1_75, %c0_76, %c0_77] : memref<3x13x28xf32, #tpu.memory_space<vmem>>, vector<1x13x28xf32>
    %93 = vector.shape_cast %92 : vector<1x13x28xf32> to vector<13x28xf32>
    %cst_78 = arith.constant dense<0.000000e+00> : vector<13x448xf32>
    %94 = tpu.matmul %93, %88, %cst_78 {dimension_numbers = #tpu.dot_dimension_numbers<[1], [0], [0], [1], [0, 0, 1, 1], [], []>} : vector<13x28xf32>, vector<28x448xf32>, vector<13x448xf32> -> vector<13x448xf32>
    %95 = arith.maximumf %91, %94 : vector<13x448xf32>
    %c2_79 = arith.constant 2 : index
    %c0_80 = arith.constant 0 : index
    %c0_81 = arith.constant 0 : index
    %96 = vector.load %arg4[%c2_79, %c0_80, %c0_81] : memref<3x13x28xf32, #tpu.memory_space<vmem>>, vector<1x13x28xf32>
    %97 = vector.shape_cast %96 : vector<1x13x28xf32> to vector<13x28xf32>
    %cst_82 = arith.constant dense<0.000000e+00> : vector<13x448xf32>
    %98 = tpu.matmul %97, %88, %cst_82 {dimension_numbers = #tpu.dot_dimension_numbers<[1], [0], [0], [1], [0, 0, 1, 1], [], []>} : vector<13x28xf32>, vector<28x448xf32>, vector<13x448xf32> -> vector<13x448xf32>
    %99 = arith.maximumf %95, %98 : vector<13x448xf32>
    %c0_83 = arith.constant 0 : index
    %c0_84 = arith.constant 0 : index
    %c0_85 = arith.constant 0 : index
    %100 = vector.load %arg5[%c0_83, %c0_84, %c0_85] : memref<3x448x208xf32, #tpu.memory_space<vmem>>, vector<1x448x208xf32>
    %101 = vector.shape_cast %100 : vector<1x448x208xf32> to vector<448x208xf32>
    %cst_86 = arith.constant dense<0.000000e+00> : vector<13x208xf32>
    %102 = tpu.matmul %99, %101, %cst_86 {dimension_numbers = #tpu.dot_dimension_numbers<[1], [0], [0], [1], [0, 0, 1, 1], [], []>} : vector<13x448xf32>, vector<448x208xf32>, vector<13x208xf32> -> vector<13x208xf32>
    %c1_87 = arith.constant 1 : index
    %c0_88 = arith.constant 0 : index
    %c0_89 = arith.constant 0 : index
    %103 = vector.load %arg5[%c1_87, %c0_88, %c0_89] : memref<3x448x208xf32, #tpu.memory_space<vmem>>, vector<1x448x208xf32>
    %104 = vector.shape_cast %103 : vector<1x448x208xf32> to vector<448x208xf32>
    %cst_90 = arith.constant dense<0.000000e+00> : vector<13x208xf32>
    %105 = tpu.matmul %99, %104, %cst_90 {dimension_numbers = #tpu.dot_dimension_numbers<[1], [0], [0], [1], [0, 0, 1, 1], [], []>} : vector<13x448xf32>, vector<448x208xf32>, vector<13x208xf32> -> vector<13x208xf32>
    %106 = arith.maximumf %102, %105 : vector<13x208xf32>
    %c2_91 = arith.constant 2 : index
    %c0_92 = arith.constant 0 : index
    %c0_93 = arith.constant 0 : index
    %107 = vector.load %arg5[%c2_91, %c0_92, %c0_93] : memref<3x448x208xf32, #tpu.memory_space<vmem>>, vector<1x448x208xf32>
    %108 = vector.shape_cast %107 : vector<1x448x208xf32> to vector<448x208xf32>
    %cst_94 = arith.constant dense<0.000000e+00> : vector<13x208xf32>
    %109 = tpu.matmul %99, %108, %cst_94 {dimension_numbers = #tpu.dot_dimension_numbers<[1], [0], [0], [1], [0, 0, 1, 1], [], []>} : vector<13x448xf32>, vector<448x208xf32>, vector<13x208xf32> -> vector<13x208xf32>
    %110 = arith.maximumf %106, %109 : vector<13x208xf32>
    %111 = arith.truncf %110 : vector<13x208xf32> to vector<13x208xbf16>
    %c1_95 = arith.constant 1 : index
    %c0_96 = arith.constant 0 : index
    %c0_97 = arith.constant 0 : index
    %112 = vector.load %arg6[%c1_95, %c0_96, %c0_97] : memref<2x13x208xbf16, #tpu.memory_space<vmem>>, vector<1x13x208xbf16>
    %113 = vector.shape_cast %112 : vector<1x13x208xbf16> to vector<13x208xbf16>
    %114 = vector.shape_cast %111 : vector<13x208xbf16> to vector<1x13x208xbf16>
    tpu.vector_store %arg6[%c1_95, %c0_96, %c0_97], %114 {strides = array<i32>} : memref<2x13x208xbf16, #tpu.memory_space<vmem>>, vector<1x13x208xbf16>,
    return
  }
  func.func @transform_0(%arg0: i32) -> (i32, i32, i32) {
    %c0_i32 = arith.constant 0 : i32
    %c0_i32_0 = arith.constant 0 : i32
    %c0_i32_1 = arith.constant 0 : i32
    return %arg0, %c0_i32, %c0_i32_0 : i32, i32, i32
  }
  func.func @transform_1(%arg0: i32) -> (i32, i32, i32) {
    %c0_i32 = arith.constant 0 : i32
    %c0_i32_0 = arith.constant 0 : i32
    %c0_i32_1 = arith.constant 0 : i32
    %c0_i32_2 = arith.constant 0 : i32
    return %c0_i32, %c0_i32_0, %c0_i32_1 : i32, i32, i32
  }
  func.func @transform_2(%arg0: i32) -> (i32, i32) {
    %c0_i32 = arith.constant 0 : i32
    %c0_i32_0 = arith.constant 0 : i32
    %c0_i32_1 = arith.constant 0 : i32
    return %c0_i32, %c0_i32_0 : i32, i32
  }
  func.func @transform_3(%arg0: i32) -> (i32, i32, i32) {
    %c0_i32 = arith.constant 0 : i32
    %c0_i32_0 = arith.constant 0 : i32
    %c0_i32_1 = arith.constant 0 : i32
    %c0_i32_2 = arith.constant 0 : i32
    return %c0_i32, %c0_i32_0, %c0_i32_1 : i32, i32, i32
  }
  func.func @transform_4(%arg0: i32) -> (i32, i32, i32) {
    %c0_i32 = arith.constant 0 : i32
    %c0_i32_0 = arith.constant 0 : i32
    %c0_i32_1 = arith.constant 0 : i32
    %c0_i32_2 = arith.constant 0 : i32
    return %c0_i32, %c0_i32_0, %c0_i32_1 : i32, i32, i32
  }
  func.func @transform_5(%arg0: i32) -> (i32, i32, i32) {
    %c0_i32 = arith.constant 0 : i32
    %c0_i32_0 = arith.constant 0 : i32
    %c0_i32_1 = arith.constant 0 : i32
    return %arg0, %c0_i32, %c0_i32_0 : i32, i32, i32
  }
}

module attributes {stable_mosaic.version = 11 : i64} {
  func.func @_conv_relu_pool_kernel(%arg0: i32, %arg1: memref<2x13x208xbf16, #tpu.memory_space<vmem>>, %arg2: memref<5x208x288xbf16, #tpu.memory_space<vmem>>, %arg3: memref<1x288xf32, #tpu.memory_space<vmem>>, %arg4: memref<3x4x9xf32, #tpu.memory_space<vmem>>, %arg5: memref<3x288x128xf32, #tpu.memory_space<vmem>>, %arg6: memref<2x4x128xbf16, #tpu.memory_space<vmem>>) attributes {dimension_semantics = [#tpu.dimension_semantics<parallel>], iteration_bounds = array<i64: 1>, scalar_prefetch = 0 : i64, scratch_operands = 0 : i64, tpu.core_type = #tpu.core_type<tc>, window_params = [{transform_indices = @transform_0, window_bounds = array<i64: 2, 13, 208>}, {pipeline_mode = #tpu.pipeline_mode<synchronous>, transform_indices = @transform_1, window_bounds = array<i64: 5, 208, 288>}, {pipeline_mode = #tpu.pipeline_mode<synchronous>, transform_indices = @transform_2, window_bounds = array<i64: 1, 288>}, {pipeline_mode = #tpu.pipeline_mode<synchronous>, transform_indices = @transform_3, window_bounds = array<i64: 3, 4, 9>}, {pipeline_mode = #tpu.pipeline_mode<synchronous>, transform_indices = @transform_4, window_bounds = array<i64: 3, 288, 128>}, {transform_indices = @transform_5, window_bounds = array<i64: 2, 4, 128>}]} {
    %c0 = arith.constant 0 : index
    %c0_0 = arith.constant 0 : index
    %0 = vector.load %arg3[%c0, %c0_0] : memref<1x288xf32, #tpu.memory_space<vmem>>, vector<1x288xf32>
    %c0_1 = arith.constant 0 : index
    %c0_2 = arith.constant 0 : index
    %c0_3 = arith.constant 0 : index
    %1 = vector.load %arg1[%c0_1, %c0_2, %c0_3] : memref<2x13x208xbf16, #tpu.memory_space<vmem>>, vector<1x13x208xbf16>
    %2 = vector.shape_cast %1 : vector<1x13x208xbf16> to vector<13x208xbf16>
    %3 = vector.extract_strided_slice %2 {offsets = [0, 0], sizes = [9, 208], strides = [1, 1]} : vector<13x208xbf16> to vector<9x208xbf16>
    %c0_4 = arith.constant 0 : index
    %c0_5 = arith.constant 0 : index
    %c0_6 = arith.constant 0 : index
    %4 = vector.load %arg2[%c0_4, %c0_5, %c0_6] : memref<5x208x288xbf16, #tpu.memory_space<vmem>>, vector<1x208x288xbf16>
    %5 = vector.shape_cast %4 : vector<1x208x288xbf16> to vector<208x288xbf16>
    %cst = arith.constant dense<0.000000e+00> : vector<9x288xf32>
    %6 = tpu.matmul %3, %5, %cst {dimension_numbers = #tpu.dot_dimension_numbers<[1], [0], [0], [1], [0, 0, 1, 1], [], []>} : vector<9x208xbf16>, vector<208x288xbf16>, vector<9x288xf32> -> vector<9x288xf32>
    %7 = vector.extract_strided_slice %2 {offsets = [1, 0], sizes = [9, 208], strides = [1, 1]} : vector<13x208xbf16> to vector<9x208xbf16>
    %c1 = arith.constant 1 : index
    %c0_7 = arith.constant 0 : index
    %c0_8 = arith.constant 0 : index
    %8 = vector.load %arg2[%c1, %c0_7, %c0_8] : memref<5x208x288xbf16, #tpu.memory_space<vmem>>, vector<1x208x288xbf16>
    %9 = vector.shape_cast %8 : vector<1x208x288xbf16> to vector<208x288xbf16>
    %cst_9 = arith.constant dense<0.000000e+00> : vector<9x288xf32>
    %10 = tpu.matmul %7, %9, %cst_9 {dimension_numbers = #tpu.dot_dimension_numbers<[1], [0], [0], [1], [0, 0, 1, 1], [], []>} : vector<9x208xbf16>, vector<208x288xbf16>, vector<9x288xf32> -> vector<9x288xf32>
    %11 = arith.addf %6, %10 : vector<9x288xf32>
    %12 = vector.extract_strided_slice %2 {offsets = [2, 0], sizes = [9, 208], strides = [1, 1]} : vector<13x208xbf16> to vector<9x208xbf16>
    %c2 = arith.constant 2 : index
    %c0_10 = arith.constant 0 : index
    %c0_11 = arith.constant 0 : index
    %13 = vector.load %arg2[%c2, %c0_10, %c0_11] : memref<5x208x288xbf16, #tpu.memory_space<vmem>>, vector<1x208x288xbf16>
    %14 = vector.shape_cast %13 : vector<1x208x288xbf16> to vector<208x288xbf16>
    %cst_12 = arith.constant dense<0.000000e+00> : vector<9x288xf32>
    %15 = tpu.matmul %12, %14, %cst_12 {dimension_numbers = #tpu.dot_dimension_numbers<[1], [0], [0], [1], [0, 0, 1, 1], [], []>} : vector<9x208xbf16>, vector<208x288xbf16>, vector<9x288xf32> -> vector<9x288xf32>
    %16 = arith.addf %11, %15 : vector<9x288xf32>
    %17 = vector.extract_strided_slice %2 {offsets = [3, 0], sizes = [9, 208], strides = [1, 1]} : vector<13x208xbf16> to vector<9x208xbf16>
    %c3 = arith.constant 3 : index
    %c0_13 = arith.constant 0 : index
    %c0_14 = arith.constant 0 : index
    %18 = vector.load %arg2[%c3, %c0_13, %c0_14] : memref<5x208x288xbf16, #tpu.memory_space<vmem>>, vector<1x208x288xbf16>
    %19 = vector.shape_cast %18 : vector<1x208x288xbf16> to vector<208x288xbf16>
    %cst_15 = arith.constant dense<0.000000e+00> : vector<9x288xf32>
    %20 = tpu.matmul %17, %19, %cst_15 {dimension_numbers = #tpu.dot_dimension_numbers<[1], [0], [0], [1], [0, 0, 1, 1], [], []>} : vector<9x208xbf16>, vector<208x288xbf16>, vector<9x288xf32> -> vector<9x288xf32>
    %21 = arith.addf %16, %20 : vector<9x288xf32>
    %22 = vector.extract_strided_slice %2 {offsets = [4, 0], sizes = [9, 208], strides = [1, 1]} : vector<13x208xbf16> to vector<9x208xbf16>
    %c4 = arith.constant 4 : index
    %c0_16 = arith.constant 0 : index
    %c0_17 = arith.constant 0 : index
    %23 = vector.load %arg2[%c4, %c0_16, %c0_17] : memref<5x208x288xbf16, #tpu.memory_space<vmem>>, vector<1x208x288xbf16>
    %24 = vector.shape_cast %23 : vector<1x208x288xbf16> to vector<208x288xbf16>
    %cst_18 = arith.constant dense<0.000000e+00> : vector<9x288xf32>
    %25 = tpu.matmul %22, %24, %cst_18 {dimension_numbers = #tpu.dot_dimension_numbers<[1], [0], [0], [1], [0, 0, 1, 1], [], []>} : vector<9x208xbf16>, vector<208x288xbf16>, vector<9x288xf32> -> vector<9x288xf32>
    %26 = arith.addf %21, %25 : vector<9x288xf32>
    %27 = vector.broadcast %0 : vector<1x288xf32> to vector<9x288xf32>
    %28 = arith.addf %26, %27 : vector<9x288xf32>
    %cst_19 = arith.constant 0.000000e+00 : f32
    %29 = vector.broadcast %cst_19 : f32 to vector<9x288xf32>
    %30 = arith.maximumf %28, %29 : vector<9x288xf32>
    %c0_20 = arith.constant 0 : index
    %c0_21 = arith.constant 0 : index
    %c0_22 = arith.constant 0 : index
    %31 = vector.load %arg4[%c0_20, %c0_21, %c0_22] : memref<3x4x9xf32, #tpu.memory_space<vmem>>, vector<1x4x9xf32>
    %32 = vector.shape_cast %31 : vector<1x4x9xf32> to vector<4x9xf32>
    %cst_23 = arith.constant dense<0.000000e+00> : vector<4x288xf32>
    %33 = tpu.matmul %32, %30, %cst_23 {dimension_numbers = #tpu.dot_dimension_numbers<[1], [0], [0], [1], [0, 0, 1, 1], [], []>} : vector<4x9xf32>, vector<9x288xf32>, vector<4x288xf32> -> vector<4x288xf32>
    %c1_24 = arith.constant 1 : index
    %c0_25 = arith.constant 0 : index
    %c0_26 = arith.constant 0 : index
    %34 = vector.load %arg4[%c1_24, %c0_25, %c0_26] : memref<3x4x9xf32, #tpu.memory_space<vmem>>, vector<1x4x9xf32>
    %35 = vector.shape_cast %34 : vector<1x4x9xf32> to vector<4x9xf32>
    %cst_27 = arith.constant dense<0.000000e+00> : vector<4x288xf32>
    %36 = tpu.matmul %35, %30, %cst_27 {dimension_numbers = #tpu.dot_dimension_numbers<[1], [0], [0], [1], [0, 0, 1, 1], [], []>} : vector<4x9xf32>, vector<9x288xf32>, vector<4x288xf32> -> vector<4x288xf32>
    %37 = arith.maximumf %33, %36 : vector<4x288xf32>
    %c2_28 = arith.constant 2 : index
    %c0_29 = arith.constant 0 : index
    %c0_30 = arith.constant 0 : index
    %38 = vector.load %arg4[%c2_28, %c0_29, %c0_30] : memref<3x4x9xf32, #tpu.memory_space<vmem>>, vector<1x4x9xf32>
    %39 = vector.shape_cast %38 : vector<1x4x9xf32> to vector<4x9xf32>
    %cst_31 = arith.constant dense<0.000000e+00> : vector<4x288xf32>
    %40 = tpu.matmul %39, %30, %cst_31 {dimension_numbers = #tpu.dot_dimension_numbers<[1], [0], [0], [1], [0, 0, 1, 1], [], []>} : vector<4x9xf32>, vector<9x288xf32>, vector<4x288xf32> -> vector<4x288xf32>
    %41 = arith.maximumf %37, %40 : vector<4x288xf32>
    %c0_32 = arith.constant 0 : index
    %c0_33 = arith.constant 0 : index
    %c0_34 = arith.constant 0 : index
    %42 = vector.load %arg5[%c0_32, %c0_33, %c0_34] : memref<3x288x128xf32, #tpu.memory_space<vmem>>, vector<1x288x128xf32>
    %43 = vector.shape_cast %42 : vector<1x288x128xf32> to vector<288x128xf32>
    %cst_35 = arith.constant dense<0.000000e+00> : vector<4x128xf32>
    %44 = tpu.matmul %41, %43, %cst_35 {dimension_numbers = #tpu.dot_dimension_numbers<[1], [0], [0], [1], [0, 0, 1, 1], [], []>} : vector<4x288xf32>, vector<288x128xf32>, vector<4x128xf32> -> vector<4x128xf32>
    %c1_36 = arith.constant 1 : index
    %c0_37 = arith.constant 0 : index
    %c0_38 = arith.constant 0 : index
    %45 = vector.load %arg5[%c1_36, %c0_37, %c0_38] : memref<3x288x128xf32, #tpu.memory_space<vmem>>, vector<1x288x128xf32>
    %46 = vector.shape_cast %45 : vector<1x288x128xf32> to vector<288x128xf32>
    %cst_39 = arith.constant dense<0.000000e+00> : vector<4x128xf32>
    %47 = tpu.matmul %41, %46, %cst_39 {dimension_numbers = #tpu.dot_dimension_numbers<[1], [0], [0], [1], [0, 0, 1, 1], [], []>} : vector<4x288xf32>, vector<288x128xf32>, vector<4x128xf32> -> vector<4x128xf32>
    %48 = arith.maximumf %44, %47 : vector<4x128xf32>
    %c2_40 = arith.constant 2 : index
    %c0_41 = arith.constant 0 : index
    %c0_42 = arith.constant 0 : index
    %49 = vector.load %arg5[%c2_40, %c0_41, %c0_42] : memref<3x288x128xf32, #tpu.memory_space<vmem>>, vector<1x288x128xf32>
    %50 = vector.shape_cast %49 : vector<1x288x128xf32> to vector<288x128xf32>
    %cst_43 = arith.constant dense<0.000000e+00> : vector<4x128xf32>
    %51 = tpu.matmul %41, %50, %cst_43 {dimension_numbers = #tpu.dot_dimension_numbers<[1], [0], [0], [1], [0, 0, 1, 1], [], []>} : vector<4x288xf32>, vector<288x128xf32>, vector<4x128xf32> -> vector<4x128xf32>
    %52 = arith.maximumf %48, %51 : vector<4x128xf32>
    %53 = arith.truncf %52 : vector<4x128xf32> to vector<4x128xbf16>
    %c0_44 = arith.constant 0 : index
    %c0_45 = arith.constant 0 : index
    %c0_46 = arith.constant 0 : index
    %54 = vector.load %arg6[%c0_44, %c0_45, %c0_46] : memref<2x4x128xbf16, #tpu.memory_space<vmem>>, vector<1x4x128xbf16>
    %55 = vector.shape_cast %54 : vector<1x4x128xbf16> to vector<4x128xbf16>
    %56 = vector.shape_cast %53 : vector<4x128xbf16> to vector<1x4x128xbf16>
    tpu.vector_store %arg6[%c0_44, %c0_45, %c0_46], %56 {strides = array<i32>} : memref<2x4x128xbf16, #tpu.memory_space<vmem>>, vector<1x4x128xbf16>,
    %c1_47 = arith.constant 1 : index
    %c0_48 = arith.constant 0 : index
    %c0_49 = arith.constant 0 : index
    %57 = vector.load %arg1[%c1_47, %c0_48, %c0_49] : memref<2x13x208xbf16, #tpu.memory_space<vmem>>, vector<1x13x208xbf16>
    %58 = vector.shape_cast %57 : vector<1x13x208xbf16> to vector<13x208xbf16>
    %59 = vector.extract_strided_slice %58 {offsets = [0, 0], sizes = [9, 208], strides = [1, 1]} : vector<13x208xbf16> to vector<9x208xbf16>
    %c0_50 = arith.constant 0 : index
    %c0_51 = arith.constant 0 : index
    %c0_52 = arith.constant 0 : index
    %60 = vector.load %arg2[%c0_50, %c0_51, %c0_52] : memref<5x208x288xbf16, #tpu.memory_space<vmem>>, vector<1x208x288xbf16>
    %61 = vector.shape_cast %60 : vector<1x208x288xbf16> to vector<208x288xbf16>
    %cst_53 = arith.constant dense<0.000000e+00> : vector<9x288xf32>
    %62 = tpu.matmul %59, %61, %cst_53 {dimension_numbers = #tpu.dot_dimension_numbers<[1], [0], [0], [1], [0, 0, 1, 1], [], []>} : vector<9x208xbf16>, vector<208x288xbf16>, vector<9x288xf32> -> vector<9x288xf32>
    %63 = vector.extract_strided_slice %58 {offsets = [1, 0], sizes = [9, 208], strides = [1, 1]} : vector<13x208xbf16> to vector<9x208xbf16>
    %c1_54 = arith.constant 1 : index
    %c0_55 = arith.constant 0 : index
    %c0_56 = arith.constant 0 : index
    %64 = vector.load %arg2[%c1_54, %c0_55, %c0_56] : memref<5x208x288xbf16, #tpu.memory_space<vmem>>, vector<1x208x288xbf16>
    %65 = vector.shape_cast %64 : vector<1x208x288xbf16> to vector<208x288xbf16>
    %cst_57 = arith.constant dense<0.000000e+00> : vector<9x288xf32>
    %66 = tpu.matmul %63, %65, %cst_57 {dimension_numbers = #tpu.dot_dimension_numbers<[1], [0], [0], [1], [0, 0, 1, 1], [], []>} : vector<9x208xbf16>, vector<208x288xbf16>, vector<9x288xf32> -> vector<9x288xf32>
    %67 = arith.addf %62, %66 : vector<9x288xf32>
    %68 = vector.extract_strided_slice %58 {offsets = [2, 0], sizes = [9, 208], strides = [1, 1]} : vector<13x208xbf16> to vector<9x208xbf16>
    %c2_58 = arith.constant 2 : index
    %c0_59 = arith.constant 0 : index
    %c0_60 = arith.constant 0 : index
    %69 = vector.load %arg2[%c2_58, %c0_59, %c0_60] : memref<5x208x288xbf16, #tpu.memory_space<vmem>>, vector<1x208x288xbf16>
    %70 = vector.shape_cast %69 : vector<1x208x288xbf16> to vector<208x288xbf16>
    %cst_61 = arith.constant dense<0.000000e+00> : vector<9x288xf32>
    %71 = tpu.matmul %68, %70, %cst_61 {dimension_numbers = #tpu.dot_dimension_numbers<[1], [0], [0], [1], [0, 0, 1, 1], [], []>} : vector<9x208xbf16>, vector<208x288xbf16>, vector<9x288xf32> -> vector<9x288xf32>
    %72 = arith.addf %67, %71 : vector<9x288xf32>
    %73 = vector.extract_strided_slice %58 {offsets = [3, 0], sizes = [9, 208], strides = [1, 1]} : vector<13x208xbf16> to vector<9x208xbf16>
    %c3_62 = arith.constant 3 : index
    %c0_63 = arith.constant 0 : index
    %c0_64 = arith.constant 0 : index
    %74 = vector.load %arg2[%c3_62, %c0_63, %c0_64] : memref<5x208x288xbf16, #tpu.memory_space<vmem>>, vector<1x208x288xbf16>
    %75 = vector.shape_cast %74 : vector<1x208x288xbf16> to vector<208x288xbf16>
    %cst_65 = arith.constant dense<0.000000e+00> : vector<9x288xf32>
    %76 = tpu.matmul %73, %75, %cst_65 {dimension_numbers = #tpu.dot_dimension_numbers<[1], [0], [0], [1], [0, 0, 1, 1], [], []>} : vector<9x208xbf16>, vector<208x288xbf16>, vector<9x288xf32> -> vector<9x288xf32>
    %77 = arith.addf %72, %76 : vector<9x288xf32>
    %78 = vector.extract_strided_slice %58 {offsets = [4, 0], sizes = [9, 208], strides = [1, 1]} : vector<13x208xbf16> to vector<9x208xbf16>
    %c4_66 = arith.constant 4 : index
    %c0_67 = arith.constant 0 : index
    %c0_68 = arith.constant 0 : index
    %79 = vector.load %arg2[%c4_66, %c0_67, %c0_68] : memref<5x208x288xbf16, #tpu.memory_space<vmem>>, vector<1x208x288xbf16>
    %80 = vector.shape_cast %79 : vector<1x208x288xbf16> to vector<208x288xbf16>
    %cst_69 = arith.constant dense<0.000000e+00> : vector<9x288xf32>
    %81 = tpu.matmul %78, %80, %cst_69 {dimension_numbers = #tpu.dot_dimension_numbers<[1], [0], [0], [1], [0, 0, 1, 1], [], []>} : vector<9x208xbf16>, vector<208x288xbf16>, vector<9x288xf32> -> vector<9x288xf32>
    %82 = arith.addf %77, %81 : vector<9x288xf32>
    %83 = vector.broadcast %0 : vector<1x288xf32> to vector<9x288xf32>
    %84 = arith.addf %82, %83 : vector<9x288xf32>
    %cst_70 = arith.constant 0.000000e+00 : f32
    %85 = vector.broadcast %cst_70 : f32 to vector<9x288xf32>
    %86 = arith.maximumf %84, %85 : vector<9x288xf32>
    %c0_71 = arith.constant 0 : index
    %c0_72 = arith.constant 0 : index
    %c0_73 = arith.constant 0 : index
    %87 = vector.load %arg4[%c0_71, %c0_72, %c0_73] : memref<3x4x9xf32, #tpu.memory_space<vmem>>, vector<1x4x9xf32>
    %88 = vector.shape_cast %87 : vector<1x4x9xf32> to vector<4x9xf32>
    %cst_74 = arith.constant dense<0.000000e+00> : vector<4x288xf32>
    %89 = tpu.matmul %88, %86, %cst_74 {dimension_numbers = #tpu.dot_dimension_numbers<[1], [0], [0], [1], [0, 0, 1, 1], [], []>} : vector<4x9xf32>, vector<9x288xf32>, vector<4x288xf32> -> vector<4x288xf32>
    %c1_75 = arith.constant 1 : index
    %c0_76 = arith.constant 0 : index
    %c0_77 = arith.constant 0 : index
    %90 = vector.load %arg4[%c1_75, %c0_76, %c0_77] : memref<3x4x9xf32, #tpu.memory_space<vmem>>, vector<1x4x9xf32>
    %91 = vector.shape_cast %90 : vector<1x4x9xf32> to vector<4x9xf32>
    %cst_78 = arith.constant dense<0.000000e+00> : vector<4x288xf32>
    %92 = tpu.matmul %91, %86, %cst_78 {dimension_numbers = #tpu.dot_dimension_numbers<[1], [0], [0], [1], [0, 0, 1, 1], [], []>} : vector<4x9xf32>, vector<9x288xf32>, vector<4x288xf32> -> vector<4x288xf32>
    %93 = arith.maximumf %89, %92 : vector<4x288xf32>
    %c2_79 = arith.constant 2 : index
    %c0_80 = arith.constant 0 : index
    %c0_81 = arith.constant 0 : index
    %94 = vector.load %arg4[%c2_79, %c0_80, %c0_81] : memref<3x4x9xf32, #tpu.memory_space<vmem>>, vector<1x4x9xf32>
    %95 = vector.shape_cast %94 : vector<1x4x9xf32> to vector<4x9xf32>
    %cst_82 = arith.constant dense<0.000000e+00> : vector<4x288xf32>
    %96 = tpu.matmul %95, %86, %cst_82 {dimension_numbers = #tpu.dot_dimension_numbers<[1], [0], [0], [1], [0, 0, 1, 1], [], []>} : vector<4x9xf32>, vector<9x288xf32>, vector<4x288xf32> -> vector<4x288xf32>
    %97 = arith.maximumf %93, %96 : vector<4x288xf32>
    %c0_83 = arith.constant 0 : index
    %c0_84 = arith.constant 0 : index
    %c0_85 = arith.constant 0 : index
    %98 = vector.load %arg5[%c0_83, %c0_84, %c0_85] : memref<3x288x128xf32, #tpu.memory_space<vmem>>, vector<1x288x128xf32>
    %99 = vector.shape_cast %98 : vector<1x288x128xf32> to vector<288x128xf32>
    %cst_86 = arith.constant dense<0.000000e+00> : vector<4x128xf32>
    %100 = tpu.matmul %97, %99, %cst_86 {dimension_numbers = #tpu.dot_dimension_numbers<[1], [0], [0], [1], [0, 0, 1, 1], [], []>} : vector<4x288xf32>, vector<288x128xf32>, vector<4x128xf32> -> vector<4x128xf32>
    %c1_87 = arith.constant 1 : index
    %c0_88 = arith.constant 0 : index
    %c0_89 = arith.constant 0 : index
    %101 = vector.load %arg5[%c1_87, %c0_88, %c0_89] : memref<3x288x128xf32, #tpu.memory_space<vmem>>, vector<1x288x128xf32>
    %102 = vector.shape_cast %101 : vector<1x288x128xf32> to vector<288x128xf32>
    %cst_90 = arith.constant dense<0.000000e+00> : vector<4x128xf32>
    %103 = tpu.matmul %97, %102, %cst_90 {dimension_numbers = #tpu.dot_dimension_numbers<[1], [0], [0], [1], [0, 0, 1, 1], [], []>} : vector<4x288xf32>, vector<288x128xf32>, vector<4x128xf32> -> vector<4x128xf32>
    %104 = arith.maximumf %100, %103 : vector<4x128xf32>
    %c2_91 = arith.constant 2 : index
    %c0_92 = arith.constant 0 : index
    %c0_93 = arith.constant 0 : index
    %105 = vector.load %arg5[%c2_91, %c0_92, %c0_93] : memref<3x288x128xf32, #tpu.memory_space<vmem>>, vector<1x288x128xf32>
    %106 = vector.shape_cast %105 : vector<1x288x128xf32> to vector<288x128xf32>
    %cst_94 = arith.constant dense<0.000000e+00> : vector<4x128xf32>
    %107 = tpu.matmul %97, %106, %cst_94 {dimension_numbers = #tpu.dot_dimension_numbers<[1], [0], [0], [1], [0, 0, 1, 1], [], []>} : vector<4x288xf32>, vector<288x128xf32>, vector<4x128xf32> -> vector<4x128xf32>
    %108 = arith.maximumf %104, %107 : vector<4x128xf32>
    %109 = arith.truncf %108 : vector<4x128xf32> to vector<4x128xbf16>
    %c1_95 = arith.constant 1 : index
    %c0_96 = arith.constant 0 : index
    %c0_97 = arith.constant 0 : index
    %110 = vector.load %arg6[%c1_95, %c0_96, %c0_97] : memref<2x4x128xbf16, #tpu.memory_space<vmem>>, vector<1x4x128xbf16>
    %111 = vector.shape_cast %110 : vector<1x4x128xbf16> to vector<4x128xbf16>
    %112 = vector.shape_cast %109 : vector<4x128xbf16> to vector<1x4x128xbf16>
    tpu.vector_store %arg6[%c1_95, %c0_96, %c0_97], %112 {strides = array<i32>} : memref<2x4x128xbf16, #tpu.memory_space<vmem>>, vector<1x4x128xbf16>,
    return
  }
  func.func @transform_0(%arg0: i32) -> (i32, i32, i32) {
    %c0_i32 = arith.constant 0 : i32
    %c0_i32_0 = arith.constant 0 : i32
    %c0_i32_1 = arith.constant 0 : i32
    return %arg0, %c0_i32, %c0_i32_0 : i32, i32, i32
  }
  func.func @transform_1(%arg0: i32) -> (i32, i32, i32) {
    %c0_i32 = arith.constant 0 : i32
    %c0_i32_0 = arith.constant 0 : i32
    %c0_i32_1 = arith.constant 0 : i32
    %c0_i32_2 = arith.constant 0 : i32
    return %c0_i32, %c0_i32_0, %c0_i32_1 : i32, i32, i32
  }
  func.func @transform_2(%arg0: i32) -> (i32, i32) {
    %c0_i32 = arith.constant 0 : i32
    %c0_i32_0 = arith.constant 0 : i32
    %c0_i32_1 = arith.constant 0 : i32
    return %c0_i32, %c0_i32_0 : i32, i32
  }
  func.func @transform_3(%arg0: i32) -> (i32, i32, i32) {
    %c0_i32 = arith.constant 0 : i32
    %c0_i32_0 = arith.constant 0 : i32
    %c0_i32_1 = arith.constant 0 : i32
    %c0_i32_2 = arith.constant 0 : i32
    return %c0_i32, %c0_i32_0, %c0_i32_1 : i32, i32, i32
  }
  func.func @transform_4(%arg0: i32) -> (i32, i32, i32) {
    %c0_i32 = arith.constant 0 : i32
    %c0_i32_0 = arith.constant 0 : i32
    %c0_i32_1 = arith.constant 0 : i32
    %c0_i32_2 = arith.constant 0 : i32
    return %c0_i32, %c0_i32_0, %c0_i32_1 : i32, i32, i32
  }
  func.func @transform_5(%arg0: i32) -> (i32, i32, i32) {
    %c0_i32 = arith.constant 0 : i32
    %c0_i32_0 = arith.constant 0 : i32
    %c0_i32_1 = arith.constant 0 : i32
    return %arg0, %c0_i32, %c0_i32_0 : i32, i32, i32
  }
}

module attributes {stable_mosaic.version = 11 : i64} {
  func.func @_fc_head_kernel(%arg0: i32, %arg1: memref<2x512xbf16, #tpu.memory_space<vmem>>, %arg2: memref<512x256xbf16, #tpu.memory_space<vmem>>, %arg3: memref<1x256xf32, #tpu.memory_space<vmem>>, %arg4: memref<256x128xbf16, #tpu.memory_space<vmem>>, %arg5: memref<1x128xf32, #tpu.memory_space<vmem>>, %arg6: memref<128x10xbf16, #tpu.memory_space<vmem>>, %arg7: memref<1x10xf32, #tpu.memory_space<vmem>>, %arg8: memref<2x10xf32, #tpu.memory_space<vmem>>) attributes {dimension_semantics = [#tpu.dimension_semantics<parallel>], iteration_bounds = array<i64: 1>, scalar_prefetch = 0 : i64, scratch_operands = 0 : i64, tpu.core_type = #tpu.core_type<tc>, window_params = [{transform_indices = @transform_0, window_bounds = array<i64: 2, 512>}, {pipeline_mode = #tpu.pipeline_mode<synchronous>, transform_indices = @transform_1, window_bounds = array<i64: 512, 256>}, {pipeline_mode = #tpu.pipeline_mode<synchronous>, transform_indices = @transform_2, window_bounds = array<i64: 1, 256>}, {pipeline_mode = #tpu.pipeline_mode<synchronous>, transform_indices = @transform_3, window_bounds = array<i64: 256, 128>}, {pipeline_mode = #tpu.pipeline_mode<synchronous>, transform_indices = @transform_4, window_bounds = array<i64: 1, 128>}, {pipeline_mode = #tpu.pipeline_mode<synchronous>, transform_indices = @transform_5, window_bounds = array<i64: 128, 10>}, {pipeline_mode = #tpu.pipeline_mode<synchronous>, transform_indices = @transform_6, window_bounds = array<i64: 1, 10>}, {transform_indices = @transform_7, window_bounds = array<i64: 2, 10>}]} {
    %c0 = arith.constant 0 : index
    %c0_0 = arith.constant 0 : index
    %0 = vector.load %arg1[%c0, %c0_0] : memref<2x512xbf16, #tpu.memory_space<vmem>>, vector<2x512xbf16>
    %c0_1 = arith.constant 0 : index
    %c0_2 = arith.constant 0 : index
    %1 = vector.load %arg2[%c0_1, %c0_2] : memref<512x256xbf16, #tpu.memory_space<vmem>>, vector<512x256xbf16>
    %cst = arith.constant dense<0.000000e+00> : vector<2x256xf32>
    %2 = tpu.matmul %0, %1, %cst {dimension_numbers = #tpu.dot_dimension_numbers<[1], [0], [0], [1], [0, 0, 1, 1], [], []>} : vector<2x512xbf16>, vector<512x256xbf16>, vector<2x256xf32> -> vector<2x256xf32>
    %c0_3 = arith.constant 0 : index
    %c0_4 = arith.constant 0 : index
    %3 = vector.load %arg3[%c0_3, %c0_4] : memref<1x256xf32, #tpu.memory_space<vmem>>, vector<1x256xf32>
    %4 = vector.broadcast %3 : vector<1x256xf32> to vector<2x256xf32>
    %5 = arith.addf %2, %4 : vector<2x256xf32>
    %cst_5 = arith.constant 0.000000e+00 : f32
    %6 = vector.broadcast %cst_5 : f32 to vector<2x256xf32>
    %7 = arith.maximumf %5, %6 : vector<2x256xf32>
    %8 = arith.truncf %7 : vector<2x256xf32> to vector<2x256xbf16>
    %c0_6 = arith.constant 0 : index
    %c0_7 = arith.constant 0 : index
    %9 = vector.load %arg4[%c0_6, %c0_7] : memref<256x128xbf16, #tpu.memory_space<vmem>>, vector<256x128xbf16>
    %cst_8 = arith.constant dense<0.000000e+00> : vector<2x128xf32>
    %10 = tpu.matmul %8, %9, %cst_8 {dimension_numbers = #tpu.dot_dimension_numbers<[1], [0], [0], [1], [0, 0, 1, 1], [], []>} : vector<2x256xbf16>, vector<256x128xbf16>, vector<2x128xf32> -> vector<2x128xf32>
    %c0_9 = arith.constant 0 : index
    %c0_10 = arith.constant 0 : index
    %11 = vector.load %arg5[%c0_9, %c0_10] : memref<1x128xf32, #tpu.memory_space<vmem>>, vector<1x128xf32>
    %12 = vector.broadcast %11 : vector<1x128xf32> to vector<2x128xf32>
    %13 = arith.addf %10, %12 : vector<2x128xf32>
    %cst_11 = arith.constant 0.000000e+00 : f32
    %14 = vector.broadcast %cst_11 : f32 to vector<2x128xf32>
    %15 = arith.maximumf %13, %14 : vector<2x128xf32>
    %16 = arith.truncf %15 : vector<2x128xf32> to vector<2x128xbf16>
    %c0_12 = arith.constant 0 : index
    %c0_13 = arith.constant 0 : index
    %17 = vector.load %arg6[%c0_12, %c0_13] : memref<128x10xbf16, #tpu.memory_space<vmem>>, vector<128x10xbf16>
    %cst_14 = arith.constant dense<0.000000e+00> : vector<2x10xf32>
    %18 = tpu.matmul %16, %17, %cst_14 {dimension_numbers = #tpu.dot_dimension_numbers<[1], [0], [0], [1], [0, 0, 1, 1], [], []>} : vector<2x128xbf16>, vector<128x10xbf16>, vector<2x10xf32> -> vector<2x10xf32>
    %c0_15 = arith.constant 0 : index
    %c0_16 = arith.constant 0 : index
    %19 = vector.load %arg7[%c0_15, %c0_16] : memref<1x10xf32, #tpu.memory_space<vmem>>, vector<1x10xf32>
    %20 = vector.broadcast %19 : vector<1x10xf32> to vector<2x10xf32>
    %21 = arith.addf %18, %20 : vector<2x10xf32>
    %c0_17 = arith.constant 0 : index
    %c0_18 = arith.constant 0 : index
    %22 = vector.load %arg8[%c0_17, %c0_18] : memref<2x10xf32, #tpu.memory_space<vmem>>, vector<2x10xf32>
    tpu.vector_store %arg8[%c0_17, %c0_18], %21 {strides = array<i32>} : memref<2x10xf32, #tpu.memory_space<vmem>>, vector<2x10xf32>,
    return
  }
  func.func @transform_0(%arg0: i32) -> (i32, i32) {
    %c0_i32 = arith.constant 0 : i32
    %c0_i32_0 = arith.constant 0 : i32
    return %arg0, %c0_i32 : i32, i32
  }
  func.func @transform_1(%arg0: i32) -> (i32, i32) {
    %c0_i32 = arith.constant 0 : i32
    %c0_i32_0 = arith.constant 0 : i32
    %c0_i32_1 = arith.constant 0 : i32
    return %c0_i32, %c0_i32_0 : i32, i32
  }
  func.func @transform_2(%arg0: i32) -> (i32, i32) {
    %c0_i32 = arith.constant 0 : i32
    %c0_i32_0 = arith.constant 0 : i32
    %c0_i32_1 = arith.constant 0 : i32
    return %c0_i32, %c0_i32_0 : i32, i32
  }
  func.func @transform_3(%arg0: i32) -> (i32, i32) {
    %c0_i32 = arith.constant 0 : i32
    %c0_i32_0 = arith.constant 0 : i32
    %c0_i32_1 = arith.constant 0 : i32
    return %c0_i32, %c0_i32_0 : i32, i32
  }
  func.func @transform_4(%arg0: i32) -> (i32, i32) {
    %c0_i32 = arith.constant 0 : i32
    %c0_i32_0 = arith.constant 0 : i32
    %c0_i32_1 = arith.constant 0 : i32
    return %c0_i32, %c0_i32_0 : i32, i32
  }
  func.func @transform_5(%arg0: i32) -> (i32, i32) {
    %c0_i32 = arith.constant 0 : i32
    %c0_i32_0 = arith.constant 0 : i32
    %c0_i32_1 = arith.constant 0 : i32
    return %c0_i32, %c0_i32_0 : i32, i32
  }
  func.func @transform_6(%arg0: i32) -> (i32, i32) {
    %c0_i32 = arith.constant 0 : i32
    %c0_i32_0 = arith.constant 0 : i32
    %c0_i32_1 = arith.constant 0 : i32
    return %c0_i32, %c0_i32_0 : i32, i32
  }
  func.func @transform_7(%arg0: i32) -> (i32, i32) {
    %c0_i32 = arith.constant 0 : i32
    %c0_i32_0 = arith.constant 0 : i32
    return %arg0, %c0_i32 : i32, i32
  }
}

</mosaic_0001>

<llo_original>
// kernel: convolutional_model_forward.5
$region0: #{convolutional_model_forward.5}
  #allocation0 [shape = 'u32[]', space=smem, size = 0x4, offset = 0x4, fixed_abs, tag = 'smem constant byte address 0x4 - core index']
  #allocation1 [shape = 'u32[144,128]{1,0:T(1,128)}', space=vmem, size = 0x12000, scoped, tag = 'internal scratch']
  %s0 = inlined_call_operand.vmem [shape: bf16[2,512], index: 0, kind: input, shape index: {}]
  %s1 = inlined_call_operand.vmem [shape: bf16[512,256], index: 1, kind: input, shape index: {}]
  %s2 = inlined_call_operand.vmem [shape: f32[1,256], index: 2, kind: input, shape index: {}]
  %s3 = inlined_call_operand.vmem [shape: bf16[256,128], index: 3, kind: input, shape index: {}]
  %s4 = inlined_call_operand.vmem [shape: f32[1,128], index: 4, kind: input, shape index: {}]
  %s5 = inlined_call_operand.vmem [shape: bf16[128,10], index: 5, kind: input, shape index: {}]
  %s6 = inlined_call_operand.vmem [shape: f32[1,10], index: 6, kind: input, shape index: {}]
  %s7 = inlined_call_operand.hbm [shape: f32[2,10], index: 7, kind: output, shape index: {}]
  %s8 = sld [smem:[#allocation0]]
  $region38: #{convolutional_model_forward.5} parent=0
    _
  %s10 = ssub.s32 1, %s8
  %s11 = scalar_select 0, %s10, %s8
  $region1: #{convolutional_model_forward.5} parent=0
    #allocation2 [shape = 'u8[1024]{0}', space=vmem, size = 0x400, scoped, tag = 'output window, operand 0, single buffered']
    #allocation3 [shape = 's32[1]{0}', space=sflag, size = 0x4, scoped, tag = 'scoped memory for convolutional_model_forward.5']
    %12 = vsyncpa [#allocation3], 0
    // Predicated region
    $region2: #{convolutional_model_forward.5} parent=1 // pred_check
      _
    $region3: #{convolutional_model_forward.5} parent=1 // pred_check_branch
      %14 = sbr.rel (0) target = $region5
    $region4: #{convolutional_model_forward.5} parent=1 // pred_region
      _
    $region5: #{convolutional_model_forward.5} parent=1 // pred_fallthru
      _
    // Predicated region
    $region6: #{convolutional_model_forward.5} parent=1 // pred_check
      _
    $region7: #{convolutional_model_forward.5} parent=1 // pred_check_branch
      %16 = sbr.rel (0) target = $region9
    $region8: #{convolutional_model_forward.5} parent=1 // pred_region
      _
    $region9: #{convolutional_model_forward.5} parent=1 // pred_fallthru
      _
    // Predicated region
    $region10: #{convolutional_model_forward.5} parent=1 // pred_check
      _
    $region11: #{convolutional_model_forward.5} parent=1 // pred_check_branch
      %18 = sbr.rel (0) target = $region13
    $region12: #{convolutional_model_forward.5} parent=1 // pred_region
      _
    $region13: #{convolutional_model_forward.5} parent=1 // pred_fallthru
      _
    // Predicated region
    $region14: #{convolutional_model_forward.5} parent=1 // pred_check
      _
    $region15: #{convolutional_model_forward.5} parent=1 // pred_check_branch
      %20 = sbr.rel (0) target = $region17
    $region16: #{convolutional_model_forward.5} parent=1 // pred_region
      _
    $region17: #{convolutional_model_forward.5} parent=1 // pred_fallthru
      _
    // Predicated region
    $region18: #{convolutional_model_forward.5} parent=1 // pred_check
      _
    $region19: #{convolutional_model_forward.5} parent=1 // pred_check_branch
      %22 = sbr.rel (0) target = $region21
    $region20: #{convolutional_model_forward.5} parent=1 // pred_region
      _
    $region21: #{convolutional_model_forward.5} parent=1 // pred_fallthru
      _
    // Predicated region
    $region22: #{convolutional_model_forward.5} parent=1 // pred_check
      _
    $region23: #{convolutional_model_forward.5} parent=1 // pred_check_branch
      %24 = sbr.rel (0) target = $region25
    $region24: #{convolutional_model_forward.5} parent=1 // pred_region
      _
    $region25: #{convolutional_model_forward.5} parent=1 // pred_fallthru
      _
    // Predicated region
    $region26: #{convolutional_model_forward.5} parent=1 // pred_check
      _
    $region27: #{convolutional_model_forward.5} parent=1 // pred_check_branch
      %26 = sbr.rel (0) target = $region29
    $region28: #{convolutional_model_forward.5} parent=1 // pred_region
      _
    $region29: #{convolutional_model_forward.5} parent=1 // pred_fallthru
      _
    %v28 = vld [vmem:[%s0] sm:$0xf]
    %v29 = vld [vmem:[%s1] sm:$0xff]
    %v30 = vld [vmem:[%s1 + $0x8] sm:$0xff]
    %v31 = vld [vmem:[%s1 + $0x10] sm:$0xff]
    %v32 = vld [vmem:[%s1 + $0x18] sm:$0xff]
    %v33 = vld [vmem:[%s1 + $0x20] sm:$0xff]
    %v34 = vld [vmem:[%s1 + $0x28] sm:$0xff]
    %v35 = vld [vmem:[%s1 + $0x30] sm:$0xff]
    %v36 = vld [vmem:[%s1 + $0x38] sm:$0xff]
    %v37 = vld [vmem:[%s1 + $0x40] sm:$0xff]
    %v38 = vld [vmem:[%s1 + $0x48] sm:$0xff]
    %v39 = vld [vmem:[%s1 + $0x50] sm:$0xff]
    %v40 = vld [vmem:[%s1 + $0x58] sm:$0xff]
    %v41 = vld [vmem:[%s1 + $0x60] sm:$0xff]
    %v42 = vld [vmem:[%s1 + $0x68] sm:$0xff]
    %v43 = vld [vmem:[%s1 + $0x70] sm:$0xff]
    %v44 = vld [vmem:[%s1 + $0x78] sm:$0xff]
    %v45 = vld [vmem:[%s1 + $0x80] sm:$0xff]
    %v46 = vld [vmem:[%s1 + $0x88] sm:$0xff]
    %v47 = vld [vmem:[%s1 + $0x90] sm:$0xff]
    %v48 = vld [vmem:[%s1 + $0x98] sm:$0xff]
    %v49 = vld [vmem:[%s1 + $0xa0] sm:$0xff]
    %v50 = vld [vmem:[%s1 + $0xa8] sm:$0xff]
    %v51 = vld [vmem:[%s1 + $0xb0] sm:$0xff]
    %v52 = vld [vmem:[%s1 + $0xb8] sm:$0xff]
    %v53 = vld [vmem:[%s1 + $0xc0] sm:$0xff]
    %v54 = vld [vmem:[%s1 + $0xc8] sm:$0xff]
    %v55 = vld [vmem:[%s1 + $0xd0] sm:$0xff]
    %v56 = vld [vmem:[%s1 + $0xd8] sm:$0xff]
    %v57 = vld [vmem:[%s1 + $0xe0] sm:$0xff]
    %v58 = vld [vmem:[%s1 + $0xe8] sm:$0xff]
    %v59 = vld [vmem:[%s1 + $0xf0] sm:$0xff]
    %v60 = vld [vmem:[%s1 + $0xf8] sm:$0xff]
    %v61 = vld [vmem:[%s1 + $0x100] sm:$0xff]
    %v62 = vld [vmem:[%s1 + $0x108] sm:$0xff]
    %v63 = vld [vmem:[%s1 + $0x110] sm:$0xff]
    %v64 = vld [vmem:[%s1 + $0x118] sm:$0xff]
    %v65 = vld [vmem:[%s1 + $0x120] sm:$0xff]
    %v66 = vld [vmem:[%s1 + $0x128] sm:$0xff]
    %v67 = vld [vmem:[%s1 + $0x130] sm:$0xff]
    %v68 = vld [vmem:[%s1 + $0x138] sm:$0xff]
    %v69 = vld [vmem:[%s1 + $0x140] sm:$0xff]
    %v70 = vld [vmem:[%s1 + $0x148] sm:$0xff]
    %v71 = vld [vmem:[%s1 + $0x150] sm:$0xff]
    %v72 = vld [vmem:[%s1 + $0x158] sm:$0xff]
    %v73 = vld [vmem:[%s1 + $0x160] sm:$0xff]
    %v74 = vld [vmem:[%s1 + $0x168] sm:$0xff]
    %v75 = vld [vmem:[%s1 + $0x170] sm:$0xff]
    %v76 = vld [vmem:[%s1 + $0x178] sm:$0xff]
    %v77 = vld [vmem:[%s1 + $0x180] sm:$0xff]
    %v78 = vld [vmem:[%s1 + $0x188] sm:$0xff]
    %v79 = vld [vmem:[%s1 + $0x190] sm:$0xff]
    %v80 = vld [vmem:[%s1 + $0x198] sm:$0xff]
    %v81 = vld [vmem:[%s1 + $0x1a0] sm:$0xff]
    %v82 = vld [vmem:[%s1 + $0x1a8] sm:$0xff]
    %v83 = vld [vmem:[%s1 + $0x1b0] sm:$0xff]
    %v84 = vld [vmem:[%s1 + $0x1b8] sm:$0xff]
    %v85 = vld [vmem:[%s1 + $0x1c0] sm:$0xff]
    %v86 = vld [vmem:[%s1 + $0x1c8] sm:$0xff]
    %v87 = vld [vmem:[%s1 + $0x1d0] sm:$0xff]
    %v88 = vld [vmem:[%s1 + $0x1d8] sm:$0xff]
    %v89 = vld [vmem:[%s1 + $0x1e0] sm:$0xff]
    %v90 = vld [vmem:[%s1 + $0x1e8] sm:$0xff]
    %v91 = vld [vmem:[%s1 + $0x1f0] sm:$0xff]
    %v92 = vld [vmem:[%s1 + $0x1f8] sm:$0xff]
    %v93 = vld [vmem:[%s2] sm:$0x3]
    %v95 = vlaneseq
    %v96 = vshrl.u32 %v95, 7
    %v97 = vsub.s32 0, %v96
    %v98 = vrot.slane %v93, %v97
    %v99 = vlaneseq
    %v100 = vshrl.u32 %v99, 7
    %v101 = vsub.s32 1, %v100
    %v102 = vrot.slane %v93, %v101
    %v107 = vunpack.c.l.s4 1966171168
    %v108 = vunpack.c.0.s8 %v107
    %v109 = vlaneseq
    %v110 = vshrl.u32 %v109, 7
    %v111 = vsub.s32 %v108, %v110
    %v112 = vrot.slane %v28, %v111
    %v113 = vcombine.high %v112, %v112
    %v115 = vunpack.c.l.s4 1966171168
    %v116 = vunpack.c.0.s8 %v115
    %v117 = vlaneseq
    %v118 = vshrl.u32 %v117, 7
    %v119 = vsub.s32 %v116, %v118
    %v120 = vrot.slane %v112, %v119
    %v122 = vunpack.c.l.s4 1966171168
    %v123 = vunpack.c.0.s8 %v122
    %v124 = vlaneseq
    %v125 = vshrl.u32 %v124, 7
    %v126 = vsub.s32 %v123, %v125
    %v127 = vrot.slane %v113, %v126
    %v128 = vcombine.high %v120, %v120
    %v129 = vcombine.high %v127, %v127
    %v198 = vunpack.c.l.b16 %v29
    %v199 = vunpack.c.h.b16 %v29
    %v200 = vunpack.c.l.b16 %v30
    %v201 = vunpack.c.h.b16 %v30
    %v202 = vunpack.c.l.b16 %v31
    %v203 = vunpack.c.h.b16 %v31
    %v204 = vunpack.c.l.b16 %v32
    %v205 = vunpack.c.h.b16 %v32
    %v206 = vunpack.c.l.b16 %v33
    %v207 = vunpack.c.h.b16 %v33
    %v208 = vunpack.c.l.b16 %v34
    %v209 = vunpack.c.h.b16 %v34
    %v210 = vunpack.c.l.b16 %v35
    %v211 = vunpack.c.h.b16 %v35
    %v212 = vunpack.c.l.b16 %v36
    %v213 = vunpack.c.h.b16 %v36
    %v214 = vunpack.c.l.b16 %v37
    %v215 = vunpack.c.h.b16 %v37
    %v216 = vunpack.c.l.b16 %v38
    %v217 = vunpack.c.h.b16 %v38
    %v218 = vunpack.c.l.b16 %v39
    %v219 = vunpack.c.h.b16 %v39
    %v220 = vunpack.c.l.b16 %v40
    %v221 = vunpack.c.h.b16 %v40
    %v222 = vunpack.c.l.b16 %v41
    %v223 = vunpack.c.h.b16 %v41
    %v224 = vunpack.c.l.b16 %v42
    %v225 = vunpack.c.h.b16 %v42
    %v226 = vunpack.c.l.b16 %v43
    %v227 = vunpack.c.h.b16 %v43
    %v228 = vunpack.c.l.b16 %v44
    %v229 = vunpack.c.h.b16 %v44
    %v230 = vunpack.c.l.b16 %v45
    %v231 = vunpack.c.h.b16 %v45
    %v232 = vunpack.c.l.b16 %v46
    %v233 = vunpack.c.h.b16 %v46
    %v234 = vunpack.c.l.b16 %v47
    %v235 = vunpack.c.h.b16 %v47
    %v236 = vunpack.c.l.b16 %v48
    %v237 = vunpack.c.h.b16 %v48
    %v238 = vunpack.c.l.b16 %v49
    %v239 = vunpack.c.h.b16 %v49
    %v240 = vunpack.c.l.b16 %v50
    %v241 = vunpack.c.h.b16 %v50
    %v242 = vunpack.c.l.b16 %v51
    %v243 = vunpack.c.h.b16 %v51
    %v244 = vunpack.c.l.b16 %v52
    %v245 = vunpack.c.h.b16 %v52
    %v246 = vunpack.c.l.b16 %v53
    %v247 = vunpack.c.h.b16 %v53
    %v248 = vunpack.c.l.b16 %v54
    %v249 = vunpack.c.h.b16 %v54
    %v250 = vunpack.c.l.b16 %v55
    %v251 = vunpack.c.h.b16 %v55
    %v252 = vunpack.c.l.b16 %v56
    %v253 = vunpack.c.h.b16 %v56
    %v254 = vunpack.c.l.b16 %v57
    %v255 = vunpack.c.h.b16 %v57
    %v256 = vunpack.c.l.b16 %v58
    %v257 = vunpack.c.h.b16 %v58
    %v258 = vunpack.c.l.b16 %v59
    %v259 = vunpack.c.h.b16 %v59
    %v260 = vunpack.c.l.b16 %v60
    %v261 = vunpack.c.h.b16 %v60
    %v262 = vunpack.c.l.b16 %v61
    %v263 = vunpack.c.h.b16 %v61
    %v264 = vunpack.c.l.b16 %v62
    %v265 = vunpack.c.h.b16 %v62
    %v266 = vunpack.c.l.b16 %v63
    %v267 = vunpack.c.h.b16 %v63
    %v268 = vunpack.c.l.b16 %v64
    %v269 = vunpack.c.h.b16 %v64
    %v270 = vunpack.c.l.b16 %v65
    %v271 = vunpack.c.h.b16 %v65
    %v272 = vunpack.c.l.b16 %v66
    %v273 = vunpack.c.h.b16 %v66
    %v274 = vunpack.c.l.b16 %v67
    %v275 = vunpack.c.h.b16 %v67
    %v276 = vunpack.c.l.b16 %v68
    %v277 = vunpack.c.h.b16 %v68
    %v278 = vunpack.c.l.b16 %v69
    %v279 = vunpack.c.h.b16 %v69
    %v280 = vunpack.c.l.b16 %v70
    %v281 = vunpack.c.h.b16 %v70
    %v282 = vunpack.c.l.b16 %v71
    %v283 = vunpack.c.h.b16 %v71
    %v284 = vunpack.c.l.b16 %v72
    %v285 = vunpack.c.h.b16 %v72
    %v286 = vunpack.c.l.b16 %v73
    %v287 = vunpack.c.h.b16 %v73
    %v288 = vunpack.c.l.b16 %v74
    %v289 = vunpack.c.h.b16 %v74
    %v290 = vunpack.c.l.b16 %v75
    %v291 = vunpack.c.h.b16 %v75
    %v292 = vunpack.c.l.b16 %v76
    %v293 = vunpack.c.h.b16 %v76
    %v294 = vunpack.c.l.b16 %v77
    %v295 = vunpack.c.h.b16 %v77
    %v296 = vunpack.c.l.b16 %v78
    %v297 = vunpack.c.h.b16 %v78
    %v298 = vunpack.c.l.b16 %v79
    %v299 = vunpack.c.h.b16 %v79
    %v300 = vunpack.c.l.b16 %v80
    %v301 = vunpack.c.h.b16 %v80
    %v302 = vunpack.c.l.b16 %v81
    %v303 = vunpack.c.h.b16 %v81
    %v304 = vunpack.c.l.b16 %v82
    %v305 = vunpack.c.h.b16 %v82
    %v306 = vunpack.c.l.b16 %v83
    %v307 = vunpack.c.h.b16 %v83
    %v308 = vunpack.c.l.b16 %v84
    %v309 = vunpack.c.h.b16 %v84
    %v310 = vunpack.c.l.b16 %v85
    %v311 = vunpack.c.h.b16 %v85
    %v312 = vunpack.c.l.b16 %v86
    %v313 = vunpack.c.h.b16 %v86
    %v314 = vunpack.c.l.b16 %v87
    %v315 = vunpack.c.h.b16 %v87
    %v316 = vunpack.c.l.b16 %v88
    %v317 = vunpack.c.h.b16 %v88
    %v318 = vunpack.c.l.b16 %v89
    %v319 = vunpack.c.h.b16 %v89
    %v320 = vunpack.c.l.b16 %v90
    %v321 = vunpack.c.h.b16 %v90
    %v322 = vunpack.c.l.b16 %v91
    %v323 = vunpack.c.h.b16 %v91
    %v324 = vunpack.c.l.b16 %v92
    %v325 = vunpack.c.h.b16 %v92
    %v326 = vpack.c.b16 %v200, %v198
    %v327 = vpack.c.b16 %v201, %v199
    %v328 = vpack.c.b16 %v204, %v202
    %v329 = vpack.c.b16 %v205, %v203
    %v330 = vpack.c.b16 %v208, %v206
    %v331 = vpack.c.b16 %v209, %v207
    %v332 = vpack.c.b16 %v212, %v210
    %v333 = vpack.c.b16 %v213, %v211
    %v334 = vpack.c.b16 %v216, %v214
    %v335 = vpack.c.b16 %v217, %v215
    %v336 = vpack.c.b16 %v220, %v218
    %v337 = vpack.c.b16 %v221, %v219
    %v338 = vpack.c.b16 %v224, %v222
    %v339 = vpack.c.b16 %v225, %v223
    %v340 = vpack.c.b16 %v228, %v226
    %v341 = vpack.c.b16 %v229, %v227
    %v342 = vpack.c.b16 %v232, %v230
    %v343 = vpack.c.b16 %v233, %v231
    %v344 = vpack.c.b16 %v236, %v234
    %v345 = vpack.c.b16 %v237, %v235
    %v346 = vpack.c.b16 %v240, %v238
    %v347 = vpack.c.b16 %v241, %v239
    %v348 = vpack.c.b16 %v244, %v242
    %v349 = vpack.c.b16 %v245, %v243
    %v350 = vpack.c.b16 %v248, %v246
    %v351 = vpack.c.b16 %v249, %v247
    %v352 = vpack.c.b16 %v252, %v250
    %v353 = vpack.c.b16 %v253, %v251
    %v354 = vpack.c.b16 %v256, %v254
    %v355 = vpack.c.b16 %v257, %v255
    %v356 = vpack.c.b16 %v260, %v258
    %v357 = vpack.c.b16 %v261, %v259
    %v358 = vpack.c.b16 %v264, %v262
    %v359 = vpack.c.b16 %v265, %v263
    %v360 = vpack.c.b16 %v268, %v266
    %v361 = vpack.c.b16 %v269, %v267
    %v362 = vpack.c.b16 %v272, %v270
    %v363 = vpack.c.b16 %v273, %v271
    %v364 = vpack.c.b16 %v276, %v274
    %v365 = vpack.c.b16 %v277, %v275
    %v366 = vpack.c.b16 %v280, %v278
    %v367 = vpack.c.b16 %v281, %v279
    %v368 = vpack.c.b16 %v284, %v282
    %v369 = vpack.c.b16 %v285, %v283
    %v370 = vpack.c.b16 %v288, %v286
    %v371 = vpack.c.b16 %v289, %v287
    %v372 = vpack.c.b16 %v292, %v290
    %v373 = vpack.c.b16 %v293, %v291
    %v374 = vpack.c.b16 %v296, %v294
    %v375 = vpack.c.b16 %v297, %v295
    %v376 = vpack.c.b16 %v300, %v298
    %v377 = vpack.c.b16 %v301, %v299
    %v378 = vpack.c.b16 %v304, %v302
    %v379 = vpack.c.b16 %v305, %v303
    %v380 = vpack.c.b16 %v308, %v306
    %v381 = vpack.c.b16 %v309, %v307
    %v382 = vpack.c.b16 %v312, %v310
    %v383 = vpack.c.b16 %v313, %v311
    %v384 = vpack.c.b16 %v316, %v314
    %v385 = vpack.c.b16 %v317, %v315
    %v386 = vpack.c.b16 %v320, %v318
    %v387 = vpack.c.b16 %v321, %v319
    %v388 = vpack.c.b16 %v324, %v322
    %v389 = vpack.c.b16 %v325, %v323
    %454 = vmatprep.subr.bf16.mxu0 %v327
    %455 = vmatpush1.bf16.msra.mxu0 %v326
    %456 = vmatprep.subr.bf16.mxu0 %v329
    %457 = vmatpush1.bf16.msra.mxu0 %v328
    %458 = vmatprep.subr.bf16.mxu0 %v331
    %459 = vmatpush1.bf16.msra.mxu0 %v330
    %460 = vmatprep.subr.bf16.mxu0 %v333
    %461 = vmatpush1.bf16.msra.mxu0 %v332
    %462 = vmatprep.subr.bf16.mxu0 %v335
    %463 = vmatpush1.bf16.msra.mxu0 %v334
    %464 = vmatprep.subr.bf16.mxu0 %v337
    %465 = vmatpush1.bf16.msra.mxu0 %v336
    %466 = vmatprep.subr.bf16.mxu0 %v339
    %467 = vmatpush1.bf16.msra.mxu0 %v338
    %468 = vmatprep.subr.bf16.mxu0 %v341
    %469 = vmatpush1.bf16.msra.mxu0 %v340
    %470 = vmatprep.subr.bf16.mxu0 %v343
    %471 = vmatpush1.bf16.msra.mxu0 %v342
    %472 = vmatprep.subr.bf16.mxu0 %v345
    %473 = vmatpush1.bf16.msra.mxu0 %v344
    %474 = vmatprep.subr.bf16.mxu0 %v347
    %475 = vmatpush1.bf16.msra.mxu0 %v346
    %476 = vmatprep.subr.bf16.mxu0 %v349
    %477 = vmatpush1.bf16.msra.mxu0 %v348
    %478 = vmatprep.subr.bf16.mxu0 %v351
    %479 = vmatpush1.bf16.msra.mxu0 %v350
    %480 = vmatprep.subr.bf16.mxu0 %v353
    %481 = vmatpush1.bf16.msra.mxu0 %v352
    %482 = vmatprep.subr.bf16.mxu0 %v355
    %483 = vmatpush1.bf16.msra.mxu0 %v354
    %484 = vmatprep.subr.bf16.mxu0 %v357
    %485 = vmatpush1.bf16.msra.mxu0 %v356
    %486 = vmatprep.mubr.bf16.mxu0 %v127
    %487 = vmatmul.mubr.bf16.gmra.mrb[0].mxu0 %v120
    %v488 = vpop.f32.mrb[0].mxu0
    %v489 = vadd.f32 %v98, %v488
    %v490 = vpop.f32.mrb[0].mxu0
    %v491 = vadd.f32 %v102, %v490
    %v492 = vpop.f32.mrb[0].mxu0
    %v493 = vpop.f32.mrb[0].mxu0
    %494 = vdwg.mxu0
    %495 = vmatprep.subr.bf16.mxu0 %v359
    %496 = vmatpush1.bf16.msra.mxu0 %v358
    %497 = vmatprep.subr.bf16.mxu0 %v361
    %498 = vmatpush1.bf16.msra.mxu0 %v360
    %499 = vmatprep.subr.bf16.mxu0 %v363
    %500 = vmatpush1.bf16.msra.mxu0 %v362
    %501 = vmatprep.subr.bf16.mxu0 %v365
    %502 = vmatpush1.bf16.msra.mxu0 %v364
    %503 = vmatprep.subr.bf16.mxu0 %v367
    %504 = vmatpush1.bf16.msra.mxu0 %v366
    %505 = vmatprep.subr.bf16.mxu0 %v369
    %506 = vmatpush1.bf16.msra.mxu0 %v368
    %507 = vmatprep.subr.bf16.mxu0 %v371
    %508 = vmatpush1.bf16.msra.mxu0 %v370
    %509 = vmatprep.subr.bf16.mxu0 %v373
    %510 = vmatpush1.bf16.msra.mxu0 %v372
    %511 = vmatprep.subr.bf16.mxu0 %v375
    %512 = vmatpush1.bf16.msra.mxu0 %v374
    %513 = vmatprep.subr.bf16.mxu0 %v377
    %514 = vmatpush1.bf16.msra.mxu0 %v376
    %515 = vmatprep.subr.bf16.mxu0 %v379
    %516 = vmatpush1.bf16.msra.mxu0 %v378
    %517 = vmatprep.subr.bf16.mxu0 %v381
    %518 = vmatpush1.bf16.msra.mxu0 %v380
    %519 = vmatprep.subr.bf16.mxu0 %v383
    %520 = vmatpush1.bf16.msra.mxu0 %v382
    %521 = vmatprep.subr.bf16.mxu0 %v385
    %522 = vmatpush1.bf16.msra.mxu0 %v384
    %523 = vmatprep.subr.bf16.mxu0 %v387
    %524 = vmatpush1.bf16.msra.mxu0 %v386
    %525 = vmatprep.subr.bf16.mxu0 %v389
    %526 = vmatpush1.bf16.msra.mxu0 %v388
    %527 = vmatprep.mubr.bf16.mxu0 %v129
    %528 = vmatmul.mubr.bf16.gmra.mrb[0].mxu0 %v128
    %v529 = vpop.f32.mrb[0].mxu0
    %v530 = vadd.f32 %v489, %v529
    %v531 = vpop.f32.mrb[0].mxu0
    %v532 = vadd.f32 %v491, %v531
    %v533 = vpop.f32.mrb[0].mxu0
    %v534 = vpop.f32.mrb[0].mxu0
    %535 = vdwg.mxu0
    %v536 = vmax.f32 %v530, 0.0
    %v537 = vmax.f32 %v532, 0.0
    %v538 = vpack.c.bf16 %v536, %v536
    %v539 = vpack.c.bf16 %v537, %v537
    %v540 = vld [vmem:[%s3] sm:$0xf]
    %v541 = vld [vmem:[%s3 + $0x4] sm:$0xf]
    %v542 = vld [vmem:[%s3 + $0x8] sm:$0xf]
    %v543 = vld [vmem:[%s3 + $0xc] sm:$0xf]
    %v544 = vld [vmem:[%s3 + $0x10] sm:$0xf]
    %v545 = vld [vmem:[%s3 + $0x14] sm:$0xf]
    %v546 = vld [vmem:[%s3 + $0x18] sm:$0xf]
    %v547 = vld [vmem:[%s3 + $0x1c] sm:$0xf]
    %v548 = vld [vmem:[%s3 + $0x20] sm:$0xf]
    %v549 = vld [vmem:[%s3 + $0x24] sm:$0xf]
    %v550 = vld [vmem:[%s3 + $0x28] sm:$0xf]
    %v551 = vld [vmem:[%s3 + $0x2c] sm:$0xf]
    %v552 = vld [vmem:[%s3 + $0x30] sm:$0xf]
    %v553 = vld [vmem:[%s3 + $0x34] sm:$0xf]
    %v554 = vld [vmem:[%s3 + $0x38] sm:$0xf]
    %v555 = vld [vmem:[%s3 + $0x3c] sm:$0xf]
    %v556 = vld [vmem:[%s3 + $0x40] sm:$0xf]
    %v557 = vld [vmem:[%s3 + $0x44] sm:$0xf]
    %v558 = vld [vmem:[%s3 + $0x48] sm:$0xf]
    %v559 = vld [vmem:[%s3 + $0x4c] sm:$0xf]
    %v560 = vld [vmem:[%s3 + $0x50] sm:$0xf]
    %v561 = vld [vmem:[%s3 + $0x54] sm:$0xf]
    %v562 = vld [vmem:[%s3 + $0x58] sm:$0xf]
    %v563 = vld [vmem:[%s3 + $0x5c] sm:$0xf]
    %v564 = vld [vmem:[%s3 + $0x60] sm:$0xf]
    %v565 = vld [vmem:[%s3 + $0x64] sm:$0xf]
    %v566 = vld [vmem:[%s3 + $0x68] sm:$0xf]
    %v567 = vld [vmem:[%s3 + $0x6c] sm:$0xf]
    %v568 = vld [vmem:[%s3 + $0x70] sm:$0xf]
    %v569 = vld [vmem:[%s3 + $0x74] sm:$0xf]
    %v570 = vld [vmem:[%s3 + $0x78] sm:$0xf]
    %v571 = vld [vmem:[%s3 + $0x7c] sm:$0xf]
    %v572 = vld [vmem:[%s4] sm:$0x1]
    %v574 = vlaneseq
    %v575 = vshrl.u32 %v574, 7
    %v576 = vsub.s32 0, %v575
    %v577 = vrot.slane %v572, %v576
    %v611 = vunpack.c.l.b16 %v540
    %v612 = vunpack.c.l.b16 %v541
    %v613 = vunpack.c.l.b16 %v542
    %v614 = vunpack.c.l.b16 %v543
    %v615 = vunpack.c.l.b16 %v544
    %v616 = vunpack.c.l.b16 %v545
    %v617 = vunpack.c.l.b16 %v546
    %v618 = vunpack.c.l.b16 %v547
    %v619 = vunpack.c.l.b16 %v548
    %v620 = vunpack.c.l.b16 %v549
    %v621 = vunpack.c.l.b16 %v550
    %v622 = vunpack.c.l.b16 %v551
    %v623 = vunpack.c.l.b16 %v552
    %v624 = vunpack.c.l.b16 %v553
    %v625 = vunpack.c.l.b16 %v554
    %v626 = vunpack.c.l.b16 %v555
    %v627 = vunpack.c.l.b16 %v556
    %v628 = vunpack.c.l.b16 %v557
    %v629 = vunpack.c.l.b16 %v558
    %v630 = vunpack.c.l.b16 %v559
    %v631 = vunpack.c.l.b16 %v560
    %v632 = vunpack.c.l.b16 %v561
    %v633 = vunpack.c.l.b16 %v562
    %v634 = vunpack.c.l.b16 %v563
    %v635 = vunpack.c.l.b16 %v564
    %v636 = vunpack.c.l.b16 %v565
    %v637 = vunpack.c.l.b16 %v566
    %v638 = vunpack.c.l.b16 %v567
    %v639 = vunpack.c.l.b16 %v568
    %v640 = vunpack.c.l.b16 %v569
    %v641 = vunpack.c.l.b16 %v570
    %v642 = vunpack.c.l.b16 %v571
    %v643 = vpack.c.b16 %v612, %v611
    %v644 = vpack.c.b16 %v614, %v613
    %v645 = vpack.c.b16 %v616, %v615
    %v646 = vpack.c.b16 %v618, %v617
    %v647 = vpack.c.b16 %v620, %v619
    %v648 = vpack.c.b16 %v622, %v621
    %v649 = vpack.c.b16 %v624, %v623
    %v650 = vpack.c.b16 %v626, %v625
    %v651 = vpack.c.b16 %v628, %v627
    %v652 = vpack.c.b16 %v630, %v629
    %v653 = vpack.c.b16 %v632, %v631
    %v654 = vpack.c.b16 %v634, %v633
    %v655 = vpack.c.b16 %v636, %v635
    %v656 = vpack.c.b16 %v638, %v637
    %v657 = vpack.c.b16 %v640, %v639
    %v658 = vpack.c.b16 %v642, %v641
    %675 = vmatprep.subr.bf16.mxu0 0
    %676 = vmatpush1.bf16.msra.mxu0 %v643
    %677 = vmatprep.subr.bf16.mxu0 0
    %678 = vmatpush1.bf16.msra.mxu0 %v644
    %679 = vmatprep.subr.bf16.mxu0 0
    %680 = vmatpush1.bf16.msra.mxu0 %v645
    %681 = vmatprep.subr.bf16.mxu0 0
    %682 = vmatpush1.bf16.msra.mxu0 %v646
    %683 = vmatprep.subr.bf16.mxu0 0
    %684 = vmatpush1.bf16.msra.mxu0 %v647
    %685 = vmatprep.subr.bf16.mxu0 0
    %686 = vmatpush1.bf16.msra.mxu0 %v648
    %687 = vmatprep.subr.bf16.mxu0 0
    %688 = vmatpush1.bf16.msra.mxu0 %v649
    %689 = vmatprep.subr.bf16.mxu0 0
    %690 = vmatpush1.bf16.msra.mxu0 %v650
    %691 = vmatprep.subr.bf16.mxu0 0
    %692 = vmatpush1.bf16.msra.mxu0 %v651
    %693 = vmatprep.subr.bf16.mxu0 0
    %694 = vmatpush1.bf16.msra.mxu0 %v652
    %695 = vmatprep.subr.bf16.mxu0 0
    %696 = vmatpush1.bf16.msra.mxu0 %v653
    %697 = vmatprep.subr.bf16.mxu0 0
    %698 = vmatpush1.bf16.msra.mxu0 %v654
    %699 = vmatprep.subr.bf16.mxu0 0
    %700 = vmatpush1.bf16.msra.mxu0 %v655
    %701 = vmatprep.subr.bf16.mxu0 0
    %702 = vmatpush1.bf16.msra.mxu0 %v656
    %703 = vmatprep.subr.bf16.mxu0 0
    %704 = vmatpush1.bf16.msra.mxu0 %v657
    %705 = vmatprep.subr.bf16.mxu0 0
    %706 = vmatpush1.bf16.msra.mxu0 %v658
    %707 = vmatprep.mubr.bf16.mxu0 %v539
    %708 = vmatmul.mubr.bf16.gmra.mrb[0].mxu0 %v538
    %v709 = vpop.f32.mrb[0].mxu0
    %v710 = vadd.f32 %v577, %v709
    %v711 = vpop.f32.mrb[0].mxu0
    %v712 = vpop.f32.mrb[0].mxu0
    %v713 = vpop.f32.mrb[0].mxu0
    %714 = vdwg.mxu0
    %v715 = vmax.f32 %v710, 0.0
    %v716 = vpack.c.bf16 %v715, %v715
    %v717 = vld [vmem:[%s5] sm:$0xf]
    %v718 = vld [vmem:[%s5 + $0x4] sm:$0xf]
    %v719 = vld [vmem:[%s5 + $0x8] sm:$0xf]
    %v720 = vld [vmem:[%s5 + $0xc] sm:$0xf]
    %v721 = vld [vmem:[%s5 + $0x10] sm:$0xf]
    %v722 = vld [vmem:[%s5 + $0x14] sm:$0xf]
    %v723 = vld [vmem:[%s5 + $0x18] sm:$0xf]
    %v724 = vld [vmem:[%s5 + $0x1c] sm:$0xf]
    %v725 = vld [vmem:[%s5 + $0x20] sm:$0xf]
    %v726 = vld [vmem:[%s5 + $0x24] sm:$0xf]
    %v727 = vld [vmem:[%s5 + $0x28] sm:$0xf]
    %v728 = vld [vmem:[%s5 + $0x2c] sm:$0xf]
    %v729 = vld [vmem:[%s5 + $0x30] sm:$0xf]
    %v730 = vld [vmem:[%s5 + $0x34] sm:$0xf]
    %v731 = vld [vmem:[%s5 + $0x38] sm:$0xf]
    %v732 = vld [vmem:[%s5 + $0x3c] sm:$0xf]
    %v733 = vld [vmem:[%s6] sm:$0x1]
    %v735 = vlaneseq
    %v736 = vshrl.u32 %v735, 7
    %v737 = vsub.s32 0, %v736
    %v738 = vrot.slane %v733, %v737
    %v756 = vunpack.c.l.b16 %v717
    %v757 = vunpack.c.l.b16 %v718
    %v758 = vunpack.c.l.b16 %v719
    %v759 = vunpack.c.l.b16 %v720
    %v760 = vunpack.c.l.b16 %v721
    %v761 = vunpack.c.l.b16 %v722
    %v762 = vunpack.c.l.b16 %v723
    %v763 = vunpack.c.l.b16 %v724
    %v764 = vunpack.c.l.b16 %v725
    %v765 = vunpack.c.l.b16 %v726
    %v766 = vunpack.c.l.b16 %v727
    %v767 = vunpack.c.l.b16 %v728
    %v768 = vunpack.c.l.b16 %v729
    %v769 = vunpack.c.l.b16 %v730
    %v770 = vunpack.c.l.b16 %v731
    %v771 = vunpack.c.l.b16 %v732
    %v772 = vpack.c.b16 %v757, %v756
    %v773 = vpack.c.b16 %v759, %v758
    %v774 = vpack.c.b16 %v761, %v760
    %v775 = vpack.c.b16 %v763, %v762
    %v776 = vpack.c.b16 %v765, %v764
    %v777 = vpack.c.b16 %v767, %v766
    %v778 = vpack.c.b16 %v769, %v768
    %v779 = vpack.c.b16 %v771, %v770
    %788 = vmatprep.subr.bf16.mxu0 0
    %789 = vmatpush1.bf16.msra.mxu0 %v772
    %790 = vmatprep.subr.bf16.mxu0 0
    %791 = vmatpush1.bf16.msra.mxu0 %v773
    %792 = vmatprep.subr.bf16.mxu0 0
    %793 = vmatpush1.bf16.msra.mxu0 %v774
    %794 = vmatprep.subr.bf16.mxu0 0
    %795 = vmatpush1.bf16.msra.mxu0 %v775
    %796 = vmatprep.subr.bf16.mxu0 0
    %797 = vmatpush1.bf16.msra.mxu0 %v776
    %798 = vmatprep.subr.bf16.mxu0 0
    %799 = vmatpush1.bf16.msra.mxu0 %v777
    %800 = vmatprep.subr.bf16.mxu0 0
    %801 = vmatpush1.bf16.msra.mxu0 %v778
    %802 = vmatprep.subr.bf16.mxu0 0
    %803 = vmatpush1.bf16.msra.mxu0 %v779
    %804 = vmatprep.subr.bf16.mxu0 0
    %805 = vmatpush1.bf16.msra.mxu0 0
    %806 = vmatprep.subr.bf16.mxu0 0
    %807 = vmatpush1.bf16.msra.mxu0 0
    %808 = vmatprep.subr.bf16.mxu0 0
    %809 = vmatpush1.bf16.msra.mxu0 0
    %810 = vmatprep.subr.bf16.mxu0 0
    %811 = vmatpush1.bf16.msra.mxu0 0
    %812 = vmatprep.subr.bf16.mxu0 0
    %813 = vmatpush1.bf16.msra.mxu0 0
    %814 = vmatprep.subr.bf16.mxu0 0
    %815 = vmatpush1.bf16.msra.mxu0 0
    %816 = vmatprep.subr.bf16.mxu0 0
    %817 = vmatpush1.bf16.msra.mxu0 0
    %818 = vmatprep.subr.bf16.mxu0 0
    %819 = vmatpush1.bf16.msra.mxu0 0
    %820 = vmatprep.mubr.bf16.mxu0 0
    %821 = vmatmul.mubr.bf16.gmra.mrb[0].mxu0 %v716
    %v822 = vpop.f32.mrb[0].mxu0
    %v823 = vadd.f32 %v738, %v822
    %v824 = vpop.f32.mrb[0].mxu0
    %v825 = vpop.f32.mrb[0].mxu0
    %v826 = vpop.f32.mrb[0].mxu0
    %827 = vdwg.mxu0
    %vm828 = vcmask 74752
    %829 = vst.msk [vmem:[#allocation2] sm:$0x3] %vm828, %v823
    // Predicated region
    $region30: #{convolutional_model_forward.5} parent=1 // pred_check
      _
    $region31: #{convolutional_model_forward.5} parent=1 // pred_check_branch
      %831 = sbr.rel (0) target = $region33
    $region32: #{convolutional_model_forward.5} parent=1 // pred_region
      %s833 = ssub.s32 32, 32
      %834 = vsyncadd [#allocation3], %s833
      %s836 = sshll.u32 [#allocation2], 4
      %s837 = int_to_ptr.vmem [resolvable:$true] %s836
      %839 = dma.vmem_to_hbm [thread:$0]  %s837, 32, %s7, [#allocation3]
    $region33: #{convolutional_model_forward.5} parent=1 // pred_fallthru
      _
    // Predicated region
    $region34: #{convolutional_model_forward.5} parent=1 // pred_check
      _
    $region35: #{convolutional_model_forward.5} parent=1 // pred_check_branch
      %841 = sbr.rel (0) target = $region37
    $region36: #{convolutional_model_forward.5} parent=1 // pred_region
      %842 = dma.done [#allocation3], 32
    $region37: #{convolutional_model_forward.5} parent=1 // pred_fallthru
      _
    %843 = vsyncpa [#allocation3], 1

// kernel: convolutional_model_forward.3
$region0: #{convolutional_model_forward.3}
  #allocation0 [shape = 'u32[]', space=smem, size = 0x4, offset = 0x4, fixed_abs, tag = 'smem constant byte address 0x4 - core index']
  #allocation1 [shape = 'u32[144,128]{1,0:T(1,128)}', space=vmem, size = 0x12000, scoped, tag = 'internal scratch']
  %s0 = inlined_call_operand.vmem [shape: f32[2,32,96], index: 0, kind: input, shape index: {}]
  %s1 = inlined_call_operand.vmem [shape: bf16[5,96,448], index: 1, kind: input, shape index: {}]
  %s2 = inlined_call_operand.vmem [shape: f32[1,448], index: 2, kind: input, shape index: {}]
  %s3 = inlined_call_operand.vmem [shape: f32[3,13,28], index: 3, kind: input, shape index: {}]
  %s4 = inlined_call_operand.vmem [shape: f32[3,448,208], index: 4, kind: input, shape index: {}]
  %s5 = inlined_call_operand.vmem [shape: bf16[2,13,208], index: 5, kind: output, shape index: {}]
  %s6 = sld [smem:[#allocation0]]
  $region30: #{convolutional_model_forward.3} parent=0
    _
  %s8 = ssub.s32 1, %s6
  %s9 = scalar_select 0, %s8, %s6
  // Predicated region
  $region2: #{convolutional_model_forward.3} parent=0 // pred_check
    _
  $region3: #{convolutional_model_forward.3} parent=0 // pred_check_branch
    %11 = sbr.rel (0) target = $region5
  $region4: #{convolutional_model_forward.3} parent=0 // pred_region
    _
  $region5: #{convolutional_model_forward.3} parent=0 // pred_fallthru
    _
  // Predicated region
  $region6: #{convolutional_model_forward.3} parent=0 // pred_check
    _
  $region7: #{convolutional_model_forward.3} parent=0 // pred_check_branch
    %13 = sbr.rel (0) target = $region9
  $region8: #{convolutional_model_forward.3} parent=0 // pred_region
    _
  $region9: #{convolutional_model_forward.3} parent=0 // pred_fallthru
    _
  // Predicated region
  $region10: #{convolutional_model_forward.3} parent=0 // pred_check
    _
  $region11: #{convolutional_model_forward.3} parent=0 // pred_check_branch
    %15 = sbr.rel (0) target = $region13
  $region12: #{convolutional_model_forward.3} parent=0 // pred_region
    _
  $region13: #{convolutional_model_forward.3} parent=0 // pred_fallthru
    _
  // Predicated region
  $region14: #{convolutional_model_forward.3} parent=0 // pred_check
    _
  $region15: #{convolutional_model_forward.3} parent=0 // pred_check_branch
    %17 = sbr.rel (0) target = $region17
  $region16: #{convolutional_model_forward.3} parent=0 // pred_region
    _
  $region17: #{convolutional_model_forward.3} parent=0 // pred_fallthru
    _
  // Predicated region
  $region18: #{convolutional_model_forward.3} parent=0 // pred_check
    _
  $region19: #{convolutional_model_forward.3} parent=0 // pred_check_branch
    %19 = sbr.rel (0) target = $region21
  $region20: #{convolutional_model_forward.3} parent=0 // pred_region
    _
  $region21: #{convolutional_model_forward.3} parent=0 // pred_fallthru
    _
  %v21 = vld [vmem:[%s2] sm:$0xf]
  %v22 = vld [vmem:[%s0] sm:$0xff]
  %v23 = vld [vmem:[%s0 + $0x8] sm:$0xff]
  %v24 = vld [vmem:[%s0 + $0x10] sm:$0xff]
  %v25 = vld [vmem:[%s0 + $0x18] sm:$0xff]
  %v26 = vpack.c.bf16 %v23, %v22
  %v27 = vpack.c.bf16 %v25, %v24
  %v28 = vld [vmem:[%s1] sm:$0xff]
  %v29 = vld [vmem:[%s1 + $0x8] sm:$0xff]
  %v30 = vld [vmem:[%s1 + $0x10] sm:$0xff]
  %v31 = vld [vmem:[%s1 + $0x18] sm:$0xff]
  %v32 = vld [vmem:[%s1 + $0x20] sm:$0xff]
  %v33 = vld [vmem:[%s1 + $0x28] sm:$0xff]
  %v34 = vld [vmem:[%s1 + $0x30] sm:$0xff]
  %v35 = vld [vmem:[%s1 + $0x38] sm:$0xff]
  %v36 = vld [vmem:[%s1 + $0x40] sm:$0xff]
  %v37 = vld [vmem:[%s1 + $0x48] sm:$0xff]
  %v38 = vld [vmem:[%s1 + $0x50] sm:$0xff]
  %v39 = vld [vmem:[%s1 + $0x58] sm:$0xff]
  %v40 = vld [vmem:[%s1 + $0x60] sm:$0xff]
  %v41 = vld [vmem:[%s1 + $0x68] sm:$0xff]
  %v42 = vld [vmem:[%s1 + $0x70] sm:$0xff]
  %v43 = vld [vmem:[%s1 + $0x78] sm:$0xff]
  %v44 = vld [vmem:[%s1 + $0x80] sm:$0xff]
  %v45 = vld [vmem:[%s1 + $0x88] sm:$0xff]
  %v46 = vld [vmem:[%s1 + $0x90] sm:$0xff]
  %v47 = vld [vmem:[%s1 + $0x98] sm:$0xff]
  %v48 = vld [vmem:[%s1 + $0xa0] sm:$0xff]
  %v49 = vld [vmem:[%s1 + $0xa8] sm:$0xff]
  %v50 = vld [vmem:[%s1 + $0xb0] sm:$0xff]
  %v51 = vld [vmem:[%s1 + $0xb8] sm:$0xff]
  %s52 = scalar_lea.vmem %s1, 192
  %v53 = vld [vmem:[%s52] sm:$0xff]
  %v54 = vld [vmem:[%s52 + $0x8] sm:$0xff]
  %v55 = vld [vmem:[%s52 + $0x10] sm:$0xff]
  %v56 = vld [vmem:[%s52 + $0x18] sm:$0xff]
  %v57 = vld [vmem:[%s52 + $0x20] sm:$0xff]
  %v58 = vld [vmem:[%s52 + $0x28] sm:$0xff]
  %v59 = vld [vmem:[%s52 + $0x30] sm:$0xff]
  %v60 = vld [vmem:[%s52 + $0x38] sm:$0xff]
  %v61 = vld [vmem:[%s52 + $0x40] sm:$0xff]
  %v62 = vld [vmem:[%s52 + $0x48] sm:$0xff]
  %v63 = vld [vmem:[%s52 + $0x50] sm:$0xff]
  %v64 = vld [vmem:[%s52 + $0x58] sm:$0xff]
  %v65 = vld [vmem:[%s52 + $0x60] sm:$0xff]
  %v66 = vld [vmem:[%s52 + $0x68] sm:$0xff]
  %v67 = vld [vmem:[%s52 + $0x70] sm:$0xff]
  %v68 = vld [vmem:[%s52 + $0x78] sm:$0xff]
  %v69 = vld [vmem:[%s52 + $0x80] sm:$0xff]
  %v70 = vld [vmem:[%s52 + $0x88] sm:$0xff]
  %v71 = vld [vmem:[%s52 + $0x90] sm:$0xff]
  %v72 = vld [vmem:[%s52 + $0x98] sm:$0xff]
  %v73 = vld [vmem:[%s52 + $0xa0] sm:$0xff]
  %v74 = vld [vmem:[%s52 + $0xa8] sm:$0xff]
  %v75 = vld [vmem:[%s52 + $0xb0] sm:$0xff]
  %v76 = vld [vmem:[%s52 + $0xb8] sm:$0xff]
  %vm77 = vsmask.f32 7424
  %v79 = vshrl.u32 %v26, 16
  %v81 = vshll.u32 %v26, 16
  %v83 = vrot.slane %v81, 1
  %v84 = vor.u32 %v79, %v83
  %v86 = vshll.u32 %v27, 16
  %v88 = vrot.slane %v86, 1
  %v89 = vsel %vm77, %v84, %v88
  %v90 = vshrl.u32 %v27, 16
  %v92 = vor.u32 %v90, %v88
  %v117 = vunpack.c.l.b16 %v53
  %v118 = vunpack.c.h.b16 %v53
  %v119 = vunpack.c.l.b16 %v54
  %v120 = vunpack.c.h.b16 %v54
  %v121 = vunpack.c.l.b16 %v55
  %v122 = vunpack.c.h.b16 %v55
  %v123 = vunpack.c.l.b16 %v56
  %v124 = vunpack.c.h.b16 %v56
  %v125 = vunpack.c.l.b16 %v57
  %v126 = vunpack.c.h.b16 %v57
  %v127 = vunpack.c.l.b16 %v58
  %v128 = vunpack.c.h.b16 %v58
  %v129 = vunpack.c.l.b16 %v59
  %v130 = vunpack.c.h.b16 %v59
  %v131 = vunpack.c.l.b16 %v60
  %v132 = vunpack.c.h.b16 %v60
  %v133 = vunpack.c.l.b16 %v61
  %v134 = vunpack.c.h.b16 %v61
  %v135 = vunpack.c.l.b16 %v62
  %v136 = vunpack.c.h.b16 %v62
  %v137 = vunpack.c.l.b16 %v63
  %v138 = vunpack.c.h.b16 %v63
  %v139 = vunpack.c.l.b16 %v64
  %v140 = vunpack.c.h.b16 %v64
  %v141 = vunpack.c.l.b16 %v65
  %v142 = vunpack.c.h.b16 %v65
  %v143 = vunpack.c.l.b16 %v66
  %v144 = vunpack.c.h.b16 %v66
  %v145 = vunpack.c.l.b16 %v67
  %v146 = vunpack.c.h.b16 %v67
  %v147 = vunpack.c.l.b16 %v68
  %v148 = vunpack.c.h.b16 %v68
  %v149 = vunpack.c.l.b16 %v69
  %v150 = vunpack.c.h.b16 %v69
  %v151 = vunpack.c.l.b16 %v70
  %v152 = vunpack.c.h.b16 %v70
  %v153 = vunpack.c.l.b16 %v71
  %v154 = vunpack.c.h.b16 %v71
  %v155 = vunpack.c.l.b16 %v72
  %v156 = vunpack.c.h.b16 %v72
  %v157 = vunpack.c.l.b16 %v73
  %v158 = vunpack.c.h.b16 %v73
  %v159 = vunpack.c.l.b16 %v74
  %v160 = vunpack.c.h.b16 %v74
  %v161 = vunpack.c.l.b16 %v75
  %v162 = vunpack.c.h.b16 %v75
  %v163 = vunpack.c.l.b16 %v76
  %v164 = vunpack.c.h.b16 %v76
  %v165 = vpack.c.b16 %v121, %v117
  %v166 = vpack.c.b16 %v122, %v118
  %v167 = vpack.c.b16 %v123, %v119
  %v168 = vpack.c.b16 %v124, %v120
  %v169 = vpack.c.b16 %v129, %v125
  %v170 = vpack.c.b16 %v130, %v126
  %v171 = vpack.c.b16 %v131, %v127
  %v172 = vpack.c.b16 %v132, %v128
  %v173 = vpack.c.b16 %v137, %v133
  %v174 = vpack.c.b16 %v138, %v134
  %v175 = vpack.c.b16 %v139, %v135
  %v176 = vpack.c.b16 %v140, %v136
  %v177 = vpack.c.b16 %v145, %v141
  %v178 = vpack.c.b16 %v146, %v142
  %v179 = vpack.c.b16 %v147, %v143
  %v180 = vpack.c.b16 %v148, %v144
  %v181 = vpack.c.b16 %v153, %v149
  %v182 = vpack.c.b16 %v154, %v150
  %v183 = vpack.c.b16 %v155, %v151
  %v184 = vpack.c.b16 %v156, %v152
  %v185 = vpack.c.b16 %v161, %v157
  %v186 = vpack.c.b16 %v162, %v158
  %v187 = vpack.c.b16 %v163, %v159
  %v188 = vpack.c.b16 %v164, %v160
  %vm213 = vcmask 785408
  %v215 = vsel %vm213, %v89, 0
  %v218 = vsel %vm213, %v92, 0
  %220 = vmatprep.subr.bf16.mxu0 %v166
  %221 = vmatpush1.bf16.msra.mxu0 %v165
  %222 = vmatprep.subr.bf16.mxu0 %v170
  %223 = vmatpush1.bf16.msra.mxu0 %v169
  %224 = vmatprep.subr.bf16.mxu0 %v174
  %225 = vmatpush1.bf16.msra.mxu0 %v173
  %226 = vmatprep.subr.bf16.mxu0 %v178
  %227 = vmatpush1.bf16.msra.mxu0 %v177
  %228 = vmatprep.subr.bf16.mxu0 %v182
  %229 = vmatpush1.bf16.msra.mxu0 %v181
  %230 = vmatprep.subr.bf16.mxu0 %v186
  %231 = vmatpush1.bf16.msra.mxu0 %v185
  %232 = vmatprep.subr.bf16.mxu0 0
  %233 = vmatpush1.bf16.msra.mxu0 0
  %234 = vmatprep.subr.bf16.mxu0 0
  %235 = vmatpush1.bf16.msra.mxu0 0
  %236 = vmatprep.subr.bf16.mxu0 0
  %237 = vmatpush1.bf16.msra.mxu0 0
  %238 = vmatprep.subr.bf16.mxu0 0
  %239 = vmatpush1.bf16.msra.mxu0 0
  %240 = vmatprep.subr.bf16.mxu0 0
  %241 = vmatpush1.bf16.msra.mxu0 0
  %242 = vmatprep.subr.bf16.mxu0 0
  %243 = vmatpush1.bf16.msra.mxu0 0
  %244 = vmatprep.subr.bf16.mxu0 0
  %245 = vmatpush1.bf16.msra.mxu0 0
  %246 = vmatprep.subr.bf16.mxu0 0
  %247 = vmatpush1.bf16.msra.mxu0 0
  %248 = vmatprep.subr.bf16.mxu0 0
  %249 = vmatpush1.bf16.msra.mxu0 0
  %250 = vmatprep.subr.bf16.mxu0 0
  %251 = vmatpush1.bf16.msra.mxu0 0
  %252 = vmatprep.mubr.bf16.mxu0 0
  %253 = vmatmul.mubr.bf16.gmra.mrb[0].mxu0 %v215
  %v254 = vpop.f32.mrb[0].mxu0
  %v255 = vadd.f32 0.0, %v254
  %v256 = vpop.f32.mrb[0].mxu0
  %v257 = vadd.f32 0.0, %v256
  %v258 = vpop.f32.mrb[0].mxu0
  %v259 = vadd.f32 0.0, %v258
  %v260 = vpop.f32.mrb[0].mxu0
  %v261 = vadd.f32 0.0, %v260
  %262 = vmatprep.mubr.bf16.mxu0 0
  %263 = vmatmul.mubr.bf16.gmra.mrb[0].mxu0 %v218
  %v264 = vpop.f32.mrb[0].mxu0
  %v265 = vadd.f32 0.0, %v264
  %v266 = vpop.f32.mrb[0].mxu0
  %v267 = vadd.f32 0.0, %v266
  %v268 = vpop.f32.mrb[0].mxu0
  %v269 = vadd.f32 0.0, %v268
  %v270 = vpop.f32.mrb[0].mxu0
  %v271 = vadd.f32 0.0, %v270
  %272 = vdwg.mxu0
  %273 = vmatprep.subr.bf16.mxu0 %v168
  %274 = vmatpush1.bf16.msra.mxu0 %v167
  %275 = vmatprep.subr.bf16.mxu0 %v172
  %276 = vmatpush1.bf16.msra.mxu0 %v171
  %277 = vmatprep.subr.bf16.mxu0 %v176
  %278 = vmatpush1.bf16.msra.mxu0 %v175
  %279 = vmatprep.subr.bf16.mxu0 %v180
  %280 = vmatpush1.bf16.msra.mxu0 %v179
  %281 = vmatprep.subr.bf16.mxu0 %v184
  %282 = vmatpush1.bf16.msra.mxu0 %v183
  %283 = vmatprep.subr.bf16.mxu0 %v188
  %284 = vmatpush1.bf16.msra.mxu0 %v187
  %285 = vmatprep.subr.bf16.mxu0 0
  %286 = vmatpush1.bf16.msra.mxu0 0
  %287 = vmatprep.subr.bf16.mxu0 0
  %288 = vmatpush1.bf16.msra.mxu0 0
  %289 = vmatprep.subr.bf16.mxu0 0
  %290 = vmatpush1.bf16.msra.mxu0 0
  %291 = vmatprep.subr.bf16.mxu0 0
  %292 = vmatpush1.bf16.msra.mxu0 0
  %293 = vmatprep.subr.bf16.mxu0 0
  %294 = vmatpush1.bf16.msra.mxu0 0
  %295 = vmatprep.subr.bf16.mxu0 0
  %296 = vmatpush1.bf16.msra.mxu0 0
  %297 = vmatprep.subr.bf16.mxu0 0
  %298 = vmatpush1.bf16.msra.mxu0 0
  %299 = vmatprep.subr.bf16.mxu0 0
  %300 = vmatpush1.bf16.msra.mxu0 0
  %301 = vmatprep.subr.bf16.mxu0 0
  %302 = vmatpush1.bf16.msra.mxu0 0
  %303 = vmatprep.subr.bf16.mxu0 0
  %304 = vmatpush1.bf16.msra.mxu0 0
  %305 = vmatprep.mubr.bf16.mxu0 0
  %306 = vmatmul.mubr.bf16.gmra.mrb[0].mxu0 %v215
  %v307 = vpop.f32.mrb[0].mxu0
  %v308 = vadd.f32 0.0, %v307
  %v309 = vpop.f32.mrb[0].mxu0
  %v310 = vadd.f32 0.0, %v309
  %v311 = vpop.f32.mrb[0].mxu0
  %v312 = vadd.f32 0.0, %v311
  %v313 = vpop.f32.mrb[0].mxu0
  %v314 = vadd.f32 0.0, %v313
  %315 = vmatprep.mubr.bf16.mxu0 0
  %316 = vmatmul.mubr.bf16.gmra.mrb[0].mxu0 %v218
  %v317 = vpop.f32.mrb[0].mxu0
  %v318 = vadd.f32 0.0, %v317
  %v319 = vpop.f32.mrb[0].mxu0
  %v320 = vadd.f32 0.0, %v319
  %v321 = vpop.f32.mrb[0].mxu0
  %v322 = vadd.f32 0.0, %v321
  %v323 = vpop.f32.mrb[0].mxu0
  %v324 = vadd.f32 0.0, %v323
  %325 = vdwg.mxu0
  %v350 = vunpack.c.l.b16 %v28
  %v351 = vunpack.c.h.b16 %v28
  %v352 = vunpack.c.l.b16 %v29
  %v353 = vunpack.c.h.b16 %v29
  %v354 = vunpack.c.l.b16 %v30
  %v355 = vunpack.c.h.b16 %v30
  %v356 = vunpack.c.l.b16 %v31
  %v357 = vunpack.c.h.b16 %v31
  %v358 = vunpack.c.l.b16 %v32
  %v359 = vunpack.c.h.b16 %v32
  %v360 = vunpack.c.l.b16 %v33
  %v361 = vunpack.c.h.b16 %v33
  %v362 = vunpack.c.l.b16 %v34
  %v363 = vunpack.c.h.b16 %v34
  %v364 = vunpack.c.l.b16 %v35
  %v365 = vunpack.c.h.b16 %v35
  %v366 = vunpack.c.l.b16 %v36
  %v367 = vunpack.c.h.b16 %v36
  %v368 = vunpack.c.l.b16 %v37
  %v369 = vunpack.c.h.b16 %v37
  %v370 = vunpack.c.l.b16 %v38
  %v371 = vunpack.c.h.b16 %v38
  %v372 = vunpack.c.l.b16 %v39
  %v373 = vunpack.c.h.b16 %v39
  %v374 = vunpack.c.l.b16 %v40
  %v375 = vunpack.c.h.b16 %v40
  %v376 = vunpack.c.l.b16 %v41
  %v377 = vunpack.c.h.b16 %v41
  %v378 = vunpack.c.l.b16 %v42
  %v379 = vunpack.c.h.b16 %v42
  %v380 = vunpack.c.l.b16 %v43
  %v381 = vunpack.c.h.b16 %v43
  %v382 = vunpack.c.l.b16 %v44
  %v383 = vunpack.c.h.b16 %v44
  %v384 = vunpack.c.l.b16 %v45
  %v385 = vunpack.c.h.b16 %v45
  %v386 = vunpack.c.l.b16 %v46
  %v387 = vunpack.c.h.b16 %v46
  %v388 = vunpack.c.l.b16 %v47
  %v389 = vunpack.c.h.b16 %v47
  %v390 = vunpack.c.l.b16 %v48
  %v391 = vunpack.c.h.b16 %v48
  %v392 = vunpack.c.l.b16 %v49
  %v393 = vunpack.c.h.b16 %v49
  %v394 = vunpack.c.l.b16 %v50
  %v395 = vunpack.c.h.b16 %v50
  %v396 = vunpack.c.l.b16 %v51
  %v397 = vunpack.c.h.b16 %v51
  %v398 = vpack.c.b16 %v354, %v350
  %v399 = vpack.c.b16 %v355, %v351
  %v400 = vpack.c.b16 %v356, %v352
  %v401 = vpack.c.b16 %v357, %v353
  %v402 = vpack.c.b16 %v362, %v358
  %v403 = vpack.c.b16 %v363, %v359
  %v404 = vpack.c.b16 %v364, %v360
  %v405 = vpack.c.b16 %v365, %v361
  %v406 = vpack.c.b16 %v370, %v366
  %v407 = vpack.c.b16 %v371, %v367
  %v408 = vpack.c.b16 %v372, %v368
  %v409 = vpack.c.b16 %v373, %v369
  %v410 = vpack.c.b16 %v378, %v374
  %v411 = vpack.c.b16 %v379, %v375
  %v412 = vpack.c.b16 %v380, %v376
  %v413 = vpack.c.b16 %v381, %v377
  %v414 = vpack.c.b16 %v386, %v382
  %v415 = vpack.c.b16 %v387, %v383
  %v416 = vpack.c.b16 %v388, %v384
  %v417 = vpack.c.b16 %v389, %v385
  %v418 = vpack.c.b16 %v394, %v390
  %v419 = vpack.c.b16 %v395, %v391
  %v420 = vpack.c.b16 %v396, %v392
  %v421 = vpack.c.b16 %v397, %v393
  %v446 = vsel %vm213, %v26, 0
  %v448 = vsel %vm213, %v27, 0
  %450 = vmatprep.subr.bf16.mxu0 %v399
  %451 = vmatpush1.bf16.msra.mxu0 %v398
  %452 = vmatprep.subr.bf16.mxu0 %v403
  %453 = vmatpush1.bf16.msra.mxu0 %v402
  %454 = vmatprep.subr.bf16.mxu0 %v407
  %455 = vmatpush1.bf16.msra.mxu0 %v406
  %456 = vmatprep.subr.bf16.mxu0 %v411
  %457 = vmatpush1.bf16.msra.mxu0 %v410
  %458 = vmatprep.subr.bf16.mxu0 %v415
  %459 = vmatpush1.bf16.msra.mxu0 %v414
  %460 = vmatprep.subr.bf16.mxu0 %v419
  %461 = vmatpush1.bf16.msra.mxu0 %v418
  %462 = vmatprep.subr.bf16.mxu0 0
  %463 = vmatpush1.bf16.msra.mxu0 0
  %464 = vmatprep.subr.bf16.mxu0 0
  %465 = vmatpush1.bf16.msra.mxu0 0
  %466 = vmatprep.subr.bf16.mxu0 0
  %467 = vmatpush1.bf16.msra.mxu0 0
  %468 = vmatprep.subr.bf16.mxu0 0
  %469 = vmatpush1.bf16.msra.mxu0 0
  %470 = vmatprep.subr.bf16.mxu0 0
  %471 = vmatpush1.bf16.msra.mxu0 0
  %472 = vmatprep.subr.bf16.mxu0 0
  %473 = vmatpush1.bf16.msra.mxu0 0
  %474 = vmatprep.subr.bf16.mxu0 0
  %475 = vmatpush1.bf16.msra.mxu0 0
  %476 = vmatprep.subr.bf16.mxu0 0
  %477 = vmatpush1.bf16.msra.mxu0 0
  %478 = vmatprep.subr.bf16.mxu0 0
  %479 = vmatpush1.bf16.msra.mxu0 0
  %480 = vmatprep.subr.bf16.mxu0 0
  %481 = vmatpush1.bf16.msra.mxu0 0
  %482 = vmatprep.mubr.bf16.mxu0 0
  %483 = vmatmul.mubr.bf16.gmra.mrb[0].mxu0 %v446
  %v484 = vpop.f32.mrb[0].mxu0
  %v485 = vadd.f32 %v255, %v484
  %v486 = vpop.f32.mrb[0].mxu0
  %v487 = vadd.f32 %v257, %v486
  %v488 = vpop.f32.mrb[0].mxu0
  %v489 = vadd.f32 %v259, %v488
  %v490 = vpop.f32.mrb[0].mxu0
  %v491 = vadd.f32 %v261, %v490
  %492 = vmatprep.mubr.bf16.mxu0 0
  %493 = vmatmul.mubr.bf16.gmra.mrb[0].mxu0 %v448
  %v494 = vpop.f32.mrb[0].mxu0
  %v495 = vadd.f32 %v265, %v494
  %v496 = vpop.f32.mrb[0].mxu0
  %v497 = vadd.f32 %v267, %v496
  %v498 = vpop.f32.mrb[0].mxu0
  %v499 = vadd.f32 %v269, %v498
  %v500 = vpop.f32.mrb[0].mxu0
  %v501 = vadd.f32 %v271, %v500
  %502 = vdwg.mxu0
  %503 = vmatprep.subr.bf16.mxu0 %v401
  %504 = vmatpush1.bf16.msra.mxu0 %v400
  %505 = vmatprep.subr.bf16.mxu0 %v405
  %506 = vmatpush1.bf16.msra.mxu0 %v404
  %507 = vmatprep.subr.bf16.mxu0 %v409
  %508 = vmatpush1.bf16.msra.mxu0 %v408
  %509 = vmatprep.subr.bf16.mxu0 %v413
  %510 = vmatpush1.bf16.msra.mxu0 %v412
  %511 = vmatprep.subr.bf16.mxu0 %v417
  %512 = vmatpush1.bf16.msra.mxu0 %v416
  %513 = vmatprep.subr.bf16.mxu0 %v421
  %514 = vmatpush1.bf16.msra.mxu0 %v420
  %515 = vmatprep.subr.bf16.mxu0 0
  %516 = vmatpush1.bf16.msra.mxu0 0
  %517 = vmatprep.subr.bf16.mxu0 0
  %518 = vmatpush1.bf16.msra.mxu0 0
  %519 = vmatprep.subr.bf16.mxu0 0
  %520 = vmatpush1.bf16.msra.mxu0 0
  %521 = vmatprep.subr.bf16.mxu0 0
  %522 = vmatpush1.bf16.msra.mxu0 0
  %523 = vmatprep.subr.bf16.mxu0 0
  %524 = vmatpush1.bf16.msra.mxu0 0
  %525 = vmatprep.subr.bf16.mxu0 0
  %526 = vmatpush1.bf16.msra.mxu0 0
  %527 = vmatprep.subr.bf16.mxu0 0
  %528 = vmatpush1.bf16.msra.mxu0 0
  %529 = vmatprep.subr.bf16.mxu0 0
  %530 = vmatpush1.bf16.msra.mxu0 0
  %531 = vmatprep.subr.bf16.mxu0 0
  %532 = vmatpush1.bf16.msra.mxu0 0
  %533 = vmatprep.subr.bf16.mxu0 0
  %534 = vmatpush1.bf16.msra.mxu0 0
  %535 = vmatprep.mubr.bf16.mxu0 0
  %536 = vmatmul.mubr.bf16.gmra.mrb[0].mxu0 %v446
  %v537 = vpop.f32.mrb[0].mxu0
  %v538 = vadd.f32 %v308, %v537
  %v539 = vpop.f32.mrb[0].mxu0
  %v540 = vadd.f32 %v310, %v539
  %v541 = vpop.f32.mrb[0].mxu0
  %v542 = vadd.f32 %v312, %v541
  %v543 = vpop.f32.mrb[0].mxu0
  %v544 = vadd.f32 %v314, %v543
  %545 = vmatprep.mubr.bf16.mxu0 0
  %546 = vmatmul.mubr.bf16.gmra.mrb[0].mxu0 %v448
  %v547 = vpop.f32.mrb[0].mxu0
  %v548 = vadd.f32 %v318, %v547
  %v549 = vpop.f32.mrb[0].mxu0
  %v550 = vadd.f32 %v320, %v549
  %v551 = vpop.f32.mrb[0].mxu0
  %v552 = vadd.f32 %v322, %v551
  %v553 = vpop.f32.mrb[0].mxu0
  %v554 = vadd.f32 %v324, %v553
  %555 = vdwg.mxu0
  %s556 = scalar_lea.vmem %s1, 384
  %v557 = vld [vmem:[%s556] sm:$0xff]
  %v558 = vld [vmem:[%s556 + $0x8] sm:$0xff]
  %v559 = vld [vmem:[%s556 + $0x10] sm:$0xff]
  %v560 = vld [vmem:[%s556 + $0x18] sm:$0xff]
  %v561 = vld [vmem:[%s556 + $0x20] sm:$0xff]
  %v562 = vld [vmem:[%s556 + $0x28] sm:$0xff]
  %v563 = vld [vmem:[%s556 + $0x30] sm:$0xff]
  %v564 = vld [vmem:[%s556 + $0x38] sm:$0xff]
  %v565 = vld [vmem:[%s556 + $0x40] sm:$0xff]
  %v566 = vld [vmem:[%s556 + $0x48] sm:$0xff]
  %v567 = vld [vmem:[%s556 + $0x50] sm:$0xff]
  %v568 = vld [vmem:[%s556 + $0x58] sm:$0xff]
  %v569 = vld [vmem:[%s556 + $0x60] sm:$0xff]
  %v570 = vld [vmem:[%s556 + $0x68] sm:$0xff]
  %v571 = vld [vmem:[%s556 + $0x70] sm:$0xff]
  %v572 = vld [vmem:[%s556 + $0x78] sm:$0xff]
  %v573 = vld [vmem:[%s556 + $0x80] sm:$0xff]
  %v574 = vld [vmem:[%s556 + $0x88] sm:$0xff]
  %v575 = vld [vmem:[%s556 + $0x90] sm:$0xff]
  %v576 = vld [vmem:[%s556 + $0x98] sm:$0xff]
  %v577 = vld [vmem:[%s556 + $0xa0] sm:$0xff]
  %v578 = vld [vmem:[%s556 + $0xa8] sm:$0xff]
  %v579 = vld [vmem:[%s556 + $0xb0] sm:$0xff]
  %v580 = vld [vmem:[%s556 + $0xb8] sm:$0xff]
  %vm583 = vcmask 1046528
  %v584 = vrot.slane %v26, 1
  %v585 = vrot.slane %v27, 1
  %v586 = vsel %vm583, %v584, %v585
  %v611 = vunpack.c.l.b16 %v557
  %v612 = vunpack.c.h.b16 %v557
  %v613 = vunpack.c.l.b16 %v558
  %v614 = vunpack.c.h.b16 %v558
  %v615 = vunpack.c.l.b16 %v559
  %v616 = vunpack.c.h.b16 %v559
  %v617 = vunpack.c.l.b16 %v560
  %v618 = vunpack.c.h.b16 %v560
  %v619 = vunpack.c.l.b16 %v561
  %v620 = vunpack.c.h.b16 %v561
  %v621 = vunpack.c.l.b16 %v562
  %v622 = vunpack.c.h.b16 %v562
  %v623 = vunpack.c.l.b16 %v563
  %v624 = vunpack.c.h.b16 %v563
  %v625 = vunpack.c.l.b16 %v564
  %v626 = vunpack.c.h.b16 %v564
  %v627 = vunpack.c.l.b16 %v565
  %v628 = vunpack.c.h.b16 %v565
  %v629 = vunpack.c.l.b16 %v566
  %v630 = vunpack.c.h.b16 %v566
  %v631 = vunpack.c.l.b16 %v567
  %v632 = vunpack.c.h.b16 %v567
  %v633 = vunpack.c.l.b16 %v568
  %v634 = vunpack.c.h.b16 %v568
  %v635 = vunpack.c.l.b16 %v569
  %v636 = vunpack.c.h.b16 %v569
  %v637 = vunpack.c.l.b16 %v570
  %v638 = vunpack.c.h.b16 %v570
  %v639 = vunpack.c.l.b16 %v571
  %v640 = vunpack.c.h.b16 %v571
  %v641 = vunpack.c.l.b16 %v572
  %v642 = vunpack.c.h.b16 %v572
  %v643 = vunpack.c.l.b16 %v573
  %v644 = vunpack.c.h.b16 %v573
  %v645 = vunpack.c.l.b16 %v574
  %v646 = vunpack.c.h.b16 %v574
  %v647 = vunpack.c.l.b16 %v575
  %v648 = vunpack.c.h.b16 %v575
  %v649 = vunpack.c.l.b16 %v576
  %v650 = vunpack.c.h.b16 %v576
  %v651 = vunpack.c.l.b16 %v577
  %v652 = vunpack.c.h.b16 %v577
  %v653 = vunpack.c.l.b16 %v578
  %v654 = vunpack.c.h.b16 %v578
  %v655 = vunpack.c.l.b16 %v579
  %v656 = vunpack.c.h.b16 %v579
  %v657 = vunpack.c.l.b16 %v580
  %v658 = vunpack.c.h.b16 %v580
  %v659 = vpack.c.b16 %v615, %v611
  %v660 = vpack.c.b16 %v616, %v612
  %v661 = vpack.c.b16 %v617, %v613
  %v662 = vpack.c.b16 %v618, %v614
  %v663 = vpack.c.b16 %v623, %v619
  %v664 = vpack.c.b16 %v624, %v620
  %v665 = vpack.c.b16 %v625, %v621
  %v666 = vpack.c.b16 %v626, %v622
  %v667 = vpack.c.b16 %v631, %v627
  %v668 = vpack.c.b16 %v632, %v628
  %v669 = vpack.c.b16 %v633, %v629
  %v670 = vpack.c.b16 %v634, %v630
  %v671 = vpack.c.b16 %v639, %v635
  %v672 = vpack.c.b16 %v640, %v636
  %v673 = vpack.c.b16 %v641, %v637
  %v674 = vpack.c.b16 %v642, %v638
  %v675 = vpack.c.b16 %v647, %v643
  %v676 = vpack.c.b16 %v648, %v644
  %v677 = vpack.c.b16 %v649, %v645
  %v678 = vpack.c.b16 %v650, %v646
  %v679 = vpack.c.b16 %v655, %v651
  %v680 = vpack.c.b16 %v656, %v652
  %v681 = vpack.c.b16 %v657, %v653
  %v682 = vpack.c.b16 %v658, %v654
  %v708 = vsel %vm213, %v586, 0
  %v711 = vsel %vm213, %v585, 0
  %713 = vmatprep.subr.bf16.mxu0 %v660
  %714 = vmatpush1.bf16.msra.mxu0 %v659
  %715 = vmatprep.subr.bf16.mxu0 %v664
  %716 = vmatpush1.bf16.msra.mxu0 %v663
  %717 = vmatprep.subr.bf16.mxu0 %v668
  %718 = vmatpush1.bf16.msra.mxu0 %v667
  %719 = vmatprep.subr.bf16.mxu0 %v672
  %720 = vmatpush1.bf16.msra.mxu0 %v671
  %721 = vmatprep.subr.bf16.mxu0 %v676
  %722 = vmatpush1.bf16.msra.mxu0 %v675
  %723 = vmatprep.subr.bf16.mxu0 %v680
  %724 = vmatpush1.bf16.msra.mxu0 %v679
  %725 = vmatprep.subr.bf16.mxu0 0
  %726 = vmatpush1.bf16.msra.mxu0 0
  %727 = vmatprep.subr.bf16.mxu0 0
  %728 = vmatpush1.bf16.msra.mxu0 0
  %729 = vmatprep.subr.bf16.mxu0 0
  %730 = vmatpush1.bf16.msra.mxu0 0
  %731 = vmatprep.subr.bf16.mxu0 0
  %732 = vmatpush1.bf16.msra.mxu0 0
  %733 = vmatprep.subr.bf16.mxu0 0
  %734 = vmatpush1.bf16.msra.mxu0 0
  %735 = vmatprep.subr.bf16.mxu0 0
  %736 = vmatpush1.bf16.msra.mxu0 0
  %737 = vmatprep.subr.bf16.mxu0 0
  %738 = vmatpush1.bf16.msra.mxu0 0
  %739 = vmatprep.subr.bf16.mxu0 0
  %740 = vmatpush1.bf16.msra.mxu0 0
  %741 = vmatprep.subr.bf16.mxu0 0
  %742 = vmatpush1.bf16.msra.mxu0 0
  %743 = vmatprep.subr.bf16.mxu0 0
  %744 = vmatpush1.bf16.msra.mxu0 0
  %745 = vmatprep.mubr.bf16.mxu0 0
  %746 = vmatmul.mubr.bf16.gmra.mrb[0].mxu0 %v708
  %v747 = vpop.f32.mrb[0].mxu0
  %v748 = vadd.f32 0.0, %v747
  %v749 = vpop.f32.mrb[0].mxu0
  %v750 = vadd.f32 0.0, %v749
  %v751 = vpop.f32.mrb[0].mxu0
  %v752 = vadd.f32 0.0, %v751
  %v753 = vpop.f32.mrb[0].mxu0
  %v754 = vadd.f32 0.0, %v753
  %755 = vmatprep.mubr.bf16.mxu0 0
  %756 = vmatmul.mubr.bf16.gmra.mrb[0].mxu0 %v711
  %v757 = vpop.f32.mrb[0].mxu0
  %v758 = vadd.f32 0.0, %v757
  %v759 = vpop.f32.mrb[0].mxu0
  %v760 = vadd.f32 0.0, %v759
  %v761 = vpop.f32.mrb[0].mxu0
  %v762 = vadd.f32 0.0, %v761
  %v763 = vpop.f32.mrb[0].mxu0
  %v764 = vadd.f32 0.0, %v763
  %765 = vdwg.mxu0
  %766 = vmatprep.subr.bf16.mxu0 %v662
  %767 = vmatpush1.bf16.msra.mxu0 %v661
  %768 = vmatprep.subr.bf16.mxu0 %v666
  %769 = vmatpush1.bf16.msra.mxu0 %v665
  %770 = vmatprep.subr.bf16.mxu0 %v670
  %771 = vmatpush1.bf16.msra.mxu0 %v669
  %772 = vmatprep.subr.bf16.mxu0 %v674
  %773 = vmatpush1.bf16.msra.mxu0 %v673
  %774 = vmatprep.subr.bf16.mxu0 %v678
  %775 = vmatpush1.bf16.msra.mxu0 %v677
  %776 = vmatprep.subr.bf16.mxu0 %v682
  %777 = vmatpush1.bf16.msra.mxu0 %v681
  %778 = vmatprep.subr.bf16.mxu0 0
  %779 = vmatpush1.bf16.msra.mxu0 0
  %780 = vmatprep.subr.bf16.mxu0 0
  %781 = vmatpush1.bf16.msra.mxu0 0
  %782 = vmatprep.subr.bf16.mxu0 0
  %783 = vmatpush1.bf16.msra.mxu0 0
  %784 = vmatprep.subr.bf16.mxu0 0
  %785 = vmatpush1.bf16.msra.mxu0 0
  %786 = vmatprep.subr.bf16.mxu0 0
  %787 = vmatpush1.bf16.msra.mxu0 0
  %788 = vmatprep.subr.bf16.mxu0 0
  %789 = vmatpush1.bf16.msra.mxu0 0
  %790 = vmatprep.subr.bf16.mxu0 0
  %791 = vmatpush1.bf16.msra.mxu0 0
  %792 = vmatprep.subr.bf16.mxu0 0
  %793 = vmatpush1.bf16.msra.mxu0 0
  %794 = vmatprep.subr.bf16.mxu0 0
  %795 = vmatpush1.bf16.msra.mxu0 0
  %796 = vmatprep.subr.bf16.mxu0 0
  %797 = vmatpush1.bf16.msra.mxu0 0
  %798 = vmatprep.mubr.bf16.mxu0 0
  %799 = vmatmul.mubr.bf16.gmra.mrb[0].mxu0 %v708
  %v800 = vpop.f32.mrb[0].mxu0
  %v801 = vadd.f32 0.0, %v800
  %v802 = vpop.f32.mrb[0].mxu0
  %v803 = vadd.f32 0.0, %v802
  %v804 = vpop.f32.mrb[0].mxu0
  %v805 = vadd.f32 0.0, %v804
  %v806 = vpop.f32.mrb[0].mxu0
  %v807 = vadd.f32 0.0, %v806
  %808 = vmatprep.mubr.bf16.mxu0 0
  %809 = vmatmul.mubr.bf16.gmra.mrb[0].mxu0 %v711
  %v810 = vpop.f32.mrb[0].mxu0
  %v811 = vadd.f32 0.0, %v810
  %v812 = vpop.f32.mrb[0].mxu0
  %v813 = vadd.f32 0.0, %v812
  %v814 = vpop.f32.mrb[0].mxu0
  %v815 = vadd.f32 0.0, %v814
  %v816 = vpop.f32.mrb[0].mxu0
  %v817 = vadd.f32 0.0, %v816
  %818 = vdwg.mxu0
  %v819 = vadd.f32 %v485, %v748
  %v820 = vadd.f32 %v487, %v750
  %v821 = vadd.f32 %v538, %v801
  %v822 = vadd.f32 %v540, %v803
  %v823 = vadd.f32 %v489, %v752
  %v824 = vadd.f32 %v491, %v754
  %v825 = vadd.f32 %v542, %v805
  %v826 = vadd.f32 %v544, %v807
  %v827 = vadd.f32 %v495, %v758
  %v828 = vadd.f32 %v497, %v760
  %v829 = vadd.f32 %v548, %v811
  %v830 = vadd.f32 %v550, %v813
  %v831 = vadd.f32 %v499, %v762
  %v832 = vadd.f32 %v501, %v764
  %v833 = vadd.f32 %v552, %v815
  %v834 = vadd.f32 %v554, %v817
  %s835 = scalar_lea.vmem %s1, 576
  %v836 = vld [vmem:[%s835] sm:$0xff]
  %v837 = vld [vmem:[%s835 + $0x8] sm:$0xff]
  %v838 = vld [vmem:[%s835 + $0x10] sm:$0xff]
  %v839 = vld [vmem:[%s835 + $0x18] sm:$0xff]
  %v840 = vld [vmem:[%s835 + $0x20] sm:$0xff]
  %v841 = vld [vmem:[%s835 + $0x28] sm:$0xff]
  %v842 = vld [vmem:[%s835 + $0x30] sm:$0xff]
  %v843 = vld [vmem:[%s835 + $0x38] sm:$0xff]
  %v844 = vld [vmem:[%s835 + $0x40] sm:$0xff]
  %v845 = vld [vmem:[%s835 + $0x48] sm:$0xff]
  %v846 = vld [vmem:[%s835 + $0x50] sm:$0xff]
  %v847 = vld [vmem:[%s835 + $0x58] sm:$0xff]
  %v848 = vld [vmem:[%s835 + $0x60] sm:$0xff]
  %v849 = vld [vmem:[%s835 + $0x68] sm:$0xff]
  %v850 = vld [vmem:[%s835 + $0x70] sm:$0xff]
  %v851 = vld [vmem:[%s835 + $0x78] sm:$0xff]
  %v852 = vld [vmem:[%s835 + $0x80] sm:$0xff]
  %v853 = vld [vmem:[%s835 + $0x88] sm:$0xff]
  %v854 = vld [vmem:[%s835 + $0x90] sm:$0xff]
  %v855 = vld [vmem:[%s835 + $0x98] sm:$0xff]
  %v856 = vld [vmem:[%s835 + $0xa0] sm:$0xff]
  %v857 = vld [vmem:[%s835 + $0xa8] sm:$0xff]
  %v858 = vld [vmem:[%s835 + $0xb0] sm:$0xff]
  %v859 = vld [vmem:[%s835 + $0xb8] sm:$0xff]
  %vm860 = vsmask.f32 6400
  %v861 = vrot.slane %v79, 1
  %v862 = vrot.slane %v81, 2
  %v863 = vor.u32 %v861, %v862
  %v864 = vrot.slane %v90, 1
  %v865 = vrot.slane %v86, 2
  %v866 = vor.u32 %v864, %v865
  %v867 = vsel %vm860, %v863, %v866
  %v892 = vunpack.c.l.b16 %v836
  %v893 = vunpack.c.h.b16 %v836
  %v894 = vunpack.c.l.b16 %v837
  %v895 = vunpack.c.h.b16 %v837
  %v896 = vunpack.c.l.b16 %v838
  %v897 = vunpack.c.h.b16 %v838
  %v898 = vunpack.c.l.b16 %v839
  %v899 = vunpack.c.h.b16 %v839
  %v900 = vunpack.c.l.b16 %v840
  %v901 = vunpack.c.h.b16 %v840
  %v902 = vunpack.c.l.b16 %v841
  %v903 = vunpack.c.h.b16 %v841
  %v904 = vunpack.c.l.b16 %v842
  %v905 = vunpack.c.h.b16 %v842
  %v906 = vunpack.c.l.b16 %v843
  %v907 = vunpack.c.h.b16 %v843
  %v908 = vunpack.c.l.b16 %v844
  %v909 = vunpack.c.h.b16 %v844
  %v910 = vunpack.c.l.b16 %v845
  %v911 = vunpack.c.h.b16 %v845
  %v912 = vunpack.c.l.b16 %v846
  %v913 = vunpack.c.h.b16 %v846
  %v914 = vunpack.c.l.b16 %v847
  %v915 = vunpack.c.h.b16 %v847
  %v916 = vunpack.c.l.b16 %v848
  %v917 = vunpack.c.h.b16 %v848
  %v918 = vunpack.c.l.b16 %v849
  %v919 = vunpack.c.h.b16 %v849
  %v920 = vunpack.c.l.b16 %v850
  %v921 = vunpack.c.h.b16 %v850
  %v922 = vunpack.c.l.b16 %v851
  %v923 = vunpack.c.h.b16 %v851
  %v924 = vunpack.c.l.b16 %v852
  %v925 = vunpack.c.h.b16 %v852
  %v926 = vunpack.c.l.b16 %v853
  %v927 = vunpack.c.h.b16 %v853
  %v928 = vunpack.c.l.b16 %v854
  %v929 = vunpack.c.h.b16 %v854
  %v930 = vunpack.c.l.b16 %v855
  %v931 = vunpack.c.h.b16 %v855
  %v932 = vunpack.c.l.b16 %v856
  %v933 = vunpack.c.h.b16 %v856
  %v934 = vunpack.c.l.b16 %v857
  %v935 = vunpack.c.h.b16 %v857
  %v936 = vunpack.c.l.b16 %v858
  %v937 = vunpack.c.h.b16 %v858
  %v938 = vunpack.c.l.b16 %v859
  %v939 = vunpack.c.h.b16 %v859
  %v940 = vpack.c.b16 %v896, %v892
  %v941 = vpack.c.b16 %v897, %v893
  %v942 = vpack.c.b16 %v898, %v894
  %v943 = vpack.c.b16 %v899, %v895
  %v944 = vpack.c.b16 %v904, %v900
  %v945 = vpack.c.b16 %v905, %v901
  %v946 = vpack.c.b16 %v906, %v902
  %v947 = vpack.c.b16 %v907, %v903
  %v948 = vpack.c.b16 %v912, %v908
  %v949 = vpack.c.b16 %v913, %v909
  %v950 = vpack.c.b16 %v914, %v910
  %v951 = vpack.c.b16 %v915, %v911
  %v952 = vpack.c.b16 %v920, %v916
  %v953 = vpack.c.b16 %v921, %v917
  %v954 = vpack.c.b16 %v922, %v918
  %v955 = vpack.c.b16 %v923, %v919
  %v956 = vpack.c.b16 %v928, %v924
  %v957 = vpack.c.b16 %v929, %v925
  %v958 = vpack.c.b16 %v930, %v926
  %v959 = vpack.c.b16 %v931, %v927
  %v960 = vpack.c.b16 %v936, %v932
  %v961 = vpack.c.b16 %v937, %v933
  %v962 = vpack.c.b16 %v938, %v934
  %v963 = vpack.c.b16 %v939, %v935
  %v989 = vsel %vm213, %v867, 0
  %v992 = vsel %vm213, %v866, 0
  %994 = vmatprep.subr.bf16.mxu0 %v941
  %995 = vmatpush1.bf16.msra.mxu0 %v940
  %996 = vmatprep.subr.bf16.mxu0 %v945
  %997 = vmatpush1.bf16.msra.mxu0 %v944
  %998 = vmatprep.subr.bf16.mxu0 %v949
  %999 = vmatpush1.bf16.msra.mxu0 %v948
  %1000 = vmatprep.subr.bf16.mxu0 %v953
  %1001 = vmatpush1.bf16.msra.mxu0 %v952
  %1002 = vmatprep.subr.bf16.mxu0 %v957
  %1003 = vmatpush1.bf16.msra.mxu0 %v956
  %1004 = vmatprep.subr.bf16.mxu0 %v961
  %1005 = vmatpush1.bf16.msra.mxu0 %v960
  %1006 = vmatprep.subr.bf16.mxu0 0
  %1007 = vmatpush1.bf16.msra.mxu0 0
  %1008 = vmatprep.subr.bf16.mxu0 0
  %1009 = vmatpush1.bf16.msra.mxu0 0
  %1010 = vmatprep.subr.bf16.mxu0 0
  %1011 = vmatpush1.bf16.msra.mxu0 0
  %1012 = vmatprep.subr.bf16.mxu0 0
  %1013 = vmatpush1.bf16.msra.mxu0 0
  %1014 = vmatprep.subr.bf16.mxu0 0
  %1015 = vmatpush1.bf16.msra.mxu0 0
  %1016 = vmatprep.subr.bf16.mxu0 0
  %1017 = vmatpush1.bf16.msra.mxu0 0
  %1018 = vmatprep.subr.bf16.mxu0 0
  %1019 = vmatpush1.bf16.msra.mxu0 0
  %1020 = vmatprep.subr.bf16.mxu0 0
  %1021 = vmatpush1.bf16.msra.mxu0 0
  %1022 = vmatprep.subr.bf16.mxu0 0
  %1023 = vmatpush1.bf16.msra.mxu0 0
  %1024 = vmatprep.subr.bf16.mxu0 0
  %1025 = vmatpush1.bf16.msra.mxu0 0
  %1026 = vmatprep.mubr.bf16.mxu0 0
  %1027 = vmatmul.mubr.bf16.gmra.mrb[0].mxu0 %v989
  %v1028 = vpop.f32.mrb[0].mxu0
  %v1029 = vadd.f32 0.0, %v1028
  %v1030 = vpop.f32.mrb[0].mxu0
  %v1031 = vadd.f32 0.0, %v1030
  %v1032 = vpop.f32.mrb[0].mxu0
  %v1033 = vadd.f32 0.0, %v1032
  %v1034 = vpop.f32.mrb[0].mxu0
  %v1035 = vadd.f32 0.0, %v1034
  %1036 = vmatprep.mubr.bf16.mxu0 0
  %1037 = vmatmul.mubr.bf16.gmra.mrb[0].mxu0 %v992
  %v1038 = vpop.f32.mrb[0].mxu0
  %v1039 = vadd.f32 0.0, %v1038
  %v1040 = vpop.f32.mrb[0].mxu0
  %v1041 = vadd.f32 0.0, %v1040
  %v1042 = vpop.f32.mrb[0].mxu0
  %v1043 = vadd.f32 0.0, %v1042
  %v1044 = vpop.f32.mrb[0].mxu0
  %v1045 = vadd.f32 0.0, %v1044
  %1046 = vdwg.mxu0
  %1047 = vmatprep.subr.bf16.mxu0 %v943
  %1048 = vmatpush1.bf16.msra.mxu0 %v942
  %1049 = vmatprep.subr.bf16.mxu0 %v947
  %1050 = vmatpush1.bf16.msra.mxu0 %v946
  %1051 = vmatprep.subr.bf16.mxu0 %v951
  %1052 = vmatpush1.bf16.msra.mxu0 %v950
  %1053 = vmatprep.subr.bf16.mxu0 %v955
  %1054 = vmatpush1.bf16.msra.mxu0 %v954
  %1055 = vmatprep.subr.bf16.mxu0 %v959
  %1056 = vmatpush1.bf16.msra.mxu0 %v958
  %1057 = vmatprep.subr.bf16.mxu0 %v963
  %1058 = vmatpush1.bf16.msra.mxu0 %v962
  %1059 = vmatprep.subr.bf16.mxu0 0
  %1060 = vmatpush1.bf16.msra.mxu0 0
  %1061 = vmatprep.subr.bf16.mxu0 0
  %1062 = vmatpush1.bf16.msra.mxu0 0
  %1063 = vmatprep.subr.bf16.mxu0 0
  %1064 = vmatpush1.bf16.msra.mxu0 0
  %1065 = vmatprep.subr.bf16.mxu0 0
  %1066 = vmatpush1.bf16.msra.mxu0 0
  %1067 = vmatprep.subr.bf16.mxu0 0
  %1068 = vmatpush1.bf16.msra.mxu0 0
  %1069 = vmatprep.subr.bf16.mxu0 0
  %1070 = vmatpush1.bf16.msra.mxu0 0
  %1071 = vmatprep.subr.bf16.mxu0 0
  %1072 = vmatpush1.bf16.msra.mxu0 0
  %1073 = vmatprep.subr.bf16.mxu0 0
  %1074 = vmatpush1.bf16.msra.mxu0 0
  %1075 = vmatprep.subr.bf16.mxu0 0
  %1076 = vmatpush1.bf16.msra.mxu0 0
  %1077 = vmatprep.subr.bf16.mxu0 0
  %1078 = vmatpush1.bf16.msra.mxu0 0
  %1079 = vmatprep.mubr.bf16.mxu0 0
  %1080 = vmatmul.mubr.bf16.gmra.mrb[0].mxu0 %v989
  %v1081 = vpop.f32.mrb[0].mxu0
  %v1082 = vadd.f32 0.0, %v1081
  %v1083 = vpop.f32.mrb[0].mxu0
  %v1084 = vadd.f32 0.0, %v1083
  %v1085 = vpop.f32.mrb[0].mxu0
  %v1086 = vadd.f32 0.0, %v1085
  %v1087 = vpop.f32.mrb[0].mxu0
  %v1088 = vadd.f32 0.0, %v1087
  %1089 = vmatprep.mubr.bf16.mxu0 0
  %1090 = vmatmul.mubr.bf16.gmra.mrb[0].mxu0 %v992
  %v1091 = vpop.f32.mrb[0].mxu0
  %v1092 = vadd.f32 0.0, %v1091
  %v1093 = vpop.f32.mrb[0].mxu0
  %v1094 = vadd.f32 0.0, %v1093
  %v1095 = vpop.f32.mrb[0].mxu0
  %v1096 = vadd.f32 0.0, %v1095
  %v1097 = vpop.f32.mrb[0].mxu0
  %v1098 = vadd.f32 0.0, %v1097
  %1099 = vdwg.mxu0
  %v1100 = vadd.f32 %v819, %v1029
  %v1101 = vadd.f32 %v820, %v1031
  %v1102 = vadd.f32 %v821, %v1082
  %v1103 = vadd.f32 %v822, %v1084
  %v1104 = vadd.f32 %v823, %v1033
  %v1105 = vadd.f32 %v824, %v1035
  %v1106 = vadd.f32 %v825, %v1086
  %v1107 = vadd.f32 %v826, %v1088
  %v1108 = vadd.f32 %v827, %v1039
  %v1109 = vadd.f32 %v828, %v1041
  %v1110 = vadd.f32 %v829, %v1092
  %v1111 = vadd.f32 %v830, %v1094
  %v1112 = vadd.f32 %v831, %v1043
  %v1113 = vadd.f32 %v832, %v1045
  %v1114 = vadd.f32 %v833, %v1096
  %v1115 = vadd.f32 %v834, %v1098
  %s1116 = scalar_lea.vmem %s1, 768
  %v1117 = vld [vmem:[%s1116] sm:$0xff]
  %v1118 = vld [vmem:[%s1116 + $0x8] sm:$0xff]
  %v1119 = vld [vmem:[%s1116 + $0x10] sm:$0xff]
  %v1120 = vld [vmem:[%s1116 + $0x18] sm:$0xff]
  %v1121 = vld [vmem:[%s1116 + $0x20] sm:$0xff]
  %v1122 = vld [vmem:[%s1116 + $0x28] sm:$0xff]
  %v1123 = vld [vmem:[%s1116 + $0x30] sm:$0xff]
  %v1124 = vld [vmem:[%s1116 + $0x38] sm:$0xff]
  %v1125 = vld [vmem:[%s1116 + $0x40] sm:$0xff]
  %v1126 = vld [vmem:[%s1116 + $0x48] sm:$0xff]
  %v1127 = vld [vmem:[%s1116 + $0x50] sm:$0xff]
  %v1128 = vld [vmem:[%s1116 + $0x58] sm:$0xff]
  %v1129 = vld [vmem:[%s1116 + $0x60] sm:$0xff]
  %v1130 = vld [vmem:[%s1116 + $0x68] sm:$0xff]
  %v1131 = vld [vmem:[%s1116 + $0x70] sm:$0xff]
  %v1132 = vld [vmem:[%s1116 + $0x78] sm:$0xff]
  %v1133 = vld [vmem:[%s1116 + $0x80] sm:$0xff]
  %v1134 = vld [vmem:[%s1116 + $0x88] sm:$0xff]
  %v1135 = vld [vmem:[%s1116 + $0x90] sm:$0xff]
  %v1136 = vld [vmem:[%s1116 + $0x98] sm:$0xff]
  %v1137 = vld [vmem:[%s1116 + $0xa0] sm:$0xff]
  %v1138 = vld [vmem:[%s1116 + $0xa8] sm:$0xff]
  %v1139 = vld [vmem:[%s1116 + $0xb0] sm:$0xff]
  %v1140 = vld [vmem:[%s1116 + $0xb8] sm:$0xff]
  %vm1141 = vcmask 1045504
  %v1142 = vrot.slane %v26, 2
  %v1143 = vrot.slane %v27, 2
  %v1144 = vsel %vm1141, %v1142, %v1143
  %v1169 = vunpack.c.l.b16 %v1117
  %v1170 = vunpack.c.h.b16 %v1117
  %v1171 = vunpack.c.l.b16 %v1118
  %v1172 = vunpack.c.h.b16 %v1118
  %v1173 = vunpack.c.l.b16 %v1119
  %v1174 = vunpack.c.h.b16 %v1119
  %v1175 = vunpack.c.l.b16 %v1120
  %v1176 = vunpack.c.h.b16 %v1120
  %v1177 = vunpack.c.l.b16 %v1121
  %v1178 = vunpack.c.h.b16 %v1121
  %v1179 = vunpack.c.l.b16 %v1122
  %v1180 = vunpack.c.h.b16 %v1122
  %v1181 = vunpack.c.l.b16 %v1123
  %v1182 = vunpack.c.h.b16 %v1123
  %v1183 = vunpack.c.l.b16 %v1124
  %v1184 = vunpack.c.h.b16 %v1124
  %v1185 = vunpack.c.l.b16 %v1125
  %v1186 = vunpack.c.h.b16 %v1125
  %v1187 = vunpack.c.l.b16 %v1126
  %v1188 = vunpack.c.h.b16 %v1126
  %v1189 = vunpack.c.l.b16 %v1127
  %v1190 = vunpack.c.h.b16 %v1127
  %v1191 = vunpack.c.l.b16 %v1128
  %v1192 = vunpack.c.h.b16 %v1128
  %v1193 = vunpack.c.l.b16 %v1129
  %v1194 = vunpack.c.h.b16 %v1129
  %v1195 = vunpack.c.l.b16 %v1130
  %v1196 = vunpack.c.h.b16 %v1130
  %v1197 = vunpack.c.l.b16 %v1131
  %v1198 = vunpack.c.h.b16 %v1131
  %v1199 = vunpack.c.l.b16 %v1132
  %v1200 = vunpack.c.h.b16 %v1132
  %v1201 = vunpack.c.l.b16 %v1133
  %v1202 = vunpack.c.h.b16 %v1133
  %v1203 = vunpack.c.l.b16 %v1134
  %v1204 = vunpack.c.h.b16 %v1134
  %v1205 = vunpack.c.l.b16 %v1135
  %v1206 = vunpack.c.h.b16 %v1135
  %v1207 = vunpack.c.l.b16 %v1136
  %v1208 = vunpack.c.h.b16 %v1136
  %v1209 = vunpack.c.l.b16 %v1137
  %v1210 = vunpack.c.h.b16 %v1137
  %v1211 = vunpack.c.l.b16 %v1138
  %v1212 = vunpack.c.h.b16 %v1138
  %v1213 = vunpack.c.l.b16 %v1139
  %v1214 = vunpack.c.h.b16 %v1139
  %v1215 = vunpack.c.l.b16 %v1140
  %v1216 = vunpack.c.h.b16 %v1140
  %v1217 = vpack.c.b16 %v1173, %v1169
  %v1218 = vpack.c.b16 %v1174, %v1170
  %v1219 = vpack.c.b16 %v1175, %v1171
  %v1220 = vpack.c.b16 %v1176, %v1172
  %v1221 = vpack.c.b16 %v1181, %v1177
  %v1222 = vpack.c.b16 %v1182, %v1178
  %v1223 = vpack.c.b16 %v1183, %v1179
  %v1224 = vpack.c.b16 %v1184, %v1180
  %v1225 = vpack.c.b16 %v1189, %v1185
  %v1226 = vpack.c.b16 %v1190, %v1186
  %v1227 = vpack.c.b16 %v1191, %v1187
  %v1228 = vpack.c.b16 %v1192, %v1188
  %v1229 = vpack.c.b16 %v1197, %v1193
  %v1230 = vpack.c.b16 %v1198, %v1194
  %v1231 = vpack.c.b16 %v1199, %v1195
  %v1232 = vpack.c.b16 %v1200, %v1196
  %v1233 = vpack.c.b16 %v1205, %v1201
  %v1234 = vpack.c.b16 %v1206, %v1202
  %v1235 = vpack.c.b16 %v1207, %v1203
  %v1236 = vpack.c.b16 %v1208, %v1204
  %v1237 = vpack.c.b16 %v1213, %v1209
  %v1238 = vpack.c.b16 %v1214, %v1210
  %v1239 = vpack.c.b16 %v1215, %v1211
  %v1240 = vpack.c.b16 %v1216, %v1212
  %v1266 = vsel %vm213, %v1144, 0
  %v1269 = vsel %vm213, %v1143, 0
  %1271 = vmatprep.subr.bf16.mxu0 %v1218
  %1272 = vmatpush1.bf16.msra.mxu0 %v1217
  %1273 = vmatprep.subr.bf16.mxu0 %v1222
  %1274 = vmatpush1.bf16.msra.mxu0 %v1221
  %1275 = vmatprep.subr.bf16.mxu0 %v1226
  %1276 = vmatpush1.bf16.msra.mxu0 %v1225
  %1277 = vmatprep.subr.bf16.mxu0 %v1230
  %1278 = vmatpush1.bf16.msra.mxu0 %v1229
  %1279 = vmatprep.subr.bf16.mxu0 %v1234
  %1280 = vmatpush1.bf16.msra.mxu0 %v1233
  %1281 = vmatprep.subr.bf16.mxu0 %v1238
  %1282 = vmatpush1.bf16.msra.mxu0 %v1237
  %1283 = vmatprep.subr.bf16.mxu0 0
  %1284 = vmatpush1.bf16.msra.mxu0 0
  %1285 = vmatprep.subr.bf16.mxu0 0
  %1286 = vmatpush1.bf16.msra.mxu0 0
  %1287 = vmatprep.subr.bf16.mxu0 0
  %1288 = vmatpush1.bf16.msra.mxu0 0
  %1289 = vmatprep.subr.bf16.mxu0 0
  %1290 = vmatpush1.bf16.msra.mxu0 0
  %1291 = vmatprep.subr.bf16.mxu0 0
  %1292 = vmatpush1.bf16.msra.mxu0 0
  %1293 = vmatprep.subr.bf16.mxu0 0
  %1294 = vmatpush1.bf16.msra.mxu0 0
  %1295 = vmatprep.subr.bf16.mxu0 0
  %1296 = vmatpush1.bf16.msra.mxu0 0
  %1297 = vmatprep.subr.bf16.mxu0 0
  %1298 = vmatpush1.bf16.msra.mxu0 0
  %1299 = vmatprep.subr.bf16.mxu0 0
  %1300 = vmatpush1.bf16.msra.mxu0 0
  %1301 = vmatprep.subr.bf16.mxu0 0
  %1302 = vmatpush1.bf16.msra.mxu0 0
  %1303 = vmatprep.mubr.bf16.mxu0 0
  %1304 = vmatmul.mubr.bf16.gmra.mrb[0].mxu0 %v1266
  %v1305 = vpop.f32.mrb[0].mxu0
  %v1306 = vadd.f32 0.0, %v1305
  %v1307 = vpop.f32.mrb[0].mxu0
  %v1308 = vadd.f32 0.0, %v1307
  %v1309 = vpop.f32.mrb[0].mxu0
  %v1310 = vadd.f32 0.0, %v1309
  %v1311 = vpop.f32.mrb[0].mxu0
  %v1312 = vadd.f32 0.0, %v1311
  %1313 = vmatprep.mubr.bf16.mxu0 0
  %1314 = vmatmul.mubr.bf16.gmra.mrb[0].mxu0 %v1269
  %v1315 = vpop.f32.mrb[0].mxu0
  %v1316 = vadd.f32 0.0, %v1315
  %v1317 = vpop.f32.mrb[0].mxu0
  %v1318 = vadd.f32 0.0, %v1317
  %v1319 = vpop.f32.mrb[0].mxu0
  %v1320 = vadd.f32 0.0, %v1319
  %v1321 = vpop.f32.mrb[0].mxu0
  %v1322 = vadd.f32 0.0, %v1321
  %1323 = vdwg.mxu0
  %1324 = vmatprep.subr.bf16.mxu0 %v1220
  %1325 = vmatpush1.bf16.msra.mxu0 %v1219
  %1326 = vmatprep.subr.bf16.mxu0 %v1224
  %1327 = vmatpush1.bf16.msra.mxu0 %v1223
  %1328 = vmatprep.subr.bf16.mxu0 %v1228
  %1329 = vmatpush1.bf16.msra.mxu0 %v1227
  %1330 = vmatprep.subr.bf16.mxu0 %v1232
  %1331 = vmatpush1.bf16.msra.mxu0 %v1231
  %1332 = vmatprep.subr.bf16.mxu0 %v1236
  %1333 = vmatpush1.bf16.msra.mxu0 %v1235
  %1334 = vmatprep.subr.bf16.mxu0 %v1240
  %1335 = vmatpush1.bf16.msra.mxu0 %v1239
  %1336 = vmatprep.subr.bf16.mxu0 0
  %1337 = vmatpush1.bf16.msra.mxu0 0
  %1338 = vmatprep.subr.bf16.mxu0 0
  %1339 = vmatpush1.bf16.msra.mxu0 0
  %1340 = vmatprep.subr.bf16.mxu0 0
  %1341 = vmatpush1.bf16.msra.mxu0 0
  %1342 = vmatprep.subr.bf16.mxu0 0
  %1343 = vmatpush1.bf16.msra.mxu0 0
  %1344 = vmatprep.subr.bf16.mxu0 0
  %1345 = vmatpush1.bf16.msra.mxu0 0
  %1346 = vmatprep.subr.bf16.mxu0 0
  %1347 = vmatpush1.bf16.msra.mxu0 0
  %1348 = vmatprep.subr.bf16.mxu0 0
  %1349 = vmatpush1.bf16.msra.mxu0 0
  %1350 = vmatprep.subr.bf16.mxu0 0
  %1351 = vmatpush1.bf16.msra.mxu0 0
  %1352 = vmatprep.subr.bf16.mxu0 0
  %1353 = vmatpush1.bf16.msra.mxu0 0
  %1354 = vmatprep.subr.bf16.mxu0 0
  %1355 = vmatpush1.bf16.msra.mxu0 0
  %1356 = vmatprep.mubr.bf16.mxu0 0
  %1357 = vmatmul.mubr.bf16.gmra.mrb[0].mxu0 %v1266
  %v1358 = vpop.f32.mrb[0].mxu0
  %v1359 = vadd.f32 0.0, %v1358
  %v1360 = vpop.f32.mrb[0].mxu0
  %v1361 = vadd.f32 0.0, %v1360
  %v1362 = vpop.f32.mrb[0].mxu0
  %v1363 = vadd.f32 0.0, %v1362
  %v1364 = vpop.f32.mrb[0].mxu0
  %v1365 = vadd.f32 0.0, %v1364
  %1366 = vmatprep.mubr.bf16.mxu0 0
  %1367 = vmatmul.mubr.bf16.gmra.mrb[0].mxu0 %v1269
  %v1368 = vpop.f32.mrb[0].mxu0
  %v1369 = vadd.f32 0.0, %v1368
  %v1370 = vpop.f32.mrb[0].mxu0
  %v1371 = vadd.f32 0.0, %v1370
  %v1372 = vpop.f32.mrb[0].mxu0
  %v1373 = vadd.f32 0.0, %v1372
  %v1374 = vpop.f32.mrb[0].mxu0
  %v1375 = vadd.f32 0.0, %v1374
  %1376 = vdwg.mxu0
  %v1377 = vadd.f32 %v1100, %v1306
  %v1378 = vadd.f32 %v1101, %v1308
  %v1379 = vadd.f32 %v1102, %v1359
  %v1380 = vadd.f32 %v1103, %v1361
  %v1381 = vadd.f32 %v1104, %v1310
  %v1382 = vadd.f32 %v1105, %v1312
  %v1383 = vadd.f32 %v1106, %v1363
  %v1384 = vadd.f32 %v1107, %v1365
  %v1385 = vadd.f32 %v1108, %v1316
  %v1386 = vadd.f32 %v1109, %v1318
  %v1387 = vadd.f32 %v1110, %v1369
  %v1388 = vadd.f32 %v1111, %v1371
  %v1389 = vadd.f32 %v1112, %v1320
  %v1390 = vadd.f32 %v1113, %v1322
  %v1391 = vadd.f32 %v1114, %v1373
  %v1392 = vadd.f32 %v1115, %v1375
  %v1394 = vlaneseq
  %v1395 = vshrl.u32 %v1394, 7
  %v1396 = vsub.s32 0, %v1395
  %v1397 = vrot.slane %v21, %v1396
  %v1398 = vlaneseq
  %v1399 = vshrl.u32 %v1398, 7
  %v1400 = vsub.s32 1, %v1399
  %v1401 = vrot.slane %v21, %v1400
  %v1402 = vlaneseq
  %v1403 = vshrl.u32 %v1402, 7
  %v1404 = vsub.s32 2, %v1403
  %v1405 = vrot.slane %v21, %v1404
  %v1406 = vlaneseq
  %v1407 = vshrl.u32 %v1406, 7
  %v1408 = vsub.s32 3, %v1407
  %v1409 = vrot.slane %v21, %v1408
  %v1414 = vadd.f32 %v1377, %v1397
  %v1415 = vadd.f32 %v1378, %v1401
  %v1416 = vadd.f32 %v1379, %v1405
  %v1417 = vadd.f32 %v1380, %v1409
  %v1418 = vadd.f32 %v1381, %v1397
  %v1419 = vadd.f32 %v1382, %v1401
  %v1420 = vadd.f32 %v1383, %v1405
  %v1421 = vadd.f32 %v1384, %v1409
  %v1422 = vadd.f32 %v1385, %v1397
  %v1423 = vadd.f32 %v1386, %v1401
  %v1424 = vadd.f32 %v1387, %v1405
  %v1425 = vadd.f32 %v1388, %v1409
  %v1426 = vadd.f32 %v1389, %v1397
  %v1427 = vadd.f32 %v1390, %v1401
  %v1428 = vadd.f32 %v1391, %v1405
  %v1429 = vadd.f32 %v1392, %v1409
  %v1430 = vmax.f32 %v1414, 0.0
  %v1431 = vmax.f32 %v1415, 0.0
  %v1432 = vmax.f32 %v1416, 0.0
  %v1433 = vmax.f32 %v1417, 0.0
  %v1434 = vmax.f32 %v1418, 0.0
  %v1435 = vmax.f32 %v1419, 0.0
  %v1436 = vmax.f32 %v1420, 0.0
  %v1437 = vmax.f32 %v1421, 0.0
  %v1438 = vmax.f32 %v1422, 0.0
  %v1439 = vmax.f32 %v1423, 0.0
  %v1440 = vmax.f32 %v1424, 0.0
  %v1441 = vmax.f32 %v1425, 0.0
  %v1442 = vmax.f32 %v1426, 0.0
  %v1443 = vmax.f32 %v1427, 0.0
  %v1444 = vmax.f32 %v1428, 0.0
  %v1445 = vmax.f32 %v1429, 0.0
  %v1446 = vld [vmem:[%s3] sm:$0xff]
  %v1447 = vld [vmem:[%s3 + $0x8] sm:$0x1f]
  %vm1448 = vcmask 228352
  %v1450 = vsel %vm1448, %v1446, 0
  %v1453 = vsel %vm1448, %v1447, 0
  %vm1455 = vcmask 1043456
  %v1457 = vsel %vm1455, %v1442, 0
  %v1460 = vsel %vm1455, %v1443, 0
  %v1463 = vsel %vm1455, %v1444, 0
  %v1466 = vsel %vm1455, %v1445, 0
  %1468 = vmatprep.subr.mxu0 %v1431
  %1469 = vmatpush1.msra.mxu0 %v1430
  %1470 = vmatprep.subr.mxu0 %v1435
  %1471 = vmatpush1.msra.mxu0 %v1434
  %1472 = vmatprep.subr.mxu0 %v1439
  %1473 = vmatpush1.msra.mxu0 %v1438
  %1474 = vmatprep.subr.mxu0 %v1460
  %1475 = vmatpush1.msra.mxu0 %v1457
  %1476 = vmatprep.subr.mxu0 0.0
  %1477 = vmatpush1.msra.mxu0 0.0
  %1478 = vmatprep.subr.mxu0 0.0
  %1479 = vmatpush1.msra.mxu0 0.0
  %1480 = vmatprep.subr.mxu0 0.0
  %1481 = vmatpush1.msra.mxu0 0.0
  %1482 = vmatprep.subr.mxu0 0.0
  %1483 = vmatpush1.msra.mxu0 0.0
  %1484 = vmatprep.subr.mxu0 0.0
  %1485 = vmatpush1.msra.mxu0 0.0
  %1486 = vmatprep.subr.mxu0 0.0
  %1487 = vmatpush1.msra.mxu0 0.0
  %1488 = vmatprep.subr.mxu0 0.0
  %1489 = vmatpush1.msra.mxu0 0.0
  %1490 = vmatprep.subr.mxu0 0.0
  %1491 = vmatpush1.msra.mxu0 0.0
  %1492 = vmatprep.subr.mxu0 0.0
  %1493 = vmatpush1.msra.mxu0 0.0
  %1494 = vmatprep.subr.mxu0 0.0
  %1495 = vmatpush1.msra.mxu0 0.0
  %1496 = vmatprep.subr.mxu0 0.0
  %1497 = vmatpush1.msra.mxu0 0.0
  %1498 = vmatprep.subr.mxu0 0.0
  %1499 = vmatpush1.msra.mxu0 0.0
  %1500 = vmatprep.subr.mxu0 0.0
  %1501 = vmatpush1.msra.mxu0 0.0
  %1502 = vmatprep.subr.mxu0 0.0
  %1503 = vmatpush1.msra.mxu0 0.0
  %1504 = vmatprep.subr.mxu0 0.0
  %1505 = vmatpush1.msra.mxu0 0.0
  %1506 = vmatprep.subr.mxu0 0.0
  %1507 = vmatpush1.msra.mxu0 0.0
  %1508 = vmatprep.subr.mxu0 0.0
  %1509 = vmatpush1.msra.mxu0 0.0
  %1510 = vmatprep.subr.mxu0 0.0
  %1511 = vmatpush1.msra.mxu0 0.0
  %1512 = vmatprep.subr.mxu0 0.0
  %1513 = vmatpush1.msra.mxu0 0.0
  %1514 = vmatprep.subr.mxu0 0.0
  %1515 = vmatpush1.msra.mxu0 0.0
  %1516 = vmatprep.subr.mxu0 0.0
  %1517 = vmatpush1.msra.mxu0 0.0
  %1518 = vmatprep.subr.mxu0 0.0
  %1519 = vmatpush1.msra.mxu0 0.0
  %1520 = vmatprep.subr.mxu0 0.0
  %1521 = vmatpush1.msra.mxu0 0.0
  %1522 = vmatprep.subr.mxu0 0.0
  %1523 = vmatpush1.msra.mxu0 0.0
  %1524 = vmatprep.subr.mxu0 0.0
  %1525 = vmatpush1.msra.mxu0 0.0
  %1526 = vmatprep.subr.mxu0 0.0
  %1527 = vmatpush1.msra.mxu0 0.0
  %1528 = vmatprep.subr.mxu0 0.0
  %1529 = vmatpush1.msra.mxu0 0.0
  %1530 = vmatprep.subr.mxu0 0.0
  %1531 = vmatpush1.msra.mxu0 0.0
  %1532 = vmatprep.mubr.f32.mxu0 0.0
  %1533 = vmatmul.mubr.f32.gmra.mrb[0].mxu0 %v1450
  %v1534 = vpop.f32.mrb[0].mxu0
  %v1535 = vadd.f32 0.0, %v1534
  %v1536 = vpop.f32.mrb[0].mxu0
  %v1537 = vadd.f32 0.0, %v1536
  %1538 = vmatprep.mubr.f32.mxu0 0.0
  %1539 = vmatmul.mubr.f32.gmra.mrb[0].mxu0 %v1453
  %v1540 = vpop.f32.mrb[0].mxu0
  %v1541 = vadd.f32 0.0, %v1540
  %v1542 = vpop.f32.mrb[0].mxu0
  %v1543 = vadd.f32 0.0, %v1542
  %1544 = vdwg.mxu0
  %1545 = vmatprep.subr.mxu0 %v1433
  %1546 = vmatpush1.msra.mxu0 %v1432
  %1547 = vmatprep.subr.mxu0 %v1437
  %1548 = vmatpush1.msra.mxu0 %v1436
  %1549 = vmatprep.subr.mxu0 %v1441
  %1550 = vmatpush1.msra.mxu0 %v1440
  %1551 = vmatprep.subr.mxu0 %v1466
  %1552 = vmatpush1.msra.mxu0 %v1463
  %1553 = vmatprep.subr.mxu0 0.0
  %1554 = vmatpush1.msra.mxu0 0.0
  %1555 = vmatprep.subr.mxu0 0.0
  %1556 = vmatpush1.msra.mxu0 0.0
  %1557 = vmatprep.subr.mxu0 0.0
  %1558 = vmatpush1.msra.mxu0 0.0
  %1559 = vmatprep.subr.mxu0 0.0
  %1560 = vmatpush1.msra.mxu0 0.0
  %1561 = vmatprep.subr.mxu0 0.0
  %1562 = vmatpush1.msra.mxu0 0.0
  %1563 = vmatprep.subr.mxu0 0.0
  %1564 = vmatpush1.msra.mxu0 0.0
  %1565 = vmatprep.subr.mxu0 0.0
  %1566 = vmatpush1.msra.mxu0 0.0
  %1567 = vmatprep.subr.mxu0 0.0
  %1568 = vmatpush1.msra.mxu0 0.0
  %1569 = vmatprep.subr.mxu0 0.0
  %1570 = vmatpush1.msra.mxu0 0.0
  %1571 = vmatprep.subr.mxu0 0.0
  %1572 = vmatpush1.msra.mxu0 0.0
  %1573 = vmatprep.subr.mxu0 0.0
  %1574 = vmatpush1.msra.mxu0 0.0
  %1575 = vmatprep.subr.mxu0 0.0
  %1576 = vmatpush1.msra.mxu0 0.0
  %1577 = vmatprep.subr.mxu0 0.0
  %1578 = vmatpush1.msra.mxu0 0.0
  %1579 = vmatprep.subr.mxu0 0.0
  %1580 = vmatpush1.msra.mxu0 0.0
  %1581 = vmatprep.subr.mxu0 0.0
  %1582 = vmatpush1.msra.mxu0 0.0
  %1583 = vmatprep.subr.mxu0 0.0
  %1584 = vmatpush1.msra.mxu0 0.0
  %1585 = vmatprep.subr.mxu0 0.0
  %1586 = vmatpush1.msra.mxu0 0.0
  %1587 = vmatprep.subr.mxu0 0.0
  %1588 = vmatpush1.msra.mxu0 0.0
  %1589 = vmatprep.subr.mxu0 0.0
  %1590 = vmatpush1.msra.mxu0 0.0
  %1591 = vmatprep.subr.mxu0 0.0
  %1592 = vmatpush1.msra.mxu0 0.0
  %1593 = vmatprep.subr.mxu0 0.0
  %1594 = vmatpush1.msra.mxu0 0.0
  %1595 = vmatprep.subr.mxu0 0.0
  %1596 = vmatpush1.msra.mxu0 0.0
  %1597 = vmatprep.subr.mxu0 0.0
  %1598 = vmatpush1.msra.mxu0 0.0
  %1599 = vmatprep.subr.mxu0 0.0
  %1600 = vmatpush1.msra.mxu0 0.0
  %1601 = vmatprep.subr.mxu0 0.0
  %1602 = vmatpush1.msra.mxu0 0.0
  %1603 = vmatprep.subr.mxu0 0.0
  %1604 = vmatpush1.msra.mxu0 0.0
  %1605 = vmatprep.subr.mxu0 0.0
  %1606 = vmatpush1.msra.mxu0 0.0
  %1607 = vmatprep.subr.mxu0 0.0
  %1608 = vmatpush1.msra.mxu0 0.0
  %1609 = vmatprep.mubr.f32.mxu0 0.0
  %1610 = vmatmul.mubr.f32.gmra.mrb[0].mxu0 %v1450
  %v1611 = vpop.f32.mrb[0].mxu0
  %v1612 = vadd.f32 0.0, %v1611
  %v1613 = vpop.f32.mrb[0].mxu0
  %v1614 = vadd.f32 0.0, %v1613
  %1615 = vmatprep.mubr.f32.mxu0 0.0
  %1616 = vmatmul.mubr.f32.gmra.mrb[0].mxu0 %v1453
  %v1617 = vpop.f32.mrb[0].mxu0
  %v1618 = vadd.f32 0.0, %v1617
  %v1619 = vpop.f32.mrb[0].mxu0
  %v1620 = vadd.f32 0.0, %v1619
  %1621 = vdwg.mxu0
  %s1622 = scalar_lea.vmem %s3, 16
  %v1623 = vld [vmem:[%s1622] sm:$0xff]
  %v1624 = vld [vmem:[%s1622 + $0x8] sm:$0x1f]
  %v1626 = vsel %vm1448, %v1623, 0
  %v1629 = vsel %vm1448, %v1624, 0
  %1631 = vmatprep.subr.mxu0 %v1431
  %1632 = vmatpush1.msra.mxu0 %v1430
  %1633 = vmatprep.subr.mxu0 %v1435
  %1634 = vmatpush1.msra.mxu0 %v1434
  %1635 = vmatprep.subr.mxu0 %v1439
  %1636 = vmatpush1.msra.mxu0 %v1438
  %1637 = vmatprep.subr.mxu0 %v1460
  %1638 = vmatpush1.msra.mxu0 %v1457
  %1639 = vmatprep.subr.mxu0 0.0
  %1640 = vmatpush1.msra.mxu0 0.0
  %1641 = vmatprep.subr.mxu0 0.0
  %1642 = vmatpush1.msra.mxu0 0.0
  %1643 = vmatprep.subr.mxu0 0.0
  %1644 = vmatpush1.msra.mxu0 0.0
  %1645 = vmatprep.subr.mxu0 0.0
  %1646 = vmatpush1.msra.mxu0 0.0
  %1647 = vmatprep.subr.mxu0 0.0
  %1648 = vmatpush1.msra.mxu0 0.0
  %1649 = vmatprep.subr.mxu0 0.0
  %1650 = vmatpush1.msra.mxu0 0.0
  %1651 = vmatprep.subr.mxu0 0.0
  %1652 = vmatpush1.msra.mxu0 0.0
  %1653 = vmatprep.subr.mxu0 0.0
  %1654 = vmatpush1.msra.mxu0 0.0
  %1655 = vmatprep.subr.mxu0 0.0
  %1656 = vmatpush1.msra.mxu0 0.0
  %1657 = vmatprep.subr.mxu0 0.0
  %1658 = vmatpush1.msra.mxu0 0.0
  %1659 = vmatprep.subr.mxu0 0.0
  %1660 = vmatpush1.msra.mxu0 0.0
  %1661 = vmatprep.subr.mxu0 0.0
  %1662 = vmatpush1.msra.mxu0 0.0
  %1663 = vmatprep.subr.mxu0 0.0
  %1664 = vmatpush1.msra.mxu0 0.0
  %1665 = vmatprep.subr.mxu0 0.0
  %1666 = vmatpush1.msra.mxu0 0.0
  %1667 = vmatprep.subr.mxu0 0.0
  %1668 = vmatpush1.msra.mxu0 0.0
  %1669 = vmatprep.subr.mxu0 0.0
  %1670 = vmatpush1.msra.mxu0 0.0
  %1671 = vmatprep.subr.mxu0 0.0
  %1672 = vmatpush1.msra.mxu0 0.0
  %1673 = vmatprep.subr.mxu0 0.0
  %1674 = vmatpush1.msra.mxu0 0.0
  %1675 = vmatprep.subr.mxu0 0.0
  %1676 = vmatpush1.msra.mxu0 0.0
  %1677 = vmatprep.subr.mxu0 0.0
  %1678 = vmatpush1.msra.mxu0 0.0
  %1679 = vmatprep.subr.mxu0 0.0
  %1680 = vmatpush1.msra.mxu0 0.0
  %1681 = vmatprep.subr.mxu0 0.0
  %1682 = vmatpush1.msra.mxu0 0.0
  %1683 = vmatprep.subr.mxu0 0.0
  %1684 = vmatpush1.msra.mxu0 0.0
  %1685 = vmatprep.subr.mxu0 0.0
  %1686 = vmatpush1.msra.mxu0 0.0
  %1687 = vmatprep.subr.mxu0 0.0
  %1688 = vmatpush1.msra.mxu0 0.0
  %1689 = vmatprep.subr.mxu0 0.0
  %1690 = vmatpush1.msra.mxu0 0.0
  %1691 = vmatprep.subr.mxu0 0.0
  %1692 = vmatpush1.msra.mxu0 0.0
  %1693 = vmatprep.subr.mxu0 0.0
  %1694 = vmatpush1.msra.mxu0 0.0
  %1695 = vmatprep.mubr.f32.mxu0 0.0
  %1696 = vmatmul.mubr.f32.gmra.mrb[0].mxu0 %v1626
  %v1697 = vpop.f32.mrb[0].mxu0
  %v1698 = vadd.f32 0.0, %v1697
  %v1699 = vpop.f32.mrb[0].mxu0
  %v1700 = vadd.f32 0.0, %v1699
  %1701 = vmatprep.mubr.f32.mxu0 0.0
  %1702 = vmatmul.mubr.f32.gmra.mrb[0].mxu0 %v1629
  %v1703 = vpop.f32.mrb[0].mxu0
  %v1704 = vadd.f32 0.0, %v1703
  %v1705 = vpop.f32.mrb[0].mxu0
  %v1706 = vadd.f32 0.0, %v1705
  %1707 = vdwg.mxu0
  %1708 = vmatprep.subr.mxu0 %v1433
  %1709 = vmatpush1.msra.mxu0 %v1432
  %1710 = vmatprep.subr.mxu0 %v1437
  %1711 = vmatpush1.msra.mxu0 %v1436
  %1712 = vmatprep.subr.mxu0 %v1441
  %1713 = vmatpush1.msra.mxu0 %v1440
  %1714 = vmatprep.subr.mxu0 %v1466
  %1715 = vmatpush1.msra.mxu0 %v1463
  %1716 = vmatprep.subr.mxu0 0.0
  %1717 = vmatpush1.msra.mxu0 0.0
  %1718 = vmatprep.subr.mxu0 0.0
  %1719 = vmatpush1.msra.mxu0 0.0
  %1720 = vmatprep.subr.mxu0 0.0
  %1721 = vmatpush1.msra.mxu0 0.0
  %1722 = vmatprep.subr.mxu0 0.0
  %1723 = vmatpush1.msra.mxu0 0.0
  %1724 = vmatprep.subr.mxu0 0.0
  %1725 = vmatpush1.msra.mxu0 0.0
  %1726 = vmatprep.subr.mxu0 0.0
  %1727 = vmatpush1.msra.mxu0 0.0
  %1728 = vmatprep.subr.mxu0 0.0
  %1729 = vmatpush1.msra.mxu0 0.0
  %1730 = vmatprep.subr.mxu0 0.0
  %1731 = vmatpush1.msra.mxu0 0.0
  %1732 = vmatprep.subr.mxu0 0.0
  %1733 = vmatpush1.msra.mxu0 0.0
  %1734 = vmatprep.subr.mxu0 0.0
  %1735 = vmatpush1.msra.mxu0 0.0
  %1736 = vmatprep.subr.mxu0 0.0
  %1737 = vmatpush1.msra.mxu0 0.0
  %1738 = vmatprep.subr.mxu0 0.0
  %1739 = vmatpush1.msra.mxu0 0.0
  %1740 = vmatprep.subr.mxu0 0.0
  %1741 = vmatpush1.msra.mxu0 0.0
  %1742 = vmatprep.subr.mxu0 0.0
  %1743 = vmatpush1.msra.mxu0 0.0
  %1744 = vmatprep.subr.mxu0 0.0
  %1745 = vmatpush1.msra.mxu0 0.0
  %1746 = vmatprep.subr.mxu0 0.0
  %1747 = vmatpush1.msra.mxu0 0.0
  %1748 = vmatprep.subr.mxu0 0.0
  %1749 = vmatpush1.msra.mxu0 0.0
  %1750 = vmatprep.subr.mxu0 0.0
  %1751 = vmatpush1.msra.mxu0 0.0
  %1752 = vmatprep.subr.mxu0 0.0
  %1753 = vmatpush1.msra.mxu0 0.0
  %1754 = vmatprep.subr.mxu0 0.0
  %1755 = vmatpush1.msra.mxu0 0.0
  %1756 = vmatprep.subr.mxu0 0.0
  %1757 = vmatpush1.msra.mxu0 0.0
  %1758 = vmatprep.subr.mxu0 0.0
  %1759 = vmatpush1.msra.mxu0 0.0
  %1760 = vmatprep.subr.mxu0 0.0
  %1761 = vmatpush1.msra.mxu0 0.0
  %1762 = vmatprep.subr.mxu0 0.0
  %1763 = vmatpush1.msra.mxu0 0.0
  %1764 = vmatprep.subr.mxu0 0.0
  %1765 = vmatpush1.msra.mxu0 0.0
  %1766 = vmatprep.subr.mxu0 0.0
  %1767 = vmatpush1.msra.mxu0 0.0
  %1768 = vmatprep.subr.mxu0 0.0
  %1769 = vmatpush1.msra.mxu0 0.0
  %1770 = vmatprep.subr.mxu0 0.0
  %1771 = vmatpush1.msra.mxu0 0.0
  %1772 = vmatprep.mubr.f32.mxu0 0.0
  %1773 = vmatmul.mubr.f32.gmra.mrb[0].mxu0 %v1626
  %v1774 = vpop.f32.mrb[0].mxu0
  %v1775 = vadd.f32 0.0, %v1774
  %v1776 = vpop.f32.mrb[0].mxu0
  %v1777 = vadd.f32 0.0, %v1776
  %1778 = vmatprep.mubr.f32.mxu0 0.0
  %1779 = vmatmul.mubr.f32.gmra.mrb[0].mxu0 %v1629
  %v1780 = vpop.f32.mrb[0].mxu0
  %v1781 = vadd.f32 0.0, %v1780
  %v1782 = vpop.f32.mrb[0].mxu0
  %v1783 = vadd.f32 0.0, %v1782
  %1784 = vdwg.mxu0
  %v1785 = vmax.f32 %v1535, %v1698
  %v1786 = vmax.f32 %v1537, %v1700
  %v1787 = vmax.f32 %v1612, %v1775
  %v1788 = vmax.f32 %v1614, %v1777
  %v1789 = vmax.f32 %v1541, %v1704
  %v1790 = vmax.f32 %v1543, %v1706
  %v1791 = vmax.f32 %v1618, %v1781
  %v1792 = vmax.f32 %v1620, %v1783
  %s1793 = scalar_lea.vmem %s3, 32
  %v1794 = vld [vmem:[%s1793] sm:$0xff]
  %v1795 = vld [vmem:[%s1793 + $0x8] sm:$0x1f]
  %v1797 = vsel %vm1448, %v1794, 0
  %v1800 = vsel %vm1448, %v1795, 0
  %1802 = vmatprep.subr.mxu0 %v1431
  %1803 = vmatpush1.msra.mxu0 %v1430
  %1804 = vmatprep.subr.mxu0 %v1435
  %1805 = vmatpush1.msra.mxu0 %v1434
  %1806 = vmatprep.subr.mxu0 %v1439
  %1807 = vmatpush1.msra.mxu0 %v1438
  %1808 = vmatprep.subr.mxu0 %v1460
  %1809 = vmatpush1.msra.mxu0 %v1457
  %1810 = vmatprep.subr.mxu0 0.0
  %1811 = vmatpush1.msra.mxu0 0.0
  %1812 = vmatprep.subr.mxu0 0.0
  %1813 = vmatpush1.msra.mxu0 0.0
  %1814 = vmatprep.subr.mxu0 0.0
  %1815 = vmatpush1.msra.mxu0 0.0
  %1816 = vmatprep.subr.mxu0 0.0
  %1817 = vmatpush1.msra.mxu0 0.0
  %1818 = vmatprep.subr.mxu0 0.0
  %1819 = vmatpush1.msra.mxu0 0.0
  %1820 = vmatprep.subr.mxu0 0.0
  %1821 = vmatpush1.msra.mxu0 0.0
  %1822 = vmatprep.subr.mxu0 0.0
  %1823 = vmatpush1.msra.mxu0 0.0
  %1824 = vmatprep.subr.mxu0 0.0
  %1825 = vmatpush1.msra.mxu0 0.0
  %1826 = vmatprep.subr.mxu0 0.0
  %1827 = vmatpush1.msra.mxu0 0.0
  %1828 = vmatprep.subr.mxu0 0.0
  %1829 = vmatpush1.msra.mxu0 0.0
  %1830 = vmatprep.subr.mxu0 0.0
  %1831 = vmatpush1.msra.mxu0 0.0
  %1832 = vmatprep.subr.mxu0 0.0
  %1833 = vmatpush1.msra.mxu0 0.0
  %1834 = vmatprep.subr.mxu0 0.0
  %1835 = vmatpush1.msra.mxu0 0.0
  %1836 = vmatprep.subr.mxu0 0.0
  %1837 = vmatpush1.msra.mxu0 0.0
  %1838 = vmatprep.subr.mxu0 0.0
  %1839 = vmatpush1.msra.mxu0 0.0
  %1840 = vmatprep.subr.mxu0 0.0
  %1841 = vmatpush1.msra.mxu0 0.0
  %1842 = vmatprep.subr.mxu0 0.0
  %1843 = vmatpush1.msra.mxu0 0.0
  %1844 = vmatprep.subr.mxu0 0.0
  %1845 = vmatpush1.msra.mxu0 0.0
  %1846 = vmatprep.subr.mxu0 0.0
  %1847 = vmatpush1.msra.mxu0 0.0
  %1848 = vmatprep.subr.mxu0 0.0
  %1849 = vmatpush1.msra.mxu0 0.0
  %1850 = vmatprep.subr.mxu0 0.0
  %1851 = vmatpush1.msra.mxu0 0.0
  %1852 = vmatprep.subr.mxu0 0.0
  %1853 = vmatpush1.msra.mxu0 0.0
  %1854 = vmatprep.subr.mxu0 0.0
  %1855 = vmatpush1.msra.mxu0 0.0
  %1856 = vmatprep.subr.mxu0 0.0
  %1857 = vmatpush1.msra.mxu0 0.0
  %1858 = vmatprep.subr.mxu0 0.0
  %1859 = vmatpush1.msra.mxu0 0.0
  %1860 = vmatprep.subr.mxu0 0.0
  %1861 = vmatpush1.msra.mxu0 0.0
  %1862 = vmatprep.subr.mxu0 0.0
  %1863 = vmatpush1.msra.mxu0 0.0
  %1864 = vmatprep.subr.mxu0 0.0
  %1865 = vmatpush1.msra.mxu0 0.0
  %1866 = vmatprep.mubr.f32.mxu0 0.0
  %1867 = vmatmul.mubr.f32.gmra.mrb[0].mxu0 %v1797
  %v1868 = vpop.f32.mrb[0].mxu0
  %v1869 = vadd.f32 0.0, %v1868
  %v1870 = vpop.f32.mrb[0].mxu0
  %v1871 = vadd.f32 0.0, %v1870
  %1872 = vmatprep.mubr.f32.mxu0 0.0
  %1873 = vmatmul.mubr.f32.gmra.mrb[0].mxu0 %v1800
  %v1874 = vpop.f32.mrb[0].mxu0
  %v1875 = vadd.f32 0.0, %v1874
  %v1876 = vpop.f32.mrb[0].mxu0
  %v1877 = vadd.f32 0.0, %v1876
  %1878 = vdwg.mxu0
  %1879 = vmatprep.subr.mxu0 %v1433
  %1880 = vmatpush1.msra.mxu0 %v1432
  %1881 = vmatprep.subr.mxu0 %v1437
  %1882 = vmatpush1.msra.mxu0 %v1436
  %1883 = vmatprep.subr.mxu0 %v1441
  %1884 = vmatpush1.msra.mxu0 %v1440
  %1885 = vmatprep.subr.mxu0 %v1466
  %1886 = vmatpush1.msra.mxu0 %v1463
  %1887 = vmatprep.subr.mxu0 0.0
  %1888 = vmatpush1.msra.mxu0 0.0
  %1889 = vmatprep.subr.mxu0 0.0
  %1890 = vmatpush1.msra.mxu0 0.0
  %1891 = vmatprep.subr.mxu0 0.0
  %1892 = vmatpush1.msra.mxu0 0.0
  %1893 = vmatprep.subr.mxu0 0.0
  %1894 = vmatpush1.msra.mxu0 0.0
  %1895 = vmatprep.subr.mxu0 0.0
  %1896 = vmatpush1.msra.mxu0 0.0
  %1897 = vmatprep.subr.mxu0 0.0
  %1898 = vmatpush1.msra.mxu0 0.0
  %1899 = vmatprep.subr.mxu0 0.0
  %1900 = vmatpush1.msra.mxu0 0.0
  %1901 = vmatprep.subr.mxu0 0.0
  %1902 = vmatpush1.msra.mxu0 0.0
  %1903 = vmatprep.subr.mxu0 0.0
  %1904 = vmatpush1.msra.mxu0 0.0
  %1905 = vmatprep.subr.mxu0 0.0
  %1906 = vmatpush1.msra.mxu0 0.0
  %1907 = vmatprep.subr.mxu0 0.0
  %1908 = vmatpush1.msra.mxu0 0.0
  %1909 = vmatprep.subr.mxu0 0.0
  %1910 = vmatpush1.msra.mxu0 0.0
  %1911 = vmatprep.subr.mxu0 0.0
  %1912 = vmatpush1.msra.mxu0 0.0
  %1913 = vmatprep.subr.mxu0 0.0
  %1914 = vmatpush1.msra.mxu0 0.0
  %1915 = vmatprep.subr.mxu0 0.0
  %1916 = vmatpush1.msra.mxu0 0.0
  %1917 = vmatprep.subr.mxu0 0.0
  %1918 = vmatpush1.msra.mxu0 0.0
  %1919 = vmatprep.subr.mxu0 0.0
  %1920 = vmatpush1.msra.mxu0 0.0
  %1921 = vmatprep.subr.mxu0 0.0
  %1922 = vmatpush1.msra.mxu0 0.0
  %1923 = vmatprep.subr.mxu0 0.0
  %1924 = vmatpush1.msra.mxu0 0.0
  %1925 = vmatprep.subr.mxu0 0.0
  %1926 = vmatpush1.msra.mxu0 0.0
  %1927 = vmatprep.subr.mxu0 0.0
  %1928 = vmatpush1.msra.mxu0 0.0
  %1929 = vmatprep.subr.mxu0 0.0
  %1930 = vmatpush1.msra.mxu0 0.0
  %1931 = vmatprep.subr.mxu0 0.0
  %1932 = vmatpush1.msra.mxu0 0.0
  %1933 = vmatprep.subr.mxu0 0.0
  %1934 = vmatpush1.msra.mxu0 0.0
  %1935 = vmatprep.subr.mxu0 0.0
  %1936 = vmatpush1.msra.mxu0 0.0
  %1937 = vmatprep.subr.mxu0 0.0
  %1938 = vmatpush1.msra.mxu0 0.0
  %1939 = vmatprep.subr.mxu0 0.0
  %1940 = vmatpush1.msra.mxu0 0.0
  %1941 = vmatprep.subr.mxu0 0.0
  %1942 = vmatpush1.msra.mxu0 0.0
  %1943 = vmatprep.mubr.f32.mxu0 0.0
  %1944 = vmatmul.mubr.f32.gmra.mrb[0].mxu0 %v1797
  %v1945 = vpop.f32.mrb[0].mxu0
  %v1946 = vadd.f32 0.0, %v1945
  %v1947 = vpop.f32.mrb[0].mxu0
  %v1948 = vadd.f32 0.0, %v1947
  %1949 = vmatprep.mubr.f32.mxu0 0.0
  %1950 = vmatmul.mubr.f32.gmra.mrb[0].mxu0 %v1800
  %v1951 = vpop.f32.mrb[0].mxu0
  %v1952 = vadd.f32 0.0, %v1951
  %v1953 = vpop.f32.mrb[0].mxu0
  %v1954 = vadd.f32 0.0, %v1953
  %1955 = vdwg.mxu0
  %v1956 = vmax.f32 %v1785, %v1869
  %v1957 = vmax.f32 %v1786, %v1871
  %v1958 = vmax.f32 %v1787, %v1946
  %v1959 = vmax.f32 %v1788, %v1948
  %v1960 = vmax.f32 %v1789, %v1875
  %v1961 = vmax.f32 %v1790, %v1877
  %v1962 = vmax.f32 %v1791, %v1952
  %v1963 = vmax.f32 %v1792, %v1954
  %v1964 = vld [vmem:[%s4] sm:$0xff]
  %v1965 = vld [vmem:[%s4 + $0x8] sm:$0xff]
  %v1966 = vld [vmem:[%s4 + $0x10] sm:$0xff]
  %v1967 = vld [vmem:[%s4 + $0x18] sm:$0xff]
  %v1968 = vld [vmem:[%s4 + $0x20] sm:$0xff]
  %v1969 = vld [vmem:[%s4 + $0x28] sm:$0xff]
  %v1970 = vld [vmem:[%s4 + $0x30] sm:$0xff]
  %v1971 = vld [vmem:[%s4 + $0x38] sm:$0xff]
  %v1972 = vld [vmem:[%s4 + $0x40] sm:$0xff]
  %v1973 = vld [vmem:[%s4 + $0x48] sm:$0xff]
  %v1974 = vld [vmem:[%s4 + $0x50] sm:$0xff]
  %v1975 = vld [vmem:[%s4 + $0x58] sm:$0xff]
  %v1976 = vld [vmem:[%s4 + $0x60] sm:$0xff]
  %v1977 = vld [vmem:[%s4 + $0x68] sm:$0xff]
  %v1978 = vld [vmem:[%s4 + $0x70] sm:$0xff]
  %v1979 = vld [vmem:[%s4 + $0x78] sm:$0xff]
  %v1980 = vld [vmem:[%s4 + $0x80] sm:$0xff]
  %v1981 = vld [vmem:[%s4 + $0x88] sm:$0xff]
  %v1982 = vld [vmem:[%s4 + $0x90] sm:$0xff]
  %v1983 = vld [vmem:[%s4 + $0x98] sm:$0xff]
  %v1984 = vld [vmem:[%s4 + $0xa0] sm:$0xff]
  %v1985 = vld [vmem:[%s4 + $0xa8] sm:$0xff]
  %v1986 = vld [vmem:[%s4 + $0xb0] sm:$0xff]
  %v1987 = vld [vmem:[%s4 + $0xb8] sm:$0xff]
  %v1988 = vld [vmem:[%s4 + $0xc0] sm:$0xff]
  %v1989 = vld [vmem:[%s4 + $0xc8] sm:$0xff]
  %v1990 = vld [vmem:[%s4 + $0xd0] sm:$0xff]
  %v1991 = vld [vmem:[%s4 + $0xd8] sm:$0xff]
  %v1992 = vld [vmem:[%s4 + $0xe0] sm:$0xff]
  %v1993 = vld [vmem:[%s4 + $0xe8] sm:$0xff]
  %v1994 = vld [vmem:[%s4 + $0xf0] sm:$0xff]
  %v1995 = vld [vmem:[%s4 + $0xf8] sm:$0xff]
  %v1996 = vld [vmem:[%s4 + $0x100] sm:$0xff]
  %v1997 = vld [vmem:[%s4 + $0x108] sm:$0xff]
  %v1998 = vld [vmem:[%s4 + $0x110] sm:$0xff]
  %v1999 = vld [vmem:[%s4 + $0x118] sm:$0xff]
  %v2000 = vld [vmem:[%s4 + $0x120] sm:$0xff]
  %v2001 = vld [vmem:[%s4 + $0x128] sm:$0xff]
  %v2002 = vld [vmem:[%s4 + $0x130] sm:$0xff]
  %v2003 = vld [vmem:[%s4 + $0x138] sm:$0xff]
  %v2004 = vld [vmem:[%s4 + $0x140] sm:$0xff]
  %v2005 = vld [vmem:[%s4 + $0x148] sm:$0xff]
  %v2006 = vld [vmem:[%s4 + $0x150] sm:$0xff]
  %v2007 = vld [vmem:[%s4 + $0x158] sm:$0xff]
  %v2008 = vld [vmem:[%s4 + $0x160] sm:$0xff]
  %v2009 = vld [vmem:[%s4 + $0x168] sm:$0xff]
  %v2010 = vld [vmem:[%s4 + $0x170] sm:$0xff]
  %v2011 = vld [vmem:[%s4 + $0x178] sm:$0xff]
  %v2012 = vld [vmem:[%s4 + $0x180] sm:$0xff]
  %v2013 = vld [vmem:[%s4 + $0x188] sm:$0xff]
  %v2014 = vld [vmem:[%s4 + $0x190] sm:$0xff]
  %v2015 = vld [vmem:[%s4 + $0x198] sm:$0xff]
  %v2016 = vld [vmem:[%s4 + $0x1a0] sm:$0xff]
  %v2017 = vld [vmem:[%s4 + $0x1a8] sm:$0xff]
  %v2018 = vld [vmem:[%s4 + $0x1b0] sm:$0xff]
  %v2019 = vld [vmem:[%s4 + $0x1b8] sm:$0xff]
  %v2020 = vld [vmem:[%s4 + $0x1c0] sm:$0xff]
  %v2021 = vld [vmem:[%s4 + $0x1c8] sm:$0xff]
  %v2022 = vld [vmem:[%s4 + $0x1d0] sm:$0xff]
  %v2023 = vld [vmem:[%s4 + $0x1d8] sm:$0xff]
  %v2024 = vld [vmem:[%s4 + $0x1e0] sm:$0xff]
  %v2025 = vld [vmem:[%s4 + $0x1e8] sm:$0xff]
  %v2026 = vld [vmem:[%s4 + $0x1f0] sm:$0xff]
  %v2027 = vld [vmem:[%s4 + $0x1f8] sm:$0xff]
  %v2028 = vld [vmem:[%s4 + $0x200] sm:$0xff]
  %v2029 = vld [vmem:[%s4 + $0x208] sm:$0xff]
  %v2030 = vld [vmem:[%s4 + $0x210] sm:$0xff]
  %v2031 = vld [vmem:[%s4 + $0x218] sm:$0xff]
  %v2032 = vld [vmem:[%s4 + $0x220] sm:$0xff]
  %v2033 = vld [vmem:[%s4 + $0x228] sm:$0xff]
  %v2034 = vld [vmem:[%s4 + $0x230] sm:$0xff]
  %v2035 = vld [vmem:[%s4 + $0x238] sm:$0xff]
  %v2036 = vld [vmem:[%s4 + $0x240] sm:$0xff]
  %v2037 = vld [vmem:[%s4 + $0x248] sm:$0xff]
  %v2038 = vld [vmem:[%s4 + $0x250] sm:$0xff]
  %v2039 = vld [vmem:[%s4 + $0x258] sm:$0xff]
  %v2040 = vld [vmem:[%s4 + $0x260] sm:$0xff]
  %v2041 = vld [vmem:[%s4 + $0x268] sm:$0xff]
  %v2042 = vld [vmem:[%s4 + $0x270] sm:$0xff]
  %v2043 = vld [vmem:[%s4 + $0x278] sm:$0xff]
  %v2044 = vld [vmem:[%s4 + $0x280] sm:$0xff]
  %v2045 = vld [vmem:[%s4 + $0x288] sm:$0xff]
  %v2046 = vld [vmem:[%s4 + $0x290] sm:$0xff]
  %v2047 = vld [vmem:[%s4 + $0x298] sm:$0xff]
  %v2048 = vld [vmem:[%s4 + $0x2a0] sm:$0xff]
  %v2049 = vld [vmem:[%s4 + $0x2a8] sm:$0xff]
  %v2050 = vld [vmem:[%s4 + $0x2b0] sm:$0xff]
  %v2051 = vld [vmem:[%s4 + $0x2b8] sm:$0xff]
  %v2052 = vld [vmem:[%s4 + $0x2c0] sm:$0xff]
  %v2053 = vld [vmem:[%s4 + $0x2c8] sm:$0xff]
  %v2054 = vld [vmem:[%s4 + $0x2d0] sm:$0xff]
  %v2055 = vld [vmem:[%s4 + $0x2d8] sm:$0xff]
  %v2056 = vld [vmem:[%s4 + $0x2e0] sm:$0xff]
  %v2057 = vld [vmem:[%s4 + $0x2e8] sm:$0xff]
  %v2058 = vld [vmem:[%s4 + $0x2f0] sm:$0xff]
  %v2059 = vld [vmem:[%s4 + $0x2f8] sm:$0xff]
  %v2060 = vld [vmem:[%s4 + $0x300] sm:$0xff]
  %v2061 = vld [vmem:[%s4 + $0x308] sm:$0xff]
  %v2062 = vld [vmem:[%s4 + $0x310] sm:$0xff]
  %v2063 = vld [vmem:[%s4 + $0x318] sm:$0xff]
  %v2064 = vld [vmem:[%s4 + $0x320] sm:$0xff]
  %v2065 = vld [vmem:[%s4 + $0x328] sm:$0xff]
  %v2066 = vld [vmem:[%s4 + $0x330] sm:$0xff]
  %v2067 = vld [vmem:[%s4 + $0x338] sm:$0xff]
  %v2068 = vld [vmem:[%s4 + $0x340] sm:$0xff]
  %v2069 = vld [vmem:[%s4 + $0x348] sm:$0xff]
  %v2070 = vld [vmem:[%s4 + $0x350] sm:$0xff]
  %v2071 = vld [vmem:[%s4 + $0x358] sm:$0xff]
  %v2072 = vld [vmem:[%s4 + $0x360] sm:$0xff]
  %v2073 = vld [vmem:[%s4 + $0x368] sm:$0xff]
  %v2074 = vld [vmem:[%s4 + $0x370] sm:$0xff]
  %v2075 = vld [vmem:[%s4 + $0x378] sm:$0xff]
  %vm2076 = vcmask 523264
  %v2078 = vsel %vm2076, %v1959, 0
  %v2081 = vsel %vm2076, %v1963, 0
  %2083 = vmatprep.subr.mxu0 %v1965
  %2084 = vmatpush1.msra.mxu0 %v1964
  %2085 = vmatprep.subr.mxu0 %v1967
  %2086 = vmatpush1.msra.mxu0 %v1966
  %2087 = vmatprep.subr.mxu0 %v1969
  %2088 = vmatpush1.msra.mxu0 %v1968
  %2089 = vmatprep.subr.mxu0 %v1971
  %2090 = vmatpush1.msra.mxu0 %v1970
  %2091 = vmatprep.subr.mxu0 %v1973
  %2092 = vmatpush1.msra.mxu0 %v1972
  %2093 = vmatprep.subr.mxu0 %v1975
  %2094 = vmatpush1.msra.mxu0 %v1974
  %2095 = vmatprep.subr.mxu0 %v1977
  %2096 = vmatpush1.msra.mxu0 %v1976
  %2097 = vmatprep.subr.mxu0 %v1979
  %2098 = vmatpush1.msra.mxu0 %v1978
  %2099 = vmatprep.subr.mxu0 %v1981
  %2100 = vmatpush1.msra.mxu0 %v1980
  %2101 = vmatprep.subr.mxu0 %v1983
  %2102 = vmatpush1.msra.mxu0 %v1982
  %2103 = vmatprep.subr.mxu0 %v1985
  %2104 = vmatpush1.msra.mxu0 %v1984
  %2105 = vmatprep.subr.mxu0 %v1987
  %2106 = vmatpush1.msra.mxu0 %v1986
  %2107 = vmatprep.subr.mxu0 %v1989
  %2108 = vmatpush1.msra.mxu0 %v1988
  %2109 = vmatprep.subr.mxu0 %v1991
  %2110 = vmatpush1.msra.mxu0 %v1990
  %2111 = vmatprep.subr.mxu0 %v1993
  %2112 = vmatpush1.msra.mxu0 %v1992
  %2113 = vmatprep.subr.mxu0 %v1995
  %2114 = vmatpush1.msra.mxu0 %v1994
  %2115 = vmatprep.subr.mxu0 %v1997
  %2116 = vmatpush1.msra.mxu0 %v1996
  %2117 = vmatprep.subr.mxu0 %v1999
  %2118 = vmatpush1.msra.mxu0 %v1998
  %2119 = vmatprep.subr.mxu0 %v2001
  %2120 = vmatpush1.msra.mxu0 %v2000
  %2121 = vmatprep.subr.mxu0 %v2003
  %2122 = vmatpush1.msra.mxu0 %v2002
  %2123 = vmatprep.subr.mxu0 %v2005
  %2124 = vmatpush1.msra.mxu0 %v2004
  %2125 = vmatprep.subr.mxu0 %v2007
  %2126 = vmatpush1.msra.mxu0 %v2006
  %2127 = vmatprep.subr.mxu0 %v2009
  %2128 = vmatpush1.msra.mxu0 %v2008
  %2129 = vmatprep.subr.mxu0 %v2011
  %2130 = vmatpush1.msra.mxu0 %v2010
  %2131 = vmatprep.subr.mxu0 %v2013
  %2132 = vmatpush1.msra.mxu0 %v2012
  %2133 = vmatprep.subr.mxu0 %v2015
  %2134 = vmatpush1.msra.mxu0 %v2014
  %2135 = vmatprep.subr.mxu0 %v2017
  %2136 = vmatpush1.msra.mxu0 %v2016
  %2137 = vmatprep.subr.mxu0 %v2019
  %2138 = vmatpush1.msra.mxu0 %v2018
  %2139 = vmatprep.subr.mxu0 %v2021
  %2140 = vmatpush1.msra.mxu0 %v2020
  %2141 = vmatprep.subr.mxu0 %v2023
  %2142 = vmatpush1.msra.mxu0 %v2022
  %2143 = vmatprep.subr.mxu0 %v2025
  %2144 = vmatpush1.msra.mxu0 %v2024
  %2145 = vmatprep.subr.mxu0 %v2027
  %2146 = vmatpush1.msra.mxu0 %v2026
  %2147 = vmatprep.mubr.f32.mxu0 %v1957
  %2148 = vmatmul.mubr.f32.gmra.mrb[0].mxu0 %v1956
  %v2149 = vpop.f32.mrb[0].mxu0
  %v2150 = vadd.f32 0.0, %v2149
  %v2151 = vpop.f32.mrb[0].mxu0
  %v2152 = vadd.f32 0.0, %v2151
  %2153 = vmatprep.mubr.f32.mxu0 %v1961
  %2154 = vmatmul.mubr.f32.gmra.mrb[0].mxu0 %v1960
  %v2155 = vpop.f32.mrb[0].mxu0
  %v2156 = vadd.f32 0.0, %v2155
  %v2157 = vpop.f32.mrb[0].mxu0
  %v2158 = vadd.f32 0.0, %v2157
  %2159 = vdwg.mxu0
  %2160 = vmatprep.subr.mxu0 %v2029
  %2161 = vmatpush1.msra.mxu0 %v2028
  %2162 = vmatprep.subr.mxu0 %v2031
  %2163 = vmatpush1.msra.mxu0 %v2030
  %2164 = vmatprep.subr.mxu0 %v2033
  %2165 = vmatpush1.msra.mxu0 %v2032
  %2166 = vmatprep.subr.mxu0 %v2035
  %2167 = vmatpush1.msra.mxu0 %v2034
  %2168 = vmatprep.subr.mxu0 %v2037
  %2169 = vmatpush1.msra.mxu0 %v2036
  %2170 = vmatprep.subr.mxu0 %v2039
  %2171 = vmatpush1.msra.mxu0 %v2038
  %2172 = vmatprep.subr.mxu0 %v2041
  %2173 = vmatpush1.msra.mxu0 %v2040
  %2174 = vmatprep.subr.mxu0 %v2043
  %2175 = vmatpush1.msra.mxu0 %v2042
  %2176 = vmatprep.subr.mxu0 %v2045
  %2177 = vmatpush1.msra.mxu0 %v2044
  %2178 = vmatprep.subr.mxu0 %v2047
  %2179 = vmatpush1.msra.mxu0 %v2046
  %2180 = vmatprep.subr.mxu0 %v2049
  %2181 = vmatpush1.msra.mxu0 %v2048
  %2182 = vmatprep.subr.mxu0 %v2051
  %2183 = vmatpush1.msra.mxu0 %v2050
  %2184 = vmatprep.subr.mxu0 %v2053
  %2185 = vmatpush1.msra.mxu0 %v2052
  %2186 = vmatprep.subr.mxu0 %v2055
  %2187 = vmatpush1.msra.mxu0 %v2054
  %2188 = vmatprep.subr.mxu0 %v2057
  %2189 = vmatpush1.msra.mxu0 %v2056
  %2190 = vmatprep.subr.mxu0 %v2059
  %2191 = vmatpush1.msra.mxu0 %v2058
  %2192 = vmatprep.subr.mxu0 %v2061
  %2193 = vmatpush1.msra.mxu0 %v2060
  %2194 = vmatprep.subr.mxu0 %v2063
  %2195 = vmatpush1.msra.mxu0 %v2062
  %2196 = vmatprep.subr.mxu0 %v2065
  %2197 = vmatpush1.msra.mxu0 %v2064
  %2198 = vmatprep.subr.mxu0 %v2067
  %2199 = vmatpush1.msra.mxu0 %v2066
  %2200 = vmatprep.subr.mxu0 %v2069
  %2201 = vmatpush1.msra.mxu0 %v2068
  %2202 = vmatprep.subr.mxu0 %v2071
  %2203 = vmatpush1.msra.mxu0 %v2070
  %2204 = vmatprep.subr.mxu0 %v2073
  %2205 = vmatpush1.msra.mxu0 %v2072
  %2206 = vmatprep.subr.mxu0 %v2075
  %2207 = vmatpush1.msra.mxu0 %v2074
  %2208 = vmatprep.subr.mxu0 0.0
  %2209 = vmatpush1.msra.mxu0 0.0
  %2210 = vmatprep.subr.mxu0 0.0
  %2211 = vmatpush1.msra.mxu0 0.0
  %2212 = vmatprep.subr.mxu0 0.0
  %2213 = vmatpush1.msra.mxu0 0.0
  %2214 = vmatprep.subr.mxu0 0.0
  %2215 = vmatpush1.msra.mxu0 0.0
  %2216 = vmatprep.subr.mxu0 0.0
  %2217 = vmatpush1.msra.mxu0 0.0
  %2218 = vmatprep.subr.mxu0 0.0
  %2219 = vmatpush1.msra.mxu0 0.0
  %2220 = vmatprep.subr.mxu0 0.0
  %2221 = vmatpush1.msra.mxu0 0.0
  %2222 = vmatprep.subr.mxu0 0.0
  %2223 = vmatpush1.msra.mxu0 0.0
  %2224 = vmatprep.mubr.f32.mxu0 %v2078
  %2225 = vmatmul.mubr.f32.gmra.mrb[0].mxu0 %v1958
  %v2226 = vpop.f32.mrb[0].mxu0
  %v2227 = vadd.f32 %v2150, %v2226
  %v2228 = vpop.f32.mrb[0].mxu0
  %v2229 = vadd.f32 %v2152, %v2228
  %2230 = vmatprep.mubr.f32.mxu0 %v2081
  %2231 = vmatmul.mubr.f32.gmra.mrb[0].mxu0 %v1962
  %v2232 = vpop.f32.mrb[0].mxu0
  %v2233 = vadd.f32 %v2156, %v2232
  %v2234 = vpop.f32.mrb[0].mxu0
  %v2235 = vadd.f32 %v2158, %v2234
  %2236 = vdwg.mxu0
  %s2237 = scalar_lea.vmem %s4, 896
  %v2238 = vld [vmem:[%s2237] sm:$0xff]
  %v2239 = vld [vmem:[%s2237 + $0x8] sm:$0xff]
  %v2240 = vld [vmem:[%s2237 + $0x10] sm:$0xff]
  %v2241 = vld [vmem:[%s2237 + $0x18] sm:$0xff]
  %v2242 = vld [vmem:[%s2237 + $0x20] sm:$0xff]
  %v2243 = vld [vmem:[%s2237 + $0x28] sm:$0xff]
  %v2244 = vld [vmem:[%s2237 + $0x30] sm:$0xff]
  %v2245 = vld [vmem:[%s2237 + $0x38] sm:$0xff]
  %v2246 = vld [vmem:[%s2237 + $0x40] sm:$0xff]
  %v2247 = vld [vmem:[%s2237 + $0x48] sm:$0xff]
  %v2248 = vld [vmem:[%s2237 + $0x50] sm:$0xff]
  %v2249 = vld [vmem:[%s2237 + $0x58] sm:$0xff]
  %v2250 = vld [vmem:[%s2237 + $0x60] sm:$0xff]
  %v2251 = vld [vmem:[%s2237 + $0x68] sm:$0xff]
  %v2252 = vld [vmem:[%s2237 + $0x70] sm:$0xff]
  %v2253 = vld [vmem:[%s2237 + $0x78] sm:$0xff]
  %v2254 = vld [vmem:[%s2237 + $0x80] sm:$0xff]
  %v2255 = vld [vmem:[%s2237 + $0x88] sm:$0xff]
  %v2256 = vld [vmem:[%s2237 + $0x90] sm:$0xff]
  %v2257 = vld [vmem:[%s2237 + $0x98] sm:$0xff]
  %v2258 = vld [vmem:[%s2237 + $0xa0] sm:$0xff]
  %v2259 = vld [vmem:[%s2237 + $0xa8] sm:$0xff]
  %v2260 = vld [vmem:[%s2237 + $0xb0] sm:$0xff]
  %v2261 = vld [vmem:[%s2237 + $0xb8] sm:$0xff]
  %v2262 = vld [vmem:[%s2237 + $0xc0] sm:$0xff]
  %v2263 = vld [vmem:[%s2237 + $0xc8] sm:$0xff]
  %v2264 = vld [vmem:[%s2237 + $0xd0] sm:$0xff]
  %v2265 = vld [vmem:[%s2237 + $0xd8] sm:$0xff]
  %v2266 = vld [vmem:[%s2237 + $0xe0] sm:$0xff]
  %v2267 = vld [vmem:[%s2237 + $0xe8] sm:$0xff]
  %v2268 = vld [vmem:[%s2237 + $0xf0] sm:$0xff]
  %v2269 = vld [vmem:[%s2237 + $0xf8] sm:$0xff]
  %v2270 = vld [vmem:[%s2237 + $0x100] sm:$0xff]
  %v2271 = vld [vmem:[%s2237 + $0x108] sm:$0xff]
  %v2272 = vld [vmem:[%s2237 + $0x110] sm:$0xff]
  %v2273 = vld [vmem:[%s2237 + $0x118] sm:$0xff]
  %v2274 = vld [vmem:[%s2237 + $0x120] sm:$0xff]
  %v2275 = vld [vmem:[%s2237 + $0x128] sm:$0xff]
  %v2276 = vld [vmem:[%s2237 + $0x130] sm:$0xff]
  %v2277 = vld [vmem:[%s2237 + $0x138] sm:$0xff]
  %v2278 = vld [vmem:[%s2237 + $0x140] sm:$0xff]
  %v2279 = vld [vmem:[%s2237 + $0x148] sm:$0xff]
  %v2280 = vld [vmem:[%s2237 + $0x150] sm:$0xff]
  %v2281 = vld [vmem:[%s2237 + $0x158] sm:$0xff]
  %v2282 = vld [vmem:[%s2237 + $0x160] sm:$0xff]
  %v2283 = vld [vmem:[%s2237 + $0x168] sm:$0xff]
  %v2284 = vld [vmem:[%s2237 + $0x170] sm:$0xff]
  %v2285 = vld [vmem:[%s2237 + $0x178] sm:$0xff]
  %v2286 = vld [vmem:[%s2237 + $0x180] sm:$0xff]
  %v2287 = vld [vmem:[%s2237 + $0x188] sm:$0xff]
  %v2288 = vld [vmem:[%s2237 + $0x190] sm:$0xff]
  %v2289 = vld [vmem:[%s2237 + $0x198] sm:$0xff]
  %v2290 = vld [vmem:[%s2237 + $0x1a0] sm:$0xff]
  %v2291 = vld [vmem:[%s2237 + $0x1a8] sm:$0xff]
  %v2292 = vld [vmem:[%s2237 + $0x1b0] sm:$0xff]
  %v2293 = vld [vmem:[%s2237 + $0x1b8] sm:$0xff]
  %v2294 = vld [vmem:[%s2237 + $0x1c0] sm:$0xff]
  %v2295 = vld [vmem:[%s2237 + $0x1c8] sm:$0xff]
  %v2296 = vld [vmem:[%s2237 + $0x1d0] sm:$0xff]
  %v2297 = vld [vmem:[%s2237 + $0x1d8] sm:$0xff]
  %v2298 = vld [vmem:[%s2237 + $0x1e0] sm:$0xff]
  %v2299 = vld [vmem:[%s2237 + $0x1e8] sm:$0xff]
  %v2300 = vld [vmem:[%s2237 + $0x1f0] sm:$0xff]
  %v2301 = vld [vmem:[%s2237 + $0x1f8] sm:$0xff]
  %v2302 = vld [vmem:[%s2237 + $0x200] sm:$0xff]
  %v2303 = vld [vmem:[%s2237 + $0x208] sm:$0xff]
  %v2304 = vld [vmem:[%s2237 + $0x210] sm:$0xff]
  %v2305 = vld [vmem:[%s2237 + $0x218] sm:$0xff]
  %v2306 = vld [vmem:[%s2237 + $0x220] sm:$0xff]
  %v2307 = vld [vmem:[%s2237 + $0x228] sm:$0xff]
  %v2308 = vld [vmem:[%s2237 + $0x230] sm:$0xff]
  %v2309 = vld [vmem:[%s2237 + $0x238] sm:$0xff]
  %v2310 = vld [vmem:[%s2237 + $0x240] sm:$0xff]
  %v2311 = vld [vmem:[%s2237 + $0x248] sm:$0xff]
  %v2312 = vld [vmem:[%s2237 + $0x250] sm:$0xff]
  %v2313 = vld [vmem:[%s2237 + $0x258] sm:$0xff]
  %v2314 = vld [vmem:[%s2237 + $0x260] sm:$0xff]
  %v2315 = vld [vmem:[%s2237 + $0x268] sm:$0xff]
  %v2316 = vld [vmem:[%s2237 + $0x270] sm:$0xff]
  %v2317 = vld [vmem:[%s2237 + $0x278] sm:$0xff]
  %v2318 = vld [vmem:[%s2237 + $0x280] sm:$0xff]
  %v2319 = vld [vmem:[%s2237 + $0x288] sm:$0xff]
  %v2320 = vld [vmem:[%s2237 + $0x290] sm:$0xff]
  %v2321 = vld [vmem:[%s2237 + $0x298] sm:$0xff]
  %v2322 = vld [vmem:[%s2237 + $0x2a0] sm:$0xff]
  %v2323 = vld [vmem:[%s2237 + $0x2a8] sm:$0xff]
  %v2324 = vld [vmem:[%s2237 + $0x2b0] sm:$0xff]
  %v2325 = vld [vmem:[%s2237 + $0x2b8] sm:$0xff]
  %v2326 = vld [vmem:[%s2237 + $0x2c0] sm:$0xff]
  %v2327 = vld [vmem:[%s2237 + $0x2c8] sm:$0xff]
  %v2328 = vld [vmem:[%s2237 + $0x2d0] sm:$0xff]
  %v2329 = vld [vmem:[%s2237 + $0x2d8] sm:$0xff]
  %v2330 = vld [vmem:[%s2237 + $0x2e0] sm:$0xff]
  %v2331 = vld [vmem:[%s2237 + $0x2e8] sm:$0xff]
  %v2332 = vld [vmem:[%s2237 + $0x2f0] sm:$0xff]
  %v2333 = vld [vmem:[%s2237 + $0x2f8] sm:$0xff]
  %v2334 = vld [vmem:[%s2237 + $0x300] sm:$0xff]
  %v2335 = vld [vmem:[%s2237 + $0x308] sm:$0xff]
  %v2336 = vld [vmem:[%s2237 + $0x310] sm:$0xff]
  %v2337 = vld [vmem:[%s2237 + $0x318] sm:$0xff]
  %v2338 = vld [vmem:[%s2237 + $0x320] sm:$0xff]
  %v2339 = vld [vmem:[%s2237 + $0x328] sm:$0xff]
  %v2340 = vld [vmem:[%s2237 + $0x330] sm:$0xff]
  %v2341 = vld [vmem:[%s2237 + $0x338] sm:$0xff]
  %v2342 = vld [vmem:[%s2237 + $0x340] sm:$0xff]
  %v2343 = vld [vmem:[%s2237 + $0x348] sm:$0xff]
  %v2344 = vld [vmem:[%s2237 + $0x350] sm:$0xff]
  %v2345 = vld [vmem:[%s2237 + $0x358] sm:$0xff]
  %v2346 = vld [vmem:[%s2237 + $0x360] sm:$0xff]
  %v2347 = vld [vmem:[%s2237 + $0x368] sm:$0xff]
  %v2348 = vld [vmem:[%s2237 + $0x370] sm:$0xff]
  %v2349 = vld [vmem:[%s2237 + $0x378] sm:$0xff]
  %2350 = vmatprep.subr.mxu0 %v2239
  %2351 = vmatpush1.msra.mxu0 %v2238
  %2352 = vmatprep.subr.mxu0 %v2241
  %2353 = vmatpush1.msra.mxu0 %v2240
  %2354 = vmatprep.subr.mxu0 %v2243
  %2355 = vmatpush1.msra.mxu0 %v2242
  %2356 = vmatprep.subr.mxu0 %v2245
  %2357 = vmatpush1.msra.mxu0 %v2244
  %2358 = vmatprep.subr.mxu0 %v2247
  %2359 = vmatpush1.msra.mxu0 %v2246
  %2360 = vmatprep.subr.mxu0 %v2249
  %2361 = vmatpush1.msra.mxu0 %v2248
  %2362 = vmatprep.subr.mxu0 %v2251
  %2363 = vmatpush1.msra.mxu0 %v2250
  %2364 = vmatprep.subr.mxu0 %v2253
  %2365 = vmatpush1.msra.mxu0 %v2252
  %2366 = vmatprep.subr.mxu0 %v2255
  %2367 = vmatpush1.msra.mxu0 %v2254
  %2368 = vmatprep.subr.mxu0 %v2257
  %2369 = vmatpush1.msra.mxu0 %v2256
  %2370 = vmatprep.subr.mxu0 %v2259
  %2371 = vmatpush1.msra.mxu0 %v2258
  %2372 = vmatprep.subr.mxu0 %v2261
  %2373 = vmatpush1.msra.mxu0 %v2260
  %2374 = vmatprep.subr.mxu0 %v2263
  %2375 = vmatpush1.msra.mxu0 %v2262
  %2376 = vmatprep.subr.mxu0 %v2265
  %2377 = vmatpush1.msra.mxu0 %v2264
  %2378 = vmatprep.subr.mxu0 %v2267
  %2379 = vmatpush1.msra.mxu0 %v2266
  %2380 = vmatprep.subr.mxu0 %v2269
  %2381 = vmatpush1.msra.mxu0 %v2268
  %2382 = vmatprep.subr.mxu0 %v2271
  %2383 = vmatpush1.msra.mxu0 %v2270
  %2384 = vmatprep.subr.mxu0 %v2273
  %2385 = vmatpush1.msra.mxu0 %v2272
  %2386 = vmatprep.subr.mxu0 %v2275
  %2387 = vmatpush1.msra.mxu0 %v2274
  %2388 = vmatprep.subr.mxu0 %v2277
  %2389 = vmatpush1.msra.mxu0 %v2276
  %2390 = vmatprep.subr.mxu0 %v2279
  %2391 = vmatpush1.msra.mxu0 %v2278
  %2392 = vmatprep.subr.mxu0 %v2281
  %2393 = vmatpush1.msra.mxu0 %v2280
  %2394 = vmatprep.subr.mxu0 %v2283
  %2395 = vmatpush1.msra.mxu0 %v2282
  %2396 = vmatprep.subr.mxu0 %v2285
  %2397 = vmatpush1.msra.mxu0 %v2284
  %2398 = vmatprep.subr.mxu0 %v2287
  %2399 = vmatpush1.msra.mxu0 %v2286
  %2400 = vmatprep.subr.mxu0 %v2289
  %2401 = vmatpush1.msra.mxu0 %v2288
  %2402 = vmatprep.subr.mxu0 %v2291
  %2403 = vmatpush1.msra.mxu0 %v2290
  %2404 = vmatprep.subr.mxu0 %v2293
  %2405 = vmatpush1.msra.mxu0 %v2292
  %2406 = vmatprep.subr.mxu0 %v2295
  %2407 = vmatpush1.msra.mxu0 %v2294
  %2408 = vmatprep.subr.mxu0 %v2297
  %2409 = vmatpush1.msra.mxu0 %v2296
  %2410 = vmatprep.subr.mxu0 %v2299
  %2411 = vmatpush1.msra.mxu0 %v2298
  %2412 = vmatprep.subr.mxu0 %v2301
  %2413 = vmatpush1.msra.mxu0 %v2300
  %2414 = vmatprep.mubr.f32.mxu0 %v1957
  %2415 = vmatmul.mubr.f32.gmra.mrb[0].mxu0 %v1956
  %v2416 = vpop.f32.mrb[0].mxu0
  %v2417 = vadd.f32 0.0, %v2416
  %v2418 = vpop.f32.mrb[0].mxu0
  %v2419 = vadd.f32 0.0, %v2418
  %2420 = vmatprep.mubr.f32.mxu0 %v1961
  %2421 = vmatmul.mubr.f32.gmra.mrb[0].mxu0 %v1960
  %v2422 = vpop.f32.mrb[0].mxu0
  %v2423 = vadd.f32 0.0, %v2422
  %v2424 = vpop.f32.mrb[0].mxu0
  %v2425 = vadd.f32 0.0, %v2424
  %2426 = vdwg.mxu0
  %2427 = vmatprep.subr.mxu0 %v2303
  %2428 = vmatpush1.msra.mxu0 %v2302
  %2429 = vmatprep.subr.mxu0 %v2305
  %2430 = vmatpush1.msra.mxu0 %v2304
  %2431 = vmatprep.subr.mxu0 %v2307
  %2432 = vmatpush1.msra.mxu0 %v2306
  %2433 = vmatprep.subr.mxu0 %v2309
  %2434 = vmatpush1.msra.mxu0 %v2308
  %2435 = vmatprep.subr.mxu0 %v2311
  %2436 = vmatpush1.msra.mxu0 %v2310
  %2437 = vmatprep.subr.mxu0 %v2313
  %2438 = vmatpush1.msra.mxu0 %v2312
  %2439 = vmatprep.subr.mxu0 %v2315
  %2440 = vmatpush1.msra.mxu0 %v2314
  %2441 = vmatprep.subr.mxu0 %v2317
  %2442 = vmatpush1.msra.mxu0 %v2316
  %2443 = vmatprep.subr.mxu0 %v2319
  %2444 = vmatpush1.msra.mxu0 %v2318
  %2445 = vmatprep.subr.mxu0 %v2321
  %2446 = vmatpush1.msra.mxu0 %v2320
  %2447 = vmatprep.subr.mxu0 %v2323
  %2448 = vmatpush1.msra.mxu0 %v2322
  %2449 = vmatprep.subr.mxu0 %v2325
  %2450 = vmatpush1.msra.mxu0 %v2324
  %2451 = vmatprep.subr.mxu0 %v2327
  %2452 = vmatpush1.msra.mxu0 %v2326
  %2453 = vmatprep.subr.mxu0 %v2329
  %2454 = vmatpush1.msra.mxu0 %v2328
  %2455 = vmatprep.subr.mxu0 %v2331
  %2456 = vmatpush1.msra.mxu0 %v2330
  %2457 = vmatprep.subr.mxu0 %v2333
  %2458 = vmatpush1.msra.mxu0 %v2332
  %2459 = vmatprep.subr.mxu0 %v2335
  %2460 = vmatpush1.msra.mxu0 %v2334
  %2461 = vmatprep.subr.mxu0 %v2337
  %2462 = vmatpush1.msra.mxu0 %v2336
  %2463 = vmatprep.subr.mxu0 %v2339
  %2464 = vmatpush1.msra.mxu0 %v2338
  %2465 = vmatprep.subr.mxu0 %v2341
  %2466 = vmatpush1.msra.mxu0 %v2340
  %2467 = vmatprep.subr.mxu0 %v2343
  %2468 = vmatpush1.msra.mxu0 %v2342
  %2469 = vmatprep.subr.mxu0 %v2345
  %2470 = vmatpush1.msra.mxu0 %v2344
  %2471 = vmatprep.subr.mxu0 %v2347
  %2472 = vmatpush1.msra.mxu0 %v2346
  %2473 = vmatprep.subr.mxu0 %v2349
  %2474 = vmatpush1.msra.mxu0 %v2348
  %2475 = vmatprep.subr.mxu0 0.0
  %2476 = vmatpush1.msra.mxu0 0.0
  %2477 = vmatprep.subr.mxu0 0.0
  %2478 = vmatpush1.msra.mxu0 0.0
  %2479 = vmatprep.subr.mxu0 0.0
  %2480 = vmatpush1.msra.mxu0 0.0
  %2481 = vmatprep.subr.mxu0 0.0
  %2482 = vmatpush1.msra.mxu0 0.0
  %2483 = vmatprep.subr.mxu0 0.0
  %2484 = vmatpush1.msra.mxu0 0.0
  %2485 = vmatprep.subr.mxu0 0.0
  %2486 = vmatpush1.msra.mxu0 0.0
  %2487 = vmatprep.subr.mxu0 0.0
  %2488 = vmatpush1.msra.mxu0 0.0
  %2489 = vmatprep.subr.mxu0 0.0
  %2490 = vmatpush1.msra.mxu0 0.0
  %2491 = vmatprep.mubr.f32.mxu0 %v2078
  %2492 = vmatmul.mubr.f32.gmra.mrb[0].mxu0 %v1958
  %v2493 = vpop.f32.mrb[0].mxu0
  %v2494 = vadd.f32 %v2417, %v2493
  %v2495 = vpop.f32.mrb[0].mxu0
  %v2496 = vadd.f32 %v2419, %v2495
  %2497 = vmatprep.mubr.f32.mxu0 %v2081
  %2498 = vmatmul.mubr.f32.gmra.mrb[0].mxu0 %v1962
  %v2499 = vpop.f32.mrb[0].mxu0
  %v2500 = vadd.f32 %v2423, %v2499
  %v2501 = vpop.f32.mrb[0].mxu0
  %v2502 = vadd.f32 %v2425, %v2501
  %2503 = vdwg.mxu0
  %v2504 = vmax.f32 %v2227, %v2494
  %v2505 = vmax.f32 %v2229, %v2496
  %v2506 = vmax.f32 %v2233, %v2500
  %v2507 = vmax.f32 %v2235, %v2502
  %s2508 = scalar_lea.vmem %s4, 1792
  %v2509 = vld [vmem:[%s2508] sm:$0xff]
  %v2510 = vld [vmem:[%s2508 + $0x8] sm:$0xff]
  %v2511 = vld [vmem:[%s2508 + $0x10] sm:$0xff]
  %v2512 = vld [vmem:[%s2508 + $0x18] sm:$0xff]
  %v2513 = vld [vmem:[%s2508 + $0x20] sm:$0xff]
  %v2514 = vld [vmem:[%s2508 + $0x28] sm:$0xff]
  %v2515 = vld [vmem:[%s2508 + $0x30] sm:$0xff]
  %v2516 = vld [vmem:[%s2508 + $0x38] sm:$0xff]
  %v2517 = vld [vmem:[%s2508 + $0x40] sm:$0xff]
  %v2518 = vld [vmem:[%s2508 + $0x48] sm:$0xff]
  %v2519 = vld [vmem:[%s2508 + $0x50] sm:$0xff]
  %v2520 = vld [vmem:[%s2508 + $0x58] sm:$0xff]
  %v2521 = vld [vmem:[%s2508 + $0x60] sm:$0xff]
  %v2522 = vld [vmem:[%s2508 + $0x68] sm:$0xff]
  %v2523 = vld [vmem:[%s2508 + $0x70] sm:$0xff]
  %v2524 = vld [vmem:[%s2508 + $0x78] sm:$0xff]
  %v2525 = vld [vmem:[%s2508 + $0x80] sm:$0xff]
  %v2526 = vld [vmem:[%s2508 + $0x88] sm:$0xff]
  %v2527 = vld [vmem:[%s2508 + $0x90] sm:$0xff]
  %v2528 = vld [vmem:[%s2508 + $0x98] sm:$0xff]
  %v2529 = vld [vmem:[%s2508 + $0xa0] sm:$0xff]
  %v2530 = vld [vmem:[%s2508 + $0xa8] sm:$0xff]
  %v2531 = vld [vmem:[%s2508 + $0xb0] sm:$0xff]
  %v2532 = vld [vmem:[%s2508 + $0xb8] sm:$0xff]
  %v2533 = vld [vmem:[%s2508 + $0xc0] sm:$0xff]
  %v2534 = vld [vmem:[%s2508 + $0xc8] sm:$0xff]
  %v2535 = vld [vmem:[%s2508 + $0xd0] sm:$0xff]
  %v2536 = vld [vmem:[%s2508 + $0xd8] sm:$0xff]
  %v2537 = vld [vmem:[%s2508 + $0xe0] sm:$0xff]
  %v2538 = vld [vmem:[%s2508 + $0xe8] sm:$0xff]
  %v2539 = vld [vmem:[%s2508 + $0xf0] sm:$0xff]
  %v2540 = vld [vmem:[%s2508 + $0xf8] sm:$0xff]
  %v2541 = vld [vmem:[%s2508 + $0x100] sm:$0xff]
  %v2542 = vld [vmem:[%s2508 + $0x108] sm:$0xff]
  %v2543 = vld [vmem:[%s2508 + $0x110] sm:$0xff]
  %v2544 = vld [vmem:[%s2508 + $0x118] sm:$0xff]
  %v2545 = vld [vmem:[%s2508 + $0x120] sm:$0xff]
  %v2546 = vld [vmem:[%s2508 + $0x128] sm:$0xff]
  %v2547 = vld [vmem:[%s2508 + $0x130] sm:$0xff]
  %v2548 = vld [vmem:[%s2508 + $0x138] sm:$0xff]
  %v2549 = vld [vmem:[%s2508 + $0x140] sm:$0xff]
  %v2550 = vld [vmem:[%s2508 + $0x148] sm:$0xff]
  %v2551 = vld [vmem:[%s2508 + $0x150] sm:$0xff]
  %v2552 = vld [vmem:[%s2508 + $0x158] sm:$0xff]
  %v2553 = vld [vmem:[%s2508 + $0x160] sm:$0xff]
  %v2554 = vld [vmem:[%s2508 + $0x168] sm:$0xff]
  %v2555 = vld [vmem:[%s2508 + $0x170] sm:$0xff]
  %v2556 = vld [vmem:[%s2508 + $0x178] sm:$0xff]
  %v2557 = vld [vmem:[%s2508 + $0x180] sm:$0xff]
  %v2558 = vld [vmem:[%s2508 + $0x188] sm:$0xff]
  %v2559 = vld [vmem:[%s2508 + $0x190] sm:$0xff]
  %v2560 = vld [vmem:[%s2508 + $0x198] sm:$0xff]
  %v2561 = vld [vmem:[%s2508 + $0x1a0] sm:$0xff]
  %v2562 = vld [vmem:[%s2508 + $0x1a8] sm:$0xff]
  %v2563 = vld [vmem:[%s2508 + $0x1b0] sm:$0xff]
  %v2564 = vld [vmem:[%s2508 + $0x1b8] sm:$0xff]
  %v2565 = vld [vmem:[%s2508 + $0x1c0] sm:$0xff]
  %v2566 = vld [vmem:[%s2508 + $0x1c8] sm:$0xff]
  %v2567 = vld [vmem:[%s2508 + $0x1d0] sm:$0xff]
  %v2568 = vld [vmem:[%s2508 + $0x1d8] sm:$0xff]
  %v2569 = vld [vmem:[%s2508 + $0x1e0] sm:$0xff]
  %v2570 = vld [vmem:[%s2508 + $0x1e8] sm:$0xff]
  %v2571 = vld [vmem:[%s2508 + $0x1f0] sm:$0xff]
  %v2572 = vld [vmem:[%s2508 + $0x1f8] sm:$0xff]
  %v2573 = vld [vmem:[%s2508 + $0x200] sm:$0xff]
  %v2574 = vld [vmem:[%s2508 + $0x208] sm:$0xff]
  %v2575 = vld [vmem:[%s2508 + $0x210] sm:$0xff]
  %v2576 = vld [vmem:[%s2508 + $0x218] sm:$0xff]
  %v2577 = vld [vmem:[%s2508 + $0x220] sm:$0xff]
  %v2578 = vld [vmem:[%s2508 + $0x228] sm:$0xff]
  %v2579 = vld [vmem:[%s2508 + $0x230] sm:$0xff]
  %v2580 = vld [vmem:[%s2508 + $0x238] sm:$0xff]
  %v2581 = vld [vmem:[%s2508 + $0x240] sm:$0xff]
  %v2582 = vld [vmem:[%s2508 + $0x248] sm:$0xff]
  %v2583 = vld [vmem:[%s2508 + $0x250] sm:$0xff]
  %v2584 = vld [vmem:[%s2508 + $0x258] sm:$0xff]
  %v2585 = vld [vmem:[%s2508 + $0x260] sm:$0xff]
  %v2586 = vld [vmem:[%s2508 + $0x268] sm:$0xff]
  %v2587 = vld [vmem:[%s2508 + $0x270] sm:$0xff]
  %v2588 = vld [vmem:[%s2508 + $0x278] sm:$0xff]
  %v2589 = vld [vmem:[%s2508 + $0x280] sm:$0xff]
  %v2590 = vld [vmem:[%s2508 + $0x288] sm:$0xff]
  %v2591 = vld [vmem:[%s2508 + $0x290] sm:$0xff]
  %v2592 = vld [vmem:[%s2508 + $0x298] sm:$0xff]
  %v2593 = vld [vmem:[%s2508 + $0x2a0] sm:$0xff]
  %v2594 = vld [vmem:[%s2508 + $0x2a8] sm:$0xff]
  %v2595 = vld [vmem:[%s2508 + $0x2b0] sm:$0xff]
  %v2596 = vld [vmem:[%s2508 + $0x2b8] sm:$0xff]
  %v2597 = vld [vmem:[%s2508 + $0x2c0] sm:$0xff]
  %v2598 = vld [vmem:[%s2508 + $0x2c8] sm:$0xff]
  %v2599 = vld [vmem:[%s2508 + $0x2d0] sm:$0xff]
  %v2600 = vld [vmem:[%s2508 + $0x2d8] sm:$0xff]
  %v2601 = vld [vmem:[%s2508 + $0x2e0] sm:$0xff]
  %v2602 = vld [vmem:[%s2508 + $0x2e8] sm:$0xff]
  %v2603 = vld [vmem:[%s2508 + $0x2f0] sm:$0xff]
  %v2604 = vld [vmem:[%s2508 + $0x2f8] sm:$0xff]
  %v2605 = vld [vmem:[%s2508 + $0x300] sm:$0xff]
  %v2606 = vld [vmem:[%s2508 + $0x308] sm:$0xff]
  %v2607 = vld [vmem:[%s2508 + $0x310] sm:$0xff]
  %v2608 = vld [vmem:[%s2508 + $0x318] sm:$0xff]
  %v2609 = vld [vmem:[%s2508 + $0x320] sm:$0xff]
  %v2610 = vld [vmem:[%s2508 + $0x328] sm:$0xff]
  %v2611 = vld [vmem:[%s2508 + $0x330] sm:$0xff]
  %v2612 = vld [vmem:[%s2508 + $0x338] sm:$0xff]
  %v2613 = vld [vmem:[%s2508 + $0x340] sm:$0xff]
  %v2614 = vld [vmem:[%s2508 + $0x348] sm:$0xff]
  %v2615 = vld [vmem:[%s2508 + $0x350] sm:$0xff]
  %v2616 = vld [vmem:[%s2508 + $0x358] sm:$0xff]
  %v2617 = vld [vmem:[%s2508 + $0x360] sm:$0xff]
  %v2618 = vld [vmem:[%s2508 + $0x368] sm:$0xff]
  %v2619 = vld [vmem:[%s2508 + $0x370] sm:$0xff]
  %v2620 = vld [vmem:[%s2508 + $0x378] sm:$0xff]
  %2621 = vmatprep.subr.mxu0 %v2510
  %2622 = vmatpush1.msra.mxu0 %v2509
  %2623 = vmatprep.subr.mxu0 %v2512
  %2624 = vmatpush1.msra.mxu0 %v2511
  %2625 = vmatprep.subr.mxu0 %v2514
  %2626 = vmatpush1.msra.mxu0 %v2513
  %2627 = vmatprep.subr.mxu0 %v2516
  %2628 = vmatpush1.msra.mxu0 %v2515
  %2629 = vmatprep.subr.mxu0 %v2518
  %2630 = vmatpush1.msra.mxu0 %v2517
  %2631 = vmatprep.subr.mxu0 %v2520
  %2632 = vmatpush1.msra.mxu0 %v2519
  %2633 = vmatprep.subr.mxu0 %v2522
  %2634 = vmatpush1.msra.mxu0 %v2521
  %2635 = vmatprep.subr.mxu0 %v2524
  %2636 = vmatpush1.msra.mxu0 %v2523
  %2637 = vmatprep.subr.mxu0 %v2526
  %2638 = vmatpush1.msra.mxu0 %v2525
  %2639 = vmatprep.subr.mxu0 %v2528
  %2640 = vmatpush1.msra.mxu0 %v2527
  %2641 = vmatprep.subr.mxu0 %v2530
  %2642 = vmatpush1.msra.mxu0 %v2529
  %2643 = vmatprep.subr.mxu0 %v2532
  %2644 = vmatpush1.msra.mxu0 %v2531
  %2645 = vmatprep.subr.mxu0 %v2534
  %2646 = vmatpush1.msra.mxu0 %v2533
  %2647 = vmatprep.subr.mxu0 %v2536
  %2648 = vmatpush1.msra.mxu0 %v2535
  %2649 = vmatprep.subr.mxu0 %v2538
  %2650 = vmatpush1.msra.mxu0 %v2537
  %2651 = vmatprep.subr.mxu0 %v2540
  %2652 = vmatpush1.msra.mxu0 %v2539
  %2653 = vmatprep.subr.mxu0 %v2542
  %2654 = vmatpush1.msra.mxu0 %v2541
  %2655 = vmatprep.subr.mxu0 %v2544
  %2656 = vmatpush1.msra.mxu0 %v2543
  %2657 = vmatprep.subr.mxu0 %v2546
  %2658 = vmatpush1.msra.mxu0 %v2545
  %2659 = vmatprep.subr.mxu0 %v2548
  %2660 = vmatpush1.msra.mxu0 %v2547
  %2661 = vmatprep.subr.mxu0 %v2550
  %2662 = vmatpush1.msra.mxu0 %v2549
  %2663 = vmatprep.subr.mxu0 %v2552
  %2664 = vmatpush1.msra.mxu0 %v2551
  %2665 = vmatprep.subr.mxu0 %v2554
  %2666 = vmatpush1.msra.mxu0 %v2553
  %2667 = vmatprep.subr.mxu0 %v2556
  %2668 = vmatpush1.msra.mxu0 %v2555
  %2669 = vmatprep.subr.mxu0 %v2558
  %2670 = vmatpush1.msra.mxu0 %v2557
  %2671 = vmatprep.subr.mxu0 %v2560
  %2672 = vmatpush1.msra.mxu0 %v2559
  %2673 = vmatprep.subr.mxu0 %v2562
  %2674 = vmatpush1.msra.mxu0 %v2561
  %2675 = vmatprep.subr.mxu0 %v2564
  %2676 = vmatpush1.msra.mxu0 %v2563
  %2677 = vmatprep.subr.mxu0 %v2566
  %2678 = vmatpush1.msra.mxu0 %v2565
  %2679 = vmatprep.subr.mxu0 %v2568
  %2680 = vmatpush1.msra.mxu0 %v2567
  %2681 = vmatprep.subr.mxu0 %v2570
  %2682 = vmatpush1.msra.mxu0 %v2569
  %2683 = vmatprep.subr.mxu0 %v2572
  %2684 = vmatpush1.msra.mxu0 %v2571
  %2685 = vmatprep.mubr.f32.mxu0 %v1957
  %2686 = vmatmul.mubr.f32.gmra.mrb[0].mxu0 %v1956
  %v2687 = vpop.f32.mrb[0].mxu0
  %v2688 = vadd.f32 0.0, %v2687
  %v2689 = vpop.f32.mrb[0].mxu0
  %v2690 = vadd.f32 0.0, %v2689
  %2691 = vmatprep.mubr.f32.mxu0 %v1961
  %2692 = vmatmul.mubr.f32.gmra.mrb[0].mxu0 %v1960
  %v2693 = vpop.f32.mrb[0].mxu0
  %v2694 = vadd.f32 0.0, %v2693
  %v2695 = vpop.f32.mrb[0].mxu0
  %v2696 = vadd.f32 0.0, %v2695
  %2697 = vdwg.mxu0
  %2698 = vmatprep.subr.mxu0 %v2574
  %2699 = vmatpush1.msra.mxu0 %v2573
  %2700 = vmatprep.subr.mxu0 %v2576
  %2701 = vmatpush1.msra.mxu0 %v2575
  %2702 = vmatprep.subr.mxu0 %v2578
  %2703 = vmatpush1.msra.mxu0 %v2577
  %2704 = vmatprep.subr.mxu0 %v2580
  %2705 = vmatpush1.msra.mxu0 %v2579
  %2706 = vmatprep.subr.mxu0 %v2582
  %2707 = vmatpush1.msra.mxu0 %v2581
  %2708 = vmatprep.subr.mxu0 %v2584
  %2709 = vmatpush1.msra.mxu0 %v2583
  %2710 = vmatprep.subr.mxu0 %v2586
  %2711 = vmatpush1.msra.mxu0 %v2585
  %2712 = vmatprep.subr.mxu0 %v2588
  %2713 = vmatpush1.msra.mxu0 %v2587
  %2714 = vmatprep.subr.mxu0 %v2590
  %2715 = vmatpush1.msra.mxu0 %v2589
  %2716 = vmatprep.subr.mxu0 %v2592
  %2717 = vmatpush1.msra.mxu0 %v2591
  %2718 = vmatprep.subr.mxu0 %v2594
  %2719 = vmatpush1.msra.mxu0 %v2593
  %2720 = vmatprep.subr.mxu0 %v2596
  %2721 = vmatpush1.msra.mxu0 %v2595
  %2722 = vmatprep.subr.mxu0 %v2598
  %2723 = vmatpush1.msra.mxu0 %v2597
  %2724 = vmatprep.subr.mxu0 %v2600
  %2725 = vmatpush1.msra.mxu0 %v2599
  %2726 = vmatprep.subr.mxu0 %v2602
  %2727 = vmatpush1.msra.mxu0 %v2601
  %2728 = vmatprep.subr.mxu0 %v2604
  %2729 = vmatpush1.msra.mxu0 %v2603
  %2730 = vmatprep.subr.mxu0 %v2606
  %2731 = vmatpush1.msra.mxu0 %v2605
  %2732 = vmatprep.subr.mxu0 %v2608
  %2733 = vmatpush1.msra.mxu0 %v2607
  %2734 = vmatprep.subr.mxu0 %v2610
  %2735 = vmatpush1.msra.mxu0 %v2609
  %2736 = vmatprep.subr.mxu0 %v2612
  %2737 = vmatpush1.msra.mxu0 %v2611
  %2738 = vmatprep.subr.mxu0 %v2614
  %2739 = vmatpush1.msra.mxu0 %v2613
  %2740 = vmatprep.subr.mxu0 %v2616
  %2741 = vmatpush1.msra.mxu0 %v2615
  %2742 = vmatprep.subr.mxu0 %v2618
  %2743 = vmatpush1.msra.mxu0 %v2617
  %2744 = vmatprep.subr.mxu0 %v2620
  %2745 = vmatpush1.msra.mxu0 %v2619
  %2746 = vmatprep.subr.mxu0 0.0
  %2747 = vmatpush1.msra.mxu0 0.0
  %2748 = vmatprep.subr.mxu0 0.0
  %2749 = vmatpush1.msra.mxu0 0.0
  %2750 = vmatprep.subr.mxu0 0.0
  %2751 = vmatpush1.msra.mxu0 0.0
  %2752 = vmatprep.subr.mxu0 0.0
  %2753 = vmatpush1.msra.mxu0 0.0
  %2754 = vmatprep.subr.mxu0 0.0
  %2755 = vmatpush1.msra.mxu0 0.0
  %2756 = vmatprep.subr.mxu0 0.0
  %2757 = vmatpush1.msra.mxu0 0.0
  %2758 = vmatprep.subr.mxu0 0.0
  %2759 = vmatpush1.msra.mxu0 0.0
  %2760 = vmatprep.subr.mxu0 0.0
  %2761 = vmatpush1.msra.mxu0 0.0
  %2762 = vmatprep.mubr.f32.mxu0 %v2078
  %2763 = vmatmul.mubr.f32.gmra.mrb[0].mxu0 %v1958
  %v2764 = vpop.f32.mrb[0].mxu0
  %v2765 = vadd.f32 %v2688, %v2764
  %v2766 = vpop.f32.mrb[0].mxu0
  %v2767 = vadd.f32 %v2690, %v2766
  %2768 = vmatprep.mubr.f32.mxu0 %v2081
  %2769 = vmatmul.mubr.f32.gmra.mrb[0].mxu0 %v1962
  %v2770 = vpop.f32.mrb[0].mxu0
  %v2771 = vadd.f32 %v2694, %v2770
  %v2772 = vpop.f32.mrb[0].mxu0
  %v2773 = vadd.f32 %v2696, %v2772
  %2774 = vdwg.mxu0
  %v2775 = vmax.f32 %v2504, %v2765
  %v2776 = vmax.f32 %v2505, %v2767
  %v2777 = vmax.f32 %v2506, %v2771
  %v2778 = vmax.f32 %v2507, %v2773
  %v2779 = vpack.c.bf16 %v2777, %v2775
  %v2780 = vpack.c.bf16 %v2778, %v2776
  %v2783 = vunpack.c.l.b16 %v2779
  %v2784 = vunpack.c.l.b16 %v2780
  %v2785 = vunpack.c.h.b16 %v2779
  %v2786 = vunpack.c.h.b16 %v2780
  %v2787 = vpack.c.b16 %v2784, %v2783
  %v2788 = vpack.c.b16 %v2786, %v2785
  %vm2791 = vcmask 654340
  %vm2792 = vmor %vm2791, %vm1455
  %2793 = vst.msk [vmem:[%s5] sm:$0xff] %vm2792, %v2787
  %vm2794 = vcmask 1042432
  %vm2795 = vsmask.f32 2304
  %vm2796 = vmand %vm2794, %vm2795
  %vm2797 = vcmask 653316
  %vm2798 = vmand %vm2797, %vm860
  %vm2799 = vmor %vm2798, %vm2796
  %v2800 = vld [vmem:[%s5 + $0x8] sm:$0x77]
  %v2801 = vsel %vm2799, %v2788, %v2800
  %2802 = vst [vmem:[%s5 + $0x8] sm:$0x77] %v2801
  %s2803 = scalar_lea.vmem %s0, 32
  %v2804 = vld [vmem:[%s2803] sm:$0xff]
  %v2805 = vld [vmem:[%s2803 + $0x8] sm:$0xff]
  %v2806 = vld [vmem:[%s2803 + $0x10] sm:$0xff]
  %v2807 = vld [vmem:[%s2803 + $0x18] sm:$0xff]
  %v2808 = vpack.c.bf16 %v2805, %v2804
  %v2809 = vpack.c.bf16 %v2807, %v2806
  %v2810 = vld [vmem:[%s1] sm:$0xff]
  %v2811 = vld [vmem:[%s1 + $0x8] sm:$0xff]
  %v2812 = vld [vmem:[%s1 + $0x10] sm:$0xff]
  %v2813 = vld [vmem:[%s1 + $0x18] sm:$0xff]
  %v2814 = vld [vmem:[%s1 + $0x20] sm:$0xff]
  %v2815 = vld [vmem:[%s1 + $0x28] sm:$0xff]
  %v2816 = vld [vmem:[%s1 + $0x30] sm:$0xff]
  %v2817 = vld [vmem:[%s1 + $0x38] sm:$0xff]
  %v2818 = vld [vmem:[%s1 + $0x40] sm:$0xff]
  %v2819 = vld [vmem:[%s1 + $0x48] sm:$0xff]
  %v2820 = vld [vmem:[%s1 + $0x50] sm:$0xff]
  %v2821 = vld [vmem:[%s1 + $0x58] sm:$0xff]
  %v2822 = vld [vmem:[%s1 + $0x60] sm:$0xff]
  %v2823 = vld [vmem:[%s1 + $0x68] sm:$0xff]
  %v2824 = vld [vmem:[%s1 + $0x70] sm:$0xff]
  %v2825 = vld [vmem:[%s1 + $0x78] sm:$0xff]
  %v2826 = vld [vmem:[%s1 + $0x80] sm:$0xff]
  %v2827 = vld [vmem:[%s1 + $0x88] sm:$0xff]
  %v2828 = vld [vmem:[%s1 + $0x90] sm:$0xff]
  %v2829 = vld [vmem:[%s1 + $0x98] sm:$0xff]
  %v2830 = vld [vmem:[%s1 + $0xa0] sm:$0xff]
  %v2831 = vld [vmem:[%s1 + $0xa8] sm:$0xff]
  %v2832 = vld [vmem:[%s1 + $0xb0] sm:$0xff]
  %v2833 = vld [vmem:[%s1 + $0xb8] sm:$0xff]
  %v2834 = vld [vmem:[%s52] sm:$0xff]
  %v2835 = vld [vmem:[%s52 + $0x8] sm:$0xff]
  %v2836 = vld [vmem:[%s52 + $0x10] sm:$0xff]
  %v2837 = vld [vmem:[%s52 + $0x18] sm:$0xff]
  %v2838 = vld [vmem:[%s52 + $0x20] sm:$0xff]
  %v2839 = vld [vmem:[%s52 + $0x28] sm:$0xff]
  %v2840 = vld [vmem:[%s52 + $0x30] sm:$0xff]
  %v2841 = vld [vmem:[%s52 + $0x38] sm:$0xff]
  %v2842 = vld [vmem:[%s52 + $0x40] sm:$0xff]
  %v2843 = vld [vmem:[%s52 + $0x48] sm:$0xff]
  %v2844 = vld [vmem:[%s52 + $0x50] sm:$0xff]
  %v2845 = vld [vmem:[%s52 + $0x58] sm:$0xff]
  %v2846 = vld [vmem:[%s52 + $0x60] sm:$0xff]
  %v2847 = vld [vmem:[%s52 + $0x68] sm:$0xff]
  %v2848 = vld [vmem:[%s52 + $0x70] sm:$0xff]
  %v2849 = vld [vmem:[%s52 + $0x78] sm:$0xff]
  %v2850 = vld [vmem:[%s52 + $0x80] sm:$0xff]
  %v2851 = vld [vmem:[%s52 + $0x88] sm:$0xff]
  %v2852 = vld [vmem:[%s52 + $0x90] sm:$0xff]
  %v2853 = vld [vmem:[%s52 + $0x98] sm:$0xff]
  %v2854 = vld [vmem:[%s52 + $0xa0] sm:$0xff]
  %v2855 = vld [vmem:[%s52 + $0xa8] sm:$0xff]
  %v2856 = vld [vmem:[%s52 + $0xb0] sm:$0xff]
  %v2857 = vld [vmem:[%s52 + $0xb8] sm:$0xff]
  %v2859 = vshrl.u32 %v2808, 16
  %v2861 = vshll.u32 %v2808, 16
  %v2863 = vrot.slane %v2861, 1
  %v2864 = vor.u32 %v2859, %v2863
  %v2866 = vshll.u32 %v2809, 16
  %v2868 = vrot.slane %v2866, 1
  %v2869 = vsel %vm77, %v2864, %v2868
  %v2870 = vshrl.u32 %v2809, 16
  %v2872 = vor.u32 %v2870, %v2868
  %v2897 = vunpack.c.l.b16 %v2834
  %v2898 = vunpack.c.h.b16 %v2834
  %v2899 = vunpack.c.l.b16 %v2835
  %v2900 = vunpack.c.h.b16 %v2835
  %v2901 = vunpack.c.l.b16 %v2836
  %v2902 = vunpack.c.h.b16 %v2836
  %v2903 = vunpack.c.l.b16 %v2837
  %v2904 = vunpack.c.h.b16 %v2837
  %v2905 = vunpack.c.l.b16 %v2838
  %v2906 = vunpack.c.h.b16 %v2838
  %v2907 = vunpack.c.l.b16 %v2839
  %v2908 = vunpack.c.h.b16 %v2839
  %v2909 = vunpack.c.l.b16 %v2840
  %v2910 = vunpack.c.h.b16 %v2840
  %v2911 = vunpack.c.l.b16 %v2841
  %v2912 = vunpack.c.h.b16 %v2841
  %v2913 = vunpack.c.l.b16 %v2842
  %v2914 = vunpack.c.h.b16 %v2842
  %v2915 = vunpack.c.l.b16 %v2843
  %v2916 = vunpack.c.h.b16 %v2843
  %v2917 = vunpack.c.l.b16 %v2844
  %v2918 = vunpack.c.h.b16 %v2844
  %v2919 = vunpack.c.l.b16 %v2845
  %v2920 = vunpack.c.h.b16 %v2845
  %v2921 = vunpack.c.l.b16 %v2846
  %v2922 = vunpack.c.h.b16 %v2846
  %v2923 = vunpack.c.l.b16 %v2847
  %v2924 = vunpack.c.h.b16 %v2847
  %v2925 = vunpack.c.l.b16 %v2848
  %v2926 = vunpack.c.h.b16 %v2848
  %v2927 = vunpack.c.l.b16 %v2849
  %v2928 = vunpack.c.h.b16 %v2849
  %v2929 = vunpack.c.l.b16 %v2850
  %v2930 = vunpack.c.h.b16 %v2850
  %v2931 = vunpack.c.l.b16 %v2851
  %v2932 = vunpack.c.h.b16 %v2851
  %v2933 = vunpack.c.l.b16 %v2852
  %v2934 = vunpack.c.h.b16 %v2852
  %v2935 = vunpack.c.l.b16 %v2853
  %v2936 = vunpack.c.h.b16 %v2853
  %v2937 = vunpack.c.l.b16 %v2854
  %v2938 = vunpack.c.h.b16 %v2854
  %v2939 = vunpack.c.l.b16 %v2855
  %v2940 = vunpack.c.h.b16 %v2855
  %v2941 = vunpack.c.l.b16 %v2856
  %v2942 = vunpack.c.h.b16 %v2856
  %v2943 = vunpack.c.l.b16 %v2857
  %v2944 = vunpack.c.h.b16 %v2857
  %v2945 = vpack.c.b16 %v2901, %v2897
  %v2946 = vpack.c.b16 %v2902, %v2898
  %v2947 = vpack.c.b16 %v2903, %v2899
  %v2948 = vpack.c.b16 %v2904, %v2900
  %v2949 = vpack.c.b16 %v2909, %v2905
  %v2950 = vpack.c.b16 %v2910, %v2906
  %v2951 = vpack.c.b16 %v2911, %v2907
  %v2952 = vpack.c.b16 %v2912, %v2908
  %v2953 = vpack.c.b16 %v2917, %v2913
  %v2954 = vpack.c.b16 %v2918, %v2914
  %v2955 = vpack.c.b16 %v2919, %v2915
  %v2956 = vpack.c.b16 %v2920, %v2916
  %v2957 = vpack.c.b16 %v2925, %v2921
  %v2958 = vpack.c.b16 %v2926, %v2922
  %v2959 = vpack.c.b16 %v2927, %v2923
  %v2960 = vpack.c.b16 %v2928, %v2924
  %v2961 = vpack.c.b16 %v2933, %v2929
  %v2962 = vpack.c.b16 %v2934, %v2930
  %v2963 = vpack.c.b16 %v2935, %v2931
  %v2964 = vpack.c.b16 %v2936, %v2932
  %v2965 = vpack.c.b16 %v2941, %v2937
  %v2966 = vpack.c.b16 %v2942, %v2938
  %v2967 = vpack.c.b16 %v2943, %v2939
  %v2968 = vpack.c.b16 %v2944, %v2940
  %v2994 = vsel %vm213, %v2869, 0
  %v2997 = vsel %vm213, %v2872, 0
  %2999 = vmatprep.subr.bf16.mxu0 %v2946
  %3000 = vmatpush1.bf16.msra.mxu0 %v2945
  %3001 = vmatprep.subr.bf16.mxu0 %v2950
  %3002 = vmatpush1.bf16.msra.mxu0 %v2949
  %3003 = vmatprep.subr.bf16.mxu0 %v2954
  %3004 = vmatpush1.bf16.msra.mxu0 %v2953
  %3005 = vmatprep.subr.bf16.mxu0 %v2958
  %3006 = vmatpush1.bf16.msra.mxu0 %v2957
  %3007 = vmatprep.subr.bf16.mxu0 %v2962
  %3008 = vmatpush1.bf16.msra.mxu0 %v2961
  %3009 = vmatprep.subr.bf16.mxu0 %v2966
  %3010 = vmatpush1.bf16.msra.mxu0 %v2965
  %3011 = vmatprep.subr.bf16.mxu0 0
  %3012 = vmatpush1.bf16.msra.mxu0 0
  %3013 = vmatprep.subr.bf16.mxu0 0
  %3014 = vmatpush1.bf16.msra.mxu0 0
  %3015 = vmatprep.subr.bf16.mxu0 0
  %3016 = vmatpush1.bf16.msra.mxu0 0
  %3017 = vmatprep.subr.bf16.mxu0 0
  %3018 = vmatpush1.bf16.msra.mxu0 0
  %3019 = vmatprep.subr.bf16.mxu0 0
  %3020 = vmatpush1.bf16.msra.mxu0 0
  %3021 = vmatprep.subr.bf16.mxu0 0
  %3022 = vmatpush1.bf16.msra.mxu0 0
  %3023 = vmatprep.subr.bf16.mxu0 0
  %3024 = vmatpush1.bf16.msra.mxu0 0
  %3025 = vmatprep.subr.bf16.mxu0 0
  %3026 = vmatpush1.bf16.msra.mxu0 0
  %3027 = vmatprep.subr.bf16.mxu0 0
  %3028 = vmatpush1.bf16.msra.mxu0 0
  %3029 = vmatprep.subr.bf16.mxu0 0
  %3030 = vmatpush1.bf16.msra.mxu0 0
  %3031 = vmatprep.mubr.bf16.mxu0 0
  %3032 = vmatmul.mubr.bf16.gmra.mrb[0].mxu0 %v2994
  %v3033 = vpop.f32.mrb[0].mxu0
  %v3034 = vadd.f32 0.0, %v3033
  %v3035 = vpop.f32.mrb[0].mxu0
  %v3036 = vadd.f32 0.0, %v3035
  %v3037 = vpop.f32.mrb[0].mxu0
  %v3038 = vadd.f32 0.0, %v3037
  %v3039 = vpop.f32.mrb[0].mxu0
  %v3040 = vadd.f32 0.0, %v3039
  %3041 = vmatprep.mubr.bf16.mxu0 0
  %3042 = vmatmul.mubr.bf16.gmra.mrb[0].mxu0 %v2997
  %v3043 = vpop.f32.mrb[0].mxu0
  %v3044 = vadd.f32 0.0, %v3043
  %v3045 = vpop.f32.mrb[0].mxu0
  %v3046 = vadd.f32 0.0, %v3045
  %v3047 = vpop.f32.mrb[0].mxu0
  %v3048 = vadd.f32 0.0, %v3047
  %v3049 = vpop.f32.mrb[0].mxu0
  %v3050 = vadd.f32 0.0, %v3049
  %3051 = vdwg.mxu0
  %3052 = vmatprep.subr.bf16.mxu0 %v2948
  %3053 = vmatpush1.bf16.msra.mxu0 %v2947
  %3054 = vmatprep.subr.bf16.mxu0 %v2952
  %3055 = vmatpush1.bf16.msra.mxu0 %v2951
  %3056 = vmatprep.subr.bf16.mxu0 %v2956
  %3057 = vmatpush1.bf16.msra.mxu0 %v2955
  %3058 = vmatprep.subr.bf16.mxu0 %v2960
  %3059 = vmatpush1.bf16.msra.mxu0 %v2959
  %3060 = vmatprep.subr.bf16.mxu0 %v2964
  %3061 = vmatpush1.bf16.msra.mxu0 %v2963
  %3062 = vmatprep.subr.bf16.mxu0 %v2968
  %3063 = vmatpush1.bf16.msra.mxu0 %v2967
  %3064 = vmatprep.subr.bf16.mxu0 0
  %3065 = vmatpush1.bf16.msra.mxu0 0
  %3066 = vmatprep.subr.bf16.mxu0 0
  %3067 = vmatpush1.bf16.msra.mxu0 0
  %3068 = vmatprep.subr.bf16.mxu0 0
  %3069 = vmatpush1.bf16.msra.mxu0 0
  %3070 = vmatprep.subr.bf16.mxu0 0
  %3071 = vmatpush1.bf16.msra.mxu0 0
  %3072 = vmatprep.subr.bf16.mxu0 0
  %3073 = vmatpush1.bf16.msra.mxu0 0
  %3074 = vmatprep.subr.bf16.mxu0 0
  %3075 = vmatpush1.bf16.msra.mxu0 0
  %3076 = vmatprep.subr.bf16.mxu0 0
  %3077 = vmatpush1.bf16.msra.mxu0 0
  %3078 = vmatprep.subr.bf16.mxu0 0
  %3079 = vmatpush1.bf16.msra.mxu0 0
  %3080 = vmatprep.subr.bf16.mxu0 0
  %3081 = vmatpush1.bf16.msra.mxu0 0
  %3082 = vmatprep.subr.bf16.mxu0 0
  %3083 = vmatpush1.bf16.msra.mxu0 0
  %3084 = vmatprep.mubr.bf16.mxu0 0
  %3085 = vmatmul.mubr.bf16.gmra.mrb[0].mxu0 %v2994
  %v3086 = vpop.f32.mrb[0].mxu0
  %v3087 = vadd.f32 0.0, %v3086
  %v3088 = vpop.f32.mrb[0].mxu0
  %v3089 = vadd.f32 0.0, %v3088
  %v3090 = vpop.f32.mrb[0].mxu0
  %v3091 = vadd.f32 0.0, %v3090
  %v3092 = vpop.f32.mrb[0].mxu0
  %v3093 = vadd.f32 0.0, %v3092
  %3094 = vmatprep.mubr.bf16.mxu0 0
  %3095 = vmatmul.mubr.bf16.gmra.mrb[0].mxu0 %v2997
  %v3096 = vpop.f32.mrb[0].mxu0
  %v3097 = vadd.f32 0.0, %v3096
  %v3098 = vpop.f32.mrb[0].mxu0
  %v3099 = vadd.f32 0.0, %v3098
  %v3100 = vpop.f32.mrb[0].mxu0
  %v3101 = vadd.f32 0.0, %v3100
  %v3102 = vpop.f32.mrb[0].mxu0
  %v3103 = vadd.f32 0.0, %v3102
  %3104 = vdwg.mxu0
  %v3129 = vunpack.c.l.b16 %v2810
  %v3130 = vunpack.c.h.b16 %v2810
  %v3131 = vunpack.c.l.b16 %v2811
  %v3132 = vunpack.c.h.b16 %v2811
  %v3133 = vunpack.c.l.b16 %v2812
  %v3134 = vunpack.c.h.b16 %v2812
  %v3135 = vunpack.c.l.b16 %v2813
  %v3136 = vunpack.c.h.b16 %v2813
  %v3137 = vunpack.c.l.b16 %v2814
  %v3138 = vunpack.c.h.b16 %v2814
  %v3139 = vunpack.c.l.b16 %v2815
  %v3140 = vunpack.c.h.b16 %v2815
  %v3141 = vunpack.c.l.b16 %v2816
  %v3142 = vunpack.c.h.b16 %v2816
  %v3143 = vunpack.c.l.b16 %v2817
  %v3144 = vunpack.c.h.b16 %v2817
  %v3145 = vunpack.c.l.b16 %v2818
  %v3146 = vunpack.c.h.b16 %v2818
  %v3147 = vunpack.c.l.b16 %v2819
  %v3148 = vunpack.c.h.b16 %v2819
  %v3149 = vunpack.c.l.b16 %v2820
  %v3150 = vunpack.c.h.b16 %v2820
  %v3151 = vunpack.c.l.b16 %v2821
  %v3152 = vunpack.c.h.b16 %v2821
  %v3153 = vunpack.c.l.b16 %v2822
  %v3154 = vunpack.c.h.b16 %v2822
  %v3155 = vunpack.c.l.b16 %v2823
  %v3156 = vunpack.c.h.b16 %v2823
  %v3157 = vunpack.c.l.b16 %v2824
  %v3158 = vunpack.c.h.b16 %v2824
  %v3159 = vunpack.c.l.b16 %v2825
  %v3160 = vunpack.c.h.b16 %v2825
  %v3161 = vunpack.c.l.b16 %v2826
  %v3162 = vunpack.c.h.b16 %v2826
  %v3163 = vunpack.c.l.b16 %v2827
  %v3164 = vunpack.c.h.b16 %v2827
  %v3165 = vunpack.c.l.b16 %v2828
  %v3166 = vunpack.c.h.b16 %v2828
  %v3167 = vunpack.c.l.b16 %v2829
  %v3168 = vunpack.c.h.b16 %v2829
  %v3169 = vunpack.c.l.b16 %v2830
  %v3170 = vunpack.c.h.b16 %v2830
  %v3171 = vunpack.c.l.b16 %v2831
  %v3172 = vunpack.c.h.b16 %v2831
  %v3173 = vunpack.c.l.b16 %v2832
  %v3174 = vunpack.c.h.b16 %v2832
  %v3175 = vunpack.c.l.b16 %v2833
  %v3176 = vunpack.c.h.b16 %v2833
  %v3177 = vpack.c.b16 %v3133, %v3129
  %v3178 = vpack.c.b16 %v3134, %v3130
  %v3179 = vpack.c.b16 %v3135, %v3131
  %v3180 = vpack.c.b16 %v3136, %v3132
  %v3181 = vpack.c.b16 %v3141, %v3137
  %v3182 = vpack.c.b16 %v3142, %v3138
  %v3183 = vpack.c.b16 %v3143, %v3139
  %v3184 = vpack.c.b16 %v3144, %v3140
  %v3185 = vpack.c.b16 %v3149, %v3145
  %v3186 = vpack.c.b16 %v3150, %v3146
  %v3187 = vpack.c.b16 %v3151, %v3147
  %v3188 = vpack.c.b16 %v3152, %v3148
  %v3189 = vpack.c.b16 %v3157, %v3153
  %v3190 = vpack.c.b16 %v3158, %v3154
  %v3191 = vpack.c.b16 %v3159, %v3155
  %v3192 = vpack.c.b16 %v3160, %v3156
  %v3193 = vpack.c.b16 %v3165, %v3161
  %v3194 = vpack.c.b16 %v3166, %v3162
  %v3195 = vpack.c.b16 %v3167, %v3163
  %v3196 = vpack.c.b16 %v3168, %v3164
  %v3197 = vpack.c.b16 %v3173, %v3169
  %v3198 = vpack.c.b16 %v3174, %v3170
  %v3199 = vpack.c.b16 %v3175, %v3171
  %v3200 = vpack.c.b16 %v3176, %v3172
  %v3225 = vsel %vm213, %v2808, 0
  %v3227 = vsel %vm213, %v2809, 0
  %3229 = vmatprep.subr.bf16.mxu0 %v3178
  %3230 = vmatpush1.bf16.msra.mxu0 %v3177
  %3231 = vmatprep.subr.bf16.mxu0 %v3182
  %3232 = vmatpush1.bf16.msra.mxu0 %v3181
  %3233 = vmatprep.subr.bf16.mxu0 %v3186
  %3234 = vmatpush1.bf16.msra.mxu0 %v3185
  %3235 = vmatprep.subr.bf16.mxu0 %v3190
  %3236 = vmatpush1.bf16.msra.mxu0 %v3189
  %3237 = vmatprep.subr.bf16.mxu0 %v3194
  %3238 = vmatpush1.bf16.msra.mxu0 %v3193
  %3239 = vmatprep.subr.bf16.mxu0 %v3198
  %3240 = vmatpush1.bf16.msra.mxu0 %v3197
  %3241 = vmatprep.subr.bf16.mxu0 0
  %3242 = vmatpush1.bf16.msra.mxu0 0
  %3243 = vmatprep.subr.bf16.mxu0 0
  %3244 = vmatpush1.bf16.msra.mxu0 0
  %3245 = vmatprep.subr.bf16.mxu0 0
  %3246 = vmatpush1.bf16.msra.mxu0 0
  %3247 = vmatprep.subr.bf16.mxu0 0
  %3248 = vmatpush1.bf16.msra.mxu0 0
  %3249 = vmatprep.subr.bf16.mxu0 0
  %3250 = vmatpush1.bf16.msra.mxu0 0
  %3251 = vmatprep.subr.bf16.mxu0 0
  %3252 = vmatpush1.bf16.msra.mxu0 0
  %3253 = vmatprep.subr.bf16.mxu0 0
  %3254 = vmatpush1.bf16.msra.mxu0 0
  %3255 = vmatprep.subr.bf16.mxu0 0
  %3256 = vmatpush1.bf16.msra.mxu0 0
  %3257 = vmatprep.subr.bf16.mxu0 0
  %3258 = vmatpush1.bf16.msra.mxu0 0
  %3259 = vmatprep.subr.bf16.mxu0 0
  %3260 = vmatpush1.bf16.msra.mxu0 0
  %3261 = vmatprep.mubr.bf16.mxu0 0
  %3262 = vmatmul.mubr.bf16.gmra.mrb[0].mxu0 %v3225
  %v3263 = vpop.f32.mrb[0].mxu0
  %v3264 = vadd.f32 %v3034, %v3263
  %v3265 = vpop.f32.mrb[0].mxu0
  %v3266 = vadd.f32 %v3036, %v3265
  %v3267 = vpop.f32.mrb[0].mxu0
  %v3268 = vadd.f32 %v3038, %v3267
  %v3269 = vpop.f32.mrb[0].mxu0
  %v3270 = vadd.f32 %v3040, %v3269
  %3271 = vmatprep.mubr.bf16.mxu0 0
  %3272 = vmatmul.mubr.bf16.gmra.mrb[0].mxu0 %v3227
  %v3273 = vpop.f32.mrb[0].mxu0
  %v3274 = vadd.f32 %v3044, %v3273
  %v3275 = vpop.f32.mrb[0].mxu0
  %v3276 = vadd.f32 %v3046, %v3275
  %v3277 = vpop.f32.mrb[0].mxu0
  %v3278 = vadd.f32 %v3048, %v3277
  %v3279 = vpop.f32.mrb[0].mxu0
  %v3280 = vadd.f32 %v3050, %v3279
  %3281 = vdwg.mxu0
  %3282 = vmatprep.subr.bf16.mxu0 %v3180
  %3283 = vmatpush1.bf16.msra.mxu0 %v3179
  %3284 = vmatprep.subr.bf16.mxu0 %v3184
  %3285 = vmatpush1.bf16.msra.mxu0 %v3183
  %3286 = vmatprep.subr.bf16.mxu0 %v3188
  %3287 = vmatpush1.bf16.msra.mxu0 %v3187
  %3288 = vmatprep.subr.bf16.mxu0 %v3192
  %3289 = vmatpush1.bf16.msra.mxu0 %v3191
  %3290 = vmatprep.subr.bf16.mxu0 %v3196
  %3291 = vmatpush1.bf16.msra.mxu0 %v3195
  %3292 = vmatprep.subr.bf16.mxu0 %v3200
  %3293 = vmatpush1.bf16.msra.mxu0 %v3199
  %3294 = vmatprep.subr.bf16.mxu0 0
  %3295 = vmatpush1.bf16.msra.mxu0 0
  %3296 = vmatprep.subr.bf16.mxu0 0
  %3297 = vmatpush1.bf16.msra.mxu0 0
  %3298 = vmatprep.subr.bf16.mxu0 0
  %3299 = vmatpush1.bf16.msra.mxu0 0
  %3300 = vmatprep.subr.bf16.mxu0 0
  %3301 = vmatpush1.bf16.msra.mxu0 0
  %3302 = vmatprep.subr.bf16.mxu0 0
  %3303 = vmatpush1.bf16.msra.mxu0 0
  %3304 = vmatprep.subr.bf16.mxu0 0
  %3305 = vmatpush1.bf16.msra.mxu0 0
  %3306 = vmatprep.subr.bf16.mxu0 0
  %3307 = vmatpush1.bf16.msra.mxu0 0
  %3308 = vmatprep.subr.bf16.mxu0 0
  %3309 = vmatpush1.bf16.msra.mxu0 0
  %3310 = vmatprep.subr.bf16.mxu0 0
  %3311 = vmatpush1.bf16.msra.mxu0 0
  %3312 = vmatprep.subr.bf16.mxu0 0
  %3313 = vmatpush1.bf16.msra.mxu0 0
  %3314 = vmatprep.mubr.bf16.mxu0 0
  %3315 = vmatmul.mubr.bf16.gmra.mrb[0].mxu0 %v3225
  %v3316 = vpop.f32.mrb[0].mxu0
  %v3317 = vadd.f32 %v3087, %v3316
  %v3318 = vpop.f32.mrb[0].mxu0
  %v3319 = vadd.f32 %v3089, %v3318
  %v3320 = vpop.f32.mrb[0].mxu0
  %v3321 = vadd.f32 %v3091, %v3320
  %v3322 = vpop.f32.mrb[0].mxu0
  %v3323 = vadd.f32 %v3093, %v3322
  %3324 = vmatprep.mubr.bf16.mxu0 0
  %3325 = vmatmul.mubr.bf16.gmra.mrb[0].mxu0 %v3227
  %v3326 = vpop.f32.mrb[0].mxu0
  %v3327 = vadd.f32 %v3097, %v3326
  %v3328 = vpop.f32.mrb[0].mxu0
  %v3329 = vadd.f32 %v3099, %v3328
  %v3330 = vpop.f32.mrb[0].mxu0
  %v3331 = vadd.f32 %v3101, %v3330
  %v3332 = vpop.f32.mrb[0].mxu0
  %v3333 = vadd.f32 %v3103, %v3332
  %3334 = vdwg.mxu0
  %v3335 = vld [vmem:[%s556] sm:$0xff]
  %v3336 = vld [vmem:[%s556 + $0x8] sm:$0xff]
  %v3337 = vld [vmem:[%s556 + $0x10] sm:$0xff]
  %v3338 = vld [vmem:[%s556 + $0x18] sm:$0xff]
  %v3339 = vld [vmem:[%s556 + $0x20] sm:$0xff]
  %v3340 = vld [vmem:[%s556 + $0x28] sm:$0xff]
  %v3341 = vld [vmem:[%s556 + $0x30] sm:$0xff]
  %v3342 = vld [vmem:[%s556 + $0x38] sm:$0xff]
  %v3343 = vld [vmem:[%s556 + $0x40] sm:$0xff]
  %v3344 = vld [vmem:[%s556 + $0x48] sm:$0xff]
  %v3345 = vld [vmem:[%s556 + $0x50] sm:$0xff]
  %v3346 = vld [vmem:[%s556 + $0x58] sm:$0xff]
  %v3347 = vld [vmem:[%s556 + $0x60] sm:$0xff]
  %v3348 = vld [vmem:[%s556 + $0x68] sm:$0xff]
  %v3349 = vld [vmem:[%s556 + $0x70] sm:$0xff]
  %v3350 = vld [vmem:[%s556 + $0x78] sm:$0xff]
  %v3351 = vld [vmem:[%s556 + $0x80] sm:$0xff]
  %v3352 = vld [vmem:[%s556 + $0x88] sm:$0xff]
  %v3353 = vld [vmem:[%s556 + $0x90] sm:$0xff]
  %v3354 = vld [vmem:[%s556 + $0x98] sm:$0xff]
  %v3355 = vld [vmem:[%s556 + $0xa0] sm:$0xff]
  %v3356 = vld [vmem:[%s556 + $0xa8] sm:$0xff]
  %v3357 = vld [vmem:[%s556 + $0xb0] sm:$0xff]
  %v3358 = vld [vmem:[%s556 + $0xb8] sm:$0xff]
  %v3361 = vrot.slane %v2808, 1
  %v3362 = vrot.slane %v2809, 1
  %v3363 = vsel %vm583, %v3361, %v3362
  %v3388 = vunpack.c.l.b16 %v3335
  %v3389 = vunpack.c.h.b16 %v3335
  %v3390 = vunpack.c.l.b16 %v3336
  %v3391 = vunpack.c.h.b16 %v3336
  %v3392 = vunpack.c.l.b16 %v3337
  %v3393 = vunpack.c.h.b16 %v3337
  %v3394 = vunpack.c.l.b16 %v3338
  %v3395 = vunpack.c.h.b16 %v3338
  %v3396 = vunpack.c.l.b16 %v3339
  %v3397 = vunpack.c.h.b16 %v3339
  %v3398 = vunpack.c.l.b16 %v3340
  %v3399 = vunpack.c.h.b16 %v3340
  %v3400 = vunpack.c.l.b16 %v3341
  %v3401 = vunpack.c.h.b16 %v3341
  %v3402 = vunpack.c.l.b16 %v3342
  %v3403 = vunpack.c.h.b16 %v3342
  %v3404 = vunpack.c.l.b16 %v3343
  %v3405 = vunpack.c.h.b16 %v3343
  %v3406 = vunpack.c.l.b16 %v3344
  %v3407 = vunpack.c.h.b16 %v3344
  %v3408 = vunpack.c.l.b16 %v3345
  %v3409 = vunpack.c.h.b16 %v3345
  %v3410 = vunpack.c.l.b16 %v3346
  %v3411 = vunpack.c.h.b16 %v3346
  %v3412 = vunpack.c.l.b16 %v3347
  %v3413 = vunpack.c.h.b16 %v3347
  %v3414 = vunpack.c.l.b16 %v3348
  %v3415 = vunpack.c.h.b16 %v3348
  %v3416 = vunpack.c.l.b16 %v3349
  %v3417 = vunpack.c.h.b16 %v3349
  %v3418 = vunpack.c.l.b16 %v3350
  %v3419 = vunpack.c.h.b16 %v3350
  %v3420 = vunpack.c.l.b16 %v3351
  %v3421 = vunpack.c.h.b16 %v3351
  %v3422 = vunpack.c.l.b16 %v3352
  %v3423 = vunpack.c.h.b16 %v3352
  %v3424 = vunpack.c.l.b16 %v3353
  %v3425 = vunpack.c.h.b16 %v3353
  %v3426 = vunpack.c.l.b16 %v3354
  %v3427 = vunpack.c.h.b16 %v3354
  %v3428 = vunpack.c.l.b16 %v3355
  %v3429 = vunpack.c.h.b16 %v3355
  %v3430 = vunpack.c.l.b16 %v3356
  %v3431 = vunpack.c.h.b16 %v3356
  %v3432 = vunpack.c.l.b16 %v3357
  %v3433 = vunpack.c.h.b16 %v3357
  %v3434 = vunpack.c.l.b16 %v3358
  %v3435 = vunpack.c.h.b16 %v3358
  %v3436 = vpack.c.b16 %v3392, %v3388
  %v3437 = vpack.c.b16 %v3393, %v3389
  %v3438 = vpack.c.b16 %v3394, %v3390
  %v3439 = vpack.c.b16 %v3395, %v3391
  %v3440 = vpack.c.b16 %v3400, %v3396
  %v3441 = vpack.c.b16 %v3401, %v3397
  %v3442 = vpack.c.b16 %v3402, %v3398
  %v3443 = vpack.c.b16 %v3403, %v3399
  %v3444 = vpack.c.b16 %v3408, %v3404
  %v3445 = vpack.c.b16 %v3409, %v3405
  %v3446 = vpack.c.b16 %v3410, %v3406
  %v3447 = vpack.c.b16 %v3411, %v3407
  %v3448 = vpack.c.b16 %v3416, %v3412
  %v3449 = vpack.c.b16 %v3417, %v3413
  %v3450 = vpack.c.b16 %v3418, %v3414
  %v3451 = vpack.c.b16 %v3419, %v3415
  %v3452 = vpack.c.b16 %v3424, %v3420
  %v3453 = vpack.c.b16 %v3425, %v3421
  %v3454 = vpack.c.b16 %v3426, %v3422
  %v3455 = vpack.c.b16 %v3427, %v3423
  %v3456 = vpack.c.b16 %v3432, %v3428
  %v3457 = vpack.c.b16 %v3433, %v3429
  %v3458 = vpack.c.b16 %v3434, %v3430
  %v3459 = vpack.c.b16 %v3435, %v3431
  %v3485 = vsel %vm213, %v3363, 0
  %v3488 = vsel %vm213, %v3362, 0
  %3490 = vmatprep.subr.bf16.mxu0 %v3437
  %3491 = vmatpush1.bf16.msra.mxu0 %v3436
  %3492 = vmatprep.subr.bf16.mxu0 %v3441
  %3493 = vmatpush1.bf16.msra.mxu0 %v3440
  %3494 = vmatprep.subr.bf16.mxu0 %v3445
  %3495 = vmatpush1.bf16.msra.mxu0 %v3444
  %3496 = vmatprep.subr.bf16.mxu0 %v3449
  %3497 = vmatpush1.bf16.msra.mxu0 %v3448
  %3498 = vmatprep.subr.bf16.mxu0 %v3453
  %3499 = vmatpush1.bf16.msra.mxu0 %v3452
  %3500 = vmatprep.subr.bf16.mxu0 %v3457
  %3501 = vmatpush1.bf16.msra.mxu0 %v3456
  %3502 = vmatprep.subr.bf16.mxu0 0
  %3503 = vmatpush1.bf16.msra.mxu0 0
  %3504 = vmatprep.subr.bf16.mxu0 0
  %3505 = vmatpush1.bf16.msra.mxu0 0
  %3506 = vmatprep.subr.bf16.mxu0 0
  %3507 = vmatpush1.bf16.msra.mxu0 0
  %3508 = vmatprep.subr.bf16.mxu0 0
  %3509 = vmatpush1.bf16.msra.mxu0 0
  %3510 = vmatprep.subr.bf16.mxu0 0
  %3511 = vmatpush1.bf16.msra.mxu0 0
  %3512 = vmatprep.subr.bf16.mxu0 0
  %3513 = vmatpush1.bf16.msra.mxu0 0
  %3514 = vmatprep.subr.bf16.mxu0 0
  %3515 = vmatpush1.bf16.msra.mxu0 0
  %3516 = vmatprep.subr.bf16.mxu0 0
  %3517 = vmatpush1.bf16.msra.mxu0 0
  %3518 = vmatprep.subr.bf16.mxu0 0
  %3519 = vmatpush1.bf16.msra.mxu0 0
  %3520 = vmatprep.subr.bf16.mxu0 0
  %3521 = vmatpush1.bf16.msra.mxu0 0
  %3522 = vmatprep.mubr.bf16.mxu0 0
  %3523 = vmatmul.mubr.bf16.gmra.mrb[0].mxu0 %v3485
  %v3524 = vpop.f32.mrb[0].mxu0
  %v3525 = vadd.f32 0.0, %v3524
  %v3526 = vpop.f32.mrb[0].mxu0
  %v3527 = vadd.f32 0.0, %v3526
  %v3528 = vpop.f32.mrb[0].mxu0
  %v3529 = vadd.f32 0.0, %v3528
  %v3530 = vpop.f32.mrb[0].mxu0
  %v3531 = vadd.f32 0.0, %v3530
  %3532 = vmatprep.mubr.bf16.mxu0 0
  %3533 = vmatmul.mubr.bf16.gmra.mrb[0].mxu0 %v3488
  %v3534 = vpop.f32.mrb[0].mxu0
  %v3535 = vadd.f32 0.0, %v3534
  %v3536 = vpop.f32.mrb[0].mxu0
  %v3537 = vadd.f32 0.0, %v3536
  %v3538 = vpop.f32.mrb[0].mxu0
  %v3539 = vadd.f32 0.0, %v3538
  %v3540 = vpop.f32.mrb[0].mxu0
  %v3541 = vadd.f32 0.0, %v3540
  %3542 = vdwg.mxu0
  %3543 = vmatprep.subr.bf16.mxu0 %v3439
  %3544 = vmatpush1.bf16.msra.mxu0 %v3438
  %3545 = vmatprep.subr.bf16.mxu0 %v3443
  %3546 = vmatpush1.bf16.msra.mxu0 %v3442
  %3547 = vmatprep.subr.bf16.mxu0 %v3447
  %3548 = vmatpush1.bf16.msra.mxu0 %v3446
  %3549 = vmatprep.subr.bf16.mxu0 %v3451
  %3550 = vmatpush1.bf16.msra.mxu0 %v3450
  %3551 = vmatprep.subr.bf16.mxu0 %v3455
  %3552 = vmatpush1.bf16.msra.mxu0 %v3454
  %3553 = vmatprep.subr.bf16.mxu0 %v3459
  %3554 = vmatpush1.bf16.msra.mxu0 %v3458
  %3555 = vmatprep.subr.bf16.mxu0 0
  %3556 = vmatpush1.bf16.msra.mxu0 0
  %3557 = vmatprep.subr.bf16.mxu0 0
  %3558 = vmatpush1.bf16.msra.mxu0 0
  %3559 = vmatprep.subr.bf16.mxu0 0
  %3560 = vmatpush1.bf16.msra.mxu0 0
  %3561 = vmatprep.subr.bf16.mxu0 0
  %3562 = vmatpush1.bf16.msra.mxu0 0
  %3563 = vmatprep.subr.bf16.mxu0 0
  %3564 = vmatpush1.bf16.msra.mxu0 0
  %3565 = vmatprep.subr.bf16.mxu0 0
  %3566 = vmatpush1.bf16.msra.mxu0 0
  %3567 = vmatprep.subr.bf16.mxu0 0
  %3568 = vmatpush1.bf16.msra.mxu0 0
  %3569 = vmatprep.subr.bf16.mxu0 0
  %3570 = vmatpush1.bf16.msra.mxu0 0
  %3571 = vmatprep.subr.bf16.mxu0 0
  %3572 = vmatpush1.bf16.msra.mxu0 0
  %3573 = vmatprep.subr.bf16.mxu0 0
  %3574 = vmatpush1.bf16.msra.mxu0 0
  %3575 = vmatprep.mubr.bf16.mxu0 0
  %3576 = vmatmul.mubr.bf16.gmra.mrb[0].mxu0 %v3485
  %v3577 = vpop.f32.mrb[0].mxu0
  %v3578 = vadd.f32 0.0, %v3577
  %v3579 = vpop.f32.mrb[0].mxu0
  %v3580 = vadd.f32 0.0, %v3579
  %v3581 = vpop.f32.mrb[0].mxu0
  %v3582 = vadd.f32 0.0, %v3581
  %v3583 = vpop.f32.mrb[0].mxu0
  %v3584 = vadd.f32 0.0, %v3583
  %3585 = vmatprep.mubr.bf16.mxu0 0
  %3586 = vmatmul.mubr.bf16.gmra.mrb[0].mxu0 %v3488
  %v3587 = vpop.f32.mrb[0].mxu0
  %v3588 = vadd.f32 0.0, %v3587
  %v3589 = vpop.f32.mrb[0].mxu0
  %v3590 = vadd.f32 0.0, %v3589
  %v3591 = vpop.f32.mrb[0].mxu0
  %v3592 = vadd.f32 0.0, %v3591
  %v3593 = vpop.f32.mrb[0].mxu0
  %v3594 = vadd.f32 0.0, %v3593
  %3595 = vdwg.mxu0
  %v3596 = vadd.f32 %v3264, %v3525
  %v3597 = vadd.f32 %v3266, %v3527
  %v3598 = vadd.f32 %v3317, %v3578
  %v3599 = vadd.f32 %v3319, %v3580
  %v3600 = vadd.f32 %v3268, %v3529
  %v3601 = vadd.f32 %v3270, %v3531
  %v3602 = vadd.f32 %v3321, %v3582
  %v3603 = vadd.f32 %v3323, %v3584
  %v3604 = vadd.f32 %v3274, %v3535
  %v3605 = vadd.f32 %v3276, %v3537
  %v3606 = vadd.f32 %v3327, %v3588
  %v3607 = vadd.f32 %v3329, %v3590
  %v3608 = vadd.f32 %v3278, %v3539
  %v3609 = vadd.f32 %v3280, %v3541
  %v3610 = vadd.f32 %v3331, %v3592
  %v3611 = vadd.f32 %v3333, %v3594
  %v3612 = vld [vmem:[%s835] sm:$0xff]
  %v3613 = vld [vmem:[%s835 + $0x8] sm:$0xff]
  %v3614 = vld [vmem:[%s835 + $0x10] sm:$0xff]
  %v3615 = vld [vmem:[%s835 + $0x18] sm:$0xff]
  %v3616 = vld [vmem:[%s835 + $0x20] sm:$0xff]
  %v3617 = vld [vmem:[%s835 + $0x28] sm:$0xff]
  %v3618 = vld [vmem:[%s835 + $0x30] sm:$0xff]
  %v3619 = vld [vmem:[%s835 + $0x38] sm:$0xff]
  %v3620 = vld [vmem:[%s835 + $0x40] sm:$0xff]
  %v3621 = vld [vmem:[%s835 + $0x48] sm:$0xff]
  %v3622 = vld [vmem:[%s835 + $0x50] sm:$0xff]
  %v3623 = vld [vmem:[%s835 + $0x58] sm:$0xff]
  %v3624 = vld [vmem:[%s835 + $0x60] sm:$0xff]
  %v3625 = vld [vmem:[%s835 + $0x68] sm:$0xff]
  %v3626 = vld [vmem:[%s835 + $0x70] sm:$0xff]
  %v3627 = vld [vmem:[%s835 + $0x78] sm:$0xff]
  %v3628 = vld [vmem:[%s835 + $0x80] sm:$0xff]
  %v3629 = vld [vmem:[%s835 + $0x88] sm:$0xff]
  %v3630 = vld [vmem:[%s835 + $0x90] sm:$0xff]
  %v3631 = vld [vmem:[%s835 + $0x98] sm:$0xff]
  %v3632 = vld [vmem:[%s835 + $0xa0] sm:$0xff]
  %v3633 = vld [vmem:[%s835 + $0xa8] sm:$0xff]
  %v3634 = vld [vmem:[%s835 + $0xb0] sm:$0xff]
  %v3635 = vld [vmem:[%s835 + $0xb8] sm:$0xff]
  %v3636 = vrot.slane %v2859, 1
  %v3637 = vrot.slane %v2861, 2
  %v3638 = vor.u32 %v3636, %v3637
  %v3639 = vrot.slane %v2870, 1
  %v3640 = vrot.slane %v2866, 2
  %v3641 = vor.u32 %v3639, %v3640
  %v3642 = vsel %vm860, %v3638, %v3641
  %v3667 = vunpack.c.l.b16 %v3612
  %v3668 = vunpack.c.h.b16 %v3612
  %v3669 = vunpack.c.l.b16 %v3613
  %v3670 = vunpack.c.h.b16 %v3613
  %v3671 = vunpack.c.l.b16 %v3614
  %v3672 = vunpack.c.h.b16 %v3614
  %v3673 = vunpack.c.l.b16 %v3615
  %v3674 = vunpack.c.h.b16 %v3615
  %v3675 = vunpack.c.l.b16 %v3616
  %v3676 = vunpack.c.h.b16 %v3616
  %v3677 = vunpack.c.l.b16 %v3617
  %v3678 = vunpack.c.h.b16 %v3617
  %v3679 = vunpack.c.l.b16 %v3618
  %v3680 = vunpack.c.h.b16 %v3618
  %v3681 = vunpack.c.l.b16 %v3619
  %v3682 = vunpack.c.h.b16 %v3619
  %v3683 = vunpack.c.l.b16 %v3620
  %v3684 = vunpack.c.h.b16 %v3620
  %v3685 = vunpack.c.l.b16 %v3621
  %v3686 = vunpack.c.h.b16 %v3621
  %v3687 = vunpack.c.l.b16 %v3622
  %v3688 = vunpack.c.h.b16 %v3622
  %v3689 = vunpack.c.l.b16 %v3623
  %v3690 = vunpack.c.h.b16 %v3623
  %v3691 = vunpack.c.l.b16 %v3624
  %v3692 = vunpack.c.h.b16 %v3624
  %v3693 = vunpack.c.l.b16 %v3625
  %v3694 = vunpack.c.h.b16 %v3625
  %v3695 = vunpack.c.l.b16 %v3626
  %v3696 = vunpack.c.h.b16 %v3626
  %v3697 = vunpack.c.l.b16 %v3627
  %v3698 = vunpack.c.h.b16 %v3627
  %v3699 = vunpack.c.l.b16 %v3628
  %v3700 = vunpack.c.h.b16 %v3628
  %v3701 = vunpack.c.l.b16 %v3629
  %v3702 = vunpack.c.h.b16 %v3629
  %v3703 = vunpack.c.l.b16 %v3630
  %v3704 = vunpack.c.h.b16 %v3630
  %v3705 = vunpack.c.l.b16 %v3631
  %v3706 = vunpack.c.h.b16 %v3631
  %v3707 = vunpack.c.l.b16 %v3632
  %v3708 = vunpack.c.h.b16 %v3632
  %v3709 = vunpack.c.l.b16 %v3633
  %v3710 = vunpack.c.h.b16 %v3633
  %v3711 = vunpack.c.l.b16 %v3634
  %v3712 = vunpack.c.h.b16 %v3634
  %v3713 = vunpack.c.l.b16 %v3635
  %v3714 = vunpack.c.h.b16 %v3635
  %v3715 = vpack.c.b16 %v3671, %v3667
  %v3716 = vpack.c.b16 %v3672, %v3668
  %v3717 = vpack.c.b16 %v3673, %v3669
  %v3718 = vpack.c.b16 %v3674, %v3670
  %v3719 = vpack.c.b16 %v3679, %v3675
  %v3720 = vpack.c.b16 %v3680, %v3676
  %v3721 = vpack.c.b16 %v3681, %v3677
  %v3722 = vpack.c.b16 %v3682, %v3678
  %v3723 = vpack.c.b16 %v3687, %v3683
  %v3724 = vpack.c.b16 %v3688, %v3684
  %v3725 = vpack.c.b16 %v3689, %v3685
  %v3726 = vpack.c.b16 %v3690, %v3686
  %v3727 = vpack.c.b16 %v3695, %v3691
  %v3728 = vpack.c.b16 %v3696, %v3692
  %v3729 = vpack.c.b16 %v3697, %v3693
  %v3730 = vpack.c.b16 %v3698, %v3694
  %v3731 = vpack.c.b16 %v3703, %v3699
  %v3732 = vpack.c.b16 %v3704, %v3700
  %v3733 = vpack.c.b16 %v3705, %v3701
  %v3734 = vpack.c.b16 %v3706, %v3702
  %v3735 = vpack.c.b16 %v3711, %v3707
  %v3736 = vpack.c.b16 %v3712, %v3708
  %v3737 = vpack.c.b16 %v3713, %v3709
  %v3738 = vpack.c.b16 %v3714, %v3710
  %v3764 = vsel %vm213, %v3642, 0
  %v3767 = vsel %vm213, %v3641, 0
  %3769 = vmatprep.subr.bf16.mxu0 %v3716
  %3770 = vmatpush1.bf16.msra.mxu0 %v3715
  %3771 = vmatprep.subr.bf16.mxu0 %v3720
  %3772 = vmatpush1.bf16.msra.mxu0 %v3719
  %3773 = vmatprep.subr.bf16.mxu0 %v3724
  %3774 = vmatpush1.bf16.msra.mxu0 %v3723
  %3775 = vmatprep.subr.bf16.mxu0 %v3728
  %3776 = vmatpush1.bf16.msra.mxu0 %v3727
  %3777 = vmatprep.subr.bf16.mxu0 %v3732
  %3778 = vmatpush1.bf16.msra.mxu0 %v3731
  %3779 = vmatprep.subr.bf16.mxu0 %v3736
  %3780 = vmatpush1.bf16.msra.mxu0 %v3735
  %3781 = vmatprep.subr.bf16.mxu0 0
  %3782 = vmatpush1.bf16.msra.mxu0 0
  %3783 = vmatprep.subr.bf16.mxu0 0
  %3784 = vmatpush1.bf16.msra.mxu0 0
  %3785 = vmatprep.subr.bf16.mxu0 0
  %3786 = vmatpush1.bf16.msra.mxu0 0
  %3787 = vmatprep.subr.bf16.mxu0 0
  %3788 = vmatpush1.bf16.msra.mxu0 0
  %3789 = vmatprep.subr.bf16.mxu0 0
  %3790 = vmatpush1.bf16.msra.mxu0 0
  %3791 = vmatprep.subr.bf16.mxu0 0
  %3792 = vmatpush1.bf16.msra.mxu0 0
  %3793 = vmatprep.subr.bf16.mxu0 0
  %3794 = vmatpush1.bf16.msra.mxu0 0
  %3795 = vmatprep.subr.bf16.mxu0 0
  %3796 = vmatpush1.bf16.msra.mxu0 0
  %3797 = vmatprep.subr.bf16.mxu0 0
  %3798 = vmatpush1.bf16.msra.mxu0 0
  %3799 = vmatprep.subr.bf16.mxu0 0
  %3800 = vmatpush1.bf16.msra.mxu0 0
  %3801 = vmatprep.mubr.bf16.mxu0 0
  %3802 = vmatmul.mubr.bf16.gmra.mrb[0].mxu0 %v3764
  %v3803 = vpop.f32.mrb[0].mxu0
  %v3804 = vadd.f32 0.0, %v3803
  %v3805 = vpop.f32.mrb[0].mxu0
  %v3806 = vadd.f32 0.0, %v3805
  %v3807 = vpop.f32.mrb[0].mxu0
  %v3808 = vadd.f32 0.0, %v3807
  %v3809 = vpop.f32.mrb[0].mxu0
  %v3810 = vadd.f32 0.0, %v3809
  %3811 = vmatprep.mubr.bf16.mxu0 0
  %3812 = vmatmul.mubr.bf16.gmra.mrb[0].mxu0 %v3767
  %v3813 = vpop.f32.mrb[0].mxu0
  %v3814 = vadd.f32 0.0, %v3813
  %v3815 = vpop.f32.mrb[0].mxu0
  %v3816 = vadd.f32 0.0, %v3815
  %v3817 = vpop.f32.mrb[0].mxu0
  %v3818 = vadd.f32 0.0, %v3817
  %v3819 = vpop.f32.mrb[0].mxu0
  %v3820 = vadd.f32 0.0, %v3819
  %3821 = vdwg.mxu0
  %3822 = vmatprep.subr.bf16.mxu0 %v3718
  %3823 = vmatpush1.bf16.msra.mxu0 %v3717
  %3824 = vmatprep.subr.bf16.mxu0 %v3722
  %3825 = vmatpush1.bf16.msra.mxu0 %v3721
  %3826 = vmatprep.subr.bf16.mxu0 %v3726
  %3827 = vmatpush1.bf16.msra.mxu0 %v3725
  %3828 = vmatprep.subr.bf16.mxu0 %v3730
  %3829 = vmatpush1.bf16.msra.mxu0 %v3729
  %3830 = vmatprep.subr.bf16.mxu0 %v3734
  %3831 = vmatpush1.bf16.msra.mxu0 %v3733
  %3832 = vmatprep.subr.bf16.mxu0 %v3738
  %3833 = vmatpush1.bf16.msra.mxu0 %v3737
  %3834 = vmatprep.subr.bf16.mxu0 0
  %3835 = vmatpush1.bf16.msra.mxu0 0
  %3836 = vmatprep.subr.bf16.mxu0 0
  %3837 = vmatpush1.bf16.msra.mxu0 0
  %3838 = vmatprep.subr.bf16.mxu0 0
  %3839 = vmatpush1.bf16.msra.mxu0 0
  %3840 = vmatprep.subr.bf16.mxu0 0
  %3841 = vmatpush1.bf16.msra.mxu0 0
  %3842 = vmatprep.subr.bf16.mxu0 0
  %3843 = vmatpush1.bf16.msra.mxu0 0
  %3844 = vmatprep.subr.bf16.mxu0 0
  %3845 = vmatpush1.bf16.msra.mxu0 0
  %3846 = vmatprep.subr.bf16.mxu0 0
  %3847 = vmatpush1.bf16.msra.mxu0 0
  %3848 = vmatprep.subr.bf16.mxu0 0
  %3849 = vmatpush1.bf16.msra.mxu0 0
  %3850 = vmatprep.subr.bf16.mxu0 0
  %3851 = vmatpush1.bf16.msra.mxu0 0
  %3852 = vmatprep.subr.bf16.mxu0 0
  %3853 = vmatpush1.bf16.msra.mxu0 0
  %3854 = vmatprep.mubr.bf16.mxu0 0
  %3855 = vmatmul.mubr.bf16.gmra.mrb[0].mxu0 %v3764
  %v3856 = vpop.f32.mrb[0].mxu0
  %v3857 = vadd.f32 0.0, %v3856
  %v3858 = vpop.f32.mrb[0].mxu0
  %v3859 = vadd.f32 0.0, %v3858
  %v3860 = vpop.f32.mrb[0].mxu0
  %v3861 = vadd.f32 0.0, %v3860
  %v3862 = vpop.f32.mrb[0].mxu0
  %v3863 = vadd.f32 0.0, %v3862
  %3864 = vmatprep.mubr.bf16.mxu0 0
  %3865 = vmatmul.mubr.bf16.gmra.mrb[0].mxu0 %v3767
  %v3866 = vpop.f32.mrb[0].mxu0
  %v3867 = vadd.f32 0.0, %v3866
  %v3868 = vpop.f32.mrb[0].mxu0
  %v3869 = vadd.f32 0.0, %v3868
  %v3870 = vpop.f32.mrb[0].mxu0
  %v3871 = vadd.f32 0.0, %v3870
  %v3872 = vpop.f32.mrb[0].mxu0
  %v3873 = vadd.f32 0.0, %v3872
  %3874 = vdwg.mxu0
  %v3875 = vadd.f32 %v3596, %v3804
  %v3876 = vadd.f32 %v3597, %v3806
  %v3877 = vadd.f32 %v3598, %v3857
  %v3878 = vadd.f32 %v3599, %v3859
  %v3879 = vadd.f32 %v3600, %v3808
  %v3880 = vadd.f32 %v3601, %v3810
  %v3881 = vadd.f32 %v3602, %v3861
  %v3882 = vadd.f32 %v3603, %v3863
  %v3883 = vadd.f32 %v3604, %v3814
  %v3884 = vadd.f32 %v3605, %v3816
  %v3885 = vadd.f32 %v3606, %v3867
  %v3886 = vadd.f32 %v3607, %v3869
  %v3887 = vadd.f32 %v3608, %v3818
  %v3888 = vadd.f32 %v3609, %v3820
  %v3889 = vadd.f32 %v3610, %v3871
  %v3890 = vadd.f32 %v3611, %v3873
  %v3891 = vld [vmem:[%s1116] sm:$0xff]
  %v3892 = vld [vmem:[%s1116 + $0x8] sm:$0xff]
  %v3893 = vld [vmem:[%s1116 + $0x10] sm:$0xff]
  %v3894 = vld [vmem:[%s1116 + $0x18] sm:$0xff]
  %v3895 = vld [vmem:[%s1116 + $0x20] sm:$0xff]
  %v3896 = vld [vmem:[%s1116 + $0x28] sm:$0xff]
  %v3897 = vld [vmem:[%s1116 + $0x30] sm:$0xff]
  %v3898 = vld [vmem:[%s1116 + $0x38] sm:$0xff]
  %v3899 = vld [vmem:[%s1116 + $0x40] sm:$0xff]
  %v3900 = vld [vmem:[%s1116 + $0x48] sm:$0xff]
  %v3901 = vld [vmem:[%s1116 + $0x50] sm:$0xff]
  %v3902 = vld [vmem:[%s1116 + $0x58] sm:$0xff]
  %v3903 = vld [vmem:[%s1116 + $0x60] sm:$0xff]
  %v3904 = vld [vmem:[%s1116 + $0x68] sm:$0xff]
  %v3905 = vld [vmem:[%s1116 + $0x70] sm:$0xff]
  %v3906 = vld [vmem:[%s1116 + $0x78] sm:$0xff]
  %v3907 = vld [vmem:[%s1116 + $0x80] sm:$0xff]
  %v3908 = vld [vmem:[%s1116 + $0x88] sm:$0xff]
  %v3909 = vld [vmem:[%s1116 + $0x90] sm:$0xff]
  %v3910 = vld [vmem:[%s1116 + $0x98] sm:$0xff]
  %v3911 = vld [vmem:[%s1116 + $0xa0] sm:$0xff]
  %v3912 = vld [vmem:[%s1116 + $0xa8] sm:$0xff]
  %v3913 = vld [vmem:[%s1116 + $0xb0] sm:$0xff]
  %v3914 = vld [vmem:[%s1116 + $0xb8] sm:$0xff]
  %v3915 = vrot.slane %v2808, 2
  %v3916 = vrot.slane %v2809, 2
  %v3917 = vsel %vm1141, %v3915, %v3916
  %v3942 = vunpack.c.l.b16 %v3891
  %v3943 = vunpack.c.h.b16 %v3891
  %v3944 = vunpack.c.l.b16 %v3892
  %v3945 = vunpack.c.h.b16 %v3892
  %v3946 = vunpack.c.l.b16 %v3893
  %v3947 = vunpack.c.h.b16 %v3893
  %v3948 = vunpack.c.l.b16 %v3894
  %v3949 = vunpack.c.h.b16 %v3894
  %v3950 = vunpack.c.l.b16 %v3895
  %v3951 = vunpack.c.h.b16 %v3895
  %v3952 = vunpack.c.l.b16 %v3896
  %v3953 = vunpack.c.h.b16 %v3896
  %v3954 = vunpack.c.l.b16 %v3897
  %v3955 = vunpack.c.h.b16 %v3897
  %v3956 = vunpack.c.l.b16 %v3898
  %v3957 = vunpack.c.h.b16 %v3898
  %v3958 = vunpack.c.l.b16 %v3899
  %v3959 = vunpack.c.h.b16 %v3899
  %v3960 = vunpack.c.l.b16 %v3900
  %v3961 = vunpack.c.h.b16 %v3900
  %v3962 = vunpack.c.l.b16 %v3901
  %v3963 = vunpack.c.h.b16 %v3901
  %v3964 = vunpack.c.l.b16 %v3902
  %v3965 = vunpack.c.h.b16 %v3902
  %v3966 = vunpack.c.l.b16 %v3903
  %v3967 = vunpack.c.h.b16 %v3903
  %v3968 = vunpack.c.l.b16 %v3904
  %v3969 = vunpack.c.h.b16 %v3904
  %v3970 = vunpack.c.l.b16 %v3905
  %v3971 = vunpack.c.h.b16 %v3905
  %v3972 = vunpack.c.l.b16 %v3906
  %v3973 = vunpack.c.h.b16 %v3906
  %v3974 = vunpack.c.l.b16 %v3907
  %v3975 = vunpack.c.h.b16 %v3907
  %v3976 = vunpack.c.l.b16 %v3908
  %v3977 = vunpack.c.h.b16 %v3908
  %v3978 = vunpack.c.l.b16 %v3909
  %v3979 = vunpack.c.h.b16 %v3909
  %v3980 = vunpack.c.l.b16 %v3910
  %v3981 = vunpack.c.h.b16 %v3910
  %v3982 = vunpack.c.l.b16 %v3911
  %v3983 = vunpack.c.h.b16 %v3911
  %v3984 = vunpack.c.l.b16 %v3912
  %v3985 = vunpack.c.h.b16 %v3912
  %v3986 = vunpack.c.l.b16 %v3913
  %v3987 = vunpack.c.h.b16 %v3913
  %v3988 = vunpack.c.l.b16 %v3914
  %v3989 = vunpack.c.h.b16 %v3914
  %v3990 = vpack.c.b16 %v3946, %v3942
  %v3991 = vpack.c.b16 %v3947, %v3943
  %v3992 = vpack.c.b16 %v3948, %v3944
  %v3993 = vpack.c.b16 %v3949, %v3945
  %v3994 = vpack.c.b16 %v3954, %v3950
  %v3995 = vpack.c.b16 %v3955, %v3951
  %v3996 = vpack.c.b16 %v3956, %v3952
  %v3997 = vpack.c.b16 %v3957, %v3953
  %v3998 = vpack.c.b16 %v3962, %v3958
  %v3999 = vpack.c.b16 %v3963, %v3959
  %v4000 = vpack.c.b16 %v3964, %v3960
  %v4001 = vpack.c.b16 %v3965, %v3961
  %v4002 = vpack.c.b16 %v3970, %v3966
  %v4003 = vpack.c.b16 %v3971, %v3967
  %v4004 = vpack.c.b16 %v3972, %v3968
  %v4005 = vpack.c.b16 %v3973, %v3969
  %v4006 = vpack.c.b16 %v3978, %v3974
  %v4007 = vpack.c.b16 %v3979, %v3975
  %v4008 = vpack.c.b16 %v3980, %v3976
  %v4009 = vpack.c.b16 %v3981, %v3977
  %v4010 = vpack.c.b16 %v3986, %v3982
  %v4011 = vpack.c.b16 %v3987, %v3983
  %v4012 = vpack.c.b16 %v3988, %v3984
  %v4013 = vpack.c.b16 %v3989, %v3985
  %v4039 = vsel %vm213, %v3917, 0
  %v4042 = vsel %vm213, %v3916, 0
  %4044 = vmatprep.subr.bf16.mxu0 %v3991
  %4045 = vmatpush1.bf16.msra.mxu0 %v3990
  %4046 = vmatprep.subr.bf16.mxu0 %v3995
  %4047 = vmatpush1.bf16.msra.mxu0 %v3994
  %4048 = vmatprep.subr.bf16.mxu0 %v3999
  %4049 = vmatpush1.bf16.msra.mxu0 %v3998
  %4050 = vmatprep.subr.bf16.mxu0 %v4003
  %4051 = vmatpush1.bf16.msra.mxu0 %v4002
  %4052 = vmatprep.subr.bf16.mxu0 %v4007
  %4053 = vmatpush1.bf16.msra.mxu0 %v4006
  %4054 = vmatprep.subr.bf16.mxu0 %v4011
  %4055 = vmatpush1.bf16.msra.mxu0 %v4010
  %4056 = vmatprep.subr.bf16.mxu0 0
  %4057 = vmatpush1.bf16.msra.mxu0 0
  %4058 = vmatprep.subr.bf16.mxu0 0
  %4059 = vmatpush1.bf16.msra.mxu0 0
  %4060 = vmatprep.subr.bf16.mxu0 0
  %4061 = vmatpush1.bf16.msra.mxu0 0
  %4062 = vmatprep.subr.bf16.mxu0 0
  %4063 = vmatpush1.bf16.msra.mxu0 0
  %4064 = vmatprep.subr.bf16.mxu0 0
  %4065 = vmatpush1.bf16.msra.mxu0 0
  %4066 = vmatprep.subr.bf16.mxu0 0
  %4067 = vmatpush1.bf16.msra.mxu0 0
  %4068 = vmatprep.subr.bf16.mxu0 0
  %4069 = vmatpush1.bf16.msra.mxu0 0
  %4070 = vmatprep.subr.bf16.mxu0 0
  %4071 = vmatpush1.bf16.msra.mxu0 0
  %4072 = vmatprep.subr.bf16.mxu0 0
  %4073 = vmatpush1.bf16.msra.mxu0 0
  %4074 = vmatprep.subr.bf16.mxu0 0
  %4075 = vmatpush1.bf16.msra.mxu0 0
  %4076 = vmatprep.mubr.bf16.mxu0 0
  %4077 = vmatmul.mubr.bf16.gmra.mrb[0].mxu0 %v4039
  %v4078 = vpop.f32.mrb[0].mxu0
  %v4079 = vadd.f32 0.0, %v4078
  %v4080 = vpop.f32.mrb[0].mxu0
  %v4081 = vadd.f32 0.0, %v4080
  %v4082 = vpop.f32.mrb[0].mxu0
  %v4083 = vadd.f32 0.0, %v4082
  %v4084 = vpop.f32.mrb[0].mxu0
  %v4085 = vadd.f32 0.0, %v4084
  %4086 = vmatprep.mubr.bf16.mxu0 0
  %4087 = vmatmul.mubr.bf16.gmra.mrb[0].mxu0 %v4042
  %v4088 = vpop.f32.mrb[0].mxu0
  %v4089 = vadd.f32 0.0, %v4088
  %v4090 = vpop.f32.mrb[0].mxu0
  %v4091 = vadd.f32 0.0, %v4090
  %v4092 = vpop.f32.mrb[0].mxu0
  %v4093 = vadd.f32 0.0, %v4092
  %v4094 = vpop.f32.mrb[0].mxu0
  %v4095 = vadd.f32 0.0, %v4094
  %4096 = vdwg.mxu0
  %4097 = vmatprep.subr.bf16.mxu0 %v3993
  %4098 = vmatpush1.bf16.msra.mxu0 %v3992
  %4099 = vmatprep.subr.bf16.mxu0 %v3997
  %4100 = vmatpush1.bf16.msra.mxu0 %v3996
  %4101 = vmatprep.subr.bf16.mxu0 %v4001
  %4102 = vmatpush1.bf16.msra.mxu0 %v4000
  %4103 = vmatprep.subr.bf16.mxu0 %v4005
  %4104 = vmatpush1.bf16.msra.mxu0 %v4004
  %4105 = vmatprep.subr.bf16.mxu0 %v4009
  %4106 = vmatpush1.bf16.msra.mxu0 %v4008
  %4107 = vmatprep.subr.bf16.mxu0 %v4013
  %4108 = vmatpush1.bf16.msra.mxu0 %v4012
  %4109 = vmatprep.subr.bf16.mxu0 0
  %4110 = vmatpush1.bf16.msra.mxu0 0
  %4111 = vmatprep.subr.bf16.mxu0 0
  %4112 = vmatpush1.bf16.msra.mxu0 0
  %4113 = vmatprep.subr.bf16.mxu0 0
  %4114 = vmatpush1.bf16.msra.mxu0 0
  %4115 = vmatprep.subr.bf16.mxu0 0
  %4116 = vmatpush1.bf16.msra.mxu0 0
  %4117 = vmatprep.subr.bf16.mxu0 0
  %4118 = vmatpush1.bf16.msra.mxu0 0
  %4119 = vmatprep.subr.bf16.mxu0 0
  %4120 = vmatpush1.bf16.msra.mxu0 0
  %4121 = vmatprep.subr.bf16.mxu0 0
  %4122 = vmatpush1.bf16.msra.mxu0 0
  %4123 = vmatprep.subr.bf16.mxu0 0
  %4124 = vmatpush1.bf16.msra.mxu0 0
  %4125 = vmatprep.subr.bf16.mxu0 0
  %4126 = vmatpush1.bf16.msra.mxu0 0
  %4127 = vmatprep.subr.bf16.mxu0 0
  %4128 = vmatpush1.bf16.msra.mxu0 0
  %4129 = vmatprep.mubr.bf16.mxu0 0
  %4130 = vmatmul.mubr.bf16.gmra.mrb[0].mxu0 %v4039
  %v4131 = vpop.f32.mrb[0].mxu0
  %v4132 = vadd.f32 0.0, %v4131
  %v4133 = vpop.f32.mrb[0].mxu0
  %v4134 = vadd.f32 0.0, %v4133
  %v4135 = vpop.f32.mrb[0].mxu0
  %v4136 = vadd.f32 0.0, %v4135
  %v4137 = vpop.f32.mrb[0].mxu0
  %v4138 = vadd.f32 0.0, %v4137
  %4139 = vmatprep.mubr.bf16.mxu0 0
  %4140 = vmatmul.mubr.bf16.gmra.mrb[0].mxu0 %v4042
  %v4141 = vpop.f32.mrb[0].mxu0
  %v4142 = vadd.f32 0.0, %v4141
  %v4143 = vpop.f32.mrb[0].mxu0
  %v4144 = vadd.f32 0.0, %v4143
  %v4145 = vpop.f32.mrb[0].mxu0
  %v4146 = vadd.f32 0.0, %v4145
  %v4147 = vpop.f32.mrb[0].mxu0
  %v4148 = vadd.f32 0.0, %v4147
  %4149 = vdwg.mxu0
  %v4150 = vadd.f32 %v3875, %v4079
  %v4151 = vadd.f32 %v3876, %v4081
  %v4152 = vadd.f32 %v3877, %v4132
  %v4153 = vadd.f32 %v3878, %v4134
  %v4154 = vadd.f32 %v3879, %v4083
  %v4155 = vadd.f32 %v3880, %v4085
  %v4156 = vadd.f32 %v3881, %v4136
  %v4157 = vadd.f32 %v3882, %v4138
  %v4158 = vadd.f32 %v3883, %v4089
  %v4159 = vadd.f32 %v3884, %v4091
  %v4160 = vadd.f32 %v3885, %v4142
  %v4161 = vadd.f32 %v3886, %v4144
  %v4162 = vadd.f32 %v3887, %v4093
  %v4163 = vadd.f32 %v3888, %v4095
  %v4164 = vadd.f32 %v3889, %v4146
  %v4165 = vadd.f32 %v3890, %v4148
  %v4166 = vadd.f32 %v4150, %v1397
  %v4167 = vadd.f32 %v4151, %v1401
  %v4168 = vadd.f32 %v4152, %v1405
  %v4169 = vadd.f32 %v4153, %v1409
  %v4170 = vadd.f32 %v4154, %v1397
  %v4171 = vadd.f32 %v4155, %v1401
  %v4172 = vadd.f32 %v4156, %v1405
  %v4173 = vadd.f32 %v4157, %v1409
  %v4174 = vadd.f32 %v4158, %v1397
  %v4175 = vadd.f32 %v4159, %v1401
  %v4176 = vadd.f32 %v4160, %v1405
  %v4177 = vadd.f32 %v4161, %v1409
  %v4178 = vadd.f32 %v4162, %v1397
  %v4179 = vadd.f32 %v4163, %v1401
  %v4180 = vadd.f32 %v4164, %v1405
  %v4181 = vadd.f32 %v4165, %v1409
  %v4182 = vmax.f32 %v4166, 0.0
  %v4183 = vmax.f32 %v4167, 0.0
  %v4184 = vmax.f32 %v4168, 0.0
  %v4185 = vmax.f32 %v4169, 0.0
  %v4186 = vmax.f32 %v4170, 0.0
  %v4187 = vmax.f32 %v4171, 0.0
  %v4188 = vmax.f32 %v4172, 0.0
  %v4189 = vmax.f32 %v4173, 0.0
  %v4190 = vmax.f32 %v4174, 0.0
  %v4191 = vmax.f32 %v4175, 0.0
  %v4192 = vmax.f32 %v4176, 0.0
  %v4193 = vmax.f32 %v4177, 0.0
  %v4194 = vmax.f32 %v4178, 0.0
  %v4195 = vmax.f32 %v4179, 0.0
  %v4196 = vmax.f32 %v4180, 0.0
  %v4197 = vmax.f32 %v4181, 0.0
  %v4198 = vld [vmem:[%s3] sm:$0xff]
  %v4199 = vld [vmem:[%s3 + $0x8] sm:$0x1f]
  %v4201 = vsel %vm1448, %v4198, 0
  %v4204 = vsel %vm1448, %v4199, 0
  %v4207 = vsel %vm1455, %v4194, 0
  %v4210 = vsel %vm1455, %v4195, 0
  %v4213 = vsel %vm1455, %v4196, 0
  %v4216 = vsel %vm1455, %v4197, 0
  %4218 = vmatprep.subr.mxu0 %v4183
  %4219 = vmatpush1.msra.mxu0 %v4182
  %4220 = vmatprep.subr.mxu0 %v4187
  %4221 = vmatpush1.msra.mxu0 %v4186
  %4222 = vmatprep.subr.mxu0 %v4191
  %4223 = vmatpush1.msra.mxu0 %v4190
  %4224 = vmatprep.subr.mxu0 %v4210
  %4225 = vmatpush1.msra.mxu0 %v4207
  %4226 = vmatprep.subr.mxu0 0.0
  %4227 = vmatpush1.msra.mxu0 0.0
  %4228 = vmatprep.subr.mxu0 0.0
  %4229 = vmatpush1.msra.mxu0 0.0
  %4230 = vmatprep.subr.mxu0 0.0
  %4231 = vmatpush1.msra.mxu0 0.0
  %4232 = vmatprep.subr.mxu0 0.0
  %4233 = vmatpush1.msra.mxu0 0.0
  %4234 = vmatprep.subr.mxu0 0.0
  %4235 = vmatpush1.msra.mxu0 0.0
  %4236 = vmatprep.subr.mxu0 0.0
  %4237 = vmatpush1.msra.mxu0 0.0
  %4238 = vmatprep.subr.mxu0 0.0
  %4239 = vmatpush1.msra.mxu0 0.0
  %4240 = vmatprep.subr.mxu0 0.0
  %4241 = vmatpush1.msra.mxu0 0.0
  %4242 = vmatprep.subr.mxu0 0.0
  %4243 = vmatpush1.msra.mxu0 0.0
  %4244 = vmatprep.subr.mxu0 0.0
  %4245 = vmatpush1.msra.mxu0 0.0
  %4246 = vmatprep.subr.mxu0 0.0
  %4247 = vmatpush1.msra.mxu0 0.0
  %4248 = vmatprep.subr.mxu0 0.0
  %4249 = vmatpush1.msra.mxu0 0.0
  %4250 = vmatprep.subr.mxu0 0.0
  %4251 = vmatpush1.msra.mxu0 0.0
  %4252 = vmatprep.subr.mxu0 0.0
  %4253 = vmatpush1.msra.mxu0 0.0
  %4254 = vmatprep.subr.mxu0 0.0
  %4255 = vmatpush1.msra.mxu0 0.0
  %4256 = vmatprep.subr.mxu0 0.0
  %4257 = vmatpush1.msra.mxu0 0.0
  %4258 = vmatprep.subr.mxu0 0.0
  %4259 = vmatpush1.msra.mxu0 0.0
  %4260 = vmatprep.subr.mxu0 0.0
  %4261 = vmatpush1.msra.mxu0 0.0
  %4262 = vmatprep.subr.mxu0 0.0
  %4263 = vmatpush1.msra.mxu0 0.0
  %4264 = vmatprep.subr.mxu0 0.0
  %4265 = vmatpush1.msra.mxu0 0.0
  %4266 = vmatprep.subr.mxu0 0.0
  %4267 = vmatpush1.msra.mxu0 0.0
  %4268 = vmatprep.subr.mxu0 0.0
  %4269 = vmatpush1.msra.mxu0 0.0
  %4270 = vmatprep.subr.mxu0 0.0
  %4271 = vmatpush1.msra.mxu0 0.0
  %4272 = vmatprep.subr.mxu0 0.0
  %4273 = vmatpush1.msra.mxu0 0.0
  %4274 = vmatprep.subr.mxu0 0.0
  %4275 = vmatpush1.msra.mxu0 0.0
  %4276 = vmatprep.subr.mxu0 0.0
  %4277 = vmatpush1.msra.mxu0 0.0
  %4278 = vmatprep.subr.mxu0 0.0
  %4279 = vmatpush1.msra.mxu0 0.0
  %4280 = vmatprep.subr.mxu0 0.0
  %4281 = vmatpush1.msra.mxu0 0.0
  %4282 = vmatprep.mubr.f32.mxu0 0.0
  %4283 = vmatmul.mubr.f32.gmra.mrb[0].mxu0 %v4201
  %v4284 = vpop.f32.mrb[0].mxu0
  %v4285 = vadd.f32 0.0, %v4284
  %v4286 = vpop.f32.mrb[0].mxu0
  %v4287 = vadd.f32 0.0, %v4286
  %4288 = vmatprep.mubr.f32.mxu0 0.0
  %4289 = vmatmul.mubr.f32.gmra.mrb[0].mxu0 %v4204
  %v4290 = vpop.f32.mrb[0].mxu0
  %v4291 = vadd.f32 0.0, %v4290
  %v4292 = vpop.f32.mrb[0].mxu0
  %v4293 = vadd.f32 0.0, %v4292
  %4294 = vdwg.mxu0
  %4295 = vmatprep.subr.mxu0 %v4185
  %4296 = vmatpush1.msra.mxu0 %v4184
  %4297 = vmatprep.subr.mxu0 %v4189
  %4298 = vmatpush1.msra.mxu0 %v4188
  %4299 = vmatprep.subr.mxu0 %v4193
  %4300 = vmatpush1.msra.mxu0 %v4192
  %4301 = vmatprep.subr.mxu0 %v4216
  %4302 = vmatpush1.msra.mxu0 %v4213
  %4303 = vmatprep.subr.mxu0 0.0
  %4304 = vmatpush1.msra.mxu0 0.0
  %4305 = vmatprep.subr.mxu0 0.0
  %4306 = vmatpush1.msra.mxu0 0.0
  %4307 = vmatprep.subr.mxu0 0.0
  %4308 = vmatpush1.msra.mxu0 0.0
  %4309 = vmatprep.subr.mxu0 0.0
  %4310 = vmatpush1.msra.mxu0 0.0
  %4311 = vmatprep.subr.mxu0 0.0
  %4312 = vmatpush1.msra.mxu0 0.0
  %4313 = vmatprep.subr.mxu0 0.0
  %4314 = vmatpush1.msra.mxu0 0.0
  %4315 = vmatprep.subr.mxu0 0.0
  %4316 = vmatpush1.msra.mxu0 0.0
  %4317 = vmatprep.subr.mxu0 0.0
  %4318 = vmatpush1.msra.mxu0 0.0
  %4319 = vmatprep.subr.mxu0 0.0
  %4320 = vmatpush1.msra.mxu0 0.0
  %4321 = vmatprep.subr.mxu0 0.0
  %4322 = vmatpush1.msra.mxu0 0.0
  %4323 = vmatprep.subr.mxu0 0.0
  %4324 = vmatpush1.msra.mxu0 0.0
  %4325 = vmatprep.subr.mxu0 0.0
  %4326 = vmatpush1.msra.mxu0 0.0
  %4327 = vmatprep.subr.mxu0 0.0
  %4328 = vmatpush1.msra.mxu0 0.0
  %4329 = vmatprep.subr.mxu0 0.0
  %4330 = vmatpush1.msra.mxu0 0.0
  %4331 = vmatprep.subr.mxu0 0.0
  %4332 = vmatpush1.msra.mxu0 0.0
  %4333 = vmatprep.subr.mxu0 0.0
  %4334 = vmatpush1.msra.mxu0 0.0
  %4335 = vmatprep.subr.mxu0 0.0
  %4336 = vmatpush1.msra.mxu0 0.0
  %4337 = vmatprep.subr.mxu0 0.0
  %4338 = vmatpush1.msra.mxu0 0.0
  %4339 = vmatprep.subr.mxu0 0.0
  %4340 = vmatpush1.msra.mxu0 0.0
  %4341 = vmatprep.subr.mxu0 0.0
  %4342 = vmatpush1.msra.mxu0 0.0
  %4343 = vmatprep.subr.mxu0 0.0
  %4344 = vmatpush1.msra.mxu0 0.0
  %4345 = vmatprep.subr.mxu0 0.0
  %4346 = vmatpush1.msra.mxu0 0.0
  %4347 = vmatprep.subr.mxu0 0.0
  %4348 = vmatpush1.msra.mxu0 0.0
  %4349 = vmatprep.subr.mxu0 0.0
  %4350 = vmatpush1.msra.mxu0 0.0
  %4351 = vmatprep.subr.mxu0 0.0
  %4352 = vmatpush1.msra.mxu0 0.0
  %4353 = vmatprep.subr.mxu0 0.0
  %4354 = vmatpush1.msra.mxu0 0.0
  %4355 = vmatprep.subr.mxu0 0.0
  %4356 = vmatpush1.msra.mxu0 0.0
  %4357 = vmatprep.subr.mxu0 0.0
  %4358 = vmatpush1.msra.mxu0 0.0
  %4359 = vmatprep.mubr.f32.mxu0 0.0
  %4360 = vmatmul.mubr.f32.gmra.mrb[0].mxu0 %v4201
  %v4361 = vpop.f32.mrb[0].mxu0
  %v4362 = vadd.f32 0.0, %v4361
  %v4363 = vpop.f32.mrb[0].mxu0
  %v4364 = vadd.f32 0.0, %v4363
  %4365 = vmatprep.mubr.f32.mxu0 0.0
  %4366 = vmatmul.mubr.f32.gmra.mrb[0].mxu0 %v4204
  %v4367 = vpop.f32.mrb[0].mxu0
  %v4368 = vadd.f32 0.0, %v4367
  %v4369 = vpop.f32.mrb[0].mxu0
  %v4370 = vadd.f32 0.0, %v4369
  %4371 = vdwg.mxu0
  %v4372 = vld [vmem:[%s1622] sm:$0xff]
  %v4373 = vld [vmem:[%s1622 + $0x8] sm:$0x1f]
  %v4375 = vsel %vm1448, %v4372, 0
  %v4378 = vsel %vm1448, %v4373, 0
  %4380 = vmatprep.subr.mxu0 %v4183
  %4381 = vmatpush1.msra.mxu0 %v4182
  %4382 = vmatprep.subr.mxu0 %v4187
  %4383 = vmatpush1.msra.mxu0 %v4186
  %4384 = vmatprep.subr.mxu0 %v4191
  %4385 = vmatpush1.msra.mxu0 %v4190
  %4386 = vmatprep.subr.mxu0 %v4210
  %4387 = vmatpush1.msra.mxu0 %v4207
  %4388 = vmatprep.subr.mxu0 0.0
  %4389 = vmatpush1.msra.mxu0 0.0
  %4390 = vmatprep.subr.mxu0 0.0
  %4391 = vmatpush1.msra.mxu0 0.0
  %4392 = vmatprep.subr.mxu0 0.0
  %4393 = vmatpush1.msra.mxu0 0.0
  %4394 = vmatprep.subr.mxu0 0.0
  %4395 = vmatpush1.msra.mxu0 0.0
  %4396 = vmatprep.subr.mxu0 0.0
  %4397 = vmatpush1.msra.mxu0 0.0
  %4398 = vmatprep.subr.mxu0 0.0
  %4399 = vmatpush1.msra.mxu0 0.0
  %4400 = vmatprep.subr.mxu0 0.0
  %4401 = vmatpush1.msra.mxu0 0.0
  %4402 = vmatprep.subr.mxu0 0.0
  %4403 = vmatpush1.msra.mxu0 0.0
  %4404 = vmatprep.subr.mxu0 0.0
  %4405 = vmatpush1.msra.mxu0 0.0
  %4406 = vmatprep.subr.mxu0 0.0
  %4407 = vmatpush1.msra.mxu0 0.0
  %4408 = vmatprep.subr.mxu0 0.0
  %4409 = vmatpush1.msra.mxu0 0.0
  %4410 = vmatprep.subr.mxu0 0.0
  %4411 = vmatpush1.msra.mxu0 0.0
  %4412 = vmatprep.subr.mxu0 0.0
  %4413 = vmatpush1.msra.mxu0 0.0
  %4414 = vmatprep.subr.mxu0 0.0
  %4415 = vmatpush1.msra.mxu0 0.0
  %4416 = vmatprep.subr.mxu0 0.0
  %4417 = vmatpush1.msra.mxu0 0.0
  %4418 = vmatprep.subr.mxu0 0.0
  %4419 = vmatpush1.msra.mxu0 0.0
  %4420 = vmatprep.subr.mxu0 0.0
  %4421 = vmatpush1.msra.mxu0 0.0
  %4422 = vmatprep.subr.mxu0 0.0
  %4423 = vmatpush1.msra.mxu0 0.0
  %4424 = vmatprep.subr.mxu0 0.0
  %4425 = vmatpush1.msra.mxu0 0.0
  %4426 = vmatprep.subr.mxu0 0.0
  %4427 = vmatpush1.msra.mxu0 0.0
  %4428 = vmatprep.subr.mxu0 0.0
  %4429 = vmatpush1.msra.mxu0 0.0
  %4430 = vmatprep.subr.mxu0 0.0
  %4431 = vmatpush1.msra.mxu0 0.0
  %4432 = vmatprep.subr.mxu0 0.0
  %4433 = vmatpush1.msra.mxu0 0.0
  %4434 = vmatprep.subr.mxu0 0.0
  %4435 = vmatpush1.msra.mxu0 0.0
  %4436 = vmatprep.subr.mxu0 0.0
  %4437 = vmatpush1.msra.mxu0 0.0
  %4438 = vmatprep.subr.mxu0 0.0
  %4439 = vmatpush1.msra.mxu0 0.0
  %4440 = vmatprep.subr.mxu0 0.0
  %4441 = vmatpush1.msra.mxu0 0.0
  %4442 = vmatprep.subr.mxu0 0.0
  %4443 = vmatpush1.msra.mxu0 0.0
  %4444 = vmatprep.mubr.f32.mxu0 0.0
  %4445 = vmatmul.mubr.f32.gmra.mrb[0].mxu0 %v4375
  %v4446 = vpop.f32.mrb[0].mxu0
  %v4447 = vadd.f32 0.0, %v4446
  %v4448 = vpop.f32.mrb[0].mxu0
  %v4449 = vadd.f32 0.0, %v4448
  %4450 = vmatprep.mubr.f32.mxu0 0.0
  %4451 = vmatmul.mubr.f32.gmra.mrb[0].mxu0 %v4378
  %v4452 = vpop.f32.mrb[0].mxu0
  %v4453 = vadd.f32 0.0, %v4452
  %v4454 = vpop.f32.mrb[0].mxu0
  %v4455 = vadd.f32 0.0, %v4454
  %4456 = vdwg.mxu0
  %4457 = vmatprep.subr.mxu0 %v4185
  %4458 = vmatpush1.msra.mxu0 %v4184
  %4459 = vmatprep.subr.mxu0 %v4189
  %4460 = vmatpush1.msra.mxu0 %v4188
  %4461 = vmatprep.subr.mxu0 %v4193
  %4462 = vmatpush1.msra.mxu0 %v4192
  %4463 = vmatprep.subr.mxu0 %v4216
  %4464 = vmatpush1.msra.mxu0 %v4213
  %4465 = vmatprep.subr.mxu0 0.0
  %4466 = vmatpush1.msra.mxu0 0.0
  %4467 = vmatprep.subr.mxu0 0.0
  %4468 = vmatpush1.msra.mxu0 0.0
  %4469 = vmatprep.subr.mxu0 0.0
  %4470 = vmatpush1.msra.mxu0 0.0
  %4471 = vmatprep.subr.mxu0 0.0
  %4472 = vmatpush1.msra.mxu0 0.0
  %4473 = vmatprep.subr.mxu0 0.0
  %4474 = vmatpush1.msra.mxu0 0.0
  %4475 = vmatprep.subr.mxu0 0.0
  %4476 = vmatpush1.msra.mxu0 0.0
  %4477 = vmatprep.subr.mxu0 0.0
  %4478 = vmatpush1.msra.mxu0 0.0
  %4479 = vmatprep.subr.mxu0 0.0
  %4480 = vmatpush1.msra.mxu0 0.0
  %4481 = vmatprep.subr.mxu0 0.0
  %4482 = vmatpush1.msra.mxu0 0.0
  %4483 = vmatprep.subr.mxu0 0.0
  %4484 = vmatpush1.msra.mxu0 0.0
  %4485 = vmatprep.subr.mxu0 0.0
  %4486 = vmatpush1.msra.mxu0 0.0
  %4487 = vmatprep.subr.mxu0 0.0
  %4488 = vmatpush1.msra.mxu0 0.0
  %4489 = vmatprep.subr.mxu0 0.0
  %4490 = vmatpush1.msra.mxu0 0.0
  %4491 = vmatprep.subr.mxu0 0.0
  %4492 = vmatpush1.msra.mxu0 0.0
  %4493 = vmatprep.subr.mxu0 0.0
  %4494 = vmatpush1.msra.mxu0 0.0
  %4495 = vmatprep.subr.mxu0 0.0
  %4496 = vmatpush1.msra.mxu0 0.0
  %4497 = vmatprep.subr.mxu0 0.0
  %4498 = vmatpush1.msra.mxu0 0.0
  %4499 = vmatprep.subr.mxu0 0.0
  %4500 = vmatpush1.msra.mxu0 0.0
  %4501 = vmatprep.subr.mxu0 0.0
  %4502 = vmatpush1.msra.mxu0 0.0
  %4503 = vmatprep.subr.mxu0 0.0
  %4504 = vmatpush1.msra.mxu0 0.0
  %4505 = vmatprep.subr.mxu0 0.0
  %4506 = vmatpush1.msra.mxu0 0.0
  %4507 = vmatprep.subr.mxu0 0.0
  %4508 = vmatpush1.msra.mxu0 0.0
  %4509 = vmatprep.subr.mxu0 0.0
  %4510 = vmatpush1.msra.mxu0 0.0
  %4511 = vmatprep.subr.mxu0 0.0
  %4512 = vmatpush1.msra.mxu0 0.0
  %4513 = vmatprep.subr.mxu0 0.0
  %4514 = vmatpush1.msra.mxu0 0.0
  %4515 = vmatprep.subr.mxu0 0.0
  %4516 = vmatpush1.msra.mxu0 0.0
  %4517 = vmatprep.subr.mxu0 0.0
  %4518 = vmatpush1.msra.mxu0 0.0
  %4519 = vmatprep.subr.mxu0 0.0
  %4520 = vmatpush1.msra.mxu0 0.0
  %4521 = vmatprep.mubr.f32.mxu0 0.0
  %4522 = vmatmul.mubr.f32.gmra.mrb[0].mxu0 %v4375
  %v4523 = vpop.f32.mrb[0].mxu0
  %v4524 = vadd.f32 0.0, %v4523
  %v4525 = vpop.f32.mrb[0].mxu0
  %v4526 = vadd.f32 0.0, %v4525
  %4527 = vmatprep.mubr.f32.mxu0 0.0
  %4528 = vmatmul.mubr.f32.gmra.mrb[0].mxu0 %v4378
  %v4529 = vpop.f32.mrb[0].mxu0
  %v4530 = vadd.f32 0.0, %v4529
  %v4531 = vpop.f32.mrb[0].mxu0
  %v4532 = vadd.f32 0.0, %v4531
  %4533 = vdwg.mxu0
  %v4534 = vmax.f32 %v4285, %v4447
  %v4535 = vmax.f32 %v4287, %v4449
  %v4536 = vmax.f32 %v4362, %v4524
  %v4537 = vmax.f32 %v4364, %v4526
  %v4538 = vmax.f32 %v4291, %v4453
  %v4539 = vmax.f32 %v4293, %v4455
  %v4540 = vmax.f32 %v4368, %v4530
  %v4541 = vmax.f32 %v4370, %v4532
  %v4542 = vld [vmem:[%s1793] sm:$0xff]
  %v4543 = vld [vmem:[%s1793 + $0x8] sm:$0x1f]
  %v4545 = vsel %vm1448, %v4542, 0
  %v4548 = vsel %vm1448, %v4543, 0
  %4550 = vmatprep.subr.mxu0 %v4183
  %4551 = vmatpush1.msra.mxu0 %v4182
  %4552 = vmatprep.subr.mxu0 %v4187
  %4553 = vmatpush1.msra.mxu0 %v4186
  %4554 = vmatprep.subr.mxu0 %v4191
  %4555 = vmatpush1.msra.mxu0 %v4190
  %4556 = vmatprep.subr.mxu0 %v4210
  %4557 = vmatpush1.msra.mxu0 %v4207
  %4558 = vmatprep.subr.mxu0 0.0
  %4559 = vmatpush1.msra.mxu0 0.0
  %4560 = vmatprep.subr.mxu0 0.0
  %4561 = vmatpush1.msra.mxu0 0.0
  %4562 = vmatprep.subr.mxu0 0.0
  %4563 = vmatpush1.msra.mxu0 0.0
  %4564 = vmatprep.subr.mxu0 0.0
  %4565 = vmatpush1.msra.mxu0 0.0
  %4566 = vmatprep.subr.mxu0 0.0
  %4567 = vmatpush1.msra.mxu0 0.0
  %4568 = vmatprep.subr.mxu0 0.0
  %4569 = vmatpush1.msra.mxu0 0.0
  %4570 = vmatprep.subr.mxu0 0.0
  %4571 = vmatpush1.msra.mxu0 0.0
  %4572 = vmatprep.subr.mxu0 0.0
  %4573 = vmatpush1.msra.mxu0 0.0
  %4574 = vmatprep.subr.mxu0 0.0
  %4575 = vmatpush1.msra.mxu0 0.0
  %4576 = vmatprep.subr.mxu0 0.0
  %4577 = vmatpush1.msra.mxu0 0.0
  %4578 = vmatprep.subr.mxu0 0.0
  %4579 = vmatpush1.msra.mxu0 0.0
  %4580 = vmatprep.subr.mxu0 0.0
  %4581 = vmatpush1.msra.mxu0 0.0
  %4582 = vmatprep.subr.mxu0 0.0
  %4583 = vmatpush1.msra.mxu0 0.0
  %4584 = vmatprep.subr.mxu0 0.0
  %4585 = vmatpush1.msra.mxu0 0.0
  %4586 = vmatprep.subr.mxu0 0.0
  %4587 = vmatpush1.msra.mxu0 0.0
  %4588 = vmatprep.subr.mxu0 0.0
  %4589 = vmatpush1.msra.mxu0 0.0
  %4590 = vmatprep.subr.mxu0 0.0
  %4591 = vmatpush1.msra.mxu0 0.0
  %4592 = vmatprep.subr.mxu0 0.0
  %4593 = vmatpush1.msra.mxu0 0.0
  %4594 = vmatprep.subr.mxu0 0.0
  %4595 = vmatpush1.msra.mxu0 0.0
  %4596 = vmatprep.subr.mxu0 0.0
  %4597 = vmatpush1.msra.mxu0 0.0
  %4598 = vmatprep.subr.mxu0 0.0
  %4599 = vmatpush1.msra.mxu0 0.0
  %4600 = vmatprep.subr.mxu0 0.0
  %4601 = vmatpush1.msra.mxu0 0.0
  %4602 = vmatprep.subr.mxu0 0.0
  %4603 = vmatpush1.msra.mxu0 0.0
  %4604 = vmatprep.subr.mxu0 0.0
  %4605 = vmatpush1.msra.mxu0 0.0
  %4606 = vmatprep.subr.mxu0 0.0
  %4607 = vmatpush1.msra.mxu0 0.0
  %4608 = vmatprep.subr.mxu0 0.0
  %4609 = vmatpush1.msra.mxu0 0.0
  %4610 = vmatprep.subr.mxu0 0.0
  %4611 = vmatpush1.msra.mxu0 0.0
  %4612 = vmatprep.subr.mxu0 0.0
  %4613 = vmatpush1.msra.mxu0 0.0
  %4614 = vmatprep.mubr.f32.mxu0 0.0
  %4615 = vmatmul.mubr.f32.gmra.mrb[0].mxu0 %v4545
  %v4616 = vpop.f32.mrb[0].mxu0
  %v4617 = vadd.f32 0.0, %v4616
  %v4618 = vpop.f32.mrb[0].mxu0
  %v4619 = vadd.f32 0.0, %v4618
  %4620 = vmatprep.mubr.f32.mxu0 0.0
  %4621 = vmatmul.mubr.f32.gmra.mrb[0].mxu0 %v4548
  %v4622 = vpop.f32.mrb[0].mxu0
  %v4623 = vadd.f32 0.0, %v4622
  %v4624 = vpop.f32.mrb[0].mxu0
  %v4625 = vadd.f32 0.0, %v4624
  %4626 = vdwg.mxu0
  %4627 = vmatprep.subr.mxu0 %v4185
  %4628 = vmatpush1.msra.mxu0 %v4184
  %4629 = vmatprep.subr.mxu0 %v4189
  %4630 = vmatpush1.msra.mxu0 %v4188
  %4631 = vmatprep.subr.mxu0 %v4193
  %4632 = vmatpush1.msra.mxu0 %v4192
  %4633 = vmatprep.subr.mxu0 %v4216
  %4634 = vmatpush1.msra.mxu0 %v4213
  %4635 = vmatprep.subr.mxu0 0.0
  %4636 = vmatpush1.msra.mxu0 0.0
  %4637 = vmatprep.subr.mxu0 0.0
  %4638 = vmatpush1.msra.mxu0 0.0
  %4639 = vmatprep.subr.mxu0 0.0
  %4640 = vmatpush1.msra.mxu0 0.0
  %4641 = vmatprep.subr.mxu0 0.0
  %4642 = vmatpush1.msra.mxu0 0.0
  %4643 = vmatprep.subr.mxu0 0.0
  %4644 = vmatpush1.msra.mxu0 0.0
  %4645 = vmatprep.subr.mxu0 0.0
  %4646 = vmatpush1.msra.mxu0 0.0
  %4647 = vmatprep.subr.mxu0 0.0
  %4648 = vmatpush1.msra.mxu0 0.0
  %4649 = vmatprep.subr.mxu0 0.0
  %4650 = vmatpush1.msra.mxu0 0.0
  %4651 = vmatprep.subr.mxu0 0.0
  %4652 = vmatpush1.msra.mxu0 0.0
  %4653 = vmatprep.subr.mxu0 0.0
  %4654 = vmatpush1.msra.mxu0 0.0
  %4655 = vmatprep.subr.mxu0 0.0
  %4656 = vmatpush1.msra.mxu0 0.0
  %4657 = vmatprep.subr.mxu0 0.0
  %4658 = vmatpush1.msra.mxu0 0.0
  %4659 = vmatprep.subr.mxu0 0.0
  %4660 = vmatpush1.msra.mxu0 0.0
  %4661 = vmatprep.subr.mxu0 0.0
  %4662 = vmatpush1.msra.mxu0 0.0
  %4663 = vmatprep.subr.mxu0 0.0
  %4664 = vmatpush1.msra.mxu0 0.0
  %4665 = vmatprep.subr.mxu0 0.0
  %4666 = vmatpush1.msra.mxu0 0.0
  %4667 = vmatprep.subr.mxu0 0.0
  %4668 = vmatpush1.msra.mxu0 0.0
  %4669 = vmatprep.subr.mxu0 0.0
  %4670 = vmatpush1.msra.mxu0 0.0
  %4671 = vmatprep.subr.mxu0 0.0
  %4672 = vmatpush1.msra.mxu0 0.0
  %4673 = vmatprep.subr.mxu0 0.0
  %4674 = vmatpush1.msra.mxu0 0.0
  %4675 = vmatprep.subr.mxu0 0.0
  %4676 = vmatpush1.msra.mxu0 0.0
  %4677 = vmatprep.subr.mxu0 0.0
  %4678 = vmatpush1.msra.mxu0 0.0
  %4679 = vmatprep.subr.mxu0 0.0
  %4680 = vmatpush1.msra.mxu0 0.0
  %4681 = vmatprep.subr.mxu0 0.0
  %4682 = vmatpush1.msra.mxu0 0.0
  %4683 = vmatprep.subr.mxu0 0.0
  %4684 = vmatpush1.msra.mxu0 0.0
  %4685 = vmatprep.subr.mxu0 0.0
  %4686 = vmatpush1.msra.mxu0 0.0
  %4687 = vmatprep.subr.mxu0 0.0
  %4688 = vmatpush1.msra.mxu0 0.0
  %4689 = vmatprep.subr.mxu0 0.0
  %4690 = vmatpush1.msra.mxu0 0.0
  %4691 = vmatprep.mubr.f32.mxu0 0.0
  %4692 = vmatmul.mubr.f32.gmra.mrb[0].mxu0 %v4545
  %v4693 = vpop.f32.mrb[0].mxu0
  %v4694 = vadd.f32 0.0, %v4693
  %v4695 = vpop.f32.mrb[0].mxu0
  %v4696 = vadd.f32 0.0, %v4695
  %4697 = vmatprep.mubr.f32.mxu0 0.0
  %4698 = vmatmul.mubr.f32.gmra.mrb[0].mxu0 %v4548
  %v4699 = vpop.f32.mrb[0].mxu0
  %v4700 = vadd.f32 0.0, %v4699
  %v4701 = vpop.f32.mrb[0].mxu0
  %v4702 = vadd.f32 0.0, %v4701
  %4703 = vdwg.mxu0
  %v4704 = vmax.f32 %v4534, %v4617
  %v4705 = vmax.f32 %v4535, %v4619
  %v4706 = vmax.f32 %v4536, %v4694
  %v4707 = vmax.f32 %v4537, %v4696
  %v4708 = vmax.f32 %v4538, %v4623
  %v4709 = vmax.f32 %v4539, %v4625
  %v4710 = vmax.f32 %v4540, %v4700
  %v4711 = vmax.f32 %v4541, %v4702
  %v4712 = vld [vmem:[%s4] sm:$0xff]
  %v4713 = vld [vmem:[%s4 + $0x8] sm:$0xff]
  %v4714 = vld [vmem:[%s4 + $0x10] sm:$0xff]
  %v4715 = vld [vmem:[%s4 + $0x18] sm:$0xff]
  %v4716 = vld [vmem:[%s4 + $0x20] sm:$0xff]
  %v4717 = vld [vmem:[%s4 + $0x28] sm:$0xff]
  %v4718 = vld [vmem:[%s4 + $0x30] sm:$0xff]
  %v4719 = vld [vmem:[%s4 + $0x38] sm:$0xff]
  %v4720 = vld [vmem:[%s4 + $0x40] sm:$0xff]
  %v4721 = vld [vmem:[%s4 + $0x48] sm:$0xff]
  %v4722 = vld [vmem:[%s4 + $0x50] sm:$0xff]
  %v4723 = vld [vmem:[%s4 + $0x58] sm:$0xff]
  %v4724 = vld [vmem:[%s4 + $0x60] sm:$0xff]
  %v4725 = vld [vmem:[%s4 + $0x68] sm:$0xff]
  %v4726 = vld [vmem:[%s4 + $0x70] sm:$0xff]
  %v4727 = vld [vmem:[%s4 + $0x78] sm:$0xff]
  %v4728 = vld [vmem:[%s4 + $0x80] sm:$0xff]
  %v4729 = vld [vmem:[%s4 + $0x88] sm:$0xff]
  %v4730 = vld [vmem:[%s4 + $0x90] sm:$0xff]
  %v4731 = vld [vmem:[%s4 + $0x98] sm:$0xff]
  %v4732 = vld [vmem:[%s4 + $0xa0] sm:$0xff]
  %v4733 = vld [vmem:[%s4 + $0xa8] sm:$0xff]
  %v4734 = vld [vmem:[%s4 + $0xb0] sm:$0xff]
  %v4735 = vld [vmem:[%s4 + $0xb8] sm:$0xff]
  %v4736 = vld [vmem:[%s4 + $0xc0] sm:$0xff]
  %v4737 = vld [vmem:[%s4 + $0xc8] sm:$0xff]
  %v4738 = vld [vmem:[%s4 + $0xd0] sm:$0xff]
  %v4739 = vld [vmem:[%s4 + $0xd8] sm:$0xff]
  %v4740 = vld [vmem:[%s4 + $0xe0] sm:$0xff]
  %v4741 = vld [vmem:[%s4 + $0xe8] sm:$0xff]
  %v4742 = vld [vmem:[%s4 + $0xf0] sm:$0xff]
  %v4743 = vld [vmem:[%s4 + $0xf8] sm:$0xff]
  %v4744 = vld [vmem:[%s4 + $0x100] sm:$0xff]
  %v4745 = vld [vmem:[%s4 + $0x108] sm:$0xff]
  %v4746 = vld [vmem:[%s4 + $0x110] sm:$0xff]
  %v4747 = vld [vmem:[%s4 + $0x118] sm:$0xff]
  %v4748 = vld [vmem:[%s4 + $0x120] sm:$0xff]
  %v4749 = vld [vmem:[%s4 + $0x128] sm:$0xff]
  %v4750 = vld [vmem:[%s4 + $0x130] sm:$0xff]
  %v4751 = vld [vmem:[%s4 + $0x138] sm:$0xff]
  %v4752 = vld [vmem:[%s4 + $0x140] sm:$0xff]
  %v4753 = vld [vmem:[%s4 + $0x148] sm:$0xff]
  %v4754 = vld [vmem:[%s4 + $0x150] sm:$0xff]
  %v4755 = vld [vmem:[%s4 + $0x158] sm:$0xff]
  %v4756 = vld [vmem:[%s4 + $0x160] sm:$0xff]
  %v4757 = vld [vmem:[%s4 + $0x168] sm:$0xff]
  %v4758 = vld [vmem:[%s4 + $0x170] sm:$0xff]
  %v4759 = vld [vmem:[%s4 + $0x178] sm:$0xff]
  %v4760 = vld [vmem:[%s4 + $0x180] sm:$0xff]
  %v4761 = vld [vmem:[%s4 + $0x188] sm:$0xff]
  %v4762 = vld [vmem:[%s4 + $0x190] sm:$0xff]
  %v4763 = vld [vmem:[%s4 + $0x198] sm:$0xff]
  %v4764 = vld [vmem:[%s4 + $0x1a0] sm:$0xff]
  %v4765 = vld [vmem:[%s4 + $0x1a8] sm:$0xff]
  %v4766 = vld [vmem:[%s4 + $0x1b0] sm:$0xff]
  %v4767 = vld [vmem:[%s4 + $0x1b8] sm:$0xff]
  %v4768 = vld [vmem:[%s4 + $0x1c0] sm:$0xff]
  %v4769 = vld [vmem:[%s4 + $0x1c8] sm:$0xff]
  %v4770 = vld [vmem:[%s4 + $0x1d0] sm:$0xff]
  %v4771 = vld [vmem:[%s4 + $0x1d8] sm:$0xff]
  %v4772 = vld [vmem:[%s4 + $0x1e0] sm:$0xff]
  %v4773 = vld [vmem:[%s4 + $0x1e8] sm:$0xff]
  %v4774 = vld [vmem:[%s4 + $0x1f0] sm:$0xff]
  %v4775 = vld [vmem:[%s4 + $0x1f8] sm:$0xff]
  %v4776 = vld [vmem:[%s4 + $0x200] sm:$0xff]
  %v4777 = vld [vmem:[%s4 + $0x208] sm:$0xff]
  %v4778 = vld [vmem:[%s4 + $0x210] sm:$0xff]
  %v4779 = vld [vmem:[%s4 + $0x218] sm:$0xff]
  %v4780 = vld [vmem:[%s4 + $0x220] sm:$0xff]
  %v4781 = vld [vmem:[%s4 + $0x228] sm:$0xff]
  %v4782 = vld [vmem:[%s4 + $0x230] sm:$0xff]
  %v4783 = vld [vmem:[%s4 + $0x238] sm:$0xff]
  %v4784 = vld [vmem:[%s4 + $0x240] sm:$0xff]
  %v4785 = vld [vmem:[%s4 + $0x248] sm:$0xff]
  %v4786 = vld [vmem:[%s4 + $0x250] sm:$0xff]
  %v4787 = vld [vmem:[%s4 + $0x258] sm:$0xff]
  %v4788 = vld [vmem:[%s4 + $0x260] sm:$0xff]
  %v4789 = vld [vmem:[%s4 + $0x268] sm:$0xff]
  %v4790 = vld [vmem:[%s4 + $0x270] sm:$0xff]
  %v4791 = vld [vmem:[%s4 + $0x278] sm:$0xff]
  %v4792 = vld [vmem:[%s4 + $0x280] sm:$0xff]
  %v4793 = vld [vmem:[%s4 + $0x288] sm:$0xff]
  %v4794 = vld [vmem:[%s4 + $0x290] sm:$0xff]
  %v4795 = vld [vmem:[%s4 + $0x298] sm:$0xff]
  %v4796 = vld [vmem:[%s4 + $0x2a0] sm:$0xff]
  %v4797 = vld [vmem:[%s4 + $0x2a8] sm:$0xff]
  %v4798 = vld [vmem:[%s4 + $0x2b0] sm:$0xff]
  %v4799 = vld [vmem:[%s4 + $0x2b8] sm:$0xff]
  %v4800 = vld [vmem:[%s4 + $0x2c0] sm:$0xff]
  %v4801 = vld [vmem:[%s4 + $0x2c8] sm:$0xff]
  %v4802 = vld [vmem:[%s4 + $0x2d0] sm:$0xff]
  %v4803 = vld [vmem:[%s4 + $0x2d8] sm:$0xff]
  %v4804 = vld [vmem:[%s4 + $0x2e0] sm:$0xff]
  %v4805 = vld [vmem:[%s4 + $0x2e8] sm:$0xff]
  %v4806 = vld [vmem:[%s4 + $0x2f0] sm:$0xff]
  %v4807 = vld [vmem:[%s4 + $0x2f8] sm:$0xff]
  %v4808 = vld [vmem:[%s4 + $0x300] sm:$0xff]
  %v4809 = vld [vmem:[%s4 + $0x308] sm:$0xff]
  %v4810 = vld [vmem:[%s4 + $0x310] sm:$0xff]
  %v4811 = vld [vmem:[%s4 + $0x318] sm:$0xff]
  %v4812 = vld [vmem:[%s4 + $0x320] sm:$0xff]
  %v4813 = vld [vmem:[%s4 + $0x328] sm:$0xff]
  %v4814 = vld [vmem:[%s4 + $0x330] sm:$0xff]
  %v4815 = vld [vmem:[%s4 + $0x338] sm:$0xff]
  %v4816 = vld [vmem:[%s4 + $0x340] sm:$0xff]
  %v4817 = vld [vmem:[%s4 + $0x348] sm:$0xff]
  %v4818 = vld [vmem:[%s4 + $0x350] sm:$0xff]
  %v4819 = vld [vmem:[%s4 + $0x358] sm:$0xff]
  %v4820 = vld [vmem:[%s4 + $0x360] sm:$0xff]
  %v4821 = vld [vmem:[%s4 + $0x368] sm:$0xff]
  %v4822 = vld [vmem:[%s4 + $0x370] sm:$0xff]
  %v4823 = vld [vmem:[%s4 + $0x378] sm:$0xff]
  %v4825 = vsel %vm2076, %v4707, 0
  %v4828 = vsel %vm2076, %v4711, 0
  %4830 = vmatprep.subr.mxu0 %v4713
  %4831 = vmatpush1.msra.mxu0 %v4712
  %4832 = vmatprep.subr.mxu0 %v4715
  %4833 = vmatpush1.msra.mxu0 %v4714
  %4834 = vmatprep.subr.mxu0 %v4717
  %4835 = vmatpush1.msra.mxu0 %v4716
  %4836 = vmatprep.subr.mxu0 %v4719
  %4837 = vmatpush1.msra.mxu0 %v4718
  %4838 = vmatprep.subr.mxu0 %v4721
  %4839 = vmatpush1.msra.mxu0 %v4720
  %4840 = vmatprep.subr.mxu0 %v4723
  %4841 = vmatpush1.msra.mxu0 %v4722
  %4842 = vmatprep.subr.mxu0 %v4725
  %4843 = vmatpush1.msra.mxu0 %v4724
  %4844 = vmatprep.subr.mxu0 %v4727
  %4845 = vmatpush1.msra.mxu0 %v4726
  %4846 = vmatprep.subr.mxu0 %v4729
  %4847 = vmatpush1.msra.mxu0 %v4728
  %4848 = vmatprep.subr.mxu0 %v4731
  %4849 = vmatpush1.msra.mxu0 %v4730
  %4850 = vmatprep.subr.mxu0 %v4733
  %4851 = vmatpush1.msra.mxu0 %v4732
  %4852 = vmatprep.subr.mxu0 %v4735
  %4853 = vmatpush1.msra.mxu0 %v4734
  %4854 = vmatprep.subr.mxu0 %v4737
  %4855 = vmatpush1.msra.mxu0 %v4736
  %4856 = vmatprep.subr.mxu0 %v4739
  %4857 = vmatpush1.msra.mxu0 %v4738
  %4858 = vmatprep.subr.mxu0 %v4741
  %4859 = vmatpush1.msra.mxu0 %v4740
  %4860 = vmatprep.subr.mxu0 %v4743
  %4861 = vmatpush1.msra.mxu0 %v4742
  %4862 = vmatprep.subr.mxu0 %v4745
  %4863 = vmatpush1.msra.mxu0 %v4744
  %4864 = vmatprep.subr.mxu0 %v4747
  %4865 = vmatpush1.msra.mxu0 %v4746
  %4866 = vmatprep.subr.mxu0 %v4749
  %4867 = vmatpush1.msra.mxu0 %v4748
  %4868 = vmatprep.subr.mxu0 %v4751
  %4869 = vmatpush1.msra.mxu0 %v4750
  %4870 = vmatprep.subr.mxu0 %v4753
  %4871 = vmatpush1.msra.mxu0 %v4752
  %4872 = vmatprep.subr.mxu0 %v4755
  %4873 = vmatpush1.msra.mxu0 %v4754
  %4874 = vmatprep.subr.mxu0 %v4757
  %4875 = vmatpush1.msra.mxu0 %v4756
  %4876 = vmatprep.subr.mxu0 %v4759
  %4877 = vmatpush1.msra.mxu0 %v4758
  %4878 = vmatprep.subr.mxu0 %v4761
  %4879 = vmatpush1.msra.mxu0 %v4760
  %4880 = vmatprep.subr.mxu0 %v4763
  %4881 = vmatpush1.msra.mxu0 %v4762
  %4882 = vmatprep.subr.mxu0 %v4765
  %4883 = vmatpush1.msra.mxu0 %v4764
  %4884 = vmatprep.subr.mxu0 %v4767
  %4885 = vmatpush1.msra.mxu0 %v4766
  %4886 = vmatprep.subr.mxu0 %v4769
  %4887 = vmatpush1.msra.mxu0 %v4768
  %4888 = vmatprep.subr.mxu0 %v4771
  %4889 = vmatpush1.msra.mxu0 %v4770
  %4890 = vmatprep.subr.mxu0 %v4773
  %4891 = vmatpush1.msra.mxu0 %v4772
  %4892 = vmatprep.subr.mxu0 %v4775
  %4893 = vmatpush1.msra.mxu0 %v4774
  %4894 = vmatprep.mubr.f32.mxu0 %v4705
  %4895 = vmatmul.mubr.f32.gmra.mrb[0].mxu0 %v4704
  %v4896 = vpop.f32.mrb[0].mxu0
  %v4897 = vadd.f32 0.0, %v4896
  %v4898 = vpop.f32.mrb[0].mxu0
  %v4899 = vadd.f32 0.0, %v4898
  %4900 = vmatprep.mubr.f32.mxu0 %v4709
  %4901 = vmatmul.mubr.f32.gmra.mrb[0].mxu0 %v4708
  %v4902 = vpop.f32.mrb[0].mxu0
  %v4903 = vadd.f32 0.0, %v4902
  %v4904 = vpop.f32.mrb[0].mxu0
  %v4905 = vadd.f32 0.0, %v4904
  %4906 = vdwg.mxu0
  %4907 = vmatprep.subr.mxu0 %v4777
  %4908 = vmatpush1.msra.mxu0 %v4776
  %4909 = vmatprep.subr.mxu0 %v4779
  %4910 = vmatpush1.msra.mxu0 %v4778
  %4911 = vmatprep.subr.mxu0 %v4781
  %4912 = vmatpush1.msra.mxu0 %v4780
  %4913 = vmatprep.subr.mxu0 %v4783
  %4914 = vmatpush1.msra.mxu0 %v4782
  %4915 = vmatprep.subr.mxu0 %v4785
  %4916 = vmatpush1.msra.mxu0 %v4784
  %4917 = vmatprep.subr.mxu0 %v4787
  %4918 = vmatpush1.msra.mxu0 %v4786
  %4919 = vmatprep.subr.mxu0 %v4789
  %4920 = vmatpush1.msra.mxu0 %v4788
  %4921 = vmatprep.subr.mxu0 %v4791
  %4922 = vmatpush1.msra.mxu0 %v4790
  %4923 = vmatprep.subr.mxu0 %v4793
  %4924 = vmatpush1.msra.mxu0 %v4792
  %4925 = vmatprep.subr.mxu0 %v4795
  %4926 = vmatpush1.msra.mxu0 %v4794
  %4927 = vmatprep.subr.mxu0 %v4797
  %4928 = vmatpush1.msra.mxu0 %v4796
  %4929 = vmatprep.subr.mxu0 %v4799
  %4930 = vmatpush1.msra.mxu0 %v4798
  %4931 = vmatprep.subr.mxu0 %v4801
  %4932 = vmatpush1.msra.mxu0 %v4800
  %4933 = vmatprep.subr.mxu0 %v4803
  %4934 = vmatpush1.msra.mxu0 %v4802
  %4935 = vmatprep.subr.mxu0 %v4805
  %4936 = vmatpush1.msra.mxu0 %v4804
  %4937 = vmatprep.subr.mxu0 %v4807
  %4938 = vmatpush1.msra.mxu0 %v4806
  %4939 = vmatprep.subr.mxu0 %v4809
  %4940 = vmatpush1.msra.mxu0 %v4808
  %4941 = vmatprep.subr.mxu0 %v4811
  %4942 = vmatpush1.msra.mxu0 %v4810
  %4943 = vmatprep.subr.mxu0 %v4813
  %4944 = vmatpush1.msra.mxu0 %v4812
  %4945 = vmatprep.subr.mxu0 %v4815
  %4946 = vmatpush1.msra.mxu0 %v4814
  %4947 = vmatprep.subr.mxu0 %v4817
  %4948 = vmatpush1.msra.mxu0 %v4816
  %4949 = vmatprep.subr.mxu0 %v4819
  %4950 = vmatpush1.msra.mxu0 %v4818
  %4951 = vmatprep.subr.mxu0 %v4821
  %4952 = vmatpush1.msra.mxu0 %v4820
  %4953 = vmatprep.subr.mxu0 %v4823
  %4954 = vmatpush1.msra.mxu0 %v4822
  %4955 = vmatprep.subr.mxu0 0.0
  %4956 = vmatpush1.msra.mxu0 0.0
  %4957 = vmatprep.subr.mxu0 0.0
  %4958 = vmatpush1.msra.mxu0 0.0
  %4959 = vmatprep.subr.mxu0 0.0
  %4960 = vmatpush1.msra.mxu0 0.0
  %4961 = vmatprep.subr.mxu0 0.0
  %4962 = vmatpush1.msra.mxu0 0.0
  %4963 = vmatprep.subr.mxu0 0.0
  %4964 = vmatpush1.msra.mxu0 0.0
  %4965 = vmatprep.subr.mxu0 0.0
  %4966 = vmatpush1.msra.mxu0 0.0
  %4967 = vmatprep.subr.mxu0 0.0
  %4968 = vmatpush1.msra.mxu0 0.0
  %4969 = vmatprep.subr.mxu0 0.0
  %4970 = vmatpush1.msra.mxu0 0.0
  %4971 = vmatprep.mubr.f32.mxu0 %v4825
  %4972 = vmatmul.mubr.f32.gmra.mrb[0].mxu0 %v4706
  %v4973 = vpop.f32.mrb[0].mxu0
  %v4974 = vadd.f32 %v4897, %v4973
  %v4975 = vpop.f32.mrb[0].mxu0
  %v4976 = vadd.f32 %v4899, %v4975
  %4977 = vmatprep.mubr.f32.mxu0 %v4828
  %4978 = vmatmul.mubr.f32.gmra.mrb[0].mxu0 %v4710
  %v4979 = vpop.f32.mrb[0].mxu0
  %v4980 = vadd.f32 %v4903, %v4979
  %v4981 = vpop.f32.mrb[0].mxu0
  %v4982 = vadd.f32 %v4905, %v4981
  %4983 = vdwg.mxu0
  %v4984 = vld [vmem:[%s2237] sm:$0xff]
  %v4985 = vld [vmem:[%s2237 + $0x8] sm:$0xff]
  %v4986 = vld [vmem:[%s2237 + $0x10] sm:$0xff]
  %v4987 = vld [vmem:[%s2237 + $0x18] sm:$0xff]
  %v4988 = vld [vmem:[%s2237 + $0x20] sm:$0xff]
  %v4989 = vld [vmem:[%s2237 + $0x28] sm:$0xff]
  %v4990 = vld [vmem:[%s2237 + $0x30] sm:$0xff]
  %v4991 = vld [vmem:[%s2237 + $0x38] sm:$0xff]
  %v4992 = vld [vmem:[%s2237 + $0x40] sm:$0xff]
  %v4993 = vld [vmem:[%s2237 + $0x48] sm:$0xff]
  %v4994 = vld [vmem:[%s2237 + $0x50] sm:$0xff]
  %v4995 = vld [vmem:[%s2237 + $0x58] sm:$0xff]
  %v4996 = vld [vmem:[%s2237 + $0x60] sm:$0xff]
  %v4997 = vld [vmem:[%s2237 + $0x68] sm:$0xff]
  %v4998 = vld [vmem:[%s2237 + $0x70] sm:$0xff]
  %v4999 = vld [vmem:[%s2237 + $0x78] sm:$0xff]
  %v5000 = vld [vmem:[%s2237 + $0x80] sm:$0xff]
  %v5001 = vld [vmem:[%s2237 + $0x88] sm:$0xff]
  %v5002 = vld [vmem:[%s2237 + $0x90] sm:$0xff]
  %v5003 = vld [vmem:[%s2237 + $0x98] sm:$0xff]
  %v5004 = vld [vmem:[%s2237 + $0xa0] sm:$0xff]
  %v5005 = vld [vmem:[%s2237 + $0xa8] sm:$0xff]
  %v5006 = vld [vmem:[%s2237 + $0xb0] sm:$0xff]
  %v5007 = vld [vmem:[%s2237 + $0xb8] sm:$0xff]
  %v5008 = vld [vmem:[%s2237 + $0xc0] sm:$0xff]
  %v5009 = vld [vmem:[%s2237 + $0xc8] sm:$0xff]
  %v5010 = vld [vmem:[%s2237 + $0xd0] sm:$0xff]
  %v5011 = vld [vmem:[%s2237 + $0xd8] sm:$0xff]
  %v5012 = vld [vmem:[%s2237 + $0xe0] sm:$0xff]
  %v5013 = vld [vmem:[%s2237 + $0xe8] sm:$0xff]
  %v5014 = vld [vmem:[%s2237 + $0xf0] sm:$0xff]
  %v5015 = vld [vmem:[%s2237 + $0xf8] sm:$0xff]
  %v5016 = vld [vmem:[%s2237 + $0x100] sm:$0xff]
  %v5017 = vld [vmem:[%s2237 + $0x108] sm:$0xff]
  %v5018 = vld [vmem:[%s2237 + $0x110] sm:$0xff]
  %v5019 = vld [vmem:[%s2237 + $0x118] sm:$0xff]
  %v5020 = vld [vmem:[%s2237 + $0x120] sm:$0xff]
  %v5021 = vld [vmem:[%s2237 + $0x128] sm:$0xff]
  %v5022 = vld [vmem:[%s2237 + $0x130] sm:$0xff]
  %v5023 = vld [vmem:[%s2237 + $0x138] sm:$0xff]
  %v5024 = vld [vmem:[%s2237 + $0x140] sm:$0xff]
  %v5025 = vld [vmem:[%s2237 + $0x148] sm:$0xff]
  %v5026 = vld [vmem:[%s2237 + $0x150] sm:$0xff]
  %v5027 = vld [vmem:[%s2237 + $0x158] sm:$0xff]
  %v5028 = vld [vmem:[%s2237 + $0x160] sm:$0xff]
  %v5029 = vld [vmem:[%s2237 + $0x168] sm:$0xff]
  %v5030 = vld [vmem:[%s2237 + $0x170] sm:$0xff]
  %v5031 = vld [vmem:[%s2237 + $0x178] sm:$0xff]
  %v5032 = vld [vmem:[%s2237 + $0x180] sm:$0xff]
  %v5033 = vld [vmem:[%s2237 + $0x188] sm:$0xff]
  %v5034 = vld [vmem:[%s2237 + $0x190] sm:$0xff]
  %v5035 = vld [vmem:[%s2237 + $0x198] sm:$0xff]
  %v5036 = vld [vmem:[%s2237 + $0x1a0] sm:$0xff]
  %v5037 = vld [vmem:[%s2237 + $0x1a8] sm:$0xff]
  %v5038 = vld [vmem:[%s2237 + $0x1b0] sm:$0xff]
  %v5039 = vld [vmem:[%s2237 + $0x1b8] sm:$0xff]
  %v5040 = vld [vmem:[%s2237 + $0x1c0] sm:$0xff]
  %v5041 = vld [vmem:[%s2237 + $0x1c8] sm:$0xff]
  %v5042 = vld [vmem:[%s2237 + $0x1d0] sm:$0xff]
  %v5043 = vld [vmem:[%s2237 + $0x1d8] sm:$0xff]
  %v5044 = vld [vmem:[%s2237 + $0x1e0] sm:$0xff]
  %v5045 = vld [vmem:[%s2237 + $0x1e8] sm:$0xff]
  %v5046 = vld [vmem:[%s2237 + $0x1f0] sm:$0xff]
  %v5047 = vld [vmem:[%s2237 + $0x1f8] sm:$0xff]
  %v5048 = vld [vmem:[%s2237 + $0x200] sm:$0xff]
  %v5049 = vld [vmem:[%s2237 + $0x208] sm:$0xff]
  %v5050 = vld [vmem:[%s2237 + $0x210] sm:$0xff]
  %v5051 = vld [vmem:[%s2237 + $0x218] sm:$0xff]
  %v5052 = vld [vmem:[%s2237 + $0x220] sm:$0xff]
  %v5053 = vld [vmem:[%s2237 + $0x228] sm:$0xff]
  %v5054 = vld [vmem:[%s2237 + $0x230] sm:$0xff]
  %v5055 = vld [vmem:[%s2237 + $0x238] sm:$0xff]
  %v5056 = vld [vmem:[%s2237 + $0x240] sm:$0xff]
  %v5057 = vld [vmem:[%s2237 + $0x248] sm:$0xff]
  %v5058 = vld [vmem:[%s2237 + $0x250] sm:$0xff]
  %v5059 = vld [vmem:[%s2237 + $0x258] sm:$0xff]
  %v5060 = vld [vmem:[%s2237 + $0x260] sm:$0xff]
  %v5061 = vld [vmem:[%s2237 + $0x268] sm:$0xff]
  %v5062 = vld [vmem:[%s2237 + $0x270] sm:$0xff]
  %v5063 = vld [vmem:[%s2237 + $0x278] sm:$0xff]
  %v5064 = vld [vmem:[%s2237 + $0x280] sm:$0xff]
  %v5065 = vld [vmem:[%s2237 + $0x288] sm:$0xff]
  %v5066 = vld [vmem:[%s2237 + $0x290] sm:$0xff]
  %v5067 = vld [vmem:[%s2237 + $0x298] sm:$0xff]
  %v5068 = vld [vmem:[%s2237 + $0x2a0] sm:$0xff]
  %v5069 = vld [vmem:[%s2237 + $0x2a8] sm:$0xff]
  %v5070 = vld [vmem:[%s2237 + $0x2b0] sm:$0xff]
  %v5071 = vld [vmem:[%s2237 + $0x2b8] sm:$0xff]
  %v5072 = vld [vmem:[%s2237 + $0x2c0] sm:$0xff]
  %v5073 = vld [vmem:[%s2237 + $0x2c8] sm:$0xff]
  %v5074 = vld [vmem:[%s2237 + $0x2d0] sm:$0xff]
  %v5075 = vld [vmem:[%s2237 + $0x2d8] sm:$0xff]
  %v5076 = vld [vmem:[%s2237 + $0x2e0] sm:$0xff]
  %v5077 = vld [vmem:[%s2237 + $0x2e8] sm:$0xff]
  %v5078 = vld [vmem:[%s2237 + $0x2f0] sm:$0xff]
  %v5079 = vld [vmem:[%s2237 + $0x2f8] sm:$0xff]
  %v5080 = vld [vmem:[%s2237 + $0x300] sm:$0xff]
  %v5081 = vld [vmem:[%s2237 + $0x308] sm:$0xff]
  %v5082 = vld [vmem:[%s2237 + $0x310] sm:$0xff]
  %v5083 = vld [vmem:[%s2237 + $0x318] sm:$0xff]
  %v5084 = vld [vmem:[%s2237 + $0x320] sm:$0xff]
  %v5085 = vld [vmem:[%s2237 + $0x328] sm:$0xff]
  %v5086 = vld [vmem:[%s2237 + $0x330] sm:$0xff]
  %v5087 = vld [vmem:[%s2237 + $0x338] sm:$0xff]
  %v5088 = vld [vmem:[%s2237 + $0x340] sm:$0xff]
  %v5089 = vld [vmem:[%s2237 + $0x348] sm:$0xff]
  %v5090 = vld [vmem:[%s2237 + $0x350] sm:$0xff]
  %v5091 = vld [vmem:[%s2237 + $0x358] sm:$0xff]
  %v5092 = vld [vmem:[%s2237 + $0x360] sm:$0xff]
  %v5093 = vld [vmem:[%s2237 + $0x368] sm:$0xff]
  %v5094 = vld [vmem:[%s2237 + $0x370] sm:$0xff]
  %v5095 = vld [vmem:[%s2237 + $0x378] sm:$0xff]
  %5096 = vmatprep.subr.mxu0 %v4985
  %5097 = vmatpush1.msra.mxu0 %v4984
  %5098 = vmatprep.subr.mxu0 %v4987
  %5099 = vmatpush1.msra.mxu0 %v4986
  %5100 = vmatprep.subr.mxu0 %v4989
  %5101 = vmatpush1.msra.mxu0 %v4988
  %5102 = vmatprep.subr.mxu0 %v4991
  %5103 = vmatpush1.msra.mxu0 %v4990
  %5104 = vmatprep.subr.mxu0 %v4993
  %5105 = vmatpush1.msra.mxu0 %v4992
  %5106 = vmatprep.subr.mxu0 %v4995
  %5107 = vmatpush1.msra.mxu0 %v4994
  %5108 = vmatprep.subr.mxu0 %v4997
  %5109 = vmatpush1.msra.mxu0 %v4996
  %5110 = vmatprep.subr.mxu0 %v4999
  %5111 = vmatpush1.msra.mxu0 %v4998
  %5112 = vmatprep.subr.mxu0 %v5001
  %5113 = vmatpush1.msra.mxu0 %v5000
  %5114 = vmatprep.subr.mxu0 %v5003
  %5115 = vmatpush1.msra.mxu0 %v5002
  %5116 = vmatprep.subr.mxu0 %v5005
  %5117 = vmatpush1.msra.mxu0 %v5004
  %5118 = vmatprep.subr.mxu0 %v5007
  %5119 = vmatpush1.msra.mxu0 %v5006
  %5120 = vmatprep.subr.mxu0 %v5009
  %5121 = vmatpush1.msra.mxu0 %v5008
  %5122 = vmatprep.subr.mxu0 %v5011
  %5123 = vmatpush1.msra.mxu0 %v5010
  %5124 = vmatprep.subr.mxu0 %v5013
  %5125 = vmatpush1.msra.mxu0 %v5012
  %5126 = vmatprep.subr.mxu0 %v5015
  %5127 = vmatpush1.msra.mxu0 %v5014
  %5128 = vmatprep.subr.mxu0 %v5017
  %5129 = vmatpush1.msra.mxu0 %v5016
  %5130 = vmatprep.subr.mxu0 %v5019
  %5131 = vmatpush1.msra.mxu0 %v5018
  %5132 = vmatprep.subr.mxu0 %v5021
  %5133 = vmatpush1.msra.mxu0 %v5020
  %5134 = vmatprep.subr.mxu0 %v5023
  %5135 = vmatpush1.msra.mxu0 %v5022
  %5136 = vmatprep.subr.mxu0 %v5025
  %5137 = vmatpush1.msra.mxu0 %v5024
  %5138 = vmatprep.subr.mxu0 %v5027
  %5139 = vmatpush1.msra.mxu0 %v5026
  %5140 = vmatprep.subr.mxu0 %v5029
  %5141 = vmatpush1.msra.mxu0 %v5028
  %5142 = vmatprep.subr.mxu0 %v5031
  %5143 = vmatpush1.msra.mxu0 %v5030
  %5144 = vmatprep.subr.mxu0 %v5033
  %5145 = vmatpush1.msra.mxu0 %v5032
  %5146 = vmatprep.subr.mxu0 %v5035
  %5147 = vmatpush1.msra.mxu0 %v5034
  %5148 = vmatprep.subr.mxu0 %v5037
  %5149 = vmatpush1.msra.mxu0 %v5036
  %5150 = vmatprep.subr.mxu0 %v5039
  %5151 = vmatpush1.msra.mxu0 %v5038
  %5152 = vmatprep.subr.mxu0 %v5041
  %5153 = vmatpush1.msra.mxu0 %v5040
  %5154 = vmatprep.subr.mxu0 %v5043
  %5155 = vmatpush1.msra.mxu0 %v5042
  %5156 = vmatprep.subr.mxu0 %v5045
  %5157 = vmatpush1.msra.mxu0 %v5044
  %5158 = vmatprep.subr.mxu0 %v5047
  %5159 = vmatpush1.msra.mxu0 %v5046
  %5160 = vmatprep.mubr.f32.mxu0 %v4705
  %5161 = vmatmul.mubr.f32.gmra.mrb[0].mxu0 %v4704
  %v5162 = vpop.f32.mrb[0].mxu0
  %v5163 = vadd.f32 0.0, %v5162
  %v5164 = vpop.f32.mrb[0].mxu0
  %v5165 = vadd.f32 0.0, %v5164
  %5166 = vmatprep.mubr.f32.mxu0 %v4709
  %5167 = vmatmul.mubr.f32.gmra.mrb[0].mxu0 %v4708
  %v5168 = vpop.f32.mrb[0].mxu0
  %v5169 = vadd.f32 0.0, %v5168
  %v5170 = vpop.f32.mrb[0].mxu0
  %v5171 = vadd.f32 0.0, %v5170
  %5172 = vdwg.mxu0
  %5173 = vmatprep.subr.mxu0 %v5049
  %5174 = vmatpush1.msra.mxu0 %v5048
  %5175 = vmatprep.subr.mxu0 %v5051
  %5176 = vmatpush1.msra.mxu0 %v5050
  %5177 = vmatprep.subr.mxu0 %v5053
  %5178 = vmatpush1.msra.mxu0 %v5052
  %5179 = vmatprep.subr.mxu0 %v5055
  %5180 = vmatpush1.msra.mxu0 %v5054
  %5181 = vmatprep.subr.mxu0 %v5057
  %5182 = vmatpush1.msra.mxu0 %v5056
  %5183 = vmatprep.subr.mxu0 %v5059
  %5184 = vmatpush1.msra.mxu0 %v5058
  %5185 = vmatprep.subr.mxu0 %v5061
  %5186 = vmatpush1.msra.mxu0 %v5060
  %5187 = vmatprep.subr.mxu0 %v5063
  %5188 = vmatpush1.msra.mxu0 %v5062
  %5189 = vmatprep.subr.mxu0 %v5065
  %5190 = vmatpush1.msra.mxu0 %v5064
  %5191 = vmatprep.subr.mxu0 %v5067
  %5192 = vmatpush1.msra.mxu0 %v5066
  %5193 = vmatprep.subr.mxu0 %v5069
  %5194 = vmatpush1.msra.mxu0 %v5068
  %5195 = vmatprep.subr.mxu0 %v5071
  %5196 = vmatpush1.msra.mxu0 %v5070
  %5197 = vmatprep.subr.mxu0 %v5073
  %5198 = vmatpush1.msra.mxu0 %v5072
  %5199 = vmatprep.subr.mxu0 %v5075
  %5200 = vmatpush1.msra.mxu0 %v5074
  %5201 = vmatprep.subr.mxu0 %v5077
  %5202 = vmatpush1.msra.mxu0 %v5076
  %5203 = vmatprep.subr.mxu0 %v5079
  %5204 = vmatpush1.msra.mxu0 %v5078
  %5205 = vmatprep.subr.mxu0 %v5081
  %5206 = vmatpush1.msra.mxu0 %v5080
  %5207 = vmatprep.subr.mxu0 %v5083
  %5208 = vmatpush1.msra.mxu0 %v5082
  %5209 = vmatprep.subr.mxu0 %v5085
  %5210 = vmatpush1.msra.mxu0 %v5084
  %5211 = vmatprep.subr.mxu0 %v5087
  %5212 = vmatpush1.msra.mxu0 %v5086
  %5213 = vmatprep.subr.mxu0 %v5089
  %5214 = vmatpush1.msra.mxu0 %v5088
  %5215 = vmatprep.subr.mxu0 %v5091
  %5216 = vmatpush1.msra.mxu0 %v5090
  %5217 = vmatprep.subr.mxu0 %v5093
  %5218 = vmatpush1.msra.mxu0 %v5092
  %5219 = vmatprep.subr.mxu0 %v5095
  %5220 = vmatpush1.msra.mxu0 %v5094
  %5221 = vmatprep.subr.mxu0 0.0
  %5222 = vmatpush1.msra.mxu0 0.0
  %5223 = vmatprep.subr.mxu0 0.0
  %5224 = vmatpush1.msra.mxu0 0.0
  %5225 = vmatprep.subr.mxu0 0.0
  %5226 = vmatpush1.msra.mxu0 0.0
  %5227 = vmatprep.subr.mxu0 0.0
  %5228 = vmatpush1.msra.mxu0 0.0
  %5229 = vmatprep.subr.mxu0 0.0
  %5230 = vmatpush1.msra.mxu0 0.0
  %5231 = vmatprep.subr.mxu0 0.0
  %5232 = vmatpush1.msra.mxu0 0.0
  %5233 = vmatprep.subr.mxu0 0.0
  %5234 = vmatpush1.msra.mxu0 0.0
  %5235 = vmatprep.subr.mxu0 0.0
  %5236 = vmatpush1.msra.mxu0 0.0
  %5237 = vmatprep.mubr.f32.mxu0 %v4825
  %5238 = vmatmul.mubr.f32.gmra.mrb[0].mxu0 %v4706
  %v5239 = vpop.f32.mrb[0].mxu0
  %v5240 = vadd.f32 %v5163, %v5239
  %v5241 = vpop.f32.mrb[0].mxu0
  %v5242 = vadd.f32 %v5165, %v5241
  %5243 = vmatprep.mubr.f32.mxu0 %v4828
  %5244 = vmatmul.mubr.f32.gmra.mrb[0].mxu0 %v4710
  %v5245 = vpop.f32.mrb[0].mxu0
  %v5246 = vadd.f32 %v5169, %v5245
  %v5247 = vpop.f32.mrb[0].mxu0
  %v5248 = vadd.f32 %v5171, %v5247
  %5249 = vdwg.mxu0
  %v5250 = vmax.f32 %v4974, %v5240
  %v5251 = vmax.f32 %v4976, %v5242
  %v5252 = vmax.f32 %v4980, %v5246
  %v5253 = vmax.f32 %v4982, %v5248
  %v5254 = vld [vmem:[%s2508] sm:$0xff]
  %v5255 = vld [vmem:[%s2508 + $0x8] sm:$0xff]
  %v5256 = vld [vmem:[%s2508 + $0x10] sm:$0xff]
  %v5257 = vld [vmem:[%s2508 + $0x18] sm:$0xff]
  %v5258 = vld [vmem:[%s2508 + $0x20] sm:$0xff]
  %v5259 = vld [vmem:[%s2508 + $0x28] sm:$0xff]
  %v5260 = vld [vmem:[%s2508 + $0x30] sm:$0xff]
  %v5261 = vld [vmem:[%s2508 + $0x38] sm:$0xff]
  %v5262 = vld [vmem:[%s2508 + $0x40] sm:$0xff]
  %v5263 = vld [vmem:[%s2508 + $0x48] sm:$0xff]
  %v5264 = vld [vmem:[%s2508 + $0x50] sm:$0xff]
  %v5265 = vld [vmem:[%s2508 + $0x58] sm:$0xff]
  %v5266 = vld [vmem:[%s2508 + $0x60] sm:$0xff]
  %v5267 = vld [vmem:[%s2508 + $0x68] sm:$0xff]
  %v5268 = vld [vmem:[%s2508 + $0x70] sm:$0xff]
  %v5269 = vld [vmem:[%s2508 + $0x78] sm:$0xff]
  %v5270 = vld [vmem:[%s2508 + $0x80] sm:$0xff]
  %v5271 = vld [vmem:[%s2508 + $0x88] sm:$0xff]
  %v5272 = vld [vmem:[%s2508 + $0x90] sm:$0xff]
  %v5273 = vld [vmem:[%s2508 + $0x98] sm:$0xff]
  %v5274 = vld [vmem:[%s2508 + $0xa0] sm:$0xff]
  %v5275 = vld [vmem:[%s2508 + $0xa8] sm:$0xff]
  %v5276 = vld [vmem:[%s2508 + $0xb0] sm:$0xff]
  %v5277 = vld [vmem:[%s2508 + $0xb8] sm:$0xff]
  %v5278 = vld [vmem:[%s2508 + $0xc0] sm:$0xff]
  %v5279 = vld [vmem:[%s2508 + $0xc8] sm:$0xff]
  %v5280 = vld [vmem:[%s2508 + $0xd0] sm:$0xff]
  %v5281 = vld [vmem:[%s2508 + $0xd8] sm:$0xff]
  %v5282 = vld [vmem:[%s2508 + $0xe0] sm:$0xff]
  %v5283 = vld [vmem:[%s2508 + $0xe8] sm:$0xff]
  %v5284 = vld [vmem:[%s2508 + $0xf0] sm:$0xff]
  %v5285 = vld [vmem:[%s2508 + $0xf8] sm:$0xff]
  %v5286 = vld [vmem:[%s2508 + $0x100] sm:$0xff]
  %v5287 = vld [vmem:[%s2508 + $0x108] sm:$0xff]
  %v5288 = vld [vmem:[%s2508 + $0x110] sm:$0xff]
  %v5289 = vld [vmem:[%s2508 + $0x118] sm:$0xff]
  %v5290 = vld [vmem:[%s2508 + $0x120] sm:$0xff]
  %v5291 = vld [vmem:[%s2508 + $0x128] sm:$0xff]
  %v5292 = vld [vmem:[%s2508 + $0x130] sm:$0xff]
  %v5293 = vld [vmem:[%s2508 + $0x138] sm:$0xff]
  %v5294 = vld [vmem:[%s2508 + $0x140] sm:$0xff]
  %v5295 = vld [vmem:[%s2508 + $0x148] sm:$0xff]
  %v5296 = vld [vmem:[%s2508 + $0x150] sm:$0xff]
  %v5297 = vld [vmem:[%s2508 + $0x158] sm:$0xff]
  %v5298 = vld [vmem:[%s2508 + $0x160] sm:$0xff]
  %v5299 = vld [vmem:[%s2508 + $0x168] sm:$0xff]
  %v5300 = vld [vmem:[%s2508 + $0x170] sm:$0xff]
  %v5301 = vld [vmem:[%s2508 + $0x178] sm:$0xff]
  %v5302 = vld [vmem:[%s2508 + $0x180] sm:$0xff]
  %v5303 = vld [vmem:[%s2508 + $0x188] sm:$0xff]
  %v5304 = vld [vmem:[%s2508 + $0x190] sm:$0xff]
  %v5305 = vld [vmem:[%s2508 + $0x198] sm:$0xff]
  %v5306 = vld [vmem:[%s2508 + $0x1a0] sm:$0xff]
  %v5307 = vld [vmem:[%s2508 + $0x1a8] sm:$0xff]
  %v5308 = vld [vmem:[%s2508 + $0x1b0] sm:$0xff]
  %v5309 = vld [vmem:[%s2508 + $0x1b8] sm:$0xff]
  %v5310 = vld [vmem:[%s2508 + $0x1c0] sm:$0xff]
  %v5311 = vld [vmem:[%s2508 + $0x1c8] sm:$0xff]
  %v5312 = vld [vmem:[%s2508 + $0x1d0] sm:$0xff]
  %v5313 = vld [vmem:[%s2508 + $0x1d8] sm:$0xff]
  %v5314 = vld [vmem:[%s2508 + $0x1e0] sm:$0xff]
  %v5315 = vld [vmem:[%s2508 + $0x1e8] sm:$0xff]
  %v5316 = vld [vmem:[%s2508 + $0x1f0] sm:$0xff]
  %v5317 = vld [vmem:[%s2508 + $0x1f8] sm:$0xff]
  %v5318 = vld [vmem:[%s2508 + $0x200] sm:$0xff]
  %v5319 = vld [vmem:[%s2508 + $0x208] sm:$0xff]
  %v5320 = vld [vmem:[%s2508 + $0x210] sm:$0xff]
  %v5321 = vld [vmem:[%s2508 + $0x218] sm:$0xff]
  %v5322 = vld [vmem:[%s2508 + $0x220] sm:$0xff]
  %v5323 = vld [vmem:[%s2508 + $0x228] sm:$0xff]
  %v5324 = vld [vmem:[%s2508 + $0x230] sm:$0xff]
  %v5325 = vld [vmem:[%s2508 + $0x238] sm:$0xff]
  %v5326 = vld [vmem:[%s2508 + $0x240] sm:$0xff]
  %v5327 = vld [vmem:[%s2508 + $0x248] sm:$0xff]
  %v5328 = vld [vmem:[%s2508 + $0x250] sm:$0xff]
  %v5329 = vld [vmem:[%s2508 + $0x258] sm:$0xff]
  %v5330 = vld [vmem:[%s2508 + $0x260] sm:$0xff]
  %v5331 = vld [vmem:[%s2508 + $0x268] sm:$0xff]
  %v5332 = vld [vmem:[%s2508 + $0x270] sm:$0xff]
  %v5333 = vld [vmem:[%s2508 + $0x278] sm:$0xff]
  %v5334 = vld [vmem:[%s2508 + $0x280] sm:$0xff]
  %v5335 = vld [vmem:[%s2508 + $0x288] sm:$0xff]
  %v5336 = vld [vmem:[%s2508 + $0x290] sm:$0xff]
  %v5337 = vld [vmem:[%s2508 + $0x298] sm:$0xff]
  %v5338 = vld [vmem:[%s2508 + $0x2a0] sm:$0xff]
  %v5339 = vld [vmem:[%s2508 + $0x2a8] sm:$0xff]
  %v5340 = vld [vmem:[%s2508 + $0x2b0] sm:$0xff]
  %v5341 = vld [vmem:[%s2508 + $0x2b8] sm:$0xff]
  %v5342 = vld [vmem:[%s2508 + $0x2c0] sm:$0xff]
  %v5343 = vld [vmem:[%s2508 + $0x2c8] sm:$0xff]
  %v5344 = vld [vmem:[%s2508 + $0x2d0] sm:$0xff]
  %v5345 = vld [vmem:[%s2508 + $0x2d8] sm:$0xff]
  %v5346 = vld [vmem:[%s2508 + $0x2e0] sm:$0xff]
  %v5347 = vld [vmem:[%s2508 + $0x2e8] sm:$0xff]
  %v5348 = vld [vmem:[%s2508 + $0x2f0] sm:$0xff]
  %v5349 = vld [vmem:[%s2508 + $0x2f8] sm:$0xff]
  %v5350 = vld [vmem:[%s2508 + $0x300] sm:$0xff]
  %v5351 = vld [vmem:[%s2508 + $0x308] sm:$0xff]
  %v5352 = vld [vmem:[%s2508 + $0x310] sm:$0xff]
  %v5353 = vld [vmem:[%s2508 + $0x318] sm:$0xff]
  %v5354 = vld [vmem:[%s2508 + $0x320] sm:$0xff]
  %v5355 = vld [vmem:[%s2508 + $0x328] sm:$0xff]
  %v5356 = vld [vmem:[%s2508 + $0x330] sm:$0xff]
  %v5357 = vld [vmem:[%s2508 + $0x338] sm:$0xff]
  %v5358 = vld [vmem:[%s2508 + $0x340] sm:$0xff]
  %v5359 = vld [vmem:[%s2508 + $0x348] sm:$0xff]
  %v5360 = vld [vmem:[%s2508 + $0x350] sm:$0xff]
  %v5361 = vld [vmem:[%s2508 + $0x358] sm:$0xff]
  %v5362 = vld [vmem:[%s2508 + $0x360] sm:$0xff]
  %v5363 = vld [vmem:[%s2508 + $0x368] sm:$0xff]
  %v5364 = vld [vmem:[%s2508 + $0x370] sm:$0xff]
  %v5365 = vld [vmem:[%s2508 + $0x378] sm:$0xff]
  %5366 = vmatprep.subr.mxu0 %v5255
  %5367 = vmatpush1.msra.mxu0 %v5254
  %5368 = vmatprep.subr.mxu0 %v5257
  %5369 = vmatpush1.msra.mxu0 %v5256
  %5370 = vmatprep.subr.mxu0 %v5259
  %5371 = vmatpush1.msra.mxu0 %v5258
  %5372 = vmatprep.subr.mxu0 %v5261
  %5373 = vmatpush1.msra.mxu0 %v5260
  %5374 = vmatprep.subr.mxu0 %v5263
  %5375 = vmatpush1.msra.mxu0 %v5262
  %5376 = vmatprep.subr.mxu0 %v5265
  %5377 = vmatpush1.msra.mxu0 %v5264
  %5378 = vmatprep.subr.mxu0 %v5267
  %5379 = vmatpush1.msra.mxu0 %v5266
  %5380 = vmatprep.subr.mxu0 %v5269
  %5381 = vmatpush1.msra.mxu0 %v5268
  %5382 = vmatprep.subr.mxu0 %v5271
  %5383 = vmatpush1.msra.mxu0 %v5270
  %5384 = vmatprep.subr.mxu0 %v5273
  %5385 = vmatpush1.msra.mxu0 %v5272
  %5386 = vmatprep.subr.mxu0 %v5275
  %5387 = vmatpush1.msra.mxu0 %v5274
  %5388 = vmatprep.subr.mxu0 %v5277
  %5389 = vmatpush1.msra.mxu0 %v5276
  %5390 = vmatprep.subr.mxu0 %v5279
  %5391 = vmatpush1.msra.mxu0 %v5278
  %5392 = vmatprep.subr.mxu0 %v5281
  %5393 = vmatpush1.msra.mxu0 %v5280
  %5394 = vmatprep.subr.mxu0 %v5283
  %5395 = vmatpush1.msra.mxu0 %v5282
  %5396 = vmatprep.subr.mxu0 %v5285
  %5397 = vmatpush1.msra.mxu0 %v5284
  %5398 = vmatprep.subr.mxu0 %v5287
  %5399 = vmatpush1.msra.mxu0 %v5286
  %5400 = vmatprep.subr.mxu0 %v5289
  %5401 = vmatpush1.msra.mxu0 %v5288
  %5402 = vmatprep.subr.mxu0 %v5291
  %5403 = vmatpush1.msra.mxu0 %v5290
  %5404 = vmatprep.subr.mxu0 %v5293
  %5405 = vmatpush1.msra.mxu0 %v5292
  %5406 = vmatprep.subr.mxu0 %v5295
  %5407 = vmatpush1.msra.mxu0 %v5294
  %5408 = vmatprep.subr.mxu0 %v5297
  %5409 = vmatpush1.msra.mxu0 %v5296
  %5410 = vmatprep.subr.mxu0 %v5299
  %5411 = vmatpush1.msra.mxu0 %v5298
  %5412 = vmatprep.subr.mxu0 %v5301
  %5413 = vmatpush1.msra.mxu0 %v5300
  %5414 = vmatprep.subr.mxu0 %v5303
  %5415 = vmatpush1.msra.mxu0 %v5302
  %5416 = vmatprep.subr.mxu0 %v5305
  %5417 = vmatpush1.msra.mxu0 %v5304
  %5418 = vmatprep.subr.mxu0 %v5307
  %5419 = vmatpush1.msra.mxu0 %v5306
  %5420 = vmatprep.subr.mxu0 %v5309
  %5421 = vmatpush1.msra.mxu0 %v5308
  %5422 = vmatprep.subr.mxu0 %v5311
  %5423 = vmatpush1.msra.mxu0 %v5310
  %5424 = vmatprep.subr.mxu0 %v5313
  %5425 = vmatpush1.msra.mxu0 %v5312
  %5426 = vmatprep.subr.mxu0 %v5315
  %5427 = vmatpush1.msra.mxu0 %v5314
  %5428 = vmatprep.subr.mxu0 %v5317
  %5429 = vmatpush1.msra.mxu0 %v5316
  %5430 = vmatprep.mubr.f32.mxu0 %v4705
  %5431 = vmatmul.mubr.f32.gmra.mrb[0].mxu0 %v4704
  %v5432 = vpop.f32.mrb[0].mxu0
  %v5433 = vadd.f32 0.0, %v5432
  %v5434 = vpop.f32.mrb[0].mxu0
  %v5435 = vadd.f32 0.0, %v5434
  %5436 = vmatprep.mubr.f32.mxu0 %v4709
  %5437 = vmatmul.mubr.f32.gmra.mrb[0].mxu0 %v4708
  %v5438 = vpop.f32.mrb[0].mxu0
  %v5439 = vadd.f32 0.0, %v5438
  %v5440 = vpop.f32.mrb[0].mxu0
  %v5441 = vadd.f32 0.0, %v5440
  %5442 = vdwg.mxu0
  %5443 = vmatprep.subr.mxu0 %v5319
  %5444 = vmatpush1.msra.mxu0 %v5318
  %5445 = vmatprep.subr.mxu0 %v5321
  %5446 = vmatpush1.msra.mxu0 %v5320
  %5447 = vmatprep.subr.mxu0 %v5323
  %5448 = vmatpush1.msra.mxu0 %v5322
  %5449 = vmatprep.subr.mxu0 %v5325
  %5450 = vmatpush1.msra.mxu0 %v5324
  %5451 = vmatprep.subr.mxu0 %v5327
  %5452 = vmatpush1.msra.mxu0 %v5326
  %5453 = vmatprep.subr.mxu0 %v5329
  %5454 = vmatpush1.msra.mxu0 %v5328
  %5455 = vmatprep.subr.mxu0 %v5331
  %5456 = vmatpush1.msra.mxu0 %v5330
  %5457 = vmatprep.subr.mxu0 %v5333
  %5458 = vmatpush1.msra.mxu0 %v5332
  %5459 = vmatprep.subr.mxu0 %v5335
  %5460 = vmatpush1.msra.mxu0 %v5334
  %5461 = vmatprep.subr.mxu0 %v5337
  %5462 = vmatpush1.msra.mxu0 %v5336
  %5463 = vmatprep.subr.mxu0 %v5339
  %5464 = vmatpush1.msra.mxu0 %v5338
  %5465 = vmatprep.subr.mxu0 %v5341
  %5466 = vmatpush1.msra.mxu0 %v5340
  %5467 = vmatprep.subr.mxu0 %v5343
  %5468 = vmatpush1.msra.mxu0 %v5342
  %5469 = vmatprep.subr.mxu0 %v5345
  %5470 = vmatpush1.msra.mxu0 %v5344
  %5471 = vmatprep.subr.mxu0 %v5347
  %5472 = vmatpush1.msra.mxu0 %v5346
  %5473 = vmatprep.subr.mxu0 %v5349
  %5474 = vmatpush1.msra.mxu0 %v5348
  %5475 = vmatprep.subr.mxu0 %v5351
  %5476 = vmatpush1.msra.mxu0 %v5350
  %5477 = vmatprep.subr.mxu0 %v5353
  %5478 = vmatpush1.msra.mxu0 %v5352
  %5479 = vmatprep.subr.mxu0 %v5355
  %5480 = vmatpush1.msra.mxu0 %v5354
  %5481 = vmatprep.subr.mxu0 %v5357
  %5482 = vmatpush1.msra.mxu0 %v5356
  %5483 = vmatprep.subr.mxu0 %v5359
  %5484 = vmatpush1.msra.mxu0 %v5358
  %5485 = vmatprep.subr.mxu0 %v5361
  %5486 = vmatpush1.msra.mxu0 %v5360
  %5487 = vmatprep.subr.mxu0 %v5363
  %5488 = vmatpush1.msra.mxu0 %v5362
  %5489 = vmatprep.subr.mxu0 %v5365
  %5490 = vmatpush1.msra.mxu0 %v5364
  %5491 = vmatprep.subr.mxu0 0.0
  %5492 = vmatpush1.msra.mxu0 0.0
  %5493 = vmatprep.subr.mxu0 0.0
  %5494 = vmatpush1.msra.mxu0 0.0
  %5495 = vmatprep.subr.mxu0 0.0
  %5496 = vmatpush1.msra.mxu0 0.0
  %5497 = vmatprep.subr.mxu0 0.0
  %5498 = vmatpush1.msra.mxu0 0.0
  %5499 = vmatprep.subr.mxu0 0.0
  %5500 = vmatpush1.msra.mxu0 0.0
  %5501 = vmatprep.subr.mxu0 0.0
  %5502 = vmatpush1.msra.mxu0 0.0
  %5503 = vmatprep.subr.mxu0 0.0
  %5504 = vmatpush1.msra.mxu0 0.0
  %5505 = vmatprep.subr.mxu0 0.0
  %5506 = vmatpush1.msra.mxu0 0.0
  %5507 = vmatprep.mubr.f32.mxu0 %v4825
  %5508 = vmatmul.mubr.f32.gmra.mrb[0].mxu0 %v4706
  %v5509 = vpop.f32.mrb[0].mxu0
  %v5510 = vadd.f32 %v5433, %v5509
  %v5511 = vpop.f32.mrb[0].mxu0
  %v5512 = vadd.f32 %v5435, %v5511
  %5513 = vmatprep.mubr.f32.mxu0 %v4828
  %5514 = vmatmul.mubr.f32.gmra.mrb[0].mxu0 %v4710
  %v5515 = vpop.f32.mrb[0].mxu0
  %v5516 = vadd.f32 %v5439, %v5515
  %v5517 = vpop.f32.mrb[0].mxu0
  %v5518 = vadd.f32 %v5441, %v5517
  %5519 = vdwg.mxu0
  %v5520 = vmax.f32 %v5250, %v5510
  %v5521 = vmax.f32 %v5251, %v5512
  %v5522 = vmax.f32 %v5252, %v5516
  %v5523 = vmax.f32 %v5253, %v5518
  %v5524 = vpack.c.bf16 %v5522, %v5520
  %v5525 = vpack.c.bf16 %v5523, %v5521
  %v5528 = vunpack.c.l.b16 %v5524
  %v5529 = vunpack.c.l.b16 %v5525
  %v5530 = vunpack.c.h.b16 %v5524
  %v5531 = vunpack.c.h.b16 %v5525
  %v5532 = vpack.c.b16 %v5529, %v5528
  %v5533 = vpack.c.b16 %v5531, %v5530
  %s5536 = scalar_lea.vmem %s5, 16
  %5537 = vst.msk [vmem:[%s5536] sm:$0xff] %vm2792, %v5532
  %v5538 = vld [vmem:[%s5536 + $0x8] sm:$0x77]
  %v5539 = vsel %vm2799, %v5533, %v5538
  %5540 = vst [vmem:[%s5536 + $0x8] sm:$0x77] %v5539
  // Predicated region
  $region22: #{convolutional_model_forward.3} parent=0 // pred_check
    _
  $region23: #{convolutional_model_forward.3} parent=0 // pred_check_branch
    %5542 = sbr.rel (0) target = $region25
  $region24: #{convolutional_model_forward.3} parent=0 // pred_region
    _
  $region25: #{convolutional_model_forward.3} parent=0 // pred_fallthru
    _
  // Predicated region
  $region26: #{convolutional_model_forward.3} parent=0 // pred_check
    _
  $region27: #{convolutional_model_forward.3} parent=0 // pred_check_branch
    %5544 = sbr.rel (0) target = $region29
  $region28: #{convolutional_model_forward.3} parent=0 // pred_region
    _
  $region29: #{convolutional_model_forward.3} parent=0 // pred_fallthru
    _

// kernel: convolutional_model_forward.4
$region0: #{convolutional_model_forward.4}
  #allocation0 [shape = 'u32[]', space=smem, size = 0x4, offset = 0x4, fixed_abs, tag = 'smem constant byte address 0x4 - core index']
  #allocation1 [shape = 'u32[144,128]{1,0:T(1,128)}', space=vmem, size = 0x12000, scoped, tag = 'internal scratch']
  %s0 = inlined_call_operand.vmem [shape: bf16[2,13,208], index: 0, kind: input, shape index: {}]
  %s1 = inlined_call_operand.vmem [shape: bf16[5,208,288], index: 1, kind: input, shape index: {}]
  %s2 = inlined_call_operand.vmem [shape: f32[1,288], index: 2, kind: input, shape index: {}]
  %s3 = inlined_call_operand.vmem [shape: f32[3,4,9], index: 3, kind: input, shape index: {}]
  %s4 = inlined_call_operand.vmem [shape: f32[3,288,128], index: 4, kind: input, shape index: {}]
  %s5 = inlined_call_operand.vmem [shape: bf16[2,4,128], index: 5, kind: output, shape index: {}]
  %s6 = sld [smem:[#allocation0]]
  $region30: #{convolutional_model_forward.4} parent=0
    _
  %s8 = ssub.s32 1, %s6
  %s9 = scalar_select 0, %s8, %s6
  // Predicated region
  $region2: #{convolutional_model_forward.4} parent=0 // pred_check
    _
  $region3: #{convolutional_model_forward.4} parent=0 // pred_check_branch
    %11 = sbr.rel (0) target = $region5
  $region4: #{convolutional_model_forward.4} parent=0 // pred_region
    _
  $region5: #{convolutional_model_forward.4} parent=0 // pred_fallthru
    _
  // Predicated region
  $region6: #{convolutional_model_forward.4} parent=0 // pred_check
    _
  $region7: #{convolutional_model_forward.4} parent=0 // pred_check_branch
    %13 = sbr.rel (0) target = $region9
  $region8: #{convolutional_model_forward.4} parent=0 // pred_region
    _
  $region9: #{convolutional_model_forward.4} parent=0 // pred_fallthru
    _
  // Predicated region
  $region10: #{convolutional_model_forward.4} parent=0 // pred_check
    _
  $region11: #{convolutional_model_forward.4} parent=0 // pred_check_branch
    %15 = sbr.rel (0) target = $region13
  $region12: #{convolutional_model_forward.4} parent=0 // pred_region
    _
  $region13: #{convolutional_model_forward.4} parent=0 // pred_fallthru
    _
  // Predicated region
  $region14: #{convolutional_model_forward.4} parent=0 // pred_check
    _
  $region15: #{convolutional_model_forward.4} parent=0 // pred_check_branch
    %17 = sbr.rel (0) target = $region17
  $region16: #{convolutional_model_forward.4} parent=0 // pred_region
    _
  $region17: #{convolutional_model_forward.4} parent=0 // pred_fallthru
    _
  // Predicated region
  $region18: #{convolutional_model_forward.4} parent=0 // pred_check
    _
  $region19: #{convolutional_model_forward.4} parent=0 // pred_check_branch
    %19 = sbr.rel (0) target = $region21
  $region20: #{convolutional_model_forward.4} parent=0 // pred_region
    _
  $region21: #{convolutional_model_forward.4} parent=0 // pred_fallthru
    _
  %v21 = vld [vmem:[%s2] sm:$0x7]
  %v22 = vld [vmem:[%s0] sm:$0xff]
  %v23 = vld [vmem:[%s0 + $0x8] sm:$0x77]
  %v24 = vld [vmem:[%s1] sm:$0xff]
  %v25 = vld [vmem:[%s1 + $0x8] sm:$0xf]
  %v26 = vld [vmem:[%s1 + $0xc] sm:$0xff]
  %v27 = vld [vmem:[%s1 + $0x14] sm:$0xf]
  %v28 = vld [vmem:[%s1 + $0x18] sm:$0xff]
  %v29 = vld [vmem:[%s1 + $0x20] sm:$0xf]
  %v30 = vld [vmem:[%s1 + $0x24] sm:$0xff]
  %v31 = vld [vmem:[%s1 + $0x2c] sm:$0xf]
  %v32 = vld [vmem:[%s1 + $0x30] sm:$0xff]
  %v33 = vld [vmem:[%s1 + $0x38] sm:$0xf]
  %v34 = vld [vmem:[%s1 + $0x3c] sm:$0xff]
  %v35 = vld [vmem:[%s1 + $0x44] sm:$0xf]
  %v36 = vld [vmem:[%s1 + $0x48] sm:$0xff]
  %v37 = vld [vmem:[%s1 + $0x50] sm:$0xf]
  %v38 = vld [vmem:[%s1 + $0x54] sm:$0xff]
  %v39 = vld [vmem:[%s1 + $0x5c] sm:$0xf]
  %v40 = vld [vmem:[%s1 + $0x60] sm:$0xff]
  %v41 = vld [vmem:[%s1 + $0x68] sm:$0xf]
  %v42 = vld [vmem:[%s1 + $0x6c] sm:$0xff]
  %v43 = vld [vmem:[%s1 + $0x74] sm:$0xf]
  %v44 = vld [vmem:[%s1 + $0x78] sm:$0xff]
  %v45 = vld [vmem:[%s1 + $0x80] sm:$0xf]
  %v46 = vld [vmem:[%s1 + $0x84] sm:$0xff]
  %v47 = vld [vmem:[%s1 + $0x8c] sm:$0xf]
  %v48 = vld [vmem:[%s1 + $0x90] sm:$0xff]
  %v49 = vld [vmem:[%s1 + $0x98] sm:$0xf]
  %v50 = vld [vmem:[%s1 + $0x9c] sm:$0xff]
  %v51 = vld [vmem:[%s1 + $0xa4] sm:$0xf]
  %v52 = vld [vmem:[%s1 + $0xa8] sm:$0xff]
  %v53 = vld [vmem:[%s1 + $0xb0] sm:$0xf]
  %v54 = vld [vmem:[%s1 + $0xb4] sm:$0xff]
  %v55 = vld [vmem:[%s1 + $0xbc] sm:$0xf]
  %v56 = vld [vmem:[%s1 + $0xc0] sm:$0xff]
  %v57 = vld [vmem:[%s1 + $0xc8] sm:$0xf]
  %v58 = vld [vmem:[%s1 + $0xcc] sm:$0xff]
  %v59 = vld [vmem:[%s1 + $0xd4] sm:$0xf]
  %v60 = vld [vmem:[%s1 + $0xd8] sm:$0xff]
  %v61 = vld [vmem:[%s1 + $0xe0] sm:$0xf]
  %v62 = vld [vmem:[%s1 + $0xe4] sm:$0xff]
  %v63 = vld [vmem:[%s1 + $0xec] sm:$0xf]
  %v64 = vld [vmem:[%s1 + $0xf0] sm:$0xff]
  %v65 = vld [vmem:[%s1 + $0xf8] sm:$0xf]
  %v66 = vld [vmem:[%s1 + $0xfc] sm:$0xff]
  %v67 = vld [vmem:[%s1 + $0x104] sm:$0xf]
  %v68 = vld [vmem:[%s1 + $0x108] sm:$0xff]
  %v69 = vld [vmem:[%s1 + $0x110] sm:$0xf]
  %v70 = vld [vmem:[%s1 + $0x114] sm:$0xff]
  %v71 = vld [vmem:[%s1 + $0x11c] sm:$0xf]
  %v72 = vld [vmem:[%s1 + $0x120] sm:$0xff]
  %v73 = vld [vmem:[%s1 + $0x128] sm:$0xf]
  %v74 = vld [vmem:[%s1 + $0x12c] sm:$0xff]
  %v75 = vld [vmem:[%s1 + $0x134] sm:$0xf]
  %s76 = scalar_lea.vmem %s1, 312
  %v77 = vld [vmem:[%s76] sm:$0xff]
  %v78 = vld [vmem:[%s76 + $0x8] sm:$0xf]
  %v79 = vld [vmem:[%s76 + $0xc] sm:$0xff]
  %v80 = vld [vmem:[%s76 + $0x14] sm:$0xf]
  %v81 = vld [vmem:[%s76 + $0x18] sm:$0xff]
  %v82 = vld [vmem:[%s76 + $0x20] sm:$0xf]
  %v83 = vld [vmem:[%s76 + $0x24] sm:$0xff]
  %v84 = vld [vmem:[%s76 + $0x2c] sm:$0xf]
  %v85 = vld [vmem:[%s76 + $0x30] sm:$0xff]
  %v86 = vld [vmem:[%s76 + $0x38] sm:$0xf]
  %v87 = vld [vmem:[%s76 + $0x3c] sm:$0xff]
  %v88 = vld [vmem:[%s76 + $0x44] sm:$0xf]
  %v89 = vld [vmem:[%s76 + $0x48] sm:$0xff]
  %v90 = vld [vmem:[%s76 + $0x50] sm:$0xf]
  %v91 = vld [vmem:[%s76 + $0x54] sm:$0xff]
  %v92 = vld [vmem:[%s76 + $0x5c] sm:$0xf]
  %v93 = vld [vmem:[%s76 + $0x60] sm:$0xff]
  %v94 = vld [vmem:[%s76 + $0x68] sm:$0xf]
  %v95 = vld [vmem:[%s76 + $0x6c] sm:$0xff]
  %v96 = vld [vmem:[%s76 + $0x74] sm:$0xf]
  %v97 = vld [vmem:[%s76 + $0x78] sm:$0xff]
  %v98 = vld [vmem:[%s76 + $0x80] sm:$0xf]
  %v99 = vld [vmem:[%s76 + $0x84] sm:$0xff]
  %v100 = vld [vmem:[%s76 + $0x8c] sm:$0xf]
  %v101 = vld [vmem:[%s76 + $0x90] sm:$0xff]
  %v102 = vld [vmem:[%s76 + $0x98] sm:$0xf]
  %v103 = vld [vmem:[%s76 + $0x9c] sm:$0xff]
  %v104 = vld [vmem:[%s76 + $0xa4] sm:$0xf]
  %v105 = vld [vmem:[%s76 + $0xa8] sm:$0xff]
  %v106 = vld [vmem:[%s76 + $0xb0] sm:$0xf]
  %v107 = vld [vmem:[%s76 + $0xb4] sm:$0xff]
  %v108 = vld [vmem:[%s76 + $0xbc] sm:$0xf]
  %v109 = vld [vmem:[%s76 + $0xc0] sm:$0xff]
  %v110 = vld [vmem:[%s76 + $0xc8] sm:$0xf]
  %v111 = vld [vmem:[%s76 + $0xcc] sm:$0xff]
  %v112 = vld [vmem:[%s76 + $0xd4] sm:$0xf]
  %v113 = vld [vmem:[%s76 + $0xd8] sm:$0xff]
  %v114 = vld [vmem:[%s76 + $0xe0] sm:$0xf]
  %v115 = vld [vmem:[%s76 + $0xe4] sm:$0xff]
  %v116 = vld [vmem:[%s76 + $0xec] sm:$0xf]
  %v117 = vld [vmem:[%s76 + $0xf0] sm:$0xff]
  %v118 = vld [vmem:[%s76 + $0xf8] sm:$0xf]
  %v119 = vld [vmem:[%s76 + $0xfc] sm:$0xff]
  %v120 = vld [vmem:[%s76 + $0x104] sm:$0xf]
  %v121 = vld [vmem:[%s76 + $0x108] sm:$0xff]
  %v122 = vld [vmem:[%s76 + $0x110] sm:$0xf]
  %v123 = vld [vmem:[%s76 + $0x114] sm:$0xff]
  %v124 = vld [vmem:[%s76 + $0x11c] sm:$0xf]
  %v125 = vld [vmem:[%s76 + $0x120] sm:$0xff]
  %v126 = vld [vmem:[%s76 + $0x128] sm:$0xf]
  %v127 = vld [vmem:[%s76 + $0x12c] sm:$0xff]
  %v128 = vld [vmem:[%s76 + $0x134] sm:$0xf]
  %v131 = vunpack.c.l.b16 %v22
  %v132 = vunpack.c.h.b16 %v22
  %v133 = vunpack.c.l.b16 %v23
  %v134 = vunpack.c.h.b16 %v23
  %v135 = vpack.c.b16 %v133, %v131
  %v136 = vpack.c.b16 %v134, %v132
  %v138 = vshrl.u32 %v135, 16
  %v140 = vshll.u32 %v135, 16
  %v142 = vrot.slane %v140, 1
  %v143 = vor.u32 %v138, %v142
  %v145 = vshrl.u32 %v136, 16
  %v147 = vshll.u32 %v136, 16
  %v149 = vrot.slane %v147, 1
  %v150 = vor.u32 %v145, %v149
  %v204 = vunpack.c.l.b16 %v77
  %v205 = vunpack.c.h.b16 %v77
  %v206 = vunpack.c.l.b16 %v78
  %v207 = vunpack.c.l.b16 %v79
  %v208 = vunpack.c.h.b16 %v79
  %v209 = vunpack.c.l.b16 %v80
  %v210 = vunpack.c.l.b16 %v81
  %v211 = vunpack.c.h.b16 %v81
  %v212 = vunpack.c.l.b16 %v82
  %v213 = vunpack.c.l.b16 %v83
  %v214 = vunpack.c.h.b16 %v83
  %v215 = vunpack.c.l.b16 %v84
  %v216 = vunpack.c.l.b16 %v85
  %v217 = vunpack.c.h.b16 %v85
  %v218 = vunpack.c.l.b16 %v86
  %v219 = vunpack.c.l.b16 %v87
  %v220 = vunpack.c.h.b16 %v87
  %v221 = vunpack.c.l.b16 %v88
  %v222 = vunpack.c.l.b16 %v89
  %v223 = vunpack.c.h.b16 %v89
  %v224 = vunpack.c.l.b16 %v90
  %v225 = vunpack.c.l.b16 %v91
  %v226 = vunpack.c.h.b16 %v91
  %v227 = vunpack.c.l.b16 %v92
  %v228 = vunpack.c.l.b16 %v93
  %v229 = vunpack.c.h.b16 %v93
  %v230 = vunpack.c.l.b16 %v94
  %v231 = vunpack.c.l.b16 %v95
  %v232 = vunpack.c.h.b16 %v95
  %v233 = vunpack.c.l.b16 %v96
  %v234 = vunpack.c.l.b16 %v97
  %v235 = vunpack.c.h.b16 %v97
  %v236 = vunpack.c.l.b16 %v98
  %v237 = vunpack.c.l.b16 %v99
  %v238 = vunpack.c.h.b16 %v99
  %v239 = vunpack.c.l.b16 %v100
  %v240 = vunpack.c.l.b16 %v101
  %v241 = vunpack.c.h.b16 %v101
  %v242 = vunpack.c.l.b16 %v102
  %v243 = vunpack.c.l.b16 %v103
  %v244 = vunpack.c.h.b16 %v103
  %v245 = vunpack.c.l.b16 %v104
  %v246 = vunpack.c.l.b16 %v105
  %v247 = vunpack.c.h.b16 %v105
  %v248 = vunpack.c.l.b16 %v106
  %v249 = vunpack.c.l.b16 %v107
  %v250 = vunpack.c.h.b16 %v107
  %v251 = vunpack.c.l.b16 %v108
  %v252 = vunpack.c.l.b16 %v109
  %v253 = vunpack.c.h.b16 %v109
  %v254 = vunpack.c.l.b16 %v110
  %v255 = vunpack.c.l.b16 %v111
  %v256 = vunpack.c.h.b16 %v111
  %v257 = vunpack.c.l.b16 %v112
  %v258 = vunpack.c.l.b16 %v113
  %v259 = vunpack.c.h.b16 %v113
  %v260 = vunpack.c.l.b16 %v114
  %v261 = vunpack.c.l.b16 %v115
  %v262 = vunpack.c.h.b16 %v115
  %v263 = vunpack.c.l.b16 %v116
  %v264 = vunpack.c.l.b16 %v117
  %v265 = vunpack.c.h.b16 %v117
  %v266 = vunpack.c.l.b16 %v118
  %v267 = vunpack.c.l.b16 %v119
  %v268 = vunpack.c.h.b16 %v119
  %v269 = vunpack.c.l.b16 %v120
  %v270 = vunpack.c.l.b16 %v121
  %v271 = vunpack.c.h.b16 %v121
  %v272 = vunpack.c.l.b16 %v122
  %v273 = vunpack.c.l.b16 %v123
  %v274 = vunpack.c.h.b16 %v123
  %v275 = vunpack.c.l.b16 %v124
  %v276 = vunpack.c.l.b16 %v125
  %v277 = vunpack.c.h.b16 %v125
  %v278 = vunpack.c.l.b16 %v126
  %v279 = vunpack.c.l.b16 %v127
  %v280 = vunpack.c.h.b16 %v127
  %v281 = vunpack.c.l.b16 %v128
  %v282 = vpack.c.b16 %v207, %v204
  %v283 = vpack.c.b16 %v208, %v205
  %v284 = vpack.c.b16 %v209, %v206
  %v285 = vpack.c.b16 %v213, %v210
  %v286 = vpack.c.b16 %v214, %v211
  %v287 = vpack.c.b16 %v215, %v212
  %v288 = vpack.c.b16 %v219, %v216
  %v289 = vpack.c.b16 %v220, %v217
  %v290 = vpack.c.b16 %v221, %v218
  %v291 = vpack.c.b16 %v225, %v222
  %v292 = vpack.c.b16 %v226, %v223
  %v293 = vpack.c.b16 %v227, %v224
  %v294 = vpack.c.b16 %v231, %v228
  %v295 = vpack.c.b16 %v232, %v229
  %v296 = vpack.c.b16 %v233, %v230
  %v297 = vpack.c.b16 %v237, %v234
  %v298 = vpack.c.b16 %v238, %v235
  %v299 = vpack.c.b16 %v239, %v236
  %v300 = vpack.c.b16 %v243, %v240
  %v301 = vpack.c.b16 %v244, %v241
  %v302 = vpack.c.b16 %v245, %v242
  %v303 = vpack.c.b16 %v249, %v246
  %v304 = vpack.c.b16 %v250, %v247
  %v305 = vpack.c.b16 %v251, %v248
  %v306 = vpack.c.b16 %v255, %v252
  %v307 = vpack.c.b16 %v256, %v253
  %v308 = vpack.c.b16 %v257, %v254
  %v309 = vpack.c.b16 %v261, %v258
  %v310 = vpack.c.b16 %v262, %v259
  %v311 = vpack.c.b16 %v263, %v260
  %v312 = vpack.c.b16 %v267, %v264
  %v313 = vpack.c.b16 %v268, %v265
  %v314 = vpack.c.b16 %v269, %v266
  %v315 = vpack.c.b16 %v273, %v270
  %v316 = vpack.c.b16 %v274, %v271
  %v317 = vpack.c.b16 %v275, %v272
  %v318 = vpack.c.b16 %v279, %v276
  %v319 = vpack.c.b16 %v280, %v277
  %v320 = vpack.c.b16 %v281, %v278
  %vm360 = vcmask 654336
  %v362 = vsel %vm360, %v150, 0
  %364 = vmatprep.subr.bf16.mxu0 %v283
  %365 = vmatpush1.bf16.msra.mxu0 %v282
  %366 = vmatprep.subr.bf16.mxu0 %v286
  %367 = vmatpush1.bf16.msra.mxu0 %v285
  %368 = vmatprep.subr.bf16.mxu0 %v289
  %369 = vmatpush1.bf16.msra.mxu0 %v288
  %370 = vmatprep.subr.bf16.mxu0 %v292
  %371 = vmatpush1.bf16.msra.mxu0 %v291
  %372 = vmatprep.subr.bf16.mxu0 %v295
  %373 = vmatpush1.bf16.msra.mxu0 %v294
  %374 = vmatprep.subr.bf16.mxu0 %v298
  %375 = vmatpush1.bf16.msra.mxu0 %v297
  %376 = vmatprep.subr.bf16.mxu0 %v301
  %377 = vmatpush1.bf16.msra.mxu0 %v300
  %378 = vmatprep.subr.bf16.mxu0 %v304
  %379 = vmatpush1.bf16.msra.mxu0 %v303
  %380 = vmatprep.subr.bf16.mxu0 %v307
  %381 = vmatpush1.bf16.msra.mxu0 %v306
  %382 = vmatprep.subr.bf16.mxu0 %v310
  %383 = vmatpush1.bf16.msra.mxu0 %v309
  %384 = vmatprep.subr.bf16.mxu0 %v313
  %385 = vmatpush1.bf16.msra.mxu0 %v312
  %386 = vmatprep.subr.bf16.mxu0 %v316
  %387 = vmatpush1.bf16.msra.mxu0 %v315
  %388 = vmatprep.subr.bf16.mxu0 %v319
  %389 = vmatpush1.bf16.msra.mxu0 %v318
  %390 = vmatprep.subr.bf16.mxu0 0
  %391 = vmatpush1.bf16.msra.mxu0 0
  %392 = vmatprep.subr.bf16.mxu0 0
  %393 = vmatpush1.bf16.msra.mxu0 0
  %394 = vmatprep.subr.bf16.mxu0 0
  %395 = vmatpush1.bf16.msra.mxu0 0
  %396 = vmatprep.mubr.bf16.mxu0 %v362
  %397 = vmatmul.mubr.bf16.gmra.mrb[0].mxu0 %v143
  %v398 = vpop.f32.mrb[0].mxu0
  %v399 = vadd.f32 0.0, %v398
  %v400 = vpop.f32.mrb[0].mxu0
  %v401 = vadd.f32 0.0, %v400
  %v402 = vpop.f32.mrb[0].mxu0
  %v403 = vadd.f32 0.0, %v402
  %v404 = vpop.f32.mrb[0].mxu0
  %v405 = vadd.f32 0.0, %v404
  %406 = vdwg.mxu0
  %407 = vmatprep.subr.bf16.mxu0 0
  %408 = vmatpush1.bf16.msra.mxu0 %v284
  %409 = vmatprep.subr.bf16.mxu0 0
  %410 = vmatpush1.bf16.msra.mxu0 %v287
  %411 = vmatprep.subr.bf16.mxu0 0
  %412 = vmatpush1.bf16.msra.mxu0 %v290
  %413 = vmatprep.subr.bf16.mxu0 0
  %414 = vmatpush1.bf16.msra.mxu0 %v293
  %415 = vmatprep.subr.bf16.mxu0 0
  %416 = vmatpush1.bf16.msra.mxu0 %v296
  %417 = vmatprep.subr.bf16.mxu0 0
  %418 = vmatpush1.bf16.msra.mxu0 %v299
  %419 = vmatprep.subr.bf16.mxu0 0
  %420 = vmatpush1.bf16.msra.mxu0 %v302
  %421 = vmatprep.subr.bf16.mxu0 0
  %422 = vmatpush1.bf16.msra.mxu0 %v305
  %423 = vmatprep.subr.bf16.mxu0 0
  %424 = vmatpush1.bf16.msra.mxu0 %v308
  %425 = vmatprep.subr.bf16.mxu0 0
  %426 = vmatpush1.bf16.msra.mxu0 %v311
  %427 = vmatprep.subr.bf16.mxu0 0
  %428 = vmatpush1.bf16.msra.mxu0 %v314
  %429 = vmatprep.subr.bf16.mxu0 0
  %430 = vmatpush1.bf16.msra.mxu0 %v317
  %431 = vmatprep.subr.bf16.mxu0 0
  %432 = vmatpush1.bf16.msra.mxu0 %v320
  %433 = vmatprep.subr.bf16.mxu0 0
  %434 = vmatpush1.bf16.msra.mxu0 0
  %435 = vmatprep.subr.bf16.mxu0 0
  %436 = vmatpush1.bf16.msra.mxu0 0
  %437 = vmatprep.subr.bf16.mxu0 0
  %438 = vmatpush1.bf16.msra.mxu0 0
  %439 = vmatprep.mubr.bf16.mxu0 %v362
  %440 = vmatmul.mubr.bf16.gmra.mrb[0].mxu0 %v143
  %v441 = vpop.f32.mrb[0].mxu0
  %v442 = vadd.f32 0.0, %v441
  %v443 = vpop.f32.mrb[0].mxu0
  %v444 = vpop.f32.mrb[0].mxu0
  %v445 = vadd.f32 0.0, %v444
  %v446 = vpop.f32.mrb[0].mxu0
  %447 = vdwg.mxu0
  %v501 = vunpack.c.l.b16 %v24
  %v502 = vunpack.c.h.b16 %v24
  %v503 = vunpack.c.l.b16 %v25
  %v504 = vunpack.c.l.b16 %v26
  %v505 = vunpack.c.h.b16 %v26
  %v506 = vunpack.c.l.b16 %v27
  %v507 = vunpack.c.l.b16 %v28
  %v508 = vunpack.c.h.b16 %v28
  %v509 = vunpack.c.l.b16 %v29
  %v510 = vunpack.c.l.b16 %v30
  %v511 = vunpack.c.h.b16 %v30
  %v512 = vunpack.c.l.b16 %v31
  %v513 = vunpack.c.l.b16 %v32
  %v514 = vunpack.c.h.b16 %v32
  %v515 = vunpack.c.l.b16 %v33
  %v516 = vunpack.c.l.b16 %v34
  %v517 = vunpack.c.h.b16 %v34
  %v518 = vunpack.c.l.b16 %v35
  %v519 = vunpack.c.l.b16 %v36
  %v520 = vunpack.c.h.b16 %v36
  %v521 = vunpack.c.l.b16 %v37
  %v522 = vunpack.c.l.b16 %v38
  %v523 = vunpack.c.h.b16 %v38
  %v524 = vunpack.c.l.b16 %v39
  %v525 = vunpack.c.l.b16 %v40
  %v526 = vunpack.c.h.b16 %v40
  %v527 = vunpack.c.l.b16 %v41
  %v528 = vunpack.c.l.b16 %v42
  %v529 = vunpack.c.h.b16 %v42
  %v530 = vunpack.c.l.b16 %v43
  %v531 = vunpack.c.l.b16 %v44
  %v532 = vunpack.c.h.b16 %v44
  %v533 = vunpack.c.l.b16 %v45
  %v534 = vunpack.c.l.b16 %v46
  %v535 = vunpack.c.h.b16 %v46
  %v536 = vunpack.c.l.b16 %v47
  %v537 = vunpack.c.l.b16 %v48
  %v538 = vunpack.c.h.b16 %v48
  %v539 = vunpack.c.l.b16 %v49
  %v540 = vunpack.c.l.b16 %v50
  %v541 = vunpack.c.h.b16 %v50
  %v542 = vunpack.c.l.b16 %v51
  %v543 = vunpack.c.l.b16 %v52
  %v544 = vunpack.c.h.b16 %v52
  %v545 = vunpack.c.l.b16 %v53
  %v546 = vunpack.c.l.b16 %v54
  %v547 = vunpack.c.h.b16 %v54
  %v548 = vunpack.c.l.b16 %v55
  %v549 = vunpack.c.l.b16 %v56
  %v550 = vunpack.c.h.b16 %v56
  %v551 = vunpack.c.l.b16 %v57
  %v552 = vunpack.c.l.b16 %v58
  %v553 = vunpack.c.h.b16 %v58
  %v554 = vunpack.c.l.b16 %v59
  %v555 = vunpack.c.l.b16 %v60
  %v556 = vunpack.c.h.b16 %v60
  %v557 = vunpack.c.l.b16 %v61
  %v558 = vunpack.c.l.b16 %v62
  %v559 = vunpack.c.h.b16 %v62
  %v560 = vunpack.c.l.b16 %v63
  %v561 = vunpack.c.l.b16 %v64
  %v562 = vunpack.c.h.b16 %v64
  %v563 = vunpack.c.l.b16 %v65
  %v564 = vunpack.c.l.b16 %v66
  %v565 = vunpack.c.h.b16 %v66
  %v566 = vunpack.c.l.b16 %v67
  %v567 = vunpack.c.l.b16 %v68
  %v568 = vunpack.c.h.b16 %v68
  %v569 = vunpack.c.l.b16 %v69
  %v570 = vunpack.c.l.b16 %v70
  %v571 = vunpack.c.h.b16 %v70
  %v572 = vunpack.c.l.b16 %v71
  %v573 = vunpack.c.l.b16 %v72
  %v574 = vunpack.c.h.b16 %v72
  %v575 = vunpack.c.l.b16 %v73
  %v576 = vunpack.c.l.b16 %v74
  %v577 = vunpack.c.h.b16 %v74
  %v578 = vunpack.c.l.b16 %v75
  %v579 = vpack.c.b16 %v504, %v501
  %v580 = vpack.c.b16 %v505, %v502
  %v581 = vpack.c.b16 %v506, %v503
  %v582 = vpack.c.b16 %v510, %v507
  %v583 = vpack.c.b16 %v511, %v508
  %v584 = vpack.c.b16 %v512, %v509
  %v585 = vpack.c.b16 %v516, %v513
  %v586 = vpack.c.b16 %v517, %v514
  %v587 = vpack.c.b16 %v518, %v515
  %v588 = vpack.c.b16 %v522, %v519
  %v589 = vpack.c.b16 %v523, %v520
  %v590 = vpack.c.b16 %v524, %v521
  %v591 = vpack.c.b16 %v528, %v525
  %v592 = vpack.c.b16 %v529, %v526
  %v593 = vpack.c.b16 %v530, %v527
  %v594 = vpack.c.b16 %v534, %v531
  %v595 = vpack.c.b16 %v535, %v532
  %v596 = vpack.c.b16 %v536, %v533
  %v597 = vpack.c.b16 %v540, %v537
  %v598 = vpack.c.b16 %v541, %v538
  %v599 = vpack.c.b16 %v542, %v539
  %v600 = vpack.c.b16 %v546, %v543
  %v601 = vpack.c.b16 %v547, %v544
  %v602 = vpack.c.b16 %v548, %v545
  %v603 = vpack.c.b16 %v552, %v549
  %v604 = vpack.c.b16 %v553, %v550
  %v605 = vpack.c.b16 %v554, %v551
  %v606 = vpack.c.b16 %v558, %v555
  %v607 = vpack.c.b16 %v559, %v556
  %v608 = vpack.c.b16 %v560, %v557
  %v609 = vpack.c.b16 %v564, %v561
  %v610 = vpack.c.b16 %v565, %v562
  %v611 = vpack.c.b16 %v566, %v563
  %v612 = vpack.c.b16 %v570, %v567
  %v613 = vpack.c.b16 %v571, %v568
  %v614 = vpack.c.b16 %v572, %v569
  %v615 = vpack.c.b16 %v576, %v573
  %v616 = vpack.c.b16 %v577, %v574
  %v617 = vpack.c.b16 %v578, %v575
  %v657 = vsel %vm360, %v136, 0
  %659 = vmatprep.subr.bf16.mxu0 %v580
  %660 = vmatpush1.bf16.msra.mxu0 %v579
  %661 = vmatprep.subr.bf16.mxu0 %v583
  %662 = vmatpush1.bf16.msra.mxu0 %v582
  %663 = vmatprep.subr.bf16.mxu0 %v586
  %664 = vmatpush1.bf16.msra.mxu0 %v585
  %665 = vmatprep.subr.bf16.mxu0 %v589
  %666 = vmatpush1.bf16.msra.mxu0 %v588
  %667 = vmatprep.subr.bf16.mxu0 %v592
  %668 = vmatpush1.bf16.msra.mxu0 %v591
  %669 = vmatprep.subr.bf16.mxu0 %v595
  %670 = vmatpush1.bf16.msra.mxu0 %v594
  %671 = vmatprep.subr.bf16.mxu0 %v598
  %672 = vmatpush1.bf16.msra.mxu0 %v597
  %673 = vmatprep.subr.bf16.mxu0 %v601
  %674 = vmatpush1.bf16.msra.mxu0 %v600
  %675 = vmatprep.subr.bf16.mxu0 %v604
  %676 = vmatpush1.bf16.msra.mxu0 %v603
  %677 = vmatprep.subr.bf16.mxu0 %v607
  %678 = vmatpush1.bf16.msra.mxu0 %v606
  %679 = vmatprep.subr.bf16.mxu0 %v610
  %680 = vmatpush1.bf16.msra.mxu0 %v609
  %681 = vmatprep.subr.bf16.mxu0 %v613
  %682 = vmatpush1.bf16.msra.mxu0 %v612
  %683 = vmatprep.subr.bf16.mxu0 %v616
  %684 = vmatpush1.bf16.msra.mxu0 %v615
  %685 = vmatprep.subr.bf16.mxu0 0
  %686 = vmatpush1.bf16.msra.mxu0 0
  %687 = vmatprep.subr.bf16.mxu0 0
  %688 = vmatpush1.bf16.msra.mxu0 0
  %689 = vmatprep.subr.bf16.mxu0 0
  %690 = vmatpush1.bf16.msra.mxu0 0
  %691 = vmatprep.mubr.bf16.mxu0 %v657
  %692 = vmatmul.mubr.bf16.gmra.mrb[0].mxu0 %v135
  %v693 = vpop.f32.mrb[0].mxu0
  %v694 = vadd.f32 %v399, %v693
  %v695 = vpop.f32.mrb[0].mxu0
  %v696 = vadd.f32 %v401, %v695
  %v697 = vpop.f32.mrb[0].mxu0
  %v698 = vadd.f32 %v403, %v697
  %v699 = vpop.f32.mrb[0].mxu0
  %v700 = vadd.f32 %v405, %v699
  %701 = vdwg.mxu0
  %702 = vmatprep.subr.bf16.mxu0 0
  %703 = vmatpush1.bf16.msra.mxu0 %v581
  %704 = vmatprep.subr.bf16.mxu0 0
  %705 = vmatpush1.bf16.msra.mxu0 %v584
  %706 = vmatprep.subr.bf16.mxu0 0
  %707 = vmatpush1.bf16.msra.mxu0 %v587
  %708 = vmatprep.subr.bf16.mxu0 0
  %709 = vmatpush1.bf16.msra.mxu0 %v590
  %710 = vmatprep.subr.bf16.mxu0 0
  %711 = vmatpush1.bf16.msra.mxu0 %v593
  %712 = vmatprep.subr.bf16.mxu0 0
  %713 = vmatpush1.bf16.msra.mxu0 %v596
  %714 = vmatprep.subr.bf16.mxu0 0
  %715 = vmatpush1.bf16.msra.mxu0 %v599
  %716 = vmatprep.subr.bf16.mxu0 0
  %717 = vmatpush1.bf16.msra.mxu0 %v602
  %718 = vmatprep.subr.bf16.mxu0 0
  %719 = vmatpush1.bf16.msra.mxu0 %v605
  %720 = vmatprep.subr.bf16.mxu0 0
  %721 = vmatpush1.bf16.msra.mxu0 %v608
  %722 = vmatprep.subr.bf16.mxu0 0
  %723 = vmatpush1.bf16.msra.mxu0 %v611
  %724 = vmatprep.subr.bf16.mxu0 0
  %725 = vmatpush1.bf16.msra.mxu0 %v614
  %726 = vmatprep.subr.bf16.mxu0 0
  %727 = vmatpush1.bf16.msra.mxu0 %v617
  %728 = vmatprep.subr.bf16.mxu0 0
  %729 = vmatpush1.bf16.msra.mxu0 0
  %730 = vmatprep.subr.bf16.mxu0 0
  %731 = vmatpush1.bf16.msra.mxu0 0
  %732 = vmatprep.subr.bf16.mxu0 0
  %733 = vmatpush1.bf16.msra.mxu0 0
  %734 = vmatprep.mubr.bf16.mxu0 %v657
  %735 = vmatmul.mubr.bf16.gmra.mrb[0].mxu0 %v135
  %v736 = vpop.f32.mrb[0].mxu0
  %v737 = vadd.f32 %v442, %v736
  %v738 = vpop.f32.mrb[0].mxu0
  %v739 = vpop.f32.mrb[0].mxu0
  %v740 = vadd.f32 %v445, %v739
  %v741 = vpop.f32.mrb[0].mxu0
  %742 = vdwg.mxu0
  %s743 = scalar_lea.vmem %s1, 624
  %v744 = vld [vmem:[%s743] sm:$0xff]
  %v745 = vld [vmem:[%s743 + $0x8] sm:$0xf]
  %v746 = vld [vmem:[%s743 + $0xc] sm:$0xff]
  %v747 = vld [vmem:[%s743 + $0x14] sm:$0xf]
  %v748 = vld [vmem:[%s743 + $0x18] sm:$0xff]
  %v749 = vld [vmem:[%s743 + $0x20] sm:$0xf]
  %v750 = vld [vmem:[%s743 + $0x24] sm:$0xff]
  %v751 = vld [vmem:[%s743 + $0x2c] sm:$0xf]
  %v752 = vld [vmem:[%s743 + $0x30] sm:$0xff]
  %v753 = vld [vmem:[%s743 + $0x38] sm:$0xf]
  %v754 = vld [vmem:[%s743 + $0x3c] sm:$0xff]
  %v755 = vld [vmem:[%s743 + $0x44] sm:$0xf]
  %v756 = vld [vmem:[%s743 + $0x48] sm:$0xff]
  %v757 = vld [vmem:[%s743 + $0x50] sm:$0xf]
  %v758 = vld [vmem:[%s743 + $0x54] sm:$0xff]
  %v759 = vld [vmem:[%s743 + $0x5c] sm:$0xf]
  %v760 = vld [vmem:[%s743 + $0x60] sm:$0xff]
  %v761 = vld [vmem:[%s743 + $0x68] sm:$0xf]
  %v762 = vld [vmem:[%s743 + $0x6c] sm:$0xff]
  %v763 = vld [vmem:[%s743 + $0x74] sm:$0xf]
  %v764 = vld [vmem:[%s743 + $0x78] sm:$0xff]
  %v765 = vld [vmem:[%s743 + $0x80] sm:$0xf]
  %v766 = vld [vmem:[%s743 + $0x84] sm:$0xff]
  %v767 = vld [vmem:[%s743 + $0x8c] sm:$0xf]
  %v768 = vld [vmem:[%s743 + $0x90] sm:$0xff]
  %v769 = vld [vmem:[%s743 + $0x98] sm:$0xf]
  %v770 = vld [vmem:[%s743 + $0x9c] sm:$0xff]
  %v771 = vld [vmem:[%s743 + $0xa4] sm:$0xf]
  %v772 = vld [vmem:[%s743 + $0xa8] sm:$0xff]
  %v773 = vld [vmem:[%s743 + $0xb0] sm:$0xf]
  %v774 = vld [vmem:[%s743 + $0xb4] sm:$0xff]
  %v775 = vld [vmem:[%s743 + $0xbc] sm:$0xf]
  %v776 = vld [vmem:[%s743 + $0xc0] sm:$0xff]
  %v777 = vld [vmem:[%s743 + $0xc8] sm:$0xf]
  %v778 = vld [vmem:[%s743 + $0xcc] sm:$0xff]
  %v779 = vld [vmem:[%s743 + $0xd4] sm:$0xf]
  %v780 = vld [vmem:[%s743 + $0xd8] sm:$0xff]
  %v781 = vld [vmem:[%s743 + $0xe0] sm:$0xf]
  %v782 = vld [vmem:[%s743 + $0xe4] sm:$0xff]
  %v783 = vld [vmem:[%s743 + $0xec] sm:$0xf]
  %v784 = vld [vmem:[%s743 + $0xf0] sm:$0xff]
  %v785 = vld [vmem:[%s743 + $0xf8] sm:$0xf]
  %v786 = vld [vmem:[%s743 + $0xfc] sm:$0xff]
  %v787 = vld [vmem:[%s743 + $0x104] sm:$0xf]
  %v788 = vld [vmem:[%s743 + $0x108] sm:$0xff]
  %v789 = vld [vmem:[%s743 + $0x110] sm:$0xf]
  %v790 = vld [vmem:[%s743 + $0x114] sm:$0xff]
  %v791 = vld [vmem:[%s743 + $0x11c] sm:$0xf]
  %v792 = vld [vmem:[%s743 + $0x120] sm:$0xff]
  %v793 = vld [vmem:[%s743 + $0x128] sm:$0xf]
  %v794 = vld [vmem:[%s743 + $0x12c] sm:$0xff]
  %v795 = vld [vmem:[%s743 + $0x134] sm:$0xf]
  %v796 = vrot.slane %v135, 1
  %v797 = vrot.slane %v136, 1
  %v851 = vunpack.c.l.b16 %v744
  %v852 = vunpack.c.h.b16 %v744
  %v853 = vunpack.c.l.b16 %v745
  %v854 = vunpack.c.l.b16 %v746
  %v855 = vunpack.c.h.b16 %v746
  %v856 = vunpack.c.l.b16 %v747
  %v857 = vunpack.c.l.b16 %v748
  %v858 = vunpack.c.h.b16 %v748
  %v859 = vunpack.c.l.b16 %v749
  %v860 = vunpack.c.l.b16 %v750
  %v861 = vunpack.c.h.b16 %v750
  %v862 = vunpack.c.l.b16 %v751
  %v863 = vunpack.c.l.b16 %v752
  %v864 = vunpack.c.h.b16 %v752
  %v865 = vunpack.c.l.b16 %v753
  %v866 = vunpack.c.l.b16 %v754
  %v867 = vunpack.c.h.b16 %v754
  %v868 = vunpack.c.l.b16 %v755
  %v869 = vunpack.c.l.b16 %v756
  %v870 = vunpack.c.h.b16 %v756
  %v871 = vunpack.c.l.b16 %v757
  %v872 = vunpack.c.l.b16 %v758
  %v873 = vunpack.c.h.b16 %v758
  %v874 = vunpack.c.l.b16 %v759
  %v875 = vunpack.c.l.b16 %v760
  %v876 = vunpack.c.h.b16 %v760
  %v877 = vunpack.c.l.b16 %v761
  %v878 = vunpack.c.l.b16 %v762
  %v879 = vunpack.c.h.b16 %v762
  %v880 = vunpack.c.l.b16 %v763
  %v881 = vunpack.c.l.b16 %v764
  %v882 = vunpack.c.h.b16 %v764
  %v883 = vunpack.c.l.b16 %v765
  %v884 = vunpack.c.l.b16 %v766
  %v885 = vunpack.c.h.b16 %v766
  %v886 = vunpack.c.l.b16 %v767
  %v887 = vunpack.c.l.b16 %v768
  %v888 = vunpack.c.h.b16 %v768
  %v889 = vunpack.c.l.b16 %v769
  %v890 = vunpack.c.l.b16 %v770
  %v891 = vunpack.c.h.b16 %v770
  %v892 = vunpack.c.l.b16 %v771
  %v893 = vunpack.c.l.b16 %v772
  %v894 = vunpack.c.h.b16 %v772
  %v895 = vunpack.c.l.b16 %v773
  %v896 = vunpack.c.l.b16 %v774
  %v897 = vunpack.c.h.b16 %v774
  %v898 = vunpack.c.l.b16 %v775
  %v899 = vunpack.c.l.b16 %v776
  %v900 = vunpack.c.h.b16 %v776
  %v901 = vunpack.c.l.b16 %v777
  %v902 = vunpack.c.l.b16 %v778
  %v903 = vunpack.c.h.b16 %v778
  %v904 = vunpack.c.l.b16 %v779
  %v905 = vunpack.c.l.b16 %v780
  %v906 = vunpack.c.h.b16 %v780
  %v907 = vunpack.c.l.b16 %v781
  %v908 = vunpack.c.l.b16 %v782
  %v909 = vunpack.c.h.b16 %v782
  %v910 = vunpack.c.l.b16 %v783
  %v911 = vunpack.c.l.b16 %v784
  %v912 = vunpack.c.h.b16 %v784
  %v913 = vunpack.c.l.b16 %v785
  %v914 = vunpack.c.l.b16 %v786
  %v915 = vunpack.c.h.b16 %v786
  %v916 = vunpack.c.l.b16 %v787
  %v917 = vunpack.c.l.b16 %v788
  %v918 = vunpack.c.h.b16 %v788
  %v919 = vunpack.c.l.b16 %v789
  %v920 = vunpack.c.l.b16 %v790
  %v921 = vunpack.c.h.b16 %v790
  %v922 = vunpack.c.l.b16 %v791
  %v923 = vunpack.c.l.b16 %v792
  %v924 = vunpack.c.h.b16 %v792
  %v925 = vunpack.c.l.b16 %v793
  %v926 = vunpack.c.l.b16 %v794
  %v927 = vunpack.c.h.b16 %v794
  %v928 = vunpack.c.l.b16 %v795
  %v929 = vpack.c.b16 %v854, %v851
  %v930 = vpack.c.b16 %v855, %v852
  %v931 = vpack.c.b16 %v856, %v853
  %v932 = vpack.c.b16 %v860, %v857
  %v933 = vpack.c.b16 %v861, %v858
  %v934 = vpack.c.b16 %v862, %v859
  %v935 = vpack.c.b16 %v866, %v863
  %v936 = vpack.c.b16 %v867, %v864
  %v937 = vpack.c.b16 %v868, %v865
  %v938 = vpack.c.b16 %v872, %v869
  %v939 = vpack.c.b16 %v873, %v870
  %v940 = vpack.c.b16 %v874, %v871
  %v941 = vpack.c.b16 %v878, %v875
  %v942 = vpack.c.b16 %v879, %v876
  %v943 = vpack.c.b16 %v880, %v877
  %v944 = vpack.c.b16 %v884, %v881
  %v945 = vpack.c.b16 %v885, %v882
  %v946 = vpack.c.b16 %v886, %v883
  %v947 = vpack.c.b16 %v890, %v887
  %v948 = vpack.c.b16 %v891, %v888
  %v949 = vpack.c.b16 %v892, %v889
  %v950 = vpack.c.b16 %v896, %v893
  %v951 = vpack.c.b16 %v897, %v894
  %v952 = vpack.c.b16 %v898, %v895
  %v953 = vpack.c.b16 %v902, %v899
  %v954 = vpack.c.b16 %v903, %v900
  %v955 = vpack.c.b16 %v904, %v901
  %v956 = vpack.c.b16 %v908, %v905
  %v957 = vpack.c.b16 %v909, %v906
  %v958 = vpack.c.b16 %v910, %v907
  %v959 = vpack.c.b16 %v914, %v911
  %v960 = vpack.c.b16 %v915, %v912
  %v961 = vpack.c.b16 %v916, %v913
  %v962 = vpack.c.b16 %v920, %v917
  %v963 = vpack.c.b16 %v921, %v918
  %v964 = vpack.c.b16 %v922, %v919
  %v965 = vpack.c.b16 %v926, %v923
  %v966 = vpack.c.b16 %v927, %v924
  %v967 = vpack.c.b16 %v928, %v925
  %v1008 = vsel %vm360, %v797, 0
  %1010 = vmatprep.subr.bf16.mxu0 %v930
  %1011 = vmatpush1.bf16.msra.mxu0 %v929
  %1012 = vmatprep.subr.bf16.mxu0 %v933
  %1013 = vmatpush1.bf16.msra.mxu0 %v932
  %1014 = vmatprep.subr.bf16.mxu0 %v936
  %1015 = vmatpush1.bf16.msra.mxu0 %v935
  %1016 = vmatprep.subr.bf16.mxu0 %v939
  %1017 = vmatpush1.bf16.msra.mxu0 %v938
  %1018 = vmatprep.subr.bf16.mxu0 %v942
  %1019 = vmatpush1.bf16.msra.mxu0 %v941
  %1020 = vmatprep.subr.bf16.mxu0 %v945
  %1021 = vmatpush1.bf16.msra.mxu0 %v944
  %1022 = vmatprep.subr.bf16.mxu0 %v948
  %1023 = vmatpush1.bf16.msra.mxu0 %v947
  %1024 = vmatprep.subr.bf16.mxu0 %v951
  %1025 = vmatpush1.bf16.msra.mxu0 %v950
  %1026 = vmatprep.subr.bf16.mxu0 %v954
  %1027 = vmatpush1.bf16.msra.mxu0 %v953
  %1028 = vmatprep.subr.bf16.mxu0 %v957
  %1029 = vmatpush1.bf16.msra.mxu0 %v956
  %1030 = vmatprep.subr.bf16.mxu0 %v960
  %1031 = vmatpush1.bf16.msra.mxu0 %v959
  %1032 = vmatprep.subr.bf16.mxu0 %v963
  %1033 = vmatpush1.bf16.msra.mxu0 %v962
  %1034 = vmatprep.subr.bf16.mxu0 %v966
  %1035 = vmatpush1.bf16.msra.mxu0 %v965
  %1036 = vmatprep.subr.bf16.mxu0 0
  %1037 = vmatpush1.bf16.msra.mxu0 0
  %1038 = vmatprep.subr.bf16.mxu0 0
  %1039 = vmatpush1.bf16.msra.mxu0 0
  %1040 = vmatprep.subr.bf16.mxu0 0
  %1041 = vmatpush1.bf16.msra.mxu0 0
  %1042 = vmatprep.mubr.bf16.mxu0 %v1008
  %1043 = vmatmul.mubr.bf16.gmra.mrb[0].mxu0 %v796
  %v1044 = vpop.f32.mrb[0].mxu0
  %v1045 = vadd.f32 0.0, %v1044
  %v1046 = vpop.f32.mrb[0].mxu0
  %v1047 = vadd.f32 0.0, %v1046
  %v1048 = vpop.f32.mrb[0].mxu0
  %v1049 = vadd.f32 0.0, %v1048
  %v1050 = vpop.f32.mrb[0].mxu0
  %v1051 = vadd.f32 0.0, %v1050
  %1052 = vdwg.mxu0
  %1053 = vmatprep.subr.bf16.mxu0 0
  %1054 = vmatpush1.bf16.msra.mxu0 %v931
  %1055 = vmatprep.subr.bf16.mxu0 0
  %1056 = vmatpush1.bf16.msra.mxu0 %v934
  %1057 = vmatprep.subr.bf16.mxu0 0
  %1058 = vmatpush1.bf16.msra.mxu0 %v937
  %1059 = vmatprep.subr.bf16.mxu0 0
  %1060 = vmatpush1.bf16.msra.mxu0 %v940
  %1061 = vmatprep.subr.bf16.mxu0 0
  %1062 = vmatpush1.bf16.msra.mxu0 %v943
  %1063 = vmatprep.subr.bf16.mxu0 0
  %1064 = vmatpush1.bf16.msra.mxu0 %v946
  %1065 = vmatprep.subr.bf16.mxu0 0
  %1066 = vmatpush1.bf16.msra.mxu0 %v949
  %1067 = vmatprep.subr.bf16.mxu0 0
  %1068 = vmatpush1.bf16.msra.mxu0 %v952
  %1069 = vmatprep.subr.bf16.mxu0 0
  %1070 = vmatpush1.bf16.msra.mxu0 %v955
  %1071 = vmatprep.subr.bf16.mxu0 0
  %1072 = vmatpush1.bf16.msra.mxu0 %v958
  %1073 = vmatprep.subr.bf16.mxu0 0
  %1074 = vmatpush1.bf16.msra.mxu0 %v961
  %1075 = vmatprep.subr.bf16.mxu0 0
  %1076 = vmatpush1.bf16.msra.mxu0 %v964
  %1077 = vmatprep.subr.bf16.mxu0 0
  %1078 = vmatpush1.bf16.msra.mxu0 %v967
  %1079 = vmatprep.subr.bf16.mxu0 0
  %1080 = vmatpush1.bf16.msra.mxu0 0
  %1081 = vmatprep.subr.bf16.mxu0 0
  %1082 = vmatpush1.bf16.msra.mxu0 0
  %1083 = vmatprep.subr.bf16.mxu0 0
  %1084 = vmatpush1.bf16.msra.mxu0 0
  %1085 = vmatprep.mubr.bf16.mxu0 %v1008
  %1086 = vmatmul.mubr.bf16.gmra.mrb[0].mxu0 %v796
  %v1087 = vpop.f32.mrb[0].mxu0
  %v1088 = vadd.f32 0.0, %v1087
  %v1089 = vpop.f32.mrb[0].mxu0
  %v1090 = vpop.f32.mrb[0].mxu0
  %v1091 = vadd.f32 0.0, %v1090
  %v1092 = vpop.f32.mrb[0].mxu0
  %1093 = vdwg.mxu0
  %v1094 = vadd.f32 %v694, %v1045
  %v1095 = vadd.f32 %v696, %v1047
  %v1096 = vadd.f32 %v737, %v1088
  %v1097 = vadd.f32 %v698, %v1049
  %v1098 = vadd.f32 %v700, %v1051
  %v1099 = vadd.f32 %v740, %v1091
  %s1100 = scalar_lea.vmem %s1, 936
  %v1101 = vld [vmem:[%s1100] sm:$0xff]
  %v1102 = vld [vmem:[%s1100 + $0x8] sm:$0xf]
  %v1103 = vld [vmem:[%s1100 + $0xc] sm:$0xff]
  %v1104 = vld [vmem:[%s1100 + $0x14] sm:$0xf]
  %v1105 = vld [vmem:[%s1100 + $0x18] sm:$0xff]
  %v1106 = vld [vmem:[%s1100 + $0x20] sm:$0xf]
  %v1107 = vld [vmem:[%s1100 + $0x24] sm:$0xff]
  %v1108 = vld [vmem:[%s1100 + $0x2c] sm:$0xf]
  %v1109 = vld [vmem:[%s1100 + $0x30] sm:$0xff]
  %v1110 = vld [vmem:[%s1100 + $0x38] sm:$0xf]
  %v1111 = vld [vmem:[%s1100 + $0x3c] sm:$0xff]
  %v1112 = vld [vmem:[%s1100 + $0x44] sm:$0xf]
  %v1113 = vld [vmem:[%s1100 + $0x48] sm:$0xff]
  %v1114 = vld [vmem:[%s1100 + $0x50] sm:$0xf]
  %v1115 = vld [vmem:[%s1100 + $0x54] sm:$0xff]
  %v1116 = vld [vmem:[%s1100 + $0x5c] sm:$0xf]
  %v1117 = vld [vmem:[%s1100 + $0x60] sm:$0xff]
  %v1118 = vld [vmem:[%s1100 + $0x68] sm:$0xf]
  %v1119 = vld [vmem:[%s1100 + $0x6c] sm:$0xff]
  %v1120 = vld [vmem:[%s1100 + $0x74] sm:$0xf]
  %v1121 = vld [vmem:[%s1100 + $0x78] sm:$0xff]
  %v1122 = vld [vmem:[%s1100 + $0x80] sm:$0xf]
  %v1123 = vld [vmem:[%s1100 + $0x84] sm:$0xff]
  %v1124 = vld [vmem:[%s1100 + $0x8c] sm:$0xf]
  %v1125 = vld [vmem:[%s1100 + $0x90] sm:$0xff]
  %v1126 = vld [vmem:[%s1100 + $0x98] sm:$0xf]
  %v1127 = vld [vmem:[%s1100 + $0x9c] sm:$0xff]
  %v1128 = vld [vmem:[%s1100 + $0xa4] sm:$0xf]
  %v1129 = vld [vmem:[%s1100 + $0xa8] sm:$0xff]
  %v1130 = vld [vmem:[%s1100 + $0xb0] sm:$0xf]
  %v1131 = vld [vmem:[%s1100 + $0xb4] sm:$0xff]
  %v1132 = vld [vmem:[%s1100 + $0xbc] sm:$0xf]
  %v1133 = vld [vmem:[%s1100 + $0xc0] sm:$0xff]
  %v1134 = vld [vmem:[%s1100 + $0xc8] sm:$0xf]
  %v1135 = vld [vmem:[%s1100 + $0xcc] sm:$0xff]
  %v1136 = vld [vmem:[%s1100 + $0xd4] sm:$0xf]
  %v1137 = vld [vmem:[%s1100 + $0xd8] sm:$0xff]
  %v1138 = vld [vmem:[%s1100 + $0xe0] sm:$0xf]
  %v1139 = vld [vmem:[%s1100 + $0xe4] sm:$0xff]
  %v1140 = vld [vmem:[%s1100 + $0xec] sm:$0xf]
  %v1141 = vld [vmem:[%s1100 + $0xf0] sm:$0xff]
  %v1142 = vld [vmem:[%s1100 + $0xf8] sm:$0xf]
  %v1143 = vld [vmem:[%s1100 + $0xfc] sm:$0xff]
  %v1144 = vld [vmem:[%s1100 + $0x104] sm:$0xf]
  %v1145 = vld [vmem:[%s1100 + $0x108] sm:$0xff]
  %v1146 = vld [vmem:[%s1100 + $0x110] sm:$0xf]
  %v1147 = vld [vmem:[%s1100 + $0x114] sm:$0xff]
  %v1148 = vld [vmem:[%s1100 + $0x11c] sm:$0xf]
  %v1149 = vld [vmem:[%s1100 + $0x120] sm:$0xff]
  %v1150 = vld [vmem:[%s1100 + $0x128] sm:$0xf]
  %v1151 = vld [vmem:[%s1100 + $0x12c] sm:$0xff]
  %v1152 = vld [vmem:[%s1100 + $0x134] sm:$0xf]
  %v1153 = vrot.slane %v138, 1
  %v1154 = vrot.slane %v140, 2
  %v1155 = vor.u32 %v1153, %v1154
  %v1156 = vrot.slane %v145, 1
  %v1157 = vrot.slane %v147, 2
  %v1158 = vor.u32 %v1156, %v1157
  %v1212 = vunpack.c.l.b16 %v1101
  %v1213 = vunpack.c.h.b16 %v1101
  %v1214 = vunpack.c.l.b16 %v1102
  %v1215 = vunpack.c.l.b16 %v1103
  %v1216 = vunpack.c.h.b16 %v1103
  %v1217 = vunpack.c.l.b16 %v1104
  %v1218 = vunpack.c.l.b16 %v1105
  %v1219 = vunpack.c.h.b16 %v1105
  %v1220 = vunpack.c.l.b16 %v1106
  %v1221 = vunpack.c.l.b16 %v1107
  %v1222 = vunpack.c.h.b16 %v1107
  %v1223 = vunpack.c.l.b16 %v1108
  %v1224 = vunpack.c.l.b16 %v1109
  %v1225 = vunpack.c.h.b16 %v1109
  %v1226 = vunpack.c.l.b16 %v1110
  %v1227 = vunpack.c.l.b16 %v1111
  %v1228 = vunpack.c.h.b16 %v1111
  %v1229 = vunpack.c.l.b16 %v1112
  %v1230 = vunpack.c.l.b16 %v1113
  %v1231 = vunpack.c.h.b16 %v1113
  %v1232 = vunpack.c.l.b16 %v1114
  %v1233 = vunpack.c.l.b16 %v1115
  %v1234 = vunpack.c.h.b16 %v1115
  %v1235 = vunpack.c.l.b16 %v1116
  %v1236 = vunpack.c.l.b16 %v1117
  %v1237 = vunpack.c.h.b16 %v1117
  %v1238 = vunpack.c.l.b16 %v1118
  %v1239 = vunpack.c.l.b16 %v1119
  %v1240 = vunpack.c.h.b16 %v1119
  %v1241 = vunpack.c.l.b16 %v1120
  %v1242 = vunpack.c.l.b16 %v1121
  %v1243 = vunpack.c.h.b16 %v1121
  %v1244 = vunpack.c.l.b16 %v1122
  %v1245 = vunpack.c.l.b16 %v1123
  %v1246 = vunpack.c.h.b16 %v1123
  %v1247 = vunpack.c.l.b16 %v1124
  %v1248 = vunpack.c.l.b16 %v1125
  %v1249 = vunpack.c.h.b16 %v1125
  %v1250 = vunpack.c.l.b16 %v1126
  %v1251 = vunpack.c.l.b16 %v1127
  %v1252 = vunpack.c.h.b16 %v1127
  %v1253 = vunpack.c.l.b16 %v1128
  %v1254 = vunpack.c.l.b16 %v1129
  %v1255 = vunpack.c.h.b16 %v1129
  %v1256 = vunpack.c.l.b16 %v1130
  %v1257 = vunpack.c.l.b16 %v1131
  %v1258 = vunpack.c.h.b16 %v1131
  %v1259 = vunpack.c.l.b16 %v1132
  %v1260 = vunpack.c.l.b16 %v1133
  %v1261 = vunpack.c.h.b16 %v1133
  %v1262 = vunpack.c.l.b16 %v1134
  %v1263 = vunpack.c.l.b16 %v1135
  %v1264 = vunpack.c.h.b16 %v1135
  %v1265 = vunpack.c.l.b16 %v1136
  %v1266 = vunpack.c.l.b16 %v1137
  %v1267 = vunpack.c.h.b16 %v1137
  %v1268 = vunpack.c.l.b16 %v1138
  %v1269 = vunpack.c.l.b16 %v1139
  %v1270 = vunpack.c.h.b16 %v1139
  %v1271 = vunpack.c.l.b16 %v1140
  %v1272 = vunpack.c.l.b16 %v1141
  %v1273 = vunpack.c.h.b16 %v1141
  %v1274 = vunpack.c.l.b16 %v1142
  %v1275 = vunpack.c.l.b16 %v1143
  %v1276 = vunpack.c.h.b16 %v1143
  %v1277 = vunpack.c.l.b16 %v1144
  %v1278 = vunpack.c.l.b16 %v1145
  %v1279 = vunpack.c.h.b16 %v1145
  %v1280 = vunpack.c.l.b16 %v1146
  %v1281 = vunpack.c.l.b16 %v1147
  %v1282 = vunpack.c.h.b16 %v1147
  %v1283 = vunpack.c.l.b16 %v1148
  %v1284 = vunpack.c.l.b16 %v1149
  %v1285 = vunpack.c.h.b16 %v1149
  %v1286 = vunpack.c.l.b16 %v1150
  %v1287 = vunpack.c.l.b16 %v1151
  %v1288 = vunpack.c.h.b16 %v1151
  %v1289 = vunpack.c.l.b16 %v1152
  %v1290 = vpack.c.b16 %v1215, %v1212
  %v1291 = vpack.c.b16 %v1216, %v1213
  %v1292 = vpack.c.b16 %v1217, %v1214
  %v1293 = vpack.c.b16 %v1221, %v1218
  %v1294 = vpack.c.b16 %v1222, %v1219
  %v1295 = vpack.c.b16 %v1223, %v1220
  %v1296 = vpack.c.b16 %v1227, %v1224
  %v1297 = vpack.c.b16 %v1228, %v1225
  %v1298 = vpack.c.b16 %v1229, %v1226
  %v1299 = vpack.c.b16 %v1233, %v1230
  %v1300 = vpack.c.b16 %v1234, %v1231
  %v1301 = vpack.c.b16 %v1235, %v1232
  %v1302 = vpack.c.b16 %v1239, %v1236
  %v1303 = vpack.c.b16 %v1240, %v1237
  %v1304 = vpack.c.b16 %v1241, %v1238
  %v1305 = vpack.c.b16 %v1245, %v1242
  %v1306 = vpack.c.b16 %v1246, %v1243
  %v1307 = vpack.c.b16 %v1247, %v1244
  %v1308 = vpack.c.b16 %v1251, %v1248
  %v1309 = vpack.c.b16 %v1252, %v1249
  %v1310 = vpack.c.b16 %v1253, %v1250
  %v1311 = vpack.c.b16 %v1257, %v1254
  %v1312 = vpack.c.b16 %v1258, %v1255
  %v1313 = vpack.c.b16 %v1259, %v1256
  %v1314 = vpack.c.b16 %v1263, %v1260
  %v1315 = vpack.c.b16 %v1264, %v1261
  %v1316 = vpack.c.b16 %v1265, %v1262
  %v1317 = vpack.c.b16 %v1269, %v1266
  %v1318 = vpack.c.b16 %v1270, %v1267
  %v1319 = vpack.c.b16 %v1271, %v1268
  %v1320 = vpack.c.b16 %v1275, %v1272
  %v1321 = vpack.c.b16 %v1276, %v1273
  %v1322 = vpack.c.b16 %v1277, %v1274
  %v1323 = vpack.c.b16 %v1281, %v1278
  %v1324 = vpack.c.b16 %v1282, %v1279
  %v1325 = vpack.c.b16 %v1283, %v1280
  %v1326 = vpack.c.b16 %v1287, %v1284
  %v1327 = vpack.c.b16 %v1288, %v1285
  %v1328 = vpack.c.b16 %v1289, %v1286
  %v1369 = vsel %vm360, %v1158, 0
  %1371 = vmatprep.subr.bf16.mxu0 %v1291
  %1372 = vmatpush1.bf16.msra.mxu0 %v1290
  %1373 = vmatprep.subr.bf16.mxu0 %v1294
  %1374 = vmatpush1.bf16.msra.mxu0 %v1293
  %1375 = vmatprep.subr.bf16.mxu0 %v1297
  %1376 = vmatpush1.bf16.msra.mxu0 %v1296
  %1377 = vmatprep.subr.bf16.mxu0 %v1300
  %1378 = vmatpush1.bf16.msra.mxu0 %v1299
  %1379 = vmatprep.subr.bf16.mxu0 %v1303
  %1380 = vmatpush1.bf16.msra.mxu0 %v1302
  %1381 = vmatprep.subr.bf16.mxu0 %v1306
  %1382 = vmatpush1.bf16.msra.mxu0 %v1305
  %1383 = vmatprep.subr.bf16.mxu0 %v1309
  %1384 = vmatpush1.bf16.msra.mxu0 %v1308
  %1385 = vmatprep.subr.bf16.mxu0 %v1312
  %1386 = vmatpush1.bf16.msra.mxu0 %v1311
  %1387 = vmatprep.subr.bf16.mxu0 %v1315
  %1388 = vmatpush1.bf16.msra.mxu0 %v1314
  %1389 = vmatprep.subr.bf16.mxu0 %v1318
  %1390 = vmatpush1.bf16.msra.mxu0 %v1317
  %1391 = vmatprep.subr.bf16.mxu0 %v1321
  %1392 = vmatpush1.bf16.msra.mxu0 %v1320
  %1393 = vmatprep.subr.bf16.mxu0 %v1324
  %1394 = vmatpush1.bf16.msra.mxu0 %v1323
  %1395 = vmatprep.subr.bf16.mxu0 %v1327
  %1396 = vmatpush1.bf16.msra.mxu0 %v1326
  %1397 = vmatprep.subr.bf16.mxu0 0
  %1398 = vmatpush1.bf16.msra.mxu0 0
  %1399 = vmatprep.subr.bf16.mxu0 0
  %1400 = vmatpush1.bf16.msra.mxu0 0
  %1401 = vmatprep.subr.bf16.mxu0 0
  %1402 = vmatpush1.bf16.msra.mxu0 0
  %1403 = vmatprep.mubr.bf16.mxu0 %v1369
  %1404 = vmatmul.mubr.bf16.gmra.mrb[0].mxu0 %v1155
  %v1405 = vpop.f32.mrb[0].mxu0
  %v1406 = vadd.f32 0.0, %v1405
  %v1407 = vpop.f32.mrb[0].mxu0
  %v1408 = vadd.f32 0.0, %v1407
  %v1409 = vpop.f32.mrb[0].mxu0
  %v1410 = vadd.f32 0.0, %v1409
  %v1411 = vpop.f32.mrb[0].mxu0
  %v1412 = vadd.f32 0.0, %v1411
  %1413 = vdwg.mxu0
  %1414 = vmatprep.subr.bf16.mxu0 0
  %1415 = vmatpush1.bf16.msra.mxu0 %v1292
  %1416 = vmatprep.subr.bf16.mxu0 0
  %1417 = vmatpush1.bf16.msra.mxu0 %v1295
  %1418 = vmatprep.subr.bf16.mxu0 0
  %1419 = vmatpush1.bf16.msra.mxu0 %v1298
  %1420 = vmatprep.subr.bf16.mxu0 0
  %1421 = vmatpush1.bf16.msra.mxu0 %v1301
  %1422 = vmatprep.subr.bf16.mxu0 0
  %1423 = vmatpush1.bf16.msra.mxu0 %v1304
  %1424 = vmatprep.subr.bf16.mxu0 0
  %1425 = vmatpush1.bf16.msra.mxu0 %v1307
  %1426 = vmatprep.subr.bf16.mxu0 0
  %1427 = vmatpush1.bf16.msra.mxu0 %v1310
  %1428 = vmatprep.subr.bf16.mxu0 0
  %1429 = vmatpush1.bf16.msra.mxu0 %v1313
  %1430 = vmatprep.subr.bf16.mxu0 0
  %1431 = vmatpush1.bf16.msra.mxu0 %v1316
  %1432 = vmatprep.subr.bf16.mxu0 0
  %1433 = vmatpush1.bf16.msra.mxu0 %v1319
  %1434 = vmatprep.subr.bf16.mxu0 0
  %1435 = vmatpush1.bf16.msra.mxu0 %v1322
  %1436 = vmatprep.subr.bf16.mxu0 0
  %1437 = vmatpush1.bf16.msra.mxu0 %v1325
  %1438 = vmatprep.subr.bf16.mxu0 0
  %1439 = vmatpush1.bf16.msra.mxu0 %v1328
  %1440 = vmatprep.subr.bf16.mxu0 0
  %1441 = vmatpush1.bf16.msra.mxu0 0
  %1442 = vmatprep.subr.bf16.mxu0 0
  %1443 = vmatpush1.bf16.msra.mxu0 0
  %1444 = vmatprep.subr.bf16.mxu0 0
  %1445 = vmatpush1.bf16.msra.mxu0 0
  %1446 = vmatprep.mubr.bf16.mxu0 %v1369
  %1447 = vmatmul.mubr.bf16.gmra.mrb[0].mxu0 %v1155
  %v1448 = vpop.f32.mrb[0].mxu0
  %v1449 = vadd.f32 0.0, %v1448
  %v1450 = vpop.f32.mrb[0].mxu0
  %v1451 = vpop.f32.mrb[0].mxu0
  %v1452 = vadd.f32 0.0, %v1451
  %v1453 = vpop.f32.mrb[0].mxu0
  %1454 = vdwg.mxu0
  %v1455 = vadd.f32 %v1094, %v1406
  %v1456 = vadd.f32 %v1095, %v1408
  %v1457 = vadd.f32 %v1096, %v1449
  %v1458 = vadd.f32 %v1097, %v1410
  %v1459 = vadd.f32 %v1098, %v1412
  %v1460 = vadd.f32 %v1099, %v1452
  %s1461 = scalar_lea.vmem %s1, 1248
  %v1462 = vld [vmem:[%s1461] sm:$0xff]
  %v1463 = vld [vmem:[%s1461 + $0x8] sm:$0xf]
  %v1464 = vld [vmem:[%s1461 + $0xc] sm:$0xff]
  %v1465 = vld [vmem:[%s1461 + $0x14] sm:$0xf]
  %v1466 = vld [vmem:[%s1461 + $0x18] sm:$0xff]
  %v1467 = vld [vmem:[%s1461 + $0x20] sm:$0xf]
  %v1468 = vld [vmem:[%s1461 + $0x24] sm:$0xff]
  %v1469 = vld [vmem:[%s1461 + $0x2c] sm:$0xf]
  %v1470 = vld [vmem:[%s1461 + $0x30] sm:$0xff]
  %v1471 = vld [vmem:[%s1461 + $0x38] sm:$0xf]
  %v1472 = vld [vmem:[%s1461 + $0x3c] sm:$0xff]
  %v1473 = vld [vmem:[%s1461 + $0x44] sm:$0xf]
  %v1474 = vld [vmem:[%s1461 + $0x48] sm:$0xff]
  %v1475 = vld [vmem:[%s1461 + $0x50] sm:$0xf]
  %v1476 = vld [vmem:[%s1461 + $0x54] sm:$0xff]
  %v1477 = vld [vmem:[%s1461 + $0x5c] sm:$0xf]
  %v1478 = vld [vmem:[%s1461 + $0x60] sm:$0xff]
  %v1479 = vld [vmem:[%s1461 + $0x68] sm:$0xf]
  %v1480 = vld [vmem:[%s1461 + $0x6c] sm:$0xff]
  %v1481 = vld [vmem:[%s1461 + $0x74] sm:$0xf]
  %v1482 = vld [vmem:[%s1461 + $0x78] sm:$0xff]
  %v1483 = vld [vmem:[%s1461 + $0x80] sm:$0xf]
  %v1484 = vld [vmem:[%s1461 + $0x84] sm:$0xff]
  %v1485 = vld [vmem:[%s1461 + $0x8c] sm:$0xf]
  %v1486 = vld [vmem:[%s1461 + $0x90] sm:$0xff]
  %v1487 = vld [vmem:[%s1461 + $0x98] sm:$0xf]
  %v1488 = vld [vmem:[%s1461 + $0x9c] sm:$0xff]
  %v1489 = vld [vmem:[%s1461 + $0xa4] sm:$0xf]
  %v1490 = vld [vmem:[%s1461 + $0xa8] sm:$0xff]
  %v1491 = vld [vmem:[%s1461 + $0xb0] sm:$0xf]
  %v1492 = vld [vmem:[%s1461 + $0xb4] sm:$0xff]
  %v1493 = vld [vmem:[%s1461 + $0xbc] sm:$0xf]
  %v1494 = vld [vmem:[%s1461 + $0xc0] sm:$0xff]
  %v1495 = vld [vmem:[%s1461 + $0xc8] sm:$0xf]
  %v1496 = vld [vmem:[%s1461 + $0xcc] sm:$0xff]
  %v1497 = vld [vmem:[%s1461 + $0xd4] sm:$0xf]
  %v1498 = vld [vmem:[%s1461 + $0xd8] sm:$0xff]
  %v1499 = vld [vmem:[%s1461 + $0xe0] sm:$0xf]
  %v1500 = vld [vmem:[%s1461 + $0xe4] sm:$0xff]
  %v1501 = vld [vmem:[%s1461 + $0xec] sm:$0xf]
  %v1502 = vld [vmem:[%s1461 + $0xf0] sm:$0xff]
  %v1503 = vld [vmem:[%s1461 + $0xf8] sm:$0xf]
  %v1504 = vld [vmem:[%s1461 + $0xfc] sm:$0xff]
  %v1505 = vld [vmem:[%s1461 + $0x104] sm:$0xf]
  %v1506 = vld [vmem:[%s1461 + $0x108] sm:$0xff]
  %v1507 = vld [vmem:[%s1461 + $0x110] sm:$0xf]
  %v1508 = vld [vmem:[%s1461 + $0x114] sm:$0xff]
  %v1509 = vld [vmem:[%s1461 + $0x11c] sm:$0xf]
  %v1510 = vld [vmem:[%s1461 + $0x120] sm:$0xff]
  %v1511 = vld [vmem:[%s1461 + $0x128] sm:$0xf]
  %v1512 = vld [vmem:[%s1461 + $0x12c] sm:$0xff]
  %v1513 = vld [vmem:[%s1461 + $0x134] sm:$0xf]
  %v1514 = vrot.slane %v135, 2
  %v1515 = vrot.slane %v136, 2
  %v1569 = vunpack.c.l.b16 %v1462
  %v1570 = vunpack.c.h.b16 %v1462
  %v1571 = vunpack.c.l.b16 %v1463
  %v1572 = vunpack.c.l.b16 %v1464
  %v1573 = vunpack.c.h.b16 %v1464
  %v1574 = vunpack.c.l.b16 %v1465
  %v1575 = vunpack.c.l.b16 %v1466
  %v1576 = vunpack.c.h.b16 %v1466
  %v1577 = vunpack.c.l.b16 %v1467
  %v1578 = vunpack.c.l.b16 %v1468
  %v1579 = vunpack.c.h.b16 %v1468
  %v1580 = vunpack.c.l.b16 %v1469
  %v1581 = vunpack.c.l.b16 %v1470
  %v1582 = vunpack.c.h.b16 %v1470
  %v1583 = vunpack.c.l.b16 %v1471
  %v1584 = vunpack.c.l.b16 %v1472
  %v1585 = vunpack.c.h.b16 %v1472
  %v1586 = vunpack.c.l.b16 %v1473
  %v1587 = vunpack.c.l.b16 %v1474
  %v1588 = vunpack.c.h.b16 %v1474
  %v1589 = vunpack.c.l.b16 %v1475
  %v1590 = vunpack.c.l.b16 %v1476
  %v1591 = vunpack.c.h.b16 %v1476
  %v1592 = vunpack.c.l.b16 %v1477
  %v1593 = vunpack.c.l.b16 %v1478
  %v1594 = vunpack.c.h.b16 %v1478
  %v1595 = vunpack.c.l.b16 %v1479
  %v1596 = vunpack.c.l.b16 %v1480
  %v1597 = vunpack.c.h.b16 %v1480
  %v1598 = vunpack.c.l.b16 %v1481
  %v1599 = vunpack.c.l.b16 %v1482
  %v1600 = vunpack.c.h.b16 %v1482
  %v1601 = vunpack.c.l.b16 %v1483
  %v1602 = vunpack.c.l.b16 %v1484
  %v1603 = vunpack.c.h.b16 %v1484
  %v1604 = vunpack.c.l.b16 %v1485
  %v1605 = vunpack.c.l.b16 %v1486
  %v1606 = vunpack.c.h.b16 %v1486
  %v1607 = vunpack.c.l.b16 %v1487
  %v1608 = vunpack.c.l.b16 %v1488
  %v1609 = vunpack.c.h.b16 %v1488
  %v1610 = vunpack.c.l.b16 %v1489
  %v1611 = vunpack.c.l.b16 %v1490
  %v1612 = vunpack.c.h.b16 %v1490
  %v1613 = vunpack.c.l.b16 %v1491
  %v1614 = vunpack.c.l.b16 %v1492
  %v1615 = vunpack.c.h.b16 %v1492
  %v1616 = vunpack.c.l.b16 %v1493
  %v1617 = vunpack.c.l.b16 %v1494
  %v1618 = vunpack.c.h.b16 %v1494
  %v1619 = vunpack.c.l.b16 %v1495
  %v1620 = vunpack.c.l.b16 %v1496
  %v1621 = vunpack.c.h.b16 %v1496
  %v1622 = vunpack.c.l.b16 %v1497
  %v1623 = vunpack.c.l.b16 %v1498
  %v1624 = vunpack.c.h.b16 %v1498
  %v1625 = vunpack.c.l.b16 %v1499
  %v1626 = vunpack.c.l.b16 %v1500
  %v1627 = vunpack.c.h.b16 %v1500
  %v1628 = vunpack.c.l.b16 %v1501
  %v1629 = vunpack.c.l.b16 %v1502
  %v1630 = vunpack.c.h.b16 %v1502
  %v1631 = vunpack.c.l.b16 %v1503
  %v1632 = vunpack.c.l.b16 %v1504
  %v1633 = vunpack.c.h.b16 %v1504
  %v1634 = vunpack.c.l.b16 %v1505
  %v1635 = vunpack.c.l.b16 %v1506
  %v1636 = vunpack.c.h.b16 %v1506
  %v1637 = vunpack.c.l.b16 %v1507
  %v1638 = vunpack.c.l.b16 %v1508
  %v1639 = vunpack.c.h.b16 %v1508
  %v1640 = vunpack.c.l.b16 %v1509
  %v1641 = vunpack.c.l.b16 %v1510
  %v1642 = vunpack.c.h.b16 %v1510
  %v1643 = vunpack.c.l.b16 %v1511
  %v1644 = vunpack.c.l.b16 %v1512
  %v1645 = vunpack.c.h.b16 %v1512
  %v1646 = vunpack.c.l.b16 %v1513
  %v1647 = vpack.c.b16 %v1572, %v1569
  %v1648 = vpack.c.b16 %v1573, %v1570
  %v1649 = vpack.c.b16 %v1574, %v1571
  %v1650 = vpack.c.b16 %v1578, %v1575
  %v1651 = vpack.c.b16 %v1579, %v1576
  %v1652 = vpack.c.b16 %v1580, %v1577
  %v1653 = vpack.c.b16 %v1584, %v1581
  %v1654 = vpack.c.b16 %v1585, %v1582
  %v1655 = vpack.c.b16 %v1586, %v1583
  %v1656 = vpack.c.b16 %v1590, %v1587
  %v1657 = vpack.c.b16 %v1591, %v1588
  %v1658 = vpack.c.b16 %v1592, %v1589
  %v1659 = vpack.c.b16 %v1596, %v1593
  %v1660 = vpack.c.b16 %v1597, %v1594
  %v1661 = vpack.c.b16 %v1598, %v1595
  %v1662 = vpack.c.b16 %v1602, %v1599
  %v1663 = vpack.c.b16 %v1603, %v1600
  %v1664 = vpack.c.b16 %v1604, %v1601
  %v1665 = vpack.c.b16 %v1608, %v1605
  %v1666 = vpack.c.b16 %v1609, %v1606
  %v1667 = vpack.c.b16 %v1610, %v1607
  %v1668 = vpack.c.b16 %v1614, %v1611
  %v1669 = vpack.c.b16 %v1615, %v1612
  %v1670 = vpack.c.b16 %v1616, %v1613
  %v1671 = vpack.c.b16 %v1620, %v1617
  %v1672 = vpack.c.b16 %v1621, %v1618
  %v1673 = vpack.c.b16 %v1622, %v1619
  %v1674 = vpack.c.b16 %v1626, %v1623
  %v1675 = vpack.c.b16 %v1627, %v1624
  %v1676 = vpack.c.b16 %v1628, %v1625
  %v1677 = vpack.c.b16 %v1632, %v1629
  %v1678 = vpack.c.b16 %v1633, %v1630
  %v1679 = vpack.c.b16 %v1634, %v1631
  %v1680 = vpack.c.b16 %v1638, %v1635
  %v1681 = vpack.c.b16 %v1639, %v1636
  %v1682 = vpack.c.b16 %v1640, %v1637
  %v1683 = vpack.c.b16 %v1644, %v1641
  %v1684 = vpack.c.b16 %v1645, %v1642
  %v1685 = vpack.c.b16 %v1646, %v1643
  %v1726 = vsel %vm360, %v1515, 0
  %1728 = vmatprep.subr.bf16.mxu0 %v1648
  %1729 = vmatpush1.bf16.msra.mxu0 %v1647
  %1730 = vmatprep.subr.bf16.mxu0 %v1651
  %1731 = vmatpush1.bf16.msra.mxu0 %v1650
  %1732 = vmatprep.subr.bf16.mxu0 %v1654
  %1733 = vmatpush1.bf16.msra.mxu0 %v1653
  %1734 = vmatprep.subr.bf16.mxu0 %v1657
  %1735 = vmatpush1.bf16.msra.mxu0 %v1656
  %1736 = vmatprep.subr.bf16.mxu0 %v1660
  %1737 = vmatpush1.bf16.msra.mxu0 %v1659
  %1738 = vmatprep.subr.bf16.mxu0 %v1663
  %1739 = vmatpush1.bf16.msra.mxu0 %v1662
  %1740 = vmatprep.subr.bf16.mxu0 %v1666
  %1741 = vmatpush1.bf16.msra.mxu0 %v1665
  %1742 = vmatprep.subr.bf16.mxu0 %v1669
  %1743 = vmatpush1.bf16.msra.mxu0 %v1668
  %1744 = vmatprep.subr.bf16.mxu0 %v1672
  %1745 = vmatpush1.bf16.msra.mxu0 %v1671
  %1746 = vmatprep.subr.bf16.mxu0 %v1675
  %1747 = vmatpush1.bf16.msra.mxu0 %v1674
  %1748 = vmatprep.subr.bf16.mxu0 %v1678
  %1749 = vmatpush1.bf16.msra.mxu0 %v1677
  %1750 = vmatprep.subr.bf16.mxu0 %v1681
  %1751 = vmatpush1.bf16.msra.mxu0 %v1680
  %1752 = vmatprep.subr.bf16.mxu0 %v1684
  %1753 = vmatpush1.bf16.msra.mxu0 %v1683
  %1754 = vmatprep.subr.bf16.mxu0 0
  %1755 = vmatpush1.bf16.msra.mxu0 0
  %1756 = vmatprep.subr.bf16.mxu0 0
  %1757 = vmatpush1.bf16.msra.mxu0 0
  %1758 = vmatprep.subr.bf16.mxu0 0
  %1759 = vmatpush1.bf16.msra.mxu0 0
  %1760 = vmatprep.mubr.bf16.mxu0 %v1726
  %1761 = vmatmul.mubr.bf16.gmra.mrb[0].mxu0 %v1514
  %v1762 = vpop.f32.mrb[0].mxu0
  %v1763 = vadd.f32 0.0, %v1762
  %v1764 = vpop.f32.mrb[0].mxu0
  %v1765 = vadd.f32 0.0, %v1764
  %v1766 = vpop.f32.mrb[0].mxu0
  %v1767 = vadd.f32 0.0, %v1766
  %v1768 = vpop.f32.mrb[0].mxu0
  %v1769 = vadd.f32 0.0, %v1768
  %1770 = vdwg.mxu0
  %1771 = vmatprep.subr.bf16.mxu0 0
  %1772 = vmatpush1.bf16.msra.mxu0 %v1649
  %1773 = vmatprep.subr.bf16.mxu0 0
  %1774 = vmatpush1.bf16.msra.mxu0 %v1652
  %1775 = vmatprep.subr.bf16.mxu0 0
  %1776 = vmatpush1.bf16.msra.mxu0 %v1655
  %1777 = vmatprep.subr.bf16.mxu0 0
  %1778 = vmatpush1.bf16.msra.mxu0 %v1658
  %1779 = vmatprep.subr.bf16.mxu0 0
  %1780 = vmatpush1.bf16.msra.mxu0 %v1661
  %1781 = vmatprep.subr.bf16.mxu0 0
  %1782 = vmatpush1.bf16.msra.mxu0 %v1664
  %1783 = vmatprep.subr.bf16.mxu0 0
  %1784 = vmatpush1.bf16.msra.mxu0 %v1667
  %1785 = vmatprep.subr.bf16.mxu0 0
  %1786 = vmatpush1.bf16.msra.mxu0 %v1670
  %1787 = vmatprep.subr.bf16.mxu0 0
  %1788 = vmatpush1.bf16.msra.mxu0 %v1673
  %1789 = vmatprep.subr.bf16.mxu0 0
  %1790 = vmatpush1.bf16.msra.mxu0 %v1676
  %1791 = vmatprep.subr.bf16.mxu0 0
  %1792 = vmatpush1.bf16.msra.mxu0 %v1679
  %1793 = vmatprep.subr.bf16.mxu0 0
  %1794 = vmatpush1.bf16.msra.mxu0 %v1682
  %1795 = vmatprep.subr.bf16.mxu0 0
  %1796 = vmatpush1.bf16.msra.mxu0 %v1685
  %1797 = vmatprep.subr.bf16.mxu0 0
  %1798 = vmatpush1.bf16.msra.mxu0 0
  %1799 = vmatprep.subr.bf16.mxu0 0
  %1800 = vmatpush1.bf16.msra.mxu0 0
  %1801 = vmatprep.subr.bf16.mxu0 0
  %1802 = vmatpush1.bf16.msra.mxu0 0
  %1803 = vmatprep.mubr.bf16.mxu0 %v1726
  %1804 = vmatmul.mubr.bf16.gmra.mrb[0].mxu0 %v1514
  %v1805 = vpop.f32.mrb[0].mxu0
  %v1806 = vadd.f32 0.0, %v1805
  %v1807 = vpop.f32.mrb[0].mxu0
  %v1808 = vpop.f32.mrb[0].mxu0
  %v1809 = vadd.f32 0.0, %v1808
  %v1810 = vpop.f32.mrb[0].mxu0
  %1811 = vdwg.mxu0
  %v1812 = vadd.f32 %v1455, %v1763
  %v1813 = vadd.f32 %v1456, %v1765
  %v1814 = vadd.f32 %v1457, %v1806
  %v1815 = vadd.f32 %v1458, %v1767
  %v1816 = vadd.f32 %v1459, %v1769
  %v1817 = vadd.f32 %v1460, %v1809
  %v1819 = vlaneseq
  %v1820 = vshrl.u32 %v1819, 7
  %v1821 = vsub.s32 0, %v1820
  %v1822 = vrot.slane %v21, %v1821
  %v1823 = vlaneseq
  %v1824 = vshrl.u32 %v1823, 7
  %v1825 = vsub.s32 1, %v1824
  %v1826 = vrot.slane %v21, %v1825
  %v1827 = vlaneseq
  %v1828 = vshrl.u32 %v1827, 7
  %v1829 = vsub.s32 2, %v1828
  %v1830 = vrot.slane %v21, %v1829
  %v1834 = vadd.f32 %v1812, %v1822
  %v1835 = vadd.f32 %v1813, %v1826
  %v1836 = vadd.f32 %v1814, %v1830
  %v1837 = vadd.f32 %v1815, %v1822
  %v1838 = vadd.f32 %v1816, %v1826
  %v1839 = vadd.f32 %v1817, %v1830
  %v1840 = vmax.f32 %v1834, 0.0
  %v1841 = vmax.f32 %v1835, 0.0
  %v1842 = vmax.f32 %v1836, 0.0
  %v1843 = vmax.f32 %v1837, 0.0
  %v1844 = vmax.f32 %v1838, 0.0
  %v1845 = vmax.f32 %v1839, 0.0
  %v1846 = vld [vmem:[%s3] sm:$0xf]
  %vm1847 = vcmask 72704
  %v1849 = vsel %vm1847, %v1846, 0
  %vm1851 = vcmask 1040384
  %v1853 = vsel %vm1851, %v1843, 0
  %v1856 = vsel %vm1851, %v1844, 0
  %v1859 = vsel %vm1851, %v1845, 0
  %1861 = vmatprep.subr.mxu0 %v1841
  %1862 = vmatpush1.msra.mxu0 %v1840
  %1863 = vmatprep.subr.mxu0 %v1856
  %1864 = vmatpush1.msra.mxu0 %v1853
  %1865 = vmatprep.subr.mxu0 0.0
  %1866 = vmatpush1.msra.mxu0 0.0
  %1867 = vmatprep.subr.mxu0 0.0
  %1868 = vmatpush1.msra.mxu0 0.0
  %1869 = vmatprep.subr.mxu0 0.0
  %1870 = vmatpush1.msra.mxu0 0.0
  %1871 = vmatprep.subr.mxu0 0.0
  %1872 = vmatpush1.msra.mxu0 0.0
  %1873 = vmatprep.subr.mxu0 0.0
  %1874 = vmatpush1.msra.mxu0 0.0
  %1875 = vmatprep.subr.mxu0 0.0
  %1876 = vmatpush1.msra.mxu0 0.0
  %1877 = vmatprep.subr.mxu0 0.0
  %1878 = vmatpush1.msra.mxu0 0.0
  %1879 = vmatprep.subr.mxu0 0.0
  %1880 = vmatpush1.msra.mxu0 0.0
  %1881 = vmatprep.subr.mxu0 0.0
  %1882 = vmatpush1.msra.mxu0 0.0
  %1883 = vmatprep.subr.mxu0 0.0
  %1884 = vmatpush1.msra.mxu0 0.0
  %1885 = vmatprep.subr.mxu0 0.0
  %1886 = vmatpush1.msra.mxu0 0.0
  %1887 = vmatprep.subr.mxu0 0.0
  %1888 = vmatpush1.msra.mxu0 0.0
  %1889 = vmatprep.subr.mxu0 0.0
  %1890 = vmatpush1.msra.mxu0 0.0
  %1891 = vmatprep.subr.mxu0 0.0
  %1892 = vmatpush1.msra.mxu0 0.0
  %1893 = vmatprep.subr.mxu0 0.0
  %1894 = vmatpush1.msra.mxu0 0.0
  %1895 = vmatprep.subr.mxu0 0.0
  %1896 = vmatpush1.msra.mxu0 0.0
  %1897 = vmatprep.subr.mxu0 0.0
  %1898 = vmatpush1.msra.mxu0 0.0
  %1899 = vmatprep.subr.mxu0 0.0
  %1900 = vmatpush1.msra.mxu0 0.0
  %1901 = vmatprep.subr.mxu0 0.0
  %1902 = vmatpush1.msra.mxu0 0.0
  %1903 = vmatprep.subr.mxu0 0.0
  %1904 = vmatpush1.msra.mxu0 0.0
  %1905 = vmatprep.subr.mxu0 0.0
  %1906 = vmatpush1.msra.mxu0 0.0
  %1907 = vmatprep.subr.mxu0 0.0
  %1908 = vmatpush1.msra.mxu0 0.0
  %1909 = vmatprep.subr.mxu0 0.0
  %1910 = vmatpush1.msra.mxu0 0.0
  %1911 = vmatprep.subr.mxu0 0.0
  %1912 = vmatpush1.msra.mxu0 0.0
  %1913 = vmatprep.subr.mxu0 0.0
  %1914 = vmatpush1.msra.mxu0 0.0
  %1915 = vmatprep.subr.mxu0 0.0
  %1916 = vmatpush1.msra.mxu0 0.0
  %1917 = vmatprep.subr.mxu0 0.0
  %1918 = vmatpush1.msra.mxu0 0.0
  %1919 = vmatprep.subr.mxu0 0.0
  %1920 = vmatpush1.msra.mxu0 0.0
  %1921 = vmatprep.subr.mxu0 0.0
  %1922 = vmatpush1.msra.mxu0 0.0
  %1923 = vmatprep.subr.mxu0 0.0
  %1924 = vmatpush1.msra.mxu0 0.0
  %1925 = vmatprep.mubr.f32.mxu0 0.0
  %1926 = vmatmul.mubr.f32.gmra.mrb[0].mxu0 %v1849
  %v1927 = vpop.f32.mrb[0].mxu0
  %v1928 = vadd.f32 0.0, %v1927
  %v1929 = vpop.f32.mrb[0].mxu0
  %v1930 = vadd.f32 0.0, %v1929
  %1931 = vdwg.mxu0
  %1932 = vmatprep.subr.mxu0 0.0
  %1933 = vmatpush1.msra.mxu0 %v1842
  %1934 = vmatprep.subr.mxu0 0.0
  %1935 = vmatpush1.msra.mxu0 %v1859
  %1936 = vmatprep.subr.mxu0 0.0
  %1937 = vmatpush1.msra.mxu0 0.0
  %1938 = vmatprep.subr.mxu0 0.0
  %1939 = vmatpush1.msra.mxu0 0.0
  %1940 = vmatprep.subr.mxu0 0.0
  %1941 = vmatpush1.msra.mxu0 0.0
  %1942 = vmatprep.subr.mxu0 0.0
  %1943 = vmatpush1.msra.mxu0 0.0
  %1944 = vmatprep.subr.mxu0 0.0
  %1945 = vmatpush1.msra.mxu0 0.0
  %1946 = vmatprep.subr.mxu0 0.0
  %1947 = vmatpush1.msra.mxu0 0.0
  %1948 = vmatprep.subr.mxu0 0.0
  %1949 = vmatpush1.msra.mxu0 0.0
  %1950 = vmatprep.subr.mxu0 0.0
  %1951 = vmatpush1.msra.mxu0 0.0
  %1952 = vmatprep.subr.mxu0 0.0
  %1953 = vmatpush1.msra.mxu0 0.0
  %1954 = vmatprep.subr.mxu0 0.0
  %1955 = vmatpush1.msra.mxu0 0.0
  %1956 = vmatprep.subr.mxu0 0.0
  %1957 = vmatpush1.msra.mxu0 0.0
  %1958 = vmatprep.subr.mxu0 0.0
  %1959 = vmatpush1.msra.mxu0 0.0
  %1960 = vmatprep.subr.mxu0 0.0
  %1961 = vmatpush1.msra.mxu0 0.0
  %1962 = vmatprep.subr.mxu0 0.0
  %1963 = vmatpush1.msra.mxu0 0.0
  %1964 = vmatprep.subr.mxu0 0.0
  %1965 = vmatpush1.msra.mxu0 0.0
  %1966 = vmatprep.subr.mxu0 0.0
  %1967 = vmatpush1.msra.mxu0 0.0
  %1968 = vmatprep.subr.mxu0 0.0
  %1969 = vmatpush1.msra.mxu0 0.0
  %1970 = vmatprep.subr.mxu0 0.0
  %1971 = vmatpush1.msra.mxu0 0.0
  %1972 = vmatprep.subr.mxu0 0.0
  %1973 = vmatpush1.msra.mxu0 0.0
  %1974 = vmatprep.subr.mxu0 0.0
  %1975 = vmatpush1.msra.mxu0 0.0
  %1976 = vmatprep.subr.mxu0 0.0
  %1977 = vmatpush1.msra.mxu0 0.0
  %1978 = vmatprep.subr.mxu0 0.0
  %1979 = vmatpush1.msra.mxu0 0.0
  %1980 = vmatprep.subr.mxu0 0.0
  %1981 = vmatpush1.msra.mxu0 0.0
  %1982 = vmatprep.subr.mxu0 0.0
  %1983 = vmatpush1.msra.mxu0 0.0
  %1984 = vmatprep.subr.mxu0 0.0
  %1985 = vmatpush1.msra.mxu0 0.0
  %1986 = vmatprep.subr.mxu0 0.0
  %1987 = vmatpush1.msra.mxu0 0.0
  %1988 = vmatprep.subr.mxu0 0.0
  %1989 = vmatpush1.msra.mxu0 0.0
  %1990 = vmatprep.subr.mxu0 0.0
  %1991 = vmatpush1.msra.mxu0 0.0
  %1992 = vmatprep.subr.mxu0 0.0
  %1993 = vmatpush1.msra.mxu0 0.0
  %1994 = vmatprep.subr.mxu0 0.0
  %1995 = vmatpush1.msra.mxu0 0.0
  %1996 = vmatprep.mubr.f32.mxu0 0.0
  %1997 = vmatmul.mubr.f32.gmra.mrb[0].mxu0 %v1849
  %v1998 = vpop.f32.mrb[0].mxu0
  %v1999 = vadd.f32 0.0, %v1998
  %v2000 = vpop.f32.mrb[0].mxu0
  %2001 = vdwg.mxu0
  %s2002 = scalar_lea.vmem %s3, 4
  %v2003 = vld [vmem:[%s2002] sm:$0xf]
  %v2005 = vsel %vm1847, %v2003, 0
  %2007 = vmatprep.subr.mxu0 %v1841
  %2008 = vmatpush1.msra.mxu0 %v1840
  %2009 = vmatprep.subr.mxu0 %v1856
  %2010 = vmatpush1.msra.mxu0 %v1853
  %2011 = vmatprep.subr.mxu0 0.0
  %2012 = vmatpush1.msra.mxu0 0.0
  %2013 = vmatprep.subr.mxu0 0.0
  %2014 = vmatpush1.msra.mxu0 0.0
  %2015 = vmatprep.subr.mxu0 0.0
  %2016 = vmatpush1.msra.mxu0 0.0
  %2017 = vmatprep.subr.mxu0 0.0
  %2018 = vmatpush1.msra.mxu0 0.0
  %2019 = vmatprep.subr.mxu0 0.0
  %2020 = vmatpush1.msra.mxu0 0.0
  %2021 = vmatprep.subr.mxu0 0.0
  %2022 = vmatpush1.msra.mxu0 0.0
  %2023 = vmatprep.subr.mxu0 0.0
  %2024 = vmatpush1.msra.mxu0 0.0
  %2025 = vmatprep.subr.mxu0 0.0
  %2026 = vmatpush1.msra.mxu0 0.0
  %2027 = vmatprep.subr.mxu0 0.0
  %2028 = vmatpush1.msra.mxu0 0.0
  %2029 = vmatprep.subr.mxu0 0.0
  %2030 = vmatpush1.msra.mxu0 0.0
  %2031 = vmatprep.subr.mxu0 0.0
  %2032 = vmatpush1.msra.mxu0 0.0
  %2033 = vmatprep.subr.mxu0 0.0
  %2034 = vmatpush1.msra.mxu0 0.0
  %2035 = vmatprep.subr.mxu0 0.0
  %2036 = vmatpush1.msra.mxu0 0.0
  %2037 = vmatprep.subr.mxu0 0.0
  %2038 = vmatpush1.msra.mxu0 0.0
  %2039 = vmatprep.subr.mxu0 0.0
  %2040 = vmatpush1.msra.mxu0 0.0
  %2041 = vmatprep.subr.mxu0 0.0
  %2042 = vmatpush1.msra.mxu0 0.0
  %2043 = vmatprep.subr.mxu0 0.0
  %2044 = vmatpush1.msra.mxu0 0.0
  %2045 = vmatprep.subr.mxu0 0.0
  %2046 = vmatpush1.msra.mxu0 0.0
  %2047 = vmatprep.subr.mxu0 0.0
  %2048 = vmatpush1.msra.mxu0 0.0
  %2049 = vmatprep.subr.mxu0 0.0
  %2050 = vmatpush1.msra.mxu0 0.0
  %2051 = vmatprep.subr.mxu0 0.0
  %2052 = vmatpush1.msra.mxu0 0.0
  %2053 = vmatprep.subr.mxu0 0.0
  %2054 = vmatpush1.msra.mxu0 0.0
  %2055 = vmatprep.subr.mxu0 0.0
  %2056 = vmatpush1.msra.mxu0 0.0
  %2057 = vmatprep.subr.mxu0 0.0
  %2058 = vmatpush1.msra.mxu0 0.0
  %2059 = vmatprep.subr.mxu0 0.0
  %2060 = vmatpush1.msra.mxu0 0.0
  %2061 = vmatprep.subr.mxu0 0.0
  %2062 = vmatpush1.msra.mxu0 0.0
  %2063 = vmatprep.subr.mxu0 0.0
  %2064 = vmatpush1.msra.mxu0 0.0
  %2065 = vmatprep.subr.mxu0 0.0
  %2066 = vmatpush1.msra.mxu0 0.0
  %2067 = vmatprep.subr.mxu0 0.0
  %2068 = vmatpush1.msra.mxu0 0.0
  %2069 = vmatprep.subr.mxu0 0.0
  %2070 = vmatpush1.msra.mxu0 0.0
  %2071 = vmatprep.mubr.f32.mxu0 0.0
  %2072 = vmatmul.mubr.f32.gmra.mrb[0].mxu0 %v2005
  %v2073 = vpop.f32.mrb[0].mxu0
  %v2074 = vadd.f32 0.0, %v2073
  %v2075 = vpop.f32.mrb[0].mxu0
  %v2076 = vadd.f32 0.0, %v2075
  %2077 = vdwg.mxu0
  %2078 = vmatprep.subr.mxu0 0.0
  %2079 = vmatpush1.msra.mxu0 %v1842
  %2080 = vmatprep.subr.mxu0 0.0
  %2081 = vmatpush1.msra.mxu0 %v1859
  %2082 = vmatprep.subr.mxu0 0.0
  %2083 = vmatpush1.msra.mxu0 0.0
  %2084 = vmatprep.subr.mxu0 0.0
  %2085 = vmatpush1.msra.mxu0 0.0
  %2086 = vmatprep.subr.mxu0 0.0
  %2087 = vmatpush1.msra.mxu0 0.0
  %2088 = vmatprep.subr.mxu0 0.0
  %2089 = vmatpush1.msra.mxu0 0.0
  %2090 = vmatprep.subr.mxu0 0.0
  %2091 = vmatpush1.msra.mxu0 0.0
  %2092 = vmatprep.subr.mxu0 0.0
  %2093 = vmatpush1.msra.mxu0 0.0
  %2094 = vmatprep.subr.mxu0 0.0
  %2095 = vmatpush1.msra.mxu0 0.0
  %2096 = vmatprep.subr.mxu0 0.0
  %2097 = vmatpush1.msra.mxu0 0.0
  %2098 = vmatprep.subr.mxu0 0.0
  %2099 = vmatpush1.msra.mxu0 0.0
  %2100 = vmatprep.subr.mxu0 0.0
  %2101 = vmatpush1.msra.mxu0 0.0
  %2102 = vmatprep.subr.mxu0 0.0
  %2103 = vmatpush1.msra.mxu0 0.0
  %2104 = vmatprep.subr.mxu0 0.0
  %2105 = vmatpush1.msra.mxu0 0.0
  %2106 = vmatprep.subr.mxu0 0.0
  %2107 = vmatpush1.msra.mxu0 0.0
  %2108 = vmatprep.subr.mxu0 0.0
  %2109 = vmatpush1.msra.mxu0 0.0
  %2110 = vmatprep.subr.mxu0 0.0
  %2111 = vmatpush1.msra.mxu0 0.0
  %2112 = vmatprep.subr.mxu0 0.0
  %2113 = vmatpush1.msra.mxu0 0.0
  %2114 = vmatprep.subr.mxu0 0.0
  %2115 = vmatpush1.msra.mxu0 0.0
  %2116 = vmatprep.subr.mxu0 0.0
  %2117 = vmatpush1.msra.mxu0 0.0
  %2118 = vmatprep.subr.mxu0 0.0
  %2119 = vmatpush1.msra.mxu0 0.0
  %2120 = vmatprep.subr.mxu0 0.0
  %2121 = vmatpush1.msra.mxu0 0.0
  %2122 = vmatprep.subr.mxu0 0.0
  %2123 = vmatpush1.msra.mxu0 0.0
  %2124 = vmatprep.subr.mxu0 0.0
  %2125 = vmatpush1.msra.mxu0 0.0
  %2126 = vmatprep.subr.mxu0 0.0
  %2127 = vmatpush1.msra.mxu0 0.0
  %2128 = vmatprep.subr.mxu0 0.0
  %2129 = vmatpush1.msra.mxu0 0.0
  %2130 = vmatprep.subr.mxu0 0.0
  %2131 = vmatpush1.msra.mxu0 0.0
  %2132 = vmatprep.subr.mxu0 0.0
  %2133 = vmatpush1.msra.mxu0 0.0
  %2134 = vmatprep.subr.mxu0 0.0
  %2135 = vmatpush1.msra.mxu0 0.0
  %2136 = vmatprep.subr.mxu0 0.0
  %2137 = vmatpush1.msra.mxu0 0.0
  %2138 = vmatprep.subr.mxu0 0.0
  %2139 = vmatpush1.msra.mxu0 0.0
  %2140 = vmatprep.subr.mxu0 0.0
  %2141 = vmatpush1.msra.mxu0 0.0
  %2142 = vmatprep.mubr.f32.mxu0 0.0
  %2143 = vmatmul.mubr.f32.gmra.mrb[0].mxu0 %v2005
  %v2144 = vpop.f32.mrb[0].mxu0
  %v2145 = vadd.f32 0.0, %v2144
  %v2146 = vpop.f32.mrb[0].mxu0
  %2147 = vdwg.mxu0
  %v2148 = vmax.f32 %v1928, %v2074
  %v2149 = vmax.f32 %v1930, %v2076
  %v2150 = vmax.f32 %v1999, %v2145
  %s2151 = scalar_lea.vmem %s3, 8
  %v2152 = vld [vmem:[%s2151] sm:$0xf]
  %v2154 = vsel %vm1847, %v2152, 0
  %2156 = vmatprep.subr.mxu0 %v1841
  %2157 = vmatpush1.msra.mxu0 %v1840
  %2158 = vmatprep.subr.mxu0 %v1856
  %2159 = vmatpush1.msra.mxu0 %v1853
  %2160 = vmatprep.subr.mxu0 0.0
  %2161 = vmatpush1.msra.mxu0 0.0
  %2162 = vmatprep.subr.mxu0 0.0
  %2163 = vmatpush1.msra.mxu0 0.0
  %2164 = vmatprep.subr.mxu0 0.0
  %2165 = vmatpush1.msra.mxu0 0.0
  %2166 = vmatprep.subr.mxu0 0.0
  %2167 = vmatpush1.msra.mxu0 0.0
  %2168 = vmatprep.subr.mxu0 0.0
  %2169 = vmatpush1.msra.mxu0 0.0
  %2170 = vmatprep.subr.mxu0 0.0
  %2171 = vmatpush1.msra.mxu0 0.0
  %2172 = vmatprep.subr.mxu0 0.0
  %2173 = vmatpush1.msra.mxu0 0.0
  %2174 = vmatprep.subr.mxu0 0.0
  %2175 = vmatpush1.msra.mxu0 0.0
  %2176 = vmatprep.subr.mxu0 0.0
  %2177 = vmatpush1.msra.mxu0 0.0
  %2178 = vmatprep.subr.mxu0 0.0
  %2179 = vmatpush1.msra.mxu0 0.0
  %2180 = vmatprep.subr.mxu0 0.0
  %2181 = vmatpush1.msra.mxu0 0.0
  %2182 = vmatprep.subr.mxu0 0.0
  %2183 = vmatpush1.msra.mxu0 0.0
  %2184 = vmatprep.subr.mxu0 0.0
  %2185 = vmatpush1.msra.mxu0 0.0
  %2186 = vmatprep.subr.mxu0 0.0
  %2187 = vmatpush1.msra.mxu0 0.0
  %2188 = vmatprep.subr.mxu0 0.0
  %2189 = vmatpush1.msra.mxu0 0.0
  %2190 = vmatprep.subr.mxu0 0.0
  %2191 = vmatpush1.msra.mxu0 0.0
  %2192 = vmatprep.subr.mxu0 0.0
  %2193 = vmatpush1.msra.mxu0 0.0
  %2194 = vmatprep.subr.mxu0 0.0
  %2195 = vmatpush1.msra.mxu0 0.0
  %2196 = vmatprep.subr.mxu0 0.0
  %2197 = vmatpush1.msra.mxu0 0.0
  %2198 = vmatprep.subr.mxu0 0.0
  %2199 = vmatpush1.msra.mxu0 0.0
  %2200 = vmatprep.subr.mxu0 0.0
  %2201 = vmatpush1.msra.mxu0 0.0
  %2202 = vmatprep.subr.mxu0 0.0
  %2203 = vmatpush1.msra.mxu0 0.0
  %2204 = vmatprep.subr.mxu0 0.0
  %2205 = vmatpush1.msra.mxu0 0.0
  %2206 = vmatprep.subr.mxu0 0.0
  %2207 = vmatpush1.msra.mxu0 0.0
  %2208 = vmatprep.subr.mxu0 0.0
  %2209 = vmatpush1.msra.mxu0 0.0
  %2210 = vmatprep.subr.mxu0 0.0
  %2211 = vmatpush1.msra.mxu0 0.0
  %2212 = vmatprep.subr.mxu0 0.0
  %2213 = vmatpush1.msra.mxu0 0.0
  %2214 = vmatprep.subr.mxu0 0.0
  %2215 = vmatpush1.msra.mxu0 0.0
  %2216 = vmatprep.subr.mxu0 0.0
  %2217 = vmatpush1.msra.mxu0 0.0
  %2218 = vmatprep.subr.mxu0 0.0
  %2219 = vmatpush1.msra.mxu0 0.0
  %2220 = vmatprep.mubr.f32.mxu0 0.0
  %2221 = vmatmul.mubr.f32.gmra.mrb[0].mxu0 %v2154
  %v2222 = vpop.f32.mrb[0].mxu0
  %v2223 = vadd.f32 0.0, %v2222
  %v2224 = vpop.f32.mrb[0].mxu0
  %v2225 = vadd.f32 0.0, %v2224
  %2226 = vdwg.mxu0
  %2227 = vmatprep.subr.mxu0 0.0
  %2228 = vmatpush1.msra.mxu0 %v1842
  %2229 = vmatprep.subr.mxu0 0.0
  %2230 = vmatpush1.msra.mxu0 %v1859
  %2231 = vmatprep.subr.mxu0 0.0
  %2232 = vmatpush1.msra.mxu0 0.0
  %2233 = vmatprep.subr.mxu0 0.0
  %2234 = vmatpush1.msra.mxu0 0.0
  %2235 = vmatprep.subr.mxu0 0.0
  %2236 = vmatpush1.msra.mxu0 0.0
  %2237 = vmatprep.subr.mxu0 0.0
  %2238 = vmatpush1.msra.mxu0 0.0
  %2239 = vmatprep.subr.mxu0 0.0
  %2240 = vmatpush1.msra.mxu0 0.0
  %2241 = vmatprep.subr.mxu0 0.0
  %2242 = vmatpush1.msra.mxu0 0.0
  %2243 = vmatprep.subr.mxu0 0.0
  %2244 = vmatpush1.msra.mxu0 0.0
  %2245 = vmatprep.subr.mxu0 0.0
  %2246 = vmatpush1.msra.mxu0 0.0
  %2247 = vmatprep.subr.mxu0 0.0
  %2248 = vmatpush1.msra.mxu0 0.0
  %2249 = vmatprep.subr.mxu0 0.0
  %2250 = vmatpush1.msra.mxu0 0.0
  %2251 = vmatprep.subr.mxu0 0.0
  %2252 = vmatpush1.msra.mxu0 0.0
  %2253 = vmatprep.subr.mxu0 0.0
  %2254 = vmatpush1.msra.mxu0 0.0
  %2255 = vmatprep.subr.mxu0 0.0
  %2256 = vmatpush1.msra.mxu0 0.0
  %2257 = vmatprep.subr.mxu0 0.0
  %2258 = vmatpush1.msra.mxu0 0.0
  %2259 = vmatprep.subr.mxu0 0.0
  %2260 = vmatpush1.msra.mxu0 0.0
  %2261 = vmatprep.subr.mxu0 0.0
  %2262 = vmatpush1.msra.mxu0 0.0
  %2263 = vmatprep.subr.mxu0 0.0
  %2264 = vmatpush1.msra.mxu0 0.0
  %2265 = vmatprep.subr.mxu0 0.0
  %2266 = vmatpush1.msra.mxu0 0.0
  %2267 = vmatprep.subr.mxu0 0.0
  %2268 = vmatpush1.msra.mxu0 0.0
  %2269 = vmatprep.subr.mxu0 0.0
  %2270 = vmatpush1.msra.mxu0 0.0
  %2271 = vmatprep.subr.mxu0 0.0
  %2272 = vmatpush1.msra.mxu0 0.0
  %2273 = vmatprep.subr.mxu0 0.0
  %2274 = vmatpush1.msra.mxu0 0.0
  %2275 = vmatprep.subr.mxu0 0.0
  %2276 = vmatpush1.msra.mxu0 0.0
  %2277 = vmatprep.subr.mxu0 0.0
  %2278 = vmatpush1.msra.mxu0 0.0
  %2279 = vmatprep.subr.mxu0 0.0
  %2280 = vmatpush1.msra.mxu0 0.0
  %2281 = vmatprep.subr.mxu0 0.0
  %2282 = vmatpush1.msra.mxu0 0.0
  %2283 = vmatprep.subr.mxu0 0.0
  %2284 = vmatpush1.msra.mxu0 0.0
  %2285 = vmatprep.subr.mxu0 0.0
  %2286 = vmatpush1.msra.mxu0 0.0
  %2287 = vmatprep.subr.mxu0 0.0
  %2288 = vmatpush1.msra.mxu0 0.0
  %2289 = vmatprep.subr.mxu0 0.0
  %2290 = vmatpush1.msra.mxu0 0.0
  %2291 = vmatprep.mubr.f32.mxu0 0.0
  %2292 = vmatmul.mubr.f32.gmra.mrb[0].mxu0 %v2154
  %v2293 = vpop.f32.mrb[0].mxu0
  %v2294 = vadd.f32 0.0, %v2293
  %v2295 = vpop.f32.mrb[0].mxu0
  %2296 = vdwg.mxu0
  %v2297 = vmax.f32 %v2148, %v2223
  %v2298 = vmax.f32 %v2149, %v2225
  %v2299 = vmax.f32 %v2150, %v2294
  %v2300 = vld [vmem:[%s4] sm:$0xff]
  %v2301 = vld [vmem:[%s4 + $0x8] sm:$0xff]
  %v2302 = vld [vmem:[%s4 + $0x10] sm:$0xff]
  %v2303 = vld [vmem:[%s4 + $0x18] sm:$0xff]
  %v2304 = vld [vmem:[%s4 + $0x20] sm:$0xff]
  %v2305 = vld [vmem:[%s4 + $0x28] sm:$0xff]
  %v2306 = vld [vmem:[%s4 + $0x30] sm:$0xff]
  %v2307 = vld [vmem:[%s4 + $0x38] sm:$0xff]
  %v2308 = vld [vmem:[%s4 + $0x40] sm:$0xff]
  %v2309 = vld [vmem:[%s4 + $0x48] sm:$0xff]
  %v2310 = vld [vmem:[%s4 + $0x50] sm:$0xff]
  %v2311 = vld [vmem:[%s4 + $0x58] sm:$0xff]
  %v2312 = vld [vmem:[%s4 + $0x60] sm:$0xff]
  %v2313 = vld [vmem:[%s4 + $0x68] sm:$0xff]
  %v2314 = vld [vmem:[%s4 + $0x70] sm:$0xff]
  %v2315 = vld [vmem:[%s4 + $0x78] sm:$0xff]
  %v2316 = vld [vmem:[%s4 + $0x80] sm:$0xff]
  %v2317 = vld [vmem:[%s4 + $0x88] sm:$0xff]
  %v2318 = vld [vmem:[%s4 + $0x90] sm:$0xff]
  %v2319 = vld [vmem:[%s4 + $0x98] sm:$0xff]
  %v2320 = vld [vmem:[%s4 + $0xa0] sm:$0xff]
  %v2321 = vld [vmem:[%s4 + $0xa8] sm:$0xff]
  %v2322 = vld [vmem:[%s4 + $0xb0] sm:$0xff]
  %v2323 = vld [vmem:[%s4 + $0xb8] sm:$0xff]
  %v2324 = vld [vmem:[%s4 + $0xc0] sm:$0xff]
  %v2325 = vld [vmem:[%s4 + $0xc8] sm:$0xff]
  %v2326 = vld [vmem:[%s4 + $0xd0] sm:$0xff]
  %v2327 = vld [vmem:[%s4 + $0xd8] sm:$0xff]
  %v2328 = vld [vmem:[%s4 + $0xe0] sm:$0xff]
  %v2329 = vld [vmem:[%s4 + $0xe8] sm:$0xff]
  %v2330 = vld [vmem:[%s4 + $0xf0] sm:$0xff]
  %v2331 = vld [vmem:[%s4 + $0xf8] sm:$0xff]
  %v2332 = vld [vmem:[%s4 + $0x100] sm:$0xff]
  %v2333 = vld [vmem:[%s4 + $0x108] sm:$0xff]
  %v2334 = vld [vmem:[%s4 + $0x110] sm:$0xff]
  %v2335 = vld [vmem:[%s4 + $0x118] sm:$0xff]
  %vm2336 = vcmask 261120
  %v2338 = vsel %vm2336, %v2299, 0
  %2340 = vmatprep.subr.mxu0 0.0
  %2341 = vmatpush1.msra.mxu0 %v2300
  %2342 = vmatprep.subr.mxu0 0.0
  %2343 = vmatpush1.msra.mxu0 %v2301
  %2344 = vmatprep.subr.mxu0 0.0
  %2345 = vmatpush1.msra.mxu0 %v2302
  %2346 = vmatprep.subr.mxu0 0.0
  %2347 = vmatpush1.msra.mxu0 %v2303
  %2348 = vmatprep.subr.mxu0 0.0
  %2349 = vmatpush1.msra.mxu0 %v2304
  %2350 = vmatprep.subr.mxu0 0.0
  %2351 = vmatpush1.msra.mxu0 %v2305
  %2352 = vmatprep.subr.mxu0 0.0
  %2353 = vmatpush1.msra.mxu0 %v2306
  %2354 = vmatprep.subr.mxu0 0.0
  %2355 = vmatpush1.msra.mxu0 %v2307
  %2356 = vmatprep.subr.mxu0 0.0
  %2357 = vmatpush1.msra.mxu0 %v2308
  %2358 = vmatprep.subr.mxu0 0.0
  %2359 = vmatpush1.msra.mxu0 %v2309
  %2360 = vmatprep.subr.mxu0 0.0
  %2361 = vmatpush1.msra.mxu0 %v2310
  %2362 = vmatprep.subr.mxu0 0.0
  %2363 = vmatpush1.msra.mxu0 %v2311
  %2364 = vmatprep.subr.mxu0 0.0
  %2365 = vmatpush1.msra.mxu0 %v2312
  %2366 = vmatprep.subr.mxu0 0.0
  %2367 = vmatpush1.msra.mxu0 %v2313
  %2368 = vmatprep.subr.mxu0 0.0
  %2369 = vmatpush1.msra.mxu0 %v2314
  %2370 = vmatprep.subr.mxu0 0.0
  %2371 = vmatpush1.msra.mxu0 %v2315
  %2372 = vmatprep.subr.mxu0 0.0
  %2373 = vmatpush1.msra.mxu0 %v2316
  %2374 = vmatprep.subr.mxu0 0.0
  %2375 = vmatpush1.msra.mxu0 %v2317
  %2376 = vmatprep.subr.mxu0 0.0
  %2377 = vmatpush1.msra.mxu0 %v2318
  %2378 = vmatprep.subr.mxu0 0.0
  %2379 = vmatpush1.msra.mxu0 %v2319
  %2380 = vmatprep.subr.mxu0 0.0
  %2381 = vmatpush1.msra.mxu0 %v2320
  %2382 = vmatprep.subr.mxu0 0.0
  %2383 = vmatpush1.msra.mxu0 %v2321
  %2384 = vmatprep.subr.mxu0 0.0
  %2385 = vmatpush1.msra.mxu0 %v2322
  %2386 = vmatprep.subr.mxu0 0.0
  %2387 = vmatpush1.msra.mxu0 %v2323
  %2388 = vmatprep.subr.mxu0 0.0
  %2389 = vmatpush1.msra.mxu0 %v2324
  %2390 = vmatprep.subr.mxu0 0.0
  %2391 = vmatpush1.msra.mxu0 %v2325
  %2392 = vmatprep.subr.mxu0 0.0
  %2393 = vmatpush1.msra.mxu0 %v2326
  %2394 = vmatprep.subr.mxu0 0.0
  %2395 = vmatpush1.msra.mxu0 %v2327
  %2396 = vmatprep.subr.mxu0 0.0
  %2397 = vmatpush1.msra.mxu0 %v2328
  %2398 = vmatprep.subr.mxu0 0.0
  %2399 = vmatpush1.msra.mxu0 %v2329
  %2400 = vmatprep.subr.mxu0 0.0
  %2401 = vmatpush1.msra.mxu0 %v2330
  %2402 = vmatprep.subr.mxu0 0.0
  %2403 = vmatpush1.msra.mxu0 %v2331
  %2404 = vmatprep.mubr.f32.mxu0 %v2298
  %2405 = vmatmul.mubr.f32.gmra.mrb[0].mxu0 %v2297
  %v2406 = vpop.f32.mrb[0].mxu0
  %v2407 = vadd.f32 0.0, %v2406
  %v2408 = vpop.f32.mrb[0].mxu0
  %2409 = vdwg.mxu0
  %2410 = vmatprep.subr.mxu0 0.0
  %2411 = vmatpush1.msra.mxu0 %v2332
  %2412 = vmatprep.subr.mxu0 0.0
  %2413 = vmatpush1.msra.mxu0 %v2333
  %2414 = vmatprep.subr.mxu0 0.0
  %2415 = vmatpush1.msra.mxu0 %v2334
  %2416 = vmatprep.subr.mxu0 0.0
  %2417 = vmatpush1.msra.mxu0 %v2335
  %2418 = vmatprep.subr.mxu0 0.0
  %2419 = vmatpush1.msra.mxu0 0.0
  %2420 = vmatprep.subr.mxu0 0.0
  %2421 = vmatpush1.msra.mxu0 0.0
  %2422 = vmatprep.subr.mxu0 0.0
  %2423 = vmatpush1.msra.mxu0 0.0
  %2424 = vmatprep.subr.mxu0 0.0
  %2425 = vmatpush1.msra.mxu0 0.0
  %2426 = vmatprep.subr.mxu0 0.0
  %2427 = vmatpush1.msra.mxu0 0.0
  %2428 = vmatprep.subr.mxu0 0.0
  %2429 = vmatpush1.msra.mxu0 0.0
  %2430 = vmatprep.subr.mxu0 0.0
  %2431 = vmatpush1.msra.mxu0 0.0
  %2432 = vmatprep.subr.mxu0 0.0
  %2433 = vmatpush1.msra.mxu0 0.0
  %2434 = vmatprep.subr.mxu0 0.0
  %2435 = vmatpush1.msra.mxu0 0.0
  %2436 = vmatprep.subr.mxu0 0.0
  %2437 = vmatpush1.msra.mxu0 0.0
  %2438 = vmatprep.subr.mxu0 0.0
  %2439 = vmatpush1.msra.mxu0 0.0
  %2440 = vmatprep.subr.mxu0 0.0
  %2441 = vmatpush1.msra.mxu0 0.0
  %2442 = vmatprep.subr.mxu0 0.0
  %2443 = vmatpush1.msra.mxu0 0.0
  %2444 = vmatprep.subr.mxu0 0.0
  %2445 = vmatpush1.msra.mxu0 0.0
  %2446 = vmatprep.subr.mxu0 0.0
  %2447 = vmatpush1.msra.mxu0 0.0
  %2448 = vmatprep.subr.mxu0 0.0
  %2449 = vmatpush1.msra.mxu0 0.0
  %2450 = vmatprep.subr.mxu0 0.0
  %2451 = vmatpush1.msra.mxu0 0.0
  %2452 = vmatprep.subr.mxu0 0.0
  %2453 = vmatpush1.msra.mxu0 0.0
  %2454 = vmatprep.subr.mxu0 0.0
  %2455 = vmatpush1.msra.mxu0 0.0
  %2456 = vmatprep.subr.mxu0 0.0
  %2457 = vmatpush1.msra.mxu0 0.0
  %2458 = vmatprep.subr.mxu0 0.0
  %2459 = vmatpush1.msra.mxu0 0.0
  %2460 = vmatprep.subr.mxu0 0.0
  %2461 = vmatpush1.msra.mxu0 0.0
  %2462 = vmatprep.subr.mxu0 0.0
  %2463 = vmatpush1.msra.mxu0 0.0
  %2464 = vmatprep.subr.mxu0 0.0
  %2465 = vmatpush1.msra.mxu0 0.0
  %2466 = vmatprep.subr.mxu0 0.0
  %2467 = vmatpush1.msra.mxu0 0.0
  %2468 = vmatprep.subr.mxu0 0.0
  %2469 = vmatpush1.msra.mxu0 0.0
  %2470 = vmatprep.subr.mxu0 0.0
  %2471 = vmatpush1.msra.mxu0 0.0
  %2472 = vmatprep.subr.mxu0 0.0
  %2473 = vmatpush1.msra.mxu0 0.0
  %2474 = vmatprep.mubr.f32.mxu0 0.0
  %2475 = vmatmul.mubr.f32.gmra.mrb[0].mxu0 %v2338
  %v2476 = vpop.f32.mrb[0].mxu0
  %v2477 = vadd.f32 %v2407, %v2476
  %v2478 = vpop.f32.mrb[0].mxu0
  %2479 = vdwg.mxu0
  %s2480 = scalar_lea.vmem %s4, 288
  %v2481 = vld [vmem:[%s2480] sm:$0xff]
  %v2482 = vld [vmem:[%s2480 + $0x8] sm:$0xff]
  %v2483 = vld [vmem:[%s2480 + $0x10] sm:$0xff]
  %v2484 = vld [vmem:[%s2480 + $0x18] sm:$0xff]
  %v2485 = vld [vmem:[%s2480 + $0x20] sm:$0xff]
  %v2486 = vld [vmem:[%s2480 + $0x28] sm:$0xff]
  %v2487 = vld [vmem:[%s2480 + $0x30] sm:$0xff]
  %v2488 = vld [vmem:[%s2480 + $0x38] sm:$0xff]
  %v2489 = vld [vmem:[%s2480 + $0x40] sm:$0xff]
  %v2490 = vld [vmem:[%s2480 + $0x48] sm:$0xff]
  %v2491 = vld [vmem:[%s2480 + $0x50] sm:$0xff]
  %v2492 = vld [vmem:[%s2480 + $0x58] sm:$0xff]
  %v2493 = vld [vmem:[%s2480 + $0x60] sm:$0xff]
  %v2494 = vld [vmem:[%s2480 + $0x68] sm:$0xff]
  %v2495 = vld [vmem:[%s2480 + $0x70] sm:$0xff]
  %v2496 = vld [vmem:[%s2480 + $0x78] sm:$0xff]
  %v2497 = vld [vmem:[%s2480 + $0x80] sm:$0xff]
  %v2498 = vld [vmem:[%s2480 + $0x88] sm:$0xff]
  %v2499 = vld [vmem:[%s2480 + $0x90] sm:$0xff]
  %v2500 = vld [vmem:[%s2480 + $0x98] sm:$0xff]
  %v2501 = vld [vmem:[%s2480 + $0xa0] sm:$0xff]
  %v2502 = vld [vmem:[%s2480 + $0xa8] sm:$0xff]
  %v2503 = vld [vmem:[%s2480 + $0xb0] sm:$0xff]
  %v2504 = vld [vmem:[%s2480 + $0xb8] sm:$0xff]
  %v2505 = vld [vmem:[%s2480 + $0xc0] sm:$0xff]
  %v2506 = vld [vmem:[%s2480 + $0xc8] sm:$0xff]
  %v2507 = vld [vmem:[%s2480 + $0xd0] sm:$0xff]
  %v2508 = vld [vmem:[%s2480 + $0xd8] sm:$0xff]
  %v2509 = vld [vmem:[%s2480 + $0xe0] sm:$0xff]
  %v2510 = vld [vmem:[%s2480 + $0xe8] sm:$0xff]
  %v2511 = vld [vmem:[%s2480 + $0xf0] sm:$0xff]
  %v2512 = vld [vmem:[%s2480 + $0xf8] sm:$0xff]
  %v2513 = vld [vmem:[%s2480 + $0x100] sm:$0xff]
  %v2514 = vld [vmem:[%s2480 + $0x108] sm:$0xff]
  %v2515 = vld [vmem:[%s2480 + $0x110] sm:$0xff]
  %v2516 = vld [vmem:[%s2480 + $0x118] sm:$0xff]
  %2517 = vmatprep.subr.mxu0 0.0
  %2518 = vmatpush1.msra.mxu0 %v2481
  %2519 = vmatprep.subr.mxu0 0.0
  %2520 = vmatpush1.msra.mxu0 %v2482
  %2521 = vmatprep.subr.mxu0 0.0
  %2522 = vmatpush1.msra.mxu0 %v2483
  %2523 = vmatprep.subr.mxu0 0.0
  %2524 = vmatpush1.msra.mxu0 %v2484
  %2525 = vmatprep.subr.mxu0 0.0
  %2526 = vmatpush1.msra.mxu0 %v2485
  %2527 = vmatprep.subr.mxu0 0.0
  %2528 = vmatpush1.msra.mxu0 %v2486
  %2529 = vmatprep.subr.mxu0 0.0
  %2530 = vmatpush1.msra.mxu0 %v2487
  %2531 = vmatprep.subr.mxu0 0.0
  %2532 = vmatpush1.msra.mxu0 %v2488
  %2533 = vmatprep.subr.mxu0 0.0
  %2534 = vmatpush1.msra.mxu0 %v2489
  %2535 = vmatprep.subr.mxu0 0.0
  %2536 = vmatpush1.msra.mxu0 %v2490
  %2537 = vmatprep.subr.mxu0 0.0
  %2538 = vmatpush1.msra.mxu0 %v2491
  %2539 = vmatprep.subr.mxu0 0.0
  %2540 = vmatpush1.msra.mxu0 %v2492
  %2541 = vmatprep.subr.mxu0 0.0
  %2542 = vmatpush1.msra.mxu0 %v2493
  %2543 = vmatprep.subr.mxu0 0.0
  %2544 = vmatpush1.msra.mxu0 %v2494
  %2545 = vmatprep.subr.mxu0 0.0
  %2546 = vmatpush1.msra.mxu0 %v2495
  %2547 = vmatprep.subr.mxu0 0.0
  %2548 = vmatpush1.msra.mxu0 %v2496
  %2549 = vmatprep.subr.mxu0 0.0
  %2550 = vmatpush1.msra.mxu0 %v2497
  %2551 = vmatprep.subr.mxu0 0.0
  %2552 = vmatpush1.msra.mxu0 %v2498
  %2553 = vmatprep.subr.mxu0 0.0
  %2554 = vmatpush1.msra.mxu0 %v2499
  %2555 = vmatprep.subr.mxu0 0.0
  %2556 = vmatpush1.msra.mxu0 %v2500
  %2557 = vmatprep.subr.mxu0 0.0
  %2558 = vmatpush1.msra.mxu0 %v2501
  %2559 = vmatprep.subr.mxu0 0.0
  %2560 = vmatpush1.msra.mxu0 %v2502
  %2561 = vmatprep.subr.mxu0 0.0
  %2562 = vmatpush1.msra.mxu0 %v2503
  %2563 = vmatprep.subr.mxu0 0.0
  %2564 = vmatpush1.msra.mxu0 %v2504
  %2565 = vmatprep.subr.mxu0 0.0
  %2566 = vmatpush1.msra.mxu0 %v2505
  %2567 = vmatprep.subr.mxu0 0.0
  %2568 = vmatpush1.msra.mxu0 %v2506
  %2569 = vmatprep.subr.mxu0 0.0
  %2570 = vmatpush1.msra.mxu0 %v2507
  %2571 = vmatprep.subr.mxu0 0.0
  %2572 = vmatpush1.msra.mxu0 %v2508
  %2573 = vmatprep.subr.mxu0 0.0
  %2574 = vmatpush1.msra.mxu0 %v2509
  %2575 = vmatprep.subr.mxu0 0.0
  %2576 = vmatpush1.msra.mxu0 %v2510
  %2577 = vmatprep.subr.mxu0 0.0
  %2578 = vmatpush1.msra.mxu0 %v2511
  %2579 = vmatprep.subr.mxu0 0.0
  %2580 = vmatpush1.msra.mxu0 %v2512
  %2581 = vmatprep.mubr.f32.mxu0 %v2298
  %2582 = vmatmul.mubr.f32.gmra.mrb[0].mxu0 %v2297
  %v2583 = vpop.f32.mrb[0].mxu0
  %v2584 = vadd.f32 0.0, %v2583
  %v2585 = vpop.f32.mrb[0].mxu0
  %2586 = vdwg.mxu0
  %2587 = vmatprep.subr.mxu0 0.0
  %2588 = vmatpush1.msra.mxu0 %v2513
  %2589 = vmatprep.subr.mxu0 0.0
  %2590 = vmatpush1.msra.mxu0 %v2514
  %2591 = vmatprep.subr.mxu0 0.0
  %2592 = vmatpush1.msra.mxu0 %v2515
  %2593 = vmatprep.subr.mxu0 0.0
  %2594 = vmatpush1.msra.mxu0 %v2516
  %2595 = vmatprep.subr.mxu0 0.0
  %2596 = vmatpush1.msra.mxu0 0.0
  %2597 = vmatprep.subr.mxu0 0.0
  %2598 = vmatpush1.msra.mxu0 0.0
  %2599 = vmatprep.subr.mxu0 0.0
  %2600 = vmatpush1.msra.mxu0 0.0
  %2601 = vmatprep.subr.mxu0 0.0
  %2602 = vmatpush1.msra.mxu0 0.0
  %2603 = vmatprep.subr.mxu0 0.0
  %2604 = vmatpush1.msra.mxu0 0.0
  %2605 = vmatprep.subr.mxu0 0.0
  %2606 = vmatpush1.msra.mxu0 0.0
  %2607 = vmatprep.subr.mxu0 0.0
  %2608 = vmatpush1.msra.mxu0 0.0
  %2609 = vmatprep.subr.mxu0 0.0
  %2610 = vmatpush1.msra.mxu0 0.0
  %2611 = vmatprep.subr.mxu0 0.0
  %2612 = vmatpush1.msra.mxu0 0.0
  %2613 = vmatprep.subr.mxu0 0.0
  %2614 = vmatpush1.msra.mxu0 0.0
  %2615 = vmatprep.subr.mxu0 0.0
  %2616 = vmatpush1.msra.mxu0 0.0
  %2617 = vmatprep.subr.mxu0 0.0
  %2618 = vmatpush1.msra.mxu0 0.0
  %2619 = vmatprep.subr.mxu0 0.0
  %2620 = vmatpush1.msra.mxu0 0.0
  %2621 = vmatprep.subr.mxu0 0.0
  %2622 = vmatpush1.msra.mxu0 0.0
  %2623 = vmatprep.subr.mxu0 0.0
  %2624 = vmatpush1.msra.mxu0 0.0
  %2625 = vmatprep.subr.mxu0 0.0
  %2626 = vmatpush1.msra.mxu0 0.0
  %2627 = vmatprep.subr.mxu0 0.0
  %2628 = vmatpush1.msra.mxu0 0.0
  %2629 = vmatprep.subr.mxu0 0.0
  %2630 = vmatpush1.msra.mxu0 0.0
  %2631 = vmatprep.subr.mxu0 0.0
  %2632 = vmatpush1.msra.mxu0 0.0
  %2633 = vmatprep.subr.mxu0 0.0
  %2634 = vmatpush1.msra.mxu0 0.0
  %2635 = vmatprep.subr.mxu0 0.0
  %2636 = vmatpush1.msra.mxu0 0.0
  %2637 = vmatprep.subr.mxu0 0.0
  %2638 = vmatpush1.msra.mxu0 0.0
  %2639 = vmatprep.subr.mxu0 0.0
  %2640 = vmatpush1.msra.mxu0 0.0
  %2641 = vmatprep.subr.mxu0 0.0
  %2642 = vmatpush1.msra.mxu0 0.0
  %2643 = vmatprep.subr.mxu0 0.0
  %2644 = vmatpush1.msra.mxu0 0.0
  %2645 = vmatprep.subr.mxu0 0.0
  %2646 = vmatpush1.msra.mxu0 0.0
  %2647 = vmatprep.subr.mxu0 0.0
  %2648 = vmatpush1.msra.mxu0 0.0
  %2649 = vmatprep.subr.mxu0 0.0
  %2650 = vmatpush1.msra.mxu0 0.0
  %2651 = vmatprep.mubr.f32.mxu0 0.0
  %2652 = vmatmul.mubr.f32.gmra.mrb[0].mxu0 %v2338
  %v2653 = vpop.f32.mrb[0].mxu0
  %v2654 = vadd.f32 %v2584, %v2653
  %v2655 = vpop.f32.mrb[0].mxu0
  %2656 = vdwg.mxu0
  %v2657 = vmax.f32 %v2477, %v2654
  %s2658 = scalar_lea.vmem %s4, 576
  %v2659 = vld [vmem:[%s2658] sm:$0xff]
  %v2660 = vld [vmem:[%s2658 + $0x8] sm:$0xff]
  %v2661 = vld [vmem:[%s2658 + $0x10] sm:$0xff]
  %v2662 = vld [vmem:[%s2658 + $0x18] sm:$0xff]
  %v2663 = vld [vmem:[%s2658 + $0x20] sm:$0xff]
  %v2664 = vld [vmem:[%s2658 + $0x28] sm:$0xff]
  %v2665 = vld [vmem:[%s2658 + $0x30] sm:$0xff]
  %v2666 = vld [vmem:[%s2658 + $0x38] sm:$0xff]
  %v2667 = vld [vmem:[%s2658 + $0x40] sm:$0xff]
  %v2668 = vld [vmem:[%s2658 + $0x48] sm:$0xff]
  %v2669 = vld [vmem:[%s2658 + $0x50] sm:$0xff]
  %v2670 = vld [vmem:[%s2658 + $0x58] sm:$0xff]
  %v2671 = vld [vmem:[%s2658 + $0x60] sm:$0xff]
  %v2672 = vld [vmem:[%s2658 + $0x68] sm:$0xff]
  %v2673 = vld [vmem:[%s2658 + $0x70] sm:$0xff]
  %v2674 = vld [vmem:[%s2658 + $0x78] sm:$0xff]
  %v2675 = vld [vmem:[%s2658 + $0x80] sm:$0xff]
  %v2676 = vld [vmem:[%s2658 + $0x88] sm:$0xff]
  %v2677 = vld [vmem:[%s2658 + $0x90] sm:$0xff]
  %v2678 = vld [vmem:[%s2658 + $0x98] sm:$0xff]
  %v2679 = vld [vmem:[%s2658 + $0xa0] sm:$0xff]
  %v2680 = vld [vmem:[%s2658 + $0xa8] sm:$0xff]
  %v2681 = vld [vmem:[%s2658 + $0xb0] sm:$0xff]
  %v2682 = vld [vmem:[%s2658 + $0xb8] sm:$0xff]
  %v2683 = vld [vmem:[%s2658 + $0xc0] sm:$0xff]
  %v2684 = vld [vmem:[%s2658 + $0xc8] sm:$0xff]
  %v2685 = vld [vmem:[%s2658 + $0xd0] sm:$0xff]
  %v2686 = vld [vmem:[%s2658 + $0xd8] sm:$0xff]
  %v2687 = vld [vmem:[%s2658 + $0xe0] sm:$0xff]
  %v2688 = vld [vmem:[%s2658 + $0xe8] sm:$0xff]
  %v2689 = vld [vmem:[%s2658 + $0xf0] sm:$0xff]
  %v2690 = vld [vmem:[%s2658 + $0xf8] sm:$0xff]
  %v2691 = vld [vmem:[%s2658 + $0x100] sm:$0xff]
  %v2692 = vld [vmem:[%s2658 + $0x108] sm:$0xff]
  %v2693 = vld [vmem:[%s2658 + $0x110] sm:$0xff]
  %v2694 = vld [vmem:[%s2658 + $0x118] sm:$0xff]
  %2695 = vmatprep.subr.mxu0 0.0
  %2696 = vmatpush1.msra.mxu0 %v2659
  %2697 = vmatprep.subr.mxu0 0.0
  %2698 = vmatpush1.msra.mxu0 %v2660
  %2699 = vmatprep.subr.mxu0 0.0
  %2700 = vmatpush1.msra.mxu0 %v2661
  %2701 = vmatprep.subr.mxu0 0.0
  %2702 = vmatpush1.msra.mxu0 %v2662
  %2703 = vmatprep.subr.mxu0 0.0
  %2704 = vmatpush1.msra.mxu0 %v2663
  %2705 = vmatprep.subr.mxu0 0.0
  %2706 = vmatpush1.msra.mxu0 %v2664
  %2707 = vmatprep.subr.mxu0 0.0
  %2708 = vmatpush1.msra.mxu0 %v2665
  %2709 = vmatprep.subr.mxu0 0.0
  %2710 = vmatpush1.msra.mxu0 %v2666
  %2711 = vmatprep.subr.mxu0 0.0
  %2712 = vmatpush1.msra.mxu0 %v2667
  %2713 = vmatprep.subr.mxu0 0.0
  %2714 = vmatpush1.msra.mxu0 %v2668
  %2715 = vmatprep.subr.mxu0 0.0
  %2716 = vmatpush1.msra.mxu0 %v2669
  %2717 = vmatprep.subr.mxu0 0.0
  %2718 = vmatpush1.msra.mxu0 %v2670
  %2719 = vmatprep.subr.mxu0 0.0
  %2720 = vmatpush1.msra.mxu0 %v2671
  %2721 = vmatprep.subr.mxu0 0.0
  %2722 = vmatpush1.msra.mxu0 %v2672
  %2723 = vmatprep.subr.mxu0 0.0
  %2724 = vmatpush1.msra.mxu0 %v2673
  %2725 = vmatprep.subr.mxu0 0.0
  %2726 = vmatpush1.msra.mxu0 %v2674
  %2727 = vmatprep.subr.mxu0 0.0
  %2728 = vmatpush1.msra.mxu0 %v2675
  %2729 = vmatprep.subr.mxu0 0.0
  %2730 = vmatpush1.msra.mxu0 %v2676
  %2731 = vmatprep.subr.mxu0 0.0
  %2732 = vmatpush1.msra.mxu0 %v2677
  %2733 = vmatprep.subr.mxu0 0.0
  %2734 = vmatpush1.msra.mxu0 %v2678
  %2735 = vmatprep.subr.mxu0 0.0
  %2736 = vmatpush1.msra.mxu0 %v2679
  %2737 = vmatprep.subr.mxu0 0.0
  %2738 = vmatpush1.msra.mxu0 %v2680
  %2739 = vmatprep.subr.mxu0 0.0
  %2740 = vmatpush1.msra.mxu0 %v2681
  %2741 = vmatprep.subr.mxu0 0.0
  %2742 = vmatpush1.msra.mxu0 %v2682
  %2743 = vmatprep.subr.mxu0 0.0
  %2744 = vmatpush1.msra.mxu0 %v2683
  %2745 = vmatprep.subr.mxu0 0.0
  %2746 = vmatpush1.msra.mxu0 %v2684
  %2747 = vmatprep.subr.mxu0 0.0
  %2748 = vmatpush1.msra.mxu0 %v2685
  %2749 = vmatprep.subr.mxu0 0.0
  %2750 = vmatpush1.msra.mxu0 %v2686
  %2751 = vmatprep.subr.mxu0 0.0
  %2752 = vmatpush1.msra.mxu0 %v2687
  %2753 = vmatprep.subr.mxu0 0.0
  %2754 = vmatpush1.msra.mxu0 %v2688
  %2755 = vmatprep.subr.mxu0 0.0
  %2756 = vmatpush1.msra.mxu0 %v2689
  %2757 = vmatprep.subr.mxu0 0.0
  %2758 = vmatpush1.msra.mxu0 %v2690
  %2759 = vmatprep.mubr.f32.mxu0 %v2298
  %2760 = vmatmul.mubr.f32.gmra.mrb[0].mxu0 %v2297
  %v2761 = vpop.f32.mrb[0].mxu0
  %v2762 = vadd.f32 0.0, %v2761
  %v2763 = vpop.f32.mrb[0].mxu0
  %2764 = vdwg.mxu0
  %2765 = vmatprep.subr.mxu0 0.0
  %2766 = vmatpush1.msra.mxu0 %v2691
  %2767 = vmatprep.subr.mxu0 0.0
  %2768 = vmatpush1.msra.mxu0 %v2692
  %2769 = vmatprep.subr.mxu0 0.0
  %2770 = vmatpush1.msra.mxu0 %v2693
  %2771 = vmatprep.subr.mxu0 0.0
  %2772 = vmatpush1.msra.mxu0 %v2694
  %2773 = vmatprep.subr.mxu0 0.0
  %2774 = vmatpush1.msra.mxu0 0.0
  %2775 = vmatprep.subr.mxu0 0.0
  %2776 = vmatpush1.msra.mxu0 0.0
  %2777 = vmatprep.subr.mxu0 0.0
  %2778 = vmatpush1.msra.mxu0 0.0
  %2779 = vmatprep.subr.mxu0 0.0
  %2780 = vmatpush1.msra.mxu0 0.0
  %2781 = vmatprep.subr.mxu0 0.0
  %2782 = vmatpush1.msra.mxu0 0.0
  %2783 = vmatprep.subr.mxu0 0.0
  %2784 = vmatpush1.msra.mxu0 0.0
  %2785 = vmatprep.subr.mxu0 0.0
  %2786 = vmatpush1.msra.mxu0 0.0
  %2787 = vmatprep.subr.mxu0 0.0
  %2788 = vmatpush1.msra.mxu0 0.0
  %2789 = vmatprep.subr.mxu0 0.0
  %2790 = vmatpush1.msra.mxu0 0.0
  %2791 = vmatprep.subr.mxu0 0.0
  %2792 = vmatpush1.msra.mxu0 0.0
  %2793 = vmatprep.subr.mxu0 0.0
  %2794 = vmatpush1.msra.mxu0 0.0
  %2795 = vmatprep.subr.mxu0 0.0
  %2796 = vmatpush1.msra.mxu0 0.0
  %2797 = vmatprep.subr.mxu0 0.0
  %2798 = vmatpush1.msra.mxu0 0.0
  %2799 = vmatprep.subr.mxu0 0.0
  %2800 = vmatpush1.msra.mxu0 0.0
  %2801 = vmatprep.subr.mxu0 0.0
  %2802 = vmatpush1.msra.mxu0 0.0
  %2803 = vmatprep.subr.mxu0 0.0
  %2804 = vmatpush1.msra.mxu0 0.0
  %2805 = vmatprep.subr.mxu0 0.0
  %2806 = vmatpush1.msra.mxu0 0.0
  %2807 = vmatprep.subr.mxu0 0.0
  %2808 = vmatpush1.msra.mxu0 0.0
  %2809 = vmatprep.subr.mxu0 0.0
  %2810 = vmatpush1.msra.mxu0 0.0
  %2811 = vmatprep.subr.mxu0 0.0
  %2812 = vmatpush1.msra.mxu0 0.0
  %2813 = vmatprep.subr.mxu0 0.0
  %2814 = vmatpush1.msra.mxu0 0.0
  %2815 = vmatprep.subr.mxu0 0.0
  %2816 = vmatpush1.msra.mxu0 0.0
  %2817 = vmatprep.subr.mxu0 0.0
  %2818 = vmatpush1.msra.mxu0 0.0
  %2819 = vmatprep.subr.mxu0 0.0
  %2820 = vmatpush1.msra.mxu0 0.0
  %2821 = vmatprep.subr.mxu0 0.0
  %2822 = vmatpush1.msra.mxu0 0.0
  %2823 = vmatprep.subr.mxu0 0.0
  %2824 = vmatpush1.msra.mxu0 0.0
  %2825 = vmatprep.subr.mxu0 0.0
  %2826 = vmatpush1.msra.mxu0 0.0
  %2827 = vmatprep.subr.mxu0 0.0
  %2828 = vmatpush1.msra.mxu0 0.0
  %2829 = vmatprep.mubr.f32.mxu0 0.0
  %2830 = vmatmul.mubr.f32.gmra.mrb[0].mxu0 %v2338
  %v2831 = vpop.f32.mrb[0].mxu0
  %v2832 = vadd.f32 %v2762, %v2831
  %v2833 = vpop.f32.mrb[0].mxu0
  %2834 = vdwg.mxu0
  %v2835 = vmax.f32 %v2657, %v2832
  %v2836 = vpack.c.bf16 %v2835, %v2835
  %2837 = vst [vmem:[%s5] sm:$0x3] %v2836
  %s2838 = scalar_lea.vmem %s0, 16
  %v2839 = vld [vmem:[%s2838] sm:$0xff]
  %v2840 = vld [vmem:[%s2838 + $0x8] sm:$0x77]
  %v2841 = vld [vmem:[%s1] sm:$0xff]
  %v2842 = vld [vmem:[%s1 + $0x8] sm:$0xf]
  %v2843 = vld [vmem:[%s1 + $0xc] sm:$0xff]
  %v2844 = vld [vmem:[%s1 + $0x14] sm:$0xf]
  %v2845 = vld [vmem:[%s1 + $0x18] sm:$0xff]
  %v2846 = vld [vmem:[%s1 + $0x20] sm:$0xf]
  %v2847 = vld [vmem:[%s1 + $0x24] sm:$0xff]
  %v2848 = vld [vmem:[%s1 + $0x2c] sm:$0xf]
  %v2849 = vld [vmem:[%s1 + $0x30] sm:$0xff]
  %v2850 = vld [vmem:[%s1 + $0x38] sm:$0xf]
  %v2851 = vld [vmem:[%s1 + $0x3c] sm:$0xff]
  %v2852 = vld [vmem:[%s1 + $0x44] sm:$0xf]
  %v2853 = vld [vmem:[%s1 + $0x48] sm:$0xff]
  %v2854 = vld [vmem:[%s1 + $0x50] sm:$0xf]
  %v2855 = vld [vmem:[%s1 + $0x54] sm:$0xff]
  %v2856 = vld [vmem:[%s1 + $0x5c] sm:$0xf]
  %v2857 = vld [vmem:[%s1 + $0x60] sm:$0xff]
  %v2858 = vld [vmem:[%s1 + $0x68] sm:$0xf]
  %v2859 = vld [vmem:[%s1 + $0x6c] sm:$0xff]
  %v2860 = vld [vmem:[%s1 + $0x74] sm:$0xf]
  %v2861 = vld [vmem:[%s1 + $0x78] sm:$0xff]
  %v2862 = vld [vmem:[%s1 + $0x80] sm:$0xf]
  %v2863 = vld [vmem:[%s1 + $0x84] sm:$0xff]
  %v2864 = vld [vmem:[%s1 + $0x8c] sm:$0xf]
  %v2865 = vld [vmem:[%s1 + $0x90] sm:$0xff]
  %v2866 = vld [vmem:[%s1 + $0x98] sm:$0xf]
  %v2867 = vld [vmem:[%s1 + $0x9c] sm:$0xff]
  %v2868 = vld [vmem:[%s1 + $0xa4] sm:$0xf]
  %v2869 = vld [vmem:[%s1 + $0xa8] sm:$0xff]
  %v2870 = vld [vmem:[%s1 + $0xb0] sm:$0xf]
  %v2871 = vld [vmem:[%s1 + $0xb4] sm:$0xff]
  %v2872 = vld [vmem:[%s1 + $0xbc] sm:$0xf]
  %v2873 = vld [vmem:[%s1 + $0xc0] sm:$0xff]
  %v2874 = vld [vmem:[%s1 + $0xc8] sm:$0xf]
  %v2875 = vld [vmem:[%s1 + $0xcc] sm:$0xff]
  %v2876 = vld [vmem:[%s1 + $0xd4] sm:$0xf]
  %v2877 = vld [vmem:[%s1 + $0xd8] sm:$0xff]
  %v2878 = vld [vmem:[%s1 + $0xe0] sm:$0xf]
  %v2879 = vld [vmem:[%s1 + $0xe4] sm:$0xff]
  %v2880 = vld [vmem:[%s1 + $0xec] sm:$0xf]
  %v2881 = vld [vmem:[%s1 + $0xf0] sm:$0xff]
  %v2882 = vld [vmem:[%s1 + $0xf8] sm:$0xf]
  %v2883 = vld [vmem:[%s1 + $0xfc] sm:$0xff]
  %v2884 = vld [vmem:[%s1 + $0x104] sm:$0xf]
  %v2885 = vld [vmem:[%s1 + $0x108] sm:$0xff]
  %v2886 = vld [vmem:[%s1 + $0x110] sm:$0xf]
  %v2887 = vld [vmem:[%s1 + $0x114] sm:$0xff]
  %v2888 = vld [vmem:[%s1 + $0x11c] sm:$0xf]
  %v2889 = vld [vmem:[%s1 + $0x120] sm:$0xff]
  %v2890 = vld [vmem:[%s1 + $0x128] sm:$0xf]
  %v2891 = vld [vmem:[%s1 + $0x12c] sm:$0xff]
  %v2892 = vld [vmem:[%s1 + $0x134] sm:$0xf]
  %v2893 = vld [vmem:[%s76] sm:$0xff]
  %v2894 = vld [vmem:[%s76 + $0x8] sm:$0xf]
  %v2895 = vld [vmem:[%s76 + $0xc] sm:$0xff]
  %v2896 = vld [vmem:[%s76 + $0x14] sm:$0xf]
  %v2897 = vld [vmem:[%s76 + $0x18] sm:$0xff]
  %v2898 = vld [vmem:[%s76 + $0x20] sm:$0xf]
  %v2899 = vld [vmem:[%s76 + $0x24] sm:$0xff]
  %v2900 = vld [vmem:[%s76 + $0x2c] sm:$0xf]
  %v2901 = vld [vmem:[%s76 + $0x30] sm:$0xff]
  %v2902 = vld [vmem:[%s76 + $0x38] sm:$0xf]
  %v2903 = vld [vmem:[%s76 + $0x3c] sm:$0xff]
  %v2904 = vld [vmem:[%s76 + $0x44] sm:$0xf]
  %v2905 = vld [vmem:[%s76 + $0x48] sm:$0xff]
  %v2906 = vld [vmem:[%s76 + $0x50] sm:$0xf]
  %v2907 = vld [vmem:[%s76 + $0x54] sm:$0xff]
  %v2908 = vld [vmem:[%s76 + $0x5c] sm:$0xf]
  %v2909 = vld [vmem:[%s76 + $0x60] sm:$0xff]
  %v2910 = vld [vmem:[%s76 + $0x68] sm:$0xf]
  %v2911 = vld [vmem:[%s76 + $0x6c] sm:$0xff]
  %v2912 = vld [vmem:[%s76 + $0x74] sm:$0xf]
  %v2913 = vld [vmem:[%s76 + $0x78] sm:$0xff]
  %v2914 = vld [vmem:[%s76 + $0x80] sm:$0xf]
  %v2915 = vld [vmem:[%s76 + $0x84] sm:$0xff]
  %v2916 = vld [vmem:[%s76 + $0x8c] sm:$0xf]
  %v2917 = vld [vmem:[%s76 + $0x90] sm:$0xff]
  %v2918 = vld [vmem:[%s76 + $0x98] sm:$0xf]
  %v2919 = vld [vmem:[%s76 + $0x9c] sm:$0xff]
  %v2920 = vld [vmem:[%s76 + $0xa4] sm:$0xf]
  %v2921 = vld [vmem:[%s76 + $0xa8] sm:$0xff]
  %v2922 = vld [vmem:[%s76 + $0xb0] sm:$0xf]
  %v2923 = vld [vmem:[%s76 + $0xb4] sm:$0xff]
  %v2924 = vld [vmem:[%s76 + $0xbc] sm:$0xf]
  %v2925 = vld [vmem:[%s76 + $0xc0] sm:$0xff]
  %v2926 = vld [vmem:[%s76 + $0xc8] sm:$0xf]
  %v2927 = vld [vmem:[%s76 + $0xcc] sm:$0xff]
  %v2928 = vld [vmem:[%s76 + $0xd4] sm:$0xf]
  %v2929 = vld [vmem:[%s76 + $0xd8] sm:$0xff]
  %v2930 = vld [vmem:[%s76 + $0xe0] sm:$0xf]
  %v2931 = vld [vmem:[%s76 + $0xe4] sm:$0xff]
  %v2932 = vld [vmem:[%s76 + $0xec] sm:$0xf]
  %v2933 = vld [vmem:[%s76 + $0xf0] sm:$0xff]
  %v2934 = vld [vmem:[%s76 + $0xf8] sm:$0xf]
  %v2935 = vld [vmem:[%s76 + $0xfc] sm:$0xff]
  %v2936 = vld [vmem:[%s76 + $0x104] sm:$0xf]
  %v2937 = vld [vmem:[%s76 + $0x108] sm:$0xff]
  %v2938 = vld [vmem:[%s76 + $0x110] sm:$0xf]
  %v2939 = vld [vmem:[%s76 + $0x114] sm:$0xff]
  %v2940 = vld [vmem:[%s76 + $0x11c] sm:$0xf]
  %v2941 = vld [vmem:[%s76 + $0x120] sm:$0xff]
  %v2942 = vld [vmem:[%s76 + $0x128] sm:$0xf]
  %v2943 = vld [vmem:[%s76 + $0x12c] sm:$0xff]
  %v2944 = vld [vmem:[%s76 + $0x134] sm:$0xf]
  %v2947 = vunpack.c.l.b16 %v2839
  %v2948 = vunpack.c.h.b16 %v2839
  %v2949 = vunpack.c.l.b16 %v2840
  %v2950 = vunpack.c.h.b16 %v2840
  %v2951 = vpack.c.b16 %v2949, %v2947
  %v2952 = vpack.c.b16 %v2950, %v2948
  %v2954 = vshrl.u32 %v2951, 16
  %v2956 = vshll.u32 %v2951, 16
  %v2958 = vrot.slane %v2956, 1
  %v2959 = vor.u32 %v2954, %v2958
  %v2961 = vshrl.u32 %v2952, 16
  %v2963 = vshll.u32 %v2952, 16
  %v2965 = vrot.slane %v2963, 1
  %v2966 = vor.u32 %v2961, %v2965
  %v3020 = vunpack.c.l.b16 %v2893
  %v3021 = vunpack.c.h.b16 %v2893
  %v3022 = vunpack.c.l.b16 %v2894
  %v3023 = vunpack.c.l.b16 %v2895
  %v3024 = vunpack.c.h.b16 %v2895
  %v3025 = vunpack.c.l.b16 %v2896
  %v3026 = vunpack.c.l.b16 %v2897
  %v3027 = vunpack.c.h.b16 %v2897
  %v3028 = vunpack.c.l.b16 %v2898
  %v3029 = vunpack.c.l.b16 %v2899
  %v3030 = vunpack.c.h.b16 %v2899
  %v3031 = vunpack.c.l.b16 %v2900
  %v3032 = vunpack.c.l.b16 %v2901
  %v3033 = vunpack.c.h.b16 %v2901
  %v3034 = vunpack.c.l.b16 %v2902
  %v3035 = vunpack.c.l.b16 %v2903
  %v3036 = vunpack.c.h.b16 %v2903
  %v3037 = vunpack.c.l.b16 %v2904
  %v3038 = vunpack.c.l.b16 %v2905
  %v3039 = vunpack.c.h.b16 %v2905
  %v3040 = vunpack.c.l.b16 %v2906
  %v3041 = vunpack.c.l.b16 %v2907
  %v3042 = vunpack.c.h.b16 %v2907
  %v3043 = vunpack.c.l.b16 %v2908
  %v3044 = vunpack.c.l.b16 %v2909
  %v3045 = vunpack.c.h.b16 %v2909
  %v3046 = vunpack.c.l.b16 %v2910
  %v3047 = vunpack.c.l.b16 %v2911
  %v3048 = vunpack.c.h.b16 %v2911
  %v3049 = vunpack.c.l.b16 %v2912
  %v3050 = vunpack.c.l.b16 %v2913
  %v3051 = vunpack.c.h.b16 %v2913
  %v3052 = vunpack.c.l.b16 %v2914
  %v3053 = vunpack.c.l.b16 %v2915
  %v3054 = vunpack.c.h.b16 %v2915
  %v3055 = vunpack.c.l.b16 %v2916
  %v3056 = vunpack.c.l.b16 %v2917
  %v3057 = vunpack.c.h.b16 %v2917
  %v3058 = vunpack.c.l.b16 %v2918
  %v3059 = vunpack.c.l.b16 %v2919
  %v3060 = vunpack.c.h.b16 %v2919
  %v3061 = vunpack.c.l.b16 %v2920
  %v3062 = vunpack.c.l.b16 %v2921
  %v3063 = vunpack.c.h.b16 %v2921
  %v3064 = vunpack.c.l.b16 %v2922
  %v3065 = vunpack.c.l.b16 %v2923
  %v3066 = vunpack.c.h.b16 %v2923
  %v3067 = vunpack.c.l.b16 %v2924
  %v3068 = vunpack.c.l.b16 %v2925
  %v3069 = vunpack.c.h.b16 %v2925
  %v3070 = vunpack.c.l.b16 %v2926
  %v3071 = vunpack.c.l.b16 %v2927
  %v3072 = vunpack.c.h.b16 %v2927
  %v3073 = vunpack.c.l.b16 %v2928
  %v3074 = vunpack.c.l.b16 %v2929
  %v3075 = vunpack.c.h.b16 %v2929
  %v3076 = vunpack.c.l.b16 %v2930
  %v3077 = vunpack.c.l.b16 %v2931
  %v3078 = vunpack.c.h.b16 %v2931
  %v3079 = vunpack.c.l.b16 %v2932
  %v3080 = vunpack.c.l.b16 %v2933
  %v3081 = vunpack.c.h.b16 %v2933
  %v3082 = vunpack.c.l.b16 %v2934
  %v3083 = vunpack.c.l.b16 %v2935
  %v3084 = vunpack.c.h.b16 %v2935
  %v3085 = vunpack.c.l.b16 %v2936
  %v3086 = vunpack.c.l.b16 %v2937
  %v3087 = vunpack.c.h.b16 %v2937
  %v3088 = vunpack.c.l.b16 %v2938
  %v3089 = vunpack.c.l.b16 %v2939
  %v3090 = vunpack.c.h.b16 %v2939
  %v3091 = vunpack.c.l.b16 %v2940
  %v3092 = vunpack.c.l.b16 %v2941
  %v3093 = vunpack.c.h.b16 %v2941
  %v3094 = vunpack.c.l.b16 %v2942
  %v3095 = vunpack.c.l.b16 %v2943
  %v3096 = vunpack.c.h.b16 %v2943
  %v3097 = vunpack.c.l.b16 %v2944
  %v3098 = vpack.c.b16 %v3023, %v3020
  %v3099 = vpack.c.b16 %v3024, %v3021
  %v3100 = vpack.c.b16 %v3025, %v3022
  %v3101 = vpack.c.b16 %v3029, %v3026
  %v3102 = vpack.c.b16 %v3030, %v3027
  %v3103 = vpack.c.b16 %v3031, %v3028
  %v3104 = vpack.c.b16 %v3035, %v3032
  %v3105 = vpack.c.b16 %v3036, %v3033
  %v3106 = vpack.c.b16 %v3037, %v3034
  %v3107 = vpack.c.b16 %v3041, %v3038
  %v3108 = vpack.c.b16 %v3042, %v3039
  %v3109 = vpack.c.b16 %v3043, %v3040
  %v3110 = vpack.c.b16 %v3047, %v3044
  %v3111 = vpack.c.b16 %v3048, %v3045
  %v3112 = vpack.c.b16 %v3049, %v3046
  %v3113 = vpack.c.b16 %v3053, %v3050
  %v3114 = vpack.c.b16 %v3054, %v3051
  %v3115 = vpack.c.b16 %v3055, %v3052
  %v3116 = vpack.c.b16 %v3059, %v3056
  %v3117 = vpack.c.b16 %v3060, %v3057
  %v3118 = vpack.c.b16 %v3061, %v3058
  %v3119 = vpack.c.b16 %v3065, %v3062
  %v3120 = vpack.c.b16 %v3066, %v3063
  %v3121 = vpack.c.b16 %v3067, %v3064
  %v3122 = vpack.c.b16 %v3071, %v3068
  %v3123 = vpack.c.b16 %v3072, %v3069
  %v3124 = vpack.c.b16 %v3073, %v3070
  %v3125 = vpack.c.b16 %v3077, %v3074
  %v3126 = vpack.c.b16 %v3078, %v3075
  %v3127 = vpack.c.b16 %v3079, %v3076
  %v3128 = vpack.c.b16 %v3083, %v3080
  %v3129 = vpack.c.b16 %v3084, %v3081
  %v3130 = vpack.c.b16 %v3085, %v3082
  %v3131 = vpack.c.b16 %v3089, %v3086
  %v3132 = vpack.c.b16 %v3090, %v3087
  %v3133 = vpack.c.b16 %v3091, %v3088
  %v3134 = vpack.c.b16 %v3095, %v3092
  %v3135 = vpack.c.b16 %v3096, %v3093
  %v3136 = vpack.c.b16 %v3097, %v3094
  %v3177 = vsel %vm360, %v2966, 0
  %3179 = vmatprep.subr.bf16.mxu0 %v3099
  %3180 = vmatpush1.bf16.msra.mxu0 %v3098
  %3181 = vmatprep.subr.bf16.mxu0 %v3102
  %3182 = vmatpush1.bf16.msra.mxu0 %v3101
  %3183 = vmatprep.subr.bf16.mxu0 %v3105
  %3184 = vmatpush1.bf16.msra.mxu0 %v3104
  %3185 = vmatprep.subr.bf16.mxu0 %v3108
  %3186 = vmatpush1.bf16.msra.mxu0 %v3107
  %3187 = vmatprep.subr.bf16.mxu0 %v3111
  %3188 = vmatpush1.bf16.msra.mxu0 %v3110
  %3189 = vmatprep.subr.bf16.mxu0 %v3114
  %3190 = vmatpush1.bf16.msra.mxu0 %v3113
  %3191 = vmatprep.subr.bf16.mxu0 %v3117
  %3192 = vmatpush1.bf16.msra.mxu0 %v3116
  %3193 = vmatprep.subr.bf16.mxu0 %v3120
  %3194 = vmatpush1.bf16.msra.mxu0 %v3119
  %3195 = vmatprep.subr.bf16.mxu0 %v3123
  %3196 = vmatpush1.bf16.msra.mxu0 %v3122
  %3197 = vmatprep.subr.bf16.mxu0 %v3126
  %3198 = vmatpush1.bf16.msra.mxu0 %v3125
  %3199 = vmatprep.subr.bf16.mxu0 %v3129
  %3200 = vmatpush1.bf16.msra.mxu0 %v3128
  %3201 = vmatprep.subr.bf16.mxu0 %v3132
  %3202 = vmatpush1.bf16.msra.mxu0 %v3131
  %3203 = vmatprep.subr.bf16.mxu0 %v3135
  %3204 = vmatpush1.bf16.msra.mxu0 %v3134
  %3205 = vmatprep.subr.bf16.mxu0 0
  %3206 = vmatpush1.bf16.msra.mxu0 0
  %3207 = vmatprep.subr.bf16.mxu0 0
  %3208 = vmatpush1.bf16.msra.mxu0 0
  %3209 = vmatprep.subr.bf16.mxu0 0
  %3210 = vmatpush1.bf16.msra.mxu0 0
  %3211 = vmatprep.mubr.bf16.mxu0 %v3177
  %3212 = vmatmul.mubr.bf16.gmra.mrb[0].mxu0 %v2959
  %v3213 = vpop.f32.mrb[0].mxu0
  %v3214 = vadd.f32 0.0, %v3213
  %v3215 = vpop.f32.mrb[0].mxu0
  %v3216 = vadd.f32 0.0, %v3215
  %v3217 = vpop.f32.mrb[0].mxu0
  %v3218 = vadd.f32 0.0, %v3217
  %v3219 = vpop.f32.mrb[0].mxu0
  %v3220 = vadd.f32 0.0, %v3219
  %3221 = vdwg.mxu0
  %3222 = vmatprep.subr.bf16.mxu0 0
  %3223 = vmatpush1.bf16.msra.mxu0 %v3100
  %3224 = vmatprep.subr.bf16.mxu0 0
  %3225 = vmatpush1.bf16.msra.mxu0 %v3103
  %3226 = vmatprep.subr.bf16.mxu0 0
  %3227 = vmatpush1.bf16.msra.mxu0 %v3106
  %3228 = vmatprep.subr.bf16.mxu0 0
  %3229 = vmatpush1.bf16.msra.mxu0 %v3109
  %3230 = vmatprep.subr.bf16.mxu0 0
  %3231 = vmatpush1.bf16.msra.mxu0 %v3112
  %3232 = vmatprep.subr.bf16.mxu0 0
  %3233 = vmatpush1.bf16.msra.mxu0 %v3115
  %3234 = vmatprep.subr.bf16.mxu0 0
  %3235 = vmatpush1.bf16.msra.mxu0 %v3118
  %3236 = vmatprep.subr.bf16.mxu0 0
  %3237 = vmatpush1.bf16.msra.mxu0 %v3121
  %3238 = vmatprep.subr.bf16.mxu0 0
  %3239 = vmatpush1.bf16.msra.mxu0 %v3124
  %3240 = vmatprep.subr.bf16.mxu0 0
  %3241 = vmatpush1.bf16.msra.mxu0 %v3127
  %3242 = vmatprep.subr.bf16.mxu0 0
  %3243 = vmatpush1.bf16.msra.mxu0 %v3130
  %3244 = vmatprep.subr.bf16.mxu0 0
  %3245 = vmatpush1.bf16.msra.mxu0 %v3133
  %3246 = vmatprep.subr.bf16.mxu0 0
  %3247 = vmatpush1.bf16.msra.mxu0 %v3136
  %3248 = vmatprep.subr.bf16.mxu0 0
  %3249 = vmatpush1.bf16.msra.mxu0 0
  %3250 = vmatprep.subr.bf16.mxu0 0
  %3251 = vmatpush1.bf16.msra.mxu0 0
  %3252 = vmatprep.subr.bf16.mxu0 0
  %3253 = vmatpush1.bf16.msra.mxu0 0
  %3254 = vmatprep.mubr.bf16.mxu0 %v3177
  %3255 = vmatmul.mubr.bf16.gmra.mrb[0].mxu0 %v2959
  %v3256 = vpop.f32.mrb[0].mxu0
  %v3257 = vadd.f32 0.0, %v3256
  %v3258 = vpop.f32.mrb[0].mxu0
  %v3259 = vpop.f32.mrb[0].mxu0
  %v3260 = vadd.f32 0.0, %v3259
  %v3261 = vpop.f32.mrb[0].mxu0
  %3262 = vdwg.mxu0
  %v3316 = vunpack.c.l.b16 %v2841
  %v3317 = vunpack.c.h.b16 %v2841
  %v3318 = vunpack.c.l.b16 %v2842
  %v3319 = vunpack.c.l.b16 %v2843
  %v3320 = vunpack.c.h.b16 %v2843
  %v3321 = vunpack.c.l.b16 %v2844
  %v3322 = vunpack.c.l.b16 %v2845
  %v3323 = vunpack.c.h.b16 %v2845
  %v3324 = vunpack.c.l.b16 %v2846
  %v3325 = vunpack.c.l.b16 %v2847
  %v3326 = vunpack.c.h.b16 %v2847
  %v3327 = vunpack.c.l.b16 %v2848
  %v3328 = vunpack.c.l.b16 %v2849
  %v3329 = vunpack.c.h.b16 %v2849
  %v3330 = vunpack.c.l.b16 %v2850
  %v3331 = vunpack.c.l.b16 %v2851
  %v3332 = vunpack.c.h.b16 %v2851
  %v3333 = vunpack.c.l.b16 %v2852
  %v3334 = vunpack.c.l.b16 %v2853
  %v3335 = vunpack.c.h.b16 %v2853
  %v3336 = vunpack.c.l.b16 %v2854
  %v3337 = vunpack.c.l.b16 %v2855
  %v3338 = vunpack.c.h.b16 %v2855
  %v3339 = vunpack.c.l.b16 %v2856
  %v3340 = vunpack.c.l.b16 %v2857
  %v3341 = vunpack.c.h.b16 %v2857
  %v3342 = vunpack.c.l.b16 %v2858
  %v3343 = vunpack.c.l.b16 %v2859
  %v3344 = vunpack.c.h.b16 %v2859
  %v3345 = vunpack.c.l.b16 %v2860
  %v3346 = vunpack.c.l.b16 %v2861
  %v3347 = vunpack.c.h.b16 %v2861
  %v3348 = vunpack.c.l.b16 %v2862
  %v3349 = vunpack.c.l.b16 %v2863
  %v3350 = vunpack.c.h.b16 %v2863
  %v3351 = vunpack.c.l.b16 %v2864
  %v3352 = vunpack.c.l.b16 %v2865
  %v3353 = vunpack.c.h.b16 %v2865
  %v3354 = vunpack.c.l.b16 %v2866
  %v3355 = vunpack.c.l.b16 %v2867
  %v3356 = vunpack.c.h.b16 %v2867
  %v3357 = vunpack.c.l.b16 %v2868
  %v3358 = vunpack.c.l.b16 %v2869
  %v3359 = vunpack.c.h.b16 %v2869
  %v3360 = vunpack.c.l.b16 %v2870
  %v3361 = vunpack.c.l.b16 %v2871
  %v3362 = vunpack.c.h.b16 %v2871
  %v3363 = vunpack.c.l.b16 %v2872
  %v3364 = vunpack.c.l.b16 %v2873
  %v3365 = vunpack.c.h.b16 %v2873
  %v3366 = vunpack.c.l.b16 %v2874
  %v3367 = vunpack.c.l.b16 %v2875
  %v3368 = vunpack.c.h.b16 %v2875
  %v3369 = vunpack.c.l.b16 %v2876
  %v3370 = vunpack.c.l.b16 %v2877
  %v3371 = vunpack.c.h.b16 %v2877
  %v3372 = vunpack.c.l.b16 %v2878
  %v3373 = vunpack.c.l.b16 %v2879
  %v3374 = vunpack.c.h.b16 %v2879
  %v3375 = vunpack.c.l.b16 %v2880
  %v3376 = vunpack.c.l.b16 %v2881
  %v3377 = vunpack.c.h.b16 %v2881
  %v3378 = vunpack.c.l.b16 %v2882
  %v3379 = vunpack.c.l.b16 %v2883
  %v3380 = vunpack.c.h.b16 %v2883
  %v3381 = vunpack.c.l.b16 %v2884
  %v3382 = vunpack.c.l.b16 %v2885
  %v3383 = vunpack.c.h.b16 %v2885
  %v3384 = vunpack.c.l.b16 %v2886
  %v3385 = vunpack.c.l.b16 %v2887
  %v3386 = vunpack.c.h.b16 %v2887
  %v3387 = vunpack.c.l.b16 %v2888
  %v3388 = vunpack.c.l.b16 %v2889
  %v3389 = vunpack.c.h.b16 %v2889
  %v3390 = vunpack.c.l.b16 %v2890
  %v3391 = vunpack.c.l.b16 %v2891
  %v3392 = vunpack.c.h.b16 %v2891
  %v3393 = vunpack.c.l.b16 %v2892
  %v3394 = vpack.c.b16 %v3319, %v3316
  %v3395 = vpack.c.b16 %v3320, %v3317
  %v3396 = vpack.c.b16 %v3321, %v3318
  %v3397 = vpack.c.b16 %v3325, %v3322
  %v3398 = vpack.c.b16 %v3326, %v3323
  %v3399 = vpack.c.b16 %v3327, %v3324
  %v3400 = vpack.c.b16 %v3331, %v3328
  %v3401 = vpack.c.b16 %v3332, %v3329
  %v3402 = vpack.c.b16 %v3333, %v3330
  %v3403 = vpack.c.b16 %v3337, %v3334
  %v3404 = vpack.c.b16 %v3338, %v3335
  %v3405 = vpack.c.b16 %v3339, %v3336
  %v3406 = vpack.c.b16 %v3343, %v3340
  %v3407 = vpack.c.b16 %v3344, %v3341
  %v3408 = vpack.c.b16 %v3345, %v3342
  %v3409 = vpack.c.b16 %v3349, %v3346
  %v3410 = vpack.c.b16 %v3350, %v3347
  %v3411 = vpack.c.b16 %v3351, %v3348
  %v3412 = vpack.c.b16 %v3355, %v3352
  %v3413 = vpack.c.b16 %v3356, %v3353
  %v3414 = vpack.c.b16 %v3357, %v3354
  %v3415 = vpack.c.b16 %v3361, %v3358
  %v3416 = vpack.c.b16 %v3362, %v3359
  %v3417 = vpack.c.b16 %v3363, %v3360
  %v3418 = vpack.c.b16 %v3367, %v3364
  %v3419 = vpack.c.b16 %v3368, %v3365
  %v3420 = vpack.c.b16 %v3369, %v3366
  %v3421 = vpack.c.b16 %v3373, %v3370
  %v3422 = vpack.c.b16 %v3374, %v3371
  %v3423 = vpack.c.b16 %v3375, %v3372
  %v3424 = vpack.c.b16 %v3379, %v3376
  %v3425 = vpack.c.b16 %v3380, %v3377
  %v3426 = vpack.c.b16 %v3381, %v3378
  %v3427 = vpack.c.b16 %v3385, %v3382
  %v3428 = vpack.c.b16 %v3386, %v3383
  %v3429 = vpack.c.b16 %v3387, %v3384
  %v3430 = vpack.c.b16 %v3391, %v3388
  %v3431 = vpack.c.b16 %v3392, %v3389
  %v3432 = vpack.c.b16 %v3393, %v3390
  %v3472 = vsel %vm360, %v2952, 0
  %3474 = vmatprep.subr.bf16.mxu0 %v3395
  %3475 = vmatpush1.bf16.msra.mxu0 %v3394
  %3476 = vmatprep.subr.bf16.mxu0 %v3398
  %3477 = vmatpush1.bf16.msra.mxu0 %v3397
  %3478 = vmatprep.subr.bf16.mxu0 %v3401
  %3479 = vmatpush1.bf16.msra.mxu0 %v3400
  %3480 = vmatprep.subr.bf16.mxu0 %v3404
  %3481 = vmatpush1.bf16.msra.mxu0 %v3403
  %3482 = vmatprep.subr.bf16.mxu0 %v3407
  %3483 = vmatpush1.bf16.msra.mxu0 %v3406
  %3484 = vmatprep.subr.bf16.mxu0 %v3410
  %3485 = vmatpush1.bf16.msra.mxu0 %v3409
  %3486 = vmatprep.subr.bf16.mxu0 %v3413
  %3487 = vmatpush1.bf16.msra.mxu0 %v3412
  %3488 = vmatprep.subr.bf16.mxu0 %v3416
  %3489 = vmatpush1.bf16.msra.mxu0 %v3415
  %3490 = vmatprep.subr.bf16.mxu0 %v3419
  %3491 = vmatpush1.bf16.msra.mxu0 %v3418
  %3492 = vmatprep.subr.bf16.mxu0 %v3422
  %3493 = vmatpush1.bf16.msra.mxu0 %v3421
  %3494 = vmatprep.subr.bf16.mxu0 %v3425
  %3495 = vmatpush1.bf16.msra.mxu0 %v3424
  %3496 = vmatprep.subr.bf16.mxu0 %v3428
  %3497 = vmatpush1.bf16.msra.mxu0 %v3427
  %3498 = vmatprep.subr.bf16.mxu0 %v3431
  %3499 = vmatpush1.bf16.msra.mxu0 %v3430
  %3500 = vmatprep.subr.bf16.mxu0 0
  %3501 = vmatpush1.bf16.msra.mxu0 0
  %3502 = vmatprep.subr.bf16.mxu0 0
  %3503 = vmatpush1.bf16.msra.mxu0 0
  %3504 = vmatprep.subr.bf16.mxu0 0
  %3505 = vmatpush1.bf16.msra.mxu0 0
  %3506 = vmatprep.mubr.bf16.mxu0 %v3472
  %3507 = vmatmul.mubr.bf16.gmra.mrb[0].mxu0 %v2951
  %v3508 = vpop.f32.mrb[0].mxu0
  %v3509 = vadd.f32 %v3214, %v3508
  %v3510 = vpop.f32.mrb[0].mxu0
  %v3511 = vadd.f32 %v3216, %v3510
  %v3512 = vpop.f32.mrb[0].mxu0
  %v3513 = vadd.f32 %v3218, %v3512
  %v3514 = vpop.f32.mrb[0].mxu0
  %v3515 = vadd.f32 %v3220, %v3514
  %3516 = vdwg.mxu0
  %3517 = vmatprep.subr.bf16.mxu0 0
  %3518 = vmatpush1.bf16.msra.mxu0 %v3396
  %3519 = vmatprep.subr.bf16.mxu0 0
  %3520 = vmatpush1.bf16.msra.mxu0 %v3399
  %3521 = vmatprep.subr.bf16.mxu0 0
  %3522 = vmatpush1.bf16.msra.mxu0 %v3402
  %3523 = vmatprep.subr.bf16.mxu0 0
  %3524 = vmatpush1.bf16.msra.mxu0 %v3405
  %3525 = vmatprep.subr.bf16.mxu0 0
  %3526 = vmatpush1.bf16.msra.mxu0 %v3408
  %3527 = vmatprep.subr.bf16.mxu0 0
  %3528 = vmatpush1.bf16.msra.mxu0 %v3411
  %3529 = vmatprep.subr.bf16.mxu0 0
  %3530 = vmatpush1.bf16.msra.mxu0 %v3414
  %3531 = vmatprep.subr.bf16.mxu0 0
  %3532 = vmatpush1.bf16.msra.mxu0 %v3417
  %3533 = vmatprep.subr.bf16.mxu0 0
  %3534 = vmatpush1.bf16.msra.mxu0 %v3420
  %3535 = vmatprep.subr.bf16.mxu0 0
  %3536 = vmatpush1.bf16.msra.mxu0 %v3423
  %3537 = vmatprep.subr.bf16.mxu0 0
  %3538 = vmatpush1.bf16.msra.mxu0 %v3426
  %3539 = vmatprep.subr.bf16.mxu0 0
  %3540 = vmatpush1.bf16.msra.mxu0 %v3429
  %3541 = vmatprep.subr.bf16.mxu0 0
  %3542 = vmatpush1.bf16.msra.mxu0 %v3432
  %3543 = vmatprep.subr.bf16.mxu0 0
  %3544 = vmatpush1.bf16.msra.mxu0 0
  %3545 = vmatprep.subr.bf16.mxu0 0
  %3546 = vmatpush1.bf16.msra.mxu0 0
  %3547 = vmatprep.subr.bf16.mxu0 0
  %3548 = vmatpush1.bf16.msra.mxu0 0
  %3549 = vmatprep.mubr.bf16.mxu0 %v3472
  %3550 = vmatmul.mubr.bf16.gmra.mrb[0].mxu0 %v2951
  %v3551 = vpop.f32.mrb[0].mxu0
  %v3552 = vadd.f32 %v3257, %v3551
  %v3553 = vpop.f32.mrb[0].mxu0
  %v3554 = vpop.f32.mrb[0].mxu0
  %v3555 = vadd.f32 %v3260, %v3554
  %v3556 = vpop.f32.mrb[0].mxu0
  %3557 = vdwg.mxu0
  %v3558 = vld [vmem:[%s743] sm:$0xff]
  %v3559 = vld [vmem:[%s743 + $0x8] sm:$0xf]
  %v3560 = vld [vmem:[%s743 + $0xc] sm:$0xff]
  %v3561 = vld [vmem:[%s743 + $0x14] sm:$0xf]
  %v3562 = vld [vmem:[%s743 + $0x18] sm:$0xff]
  %v3563 = vld [vmem:[%s743 + $0x20] sm:$0xf]
  %v3564 = vld [vmem:[%s743 + $0x24] sm:$0xff]
  %v3565 = vld [vmem:[%s743 + $0x2c] sm:$0xf]
  %v3566 = vld [vmem:[%s743 + $0x30] sm:$0xff]
  %v3567 = vld [vmem:[%s743 + $0x38] sm:$0xf]
  %v3568 = vld [vmem:[%s743 + $0x3c] sm:$0xff]
  %v3569 = vld [vmem:[%s743 + $0x44] sm:$0xf]
  %v3570 = vld [vmem:[%s743 + $0x48] sm:$0xff]
  %v3571 = vld [vmem:[%s743 + $0x50] sm:$0xf]
  %v3572 = vld [vmem:[%s743 + $0x54] sm:$0xff]
  %v3573 = vld [vmem:[%s743 + $0x5c] sm:$0xf]
  %v3574 = vld [vmem:[%s743 + $0x60] sm:$0xff]
  %v3575 = vld [vmem:[%s743 + $0x68] sm:$0xf]
  %v3576 = vld [vmem:[%s743 + $0x6c] sm:$0xff]
  %v3577 = vld [vmem:[%s743 + $0x74] sm:$0xf]
  %v3578 = vld [vmem:[%s743 + $0x78] sm:$0xff]
  %v3579 = vld [vmem:[%s743 + $0x80] sm:$0xf]
  %v3580 = vld [vmem:[%s743 + $0x84] sm:$0xff]
  %v3581 = vld [vmem:[%s743 + $0x8c] sm:$0xf]
  %v3582 = vld [vmem:[%s743 + $0x90] sm:$0xff]
  %v3583 = vld [vmem:[%s743 + $0x98] sm:$0xf]
  %v3584 = vld [vmem:[%s743 + $0x9c] sm:$0xff]
  %v3585 = vld [vmem:[%s743 + $0xa4] sm:$0xf]
  %v3586 = vld [vmem:[%s743 + $0xa8] sm:$0xff]
  %v3587 = vld [vmem:[%s743 + $0xb0] sm:$0xf]
  %v3588 = vld [vmem:[%s743 + $0xb4] sm:$0xff]
  %v3589 = vld [vmem:[%s743 + $0xbc] sm:$0xf]
  %v3590 = vld [vmem:[%s743 + $0xc0] sm:$0xff]
  %v3591 = vld [vmem:[%s743 + $0xc8] sm:$0xf]
  %v3592 = vld [vmem:[%s743 + $0xcc] sm:$0xff]
  %v3593 = vld [vmem:[%s743 + $0xd4] sm:$0xf]
  %v3594 = vld [vmem:[%s743 + $0xd8] sm:$0xff]
  %v3595 = vld [vmem:[%s743 + $0xe0] sm:$0xf]
  %v3596 = vld [vmem:[%s743 + $0xe4] sm:$0xff]
  %v3597 = vld [vmem:[%s743 + $0xec] sm:$0xf]
  %v3598 = vld [vmem:[%s743 + $0xf0] sm:$0xff]
  %v3599 = vld [vmem:[%s743 + $0xf8] sm:$0xf]
  %v3600 = vld [vmem:[%s743 + $0xfc] sm:$0xff]
  %v3601 = vld [vmem:[%s743 + $0x104] sm:$0xf]
  %v3602 = vld [vmem:[%s743 + $0x108] sm:$0xff]
  %v3603 = vld [vmem:[%s743 + $0x110] sm:$0xf]
  %v3604 = vld [vmem:[%s743 + $0x114] sm:$0xff]
  %v3605 = vld [vmem:[%s743 + $0x11c] sm:$0xf]
  %v3606 = vld [vmem:[%s743 + $0x120] sm:$0xff]
  %v3607 = vld [vmem:[%s743 + $0x128] sm:$0xf]
  %v3608 = vld [vmem:[%s743 + $0x12c] sm:$0xff]
  %v3609 = vld [vmem:[%s743 + $0x134] sm:$0xf]
  %v3610 = vrot.slane %v2951, 1
  %v3611 = vrot.slane %v2952, 1
  %v3665 = vunpack.c.l.b16 %v3558
  %v3666 = vunpack.c.h.b16 %v3558
  %v3667 = vunpack.c.l.b16 %v3559
  %v3668 = vunpack.c.l.b16 %v3560
  %v3669 = vunpack.c.h.b16 %v3560
  %v3670 = vunpack.c.l.b16 %v3561
  %v3671 = vunpack.c.l.b16 %v3562
  %v3672 = vunpack.c.h.b16 %v3562
  %v3673 = vunpack.c.l.b16 %v3563
  %v3674 = vunpack.c.l.b16 %v3564
  %v3675 = vunpack.c.h.b16 %v3564
  %v3676 = vunpack.c.l.b16 %v3565
  %v3677 = vunpack.c.l.b16 %v3566
  %v3678 = vunpack.c.h.b16 %v3566
  %v3679 = vunpack.c.l.b16 %v3567
  %v3680 = vunpack.c.l.b16 %v3568
  %v3681 = vunpack.c.h.b16 %v3568
  %v3682 = vunpack.c.l.b16 %v3569
  %v3683 = vunpack.c.l.b16 %v3570
  %v3684 = vunpack.c.h.b16 %v3570
  %v3685 = vunpack.c.l.b16 %v3571
  %v3686 = vunpack.c.l.b16 %v3572
  %v3687 = vunpack.c.h.b16 %v3572
  %v3688 = vunpack.c.l.b16 %v3573
  %v3689 = vunpack.c.l.b16 %v3574
  %v3690 = vunpack.c.h.b16 %v3574
  %v3691 = vunpack.c.l.b16 %v3575
  %v3692 = vunpack.c.l.b16 %v3576
  %v3693 = vunpack.c.h.b16 %v3576
  %v3694 = vunpack.c.l.b16 %v3577
  %v3695 = vunpack.c.l.b16 %v3578
  %v3696 = vunpack.c.h.b16 %v3578
  %v3697 = vunpack.c.l.b16 %v3579
  %v3698 = vunpack.c.l.b16 %v3580
  %v3699 = vunpack.c.h.b16 %v3580
  %v3700 = vunpack.c.l.b16 %v3581
  %v3701 = vunpack.c.l.b16 %v3582
  %v3702 = vunpack.c.h.b16 %v3582
  %v3703 = vunpack.c.l.b16 %v3583
  %v3704 = vunpack.c.l.b16 %v3584
  %v3705 = vunpack.c.h.b16 %v3584
  %v3706 = vunpack.c.l.b16 %v3585
  %v3707 = vunpack.c.l.b16 %v3586
  %v3708 = vunpack.c.h.b16 %v3586
  %v3709 = vunpack.c.l.b16 %v3587
  %v3710 = vunpack.c.l.b16 %v3588
  %v3711 = vunpack.c.h.b16 %v3588
  %v3712 = vunpack.c.l.b16 %v3589
  %v3713 = vunpack.c.l.b16 %v3590
  %v3714 = vunpack.c.h.b16 %v3590
  %v3715 = vunpack.c.l.b16 %v3591
  %v3716 = vunpack.c.l.b16 %v3592
  %v3717 = vunpack.c.h.b16 %v3592
  %v3718 = vunpack.c.l.b16 %v3593
  %v3719 = vunpack.c.l.b16 %v3594
  %v3720 = vunpack.c.h.b16 %v3594
  %v3721 = vunpack.c.l.b16 %v3595
  %v3722 = vunpack.c.l.b16 %v3596
  %v3723 = vunpack.c.h.b16 %v3596
  %v3724 = vunpack.c.l.b16 %v3597
  %v3725 = vunpack.c.l.b16 %v3598
  %v3726 = vunpack.c.h.b16 %v3598
  %v3727 = vunpack.c.l.b16 %v3599
  %v3728 = vunpack.c.l.b16 %v3600
  %v3729 = vunpack.c.h.b16 %v3600
  %v3730 = vunpack.c.l.b16 %v3601
  %v3731 = vunpack.c.l.b16 %v3602
  %v3732 = vunpack.c.h.b16 %v3602
  %v3733 = vunpack.c.l.b16 %v3603
  %v3734 = vunpack.c.l.b16 %v3604
  %v3735 = vunpack.c.h.b16 %v3604
  %v3736 = vunpack.c.l.b16 %v3605
  %v3737 = vunpack.c.l.b16 %v3606
  %v3738 = vunpack.c.h.b16 %v3606
  %v3739 = vunpack.c.l.b16 %v3607
  %v3740 = vunpack.c.l.b16 %v3608
  %v3741 = vunpack.c.h.b16 %v3608
  %v3742 = vunpack.c.l.b16 %v3609
  %v3743 = vpack.c.b16 %v3668, %v3665
  %v3744 = vpack.c.b16 %v3669, %v3666
  %v3745 = vpack.c.b16 %v3670, %v3667
  %v3746 = vpack.c.b16 %v3674, %v3671
  %v3747 = vpack.c.b16 %v3675, %v3672
  %v3748 = vpack.c.b16 %v3676, %v3673
  %v3749 = vpack.c.b16 %v3680, %v3677
  %v3750 = vpack.c.b16 %v3681, %v3678
  %v3751 = vpack.c.b16 %v3682, %v3679
  %v3752 = vpack.c.b16 %v3686, %v3683
  %v3753 = vpack.c.b16 %v3687, %v3684
  %v3754 = vpack.c.b16 %v3688, %v3685
  %v3755 = vpack.c.b16 %v3692, %v3689
  %v3756 = vpack.c.b16 %v3693, %v3690
  %v3757 = vpack.c.b16 %v3694, %v3691
  %v3758 = vpack.c.b16 %v3698, %v3695
  %v3759 = vpack.c.b16 %v3699, %v3696
  %v3760 = vpack.c.b16 %v3700, %v3697
  %v3761 = vpack.c.b16 %v3704, %v3701
  %v3762 = vpack.c.b16 %v3705, %v3702
  %v3763 = vpack.c.b16 %v3706, %v3703
  %v3764 = vpack.c.b16 %v3710, %v3707
  %v3765 = vpack.c.b16 %v3711, %v3708
  %v3766 = vpack.c.b16 %v3712, %v3709
  %v3767 = vpack.c.b16 %v3716, %v3713
  %v3768 = vpack.c.b16 %v3717, %v3714
  %v3769 = vpack.c.b16 %v3718, %v3715
  %v3770 = vpack.c.b16 %v3722, %v3719
  %v3771 = vpack.c.b16 %v3723, %v3720
  %v3772 = vpack.c.b16 %v3724, %v3721
  %v3773 = vpack.c.b16 %v3728, %v3725
  %v3774 = vpack.c.b16 %v3729, %v3726
  %v3775 = vpack.c.b16 %v3730, %v3727
  %v3776 = vpack.c.b16 %v3734, %v3731
  %v3777 = vpack.c.b16 %v3735, %v3732
  %v3778 = vpack.c.b16 %v3736, %v3733
  %v3779 = vpack.c.b16 %v3740, %v3737
  %v3780 = vpack.c.b16 %v3741, %v3738
  %v3781 = vpack.c.b16 %v3742, %v3739
  %v3822 = vsel %vm360, %v3611, 0
  %3824 = vmatprep.subr.bf16.mxu0 %v3744
  %3825 = vmatpush1.bf16.msra.mxu0 %v3743
  %3826 = vmatprep.subr.bf16.mxu0 %v3747
  %3827 = vmatpush1.bf16.msra.mxu0 %v3746
  %3828 = vmatprep.subr.bf16.mxu0 %v3750
  %3829 = vmatpush1.bf16.msra.mxu0 %v3749
  %3830 = vmatprep.subr.bf16.mxu0 %v3753
  %3831 = vmatpush1.bf16.msra.mxu0 %v3752
  %3832 = vmatprep.subr.bf16.mxu0 %v3756
  %3833 = vmatpush1.bf16.msra.mxu0 %v3755
  %3834 = vmatprep.subr.bf16.mxu0 %v3759
  %3835 = vmatpush1.bf16.msra.mxu0 %v3758
  %3836 = vmatprep.subr.bf16.mxu0 %v3762
  %3837 = vmatpush1.bf16.msra.mxu0 %v3761
  %3838 = vmatprep.subr.bf16.mxu0 %v3765
  %3839 = vmatpush1.bf16.msra.mxu0 %v3764
  %3840 = vmatprep.subr.bf16.mxu0 %v3768
  %3841 = vmatpush1.bf16.msra.mxu0 %v3767
  %3842 = vmatprep.subr.bf16.mxu0 %v3771
  %3843 = vmatpush1.bf16.msra.mxu0 %v3770
  %3844 = vmatprep.subr.bf16.mxu0 %v3774
  %3845 = vmatpush1.bf16.msra.mxu0 %v3773
  %3846 = vmatprep.subr.bf16.mxu0 %v3777
  %3847 = vmatpush1.bf16.msra.mxu0 %v3776
  %3848 = vmatprep.subr.bf16.mxu0 %v3780
  %3849 = vmatpush1.bf16.msra.mxu0 %v3779
  %3850 = vmatprep.subr.bf16.mxu0 0
  %3851 = vmatpush1.bf16.msra.mxu0 0
  %3852 = vmatprep.subr.bf16.mxu0 0
  %3853 = vmatpush1.bf16.msra.mxu0 0
  %3854 = vmatprep.subr.bf16.mxu0 0
  %3855 = vmatpush1.bf16.msra.mxu0 0
  %3856 = vmatprep.mubr.bf16.mxu0 %v3822
  %3857 = vmatmul.mubr.bf16.gmra.mrb[0].mxu0 %v3610
  %v3858 = vpop.f32.mrb[0].mxu0
  %v3859 = vadd.f32 0.0, %v3858
  %v3860 = vpop.f32.mrb[0].mxu0
  %v3861 = vadd.f32 0.0, %v3860
  %v3862 = vpop.f32.mrb[0].mxu0
  %v3863 = vadd.f32 0.0, %v3862
  %v3864 = vpop.f32.mrb[0].mxu0
  %v3865 = vadd.f32 0.0, %v3864
  %3866 = vdwg.mxu0
  %3867 = vmatprep.subr.bf16.mxu0 0
  %3868 = vmatpush1.bf16.msra.mxu0 %v3745
  %3869 = vmatprep.subr.bf16.mxu0 0
  %3870 = vmatpush1.bf16.msra.mxu0 %v3748
  %3871 = vmatprep.subr.bf16.mxu0 0
  %3872 = vmatpush1.bf16.msra.mxu0 %v3751
  %3873 = vmatprep.subr.bf16.mxu0 0
  %3874 = vmatpush1.bf16.msra.mxu0 %v3754
  %3875 = vmatprep.subr.bf16.mxu0 0
  %3876 = vmatpush1.bf16.msra.mxu0 %v3757
  %3877 = vmatprep.subr.bf16.mxu0 0
  %3878 = vmatpush1.bf16.msra.mxu0 %v3760
  %3879 = vmatprep.subr.bf16.mxu0 0
  %3880 = vmatpush1.bf16.msra.mxu0 %v3763
  %3881 = vmatprep.subr.bf16.mxu0 0
  %3882 = vmatpush1.bf16.msra.mxu0 %v3766
  %3883 = vmatprep.subr.bf16.mxu0 0
  %3884 = vmatpush1.bf16.msra.mxu0 %v3769
  %3885 = vmatprep.subr.bf16.mxu0 0
  %3886 = vmatpush1.bf16.msra.mxu0 %v3772
  %3887 = vmatprep.subr.bf16.mxu0 0
  %3888 = vmatpush1.bf16.msra.mxu0 %v3775
  %3889 = vmatprep.subr.bf16.mxu0 0
  %3890 = vmatpush1.bf16.msra.mxu0 %v3778
  %3891 = vmatprep.subr.bf16.mxu0 0
  %3892 = vmatpush1.bf16.msra.mxu0 %v3781
  %3893 = vmatprep.subr.bf16.mxu0 0
  %3894 = vmatpush1.bf16.msra.mxu0 0
  %3895 = vmatprep.subr.bf16.mxu0 0
  %3896 = vmatpush1.bf16.msra.mxu0 0
  %3897 = vmatprep.subr.bf16.mxu0 0
  %3898 = vmatpush1.bf16.msra.mxu0 0
  %3899 = vmatprep.mubr.bf16.mxu0 %v3822
  %3900 = vmatmul.mubr.bf16.gmra.mrb[0].mxu0 %v3610
  %v3901 = vpop.f32.mrb[0].mxu0
  %v3902 = vadd.f32 0.0, %v3901
  %v3903 = vpop.f32.mrb[0].mxu0
  %v3904 = vpop.f32.mrb[0].mxu0
  %v3905 = vadd.f32 0.0, %v3904
  %v3906 = vpop.f32.mrb[0].mxu0
  %3907 = vdwg.mxu0
  %v3908 = vadd.f32 %v3509, %v3859
  %v3909 = vadd.f32 %v3511, %v3861
  %v3910 = vadd.f32 %v3552, %v3902
  %v3911 = vadd.f32 %v3513, %v3863
  %v3912 = vadd.f32 %v3515, %v3865
  %v3913 = vadd.f32 %v3555, %v3905
  %v3914 = vld [vmem:[%s1100] sm:$0xff]
  %v3915 = vld [vmem:[%s1100 + $0x8] sm:$0xf]
  %v3916 = vld [vmem:[%s1100 + $0xc] sm:$0xff]
  %v3917 = vld [vmem:[%s1100 + $0x14] sm:$0xf]
  %v3918 = vld [vmem:[%s1100 + $0x18] sm:$0xff]
  %v3919 = vld [vmem:[%s1100 + $0x20] sm:$0xf]
  %v3920 = vld [vmem:[%s1100 + $0x24] sm:$0xff]
  %v3921 = vld [vmem:[%s1100 + $0x2c] sm:$0xf]
  %v3922 = vld [vmem:[%s1100 + $0x30] sm:$0xff]
  %v3923 = vld [vmem:[%s1100 + $0x38] sm:$0xf]
  %v3924 = vld [vmem:[%s1100 + $0x3c] sm:$0xff]
  %v3925 = vld [vmem:[%s1100 + $0x44] sm:$0xf]
  %v3926 = vld [vmem:[%s1100 + $0x48] sm:$0xff]
  %v3927 = vld [vmem:[%s1100 + $0x50] sm:$0xf]
  %v3928 = vld [vmem:[%s1100 + $0x54] sm:$0xff]
  %v3929 = vld [vmem:[%s1100 + $0x5c] sm:$0xf]
  %v3930 = vld [vmem:[%s1100 + $0x60] sm:$0xff]
  %v3931 = vld [vmem:[%s1100 + $0x68] sm:$0xf]
  %v3932 = vld [vmem:[%s1100 + $0x6c] sm:$0xff]
  %v3933 = vld [vmem:[%s1100 + $0x74] sm:$0xf]
  %v3934 = vld [vmem:[%s1100 + $0x78] sm:$0xff]
  %v3935 = vld [vmem:[%s1100 + $0x80] sm:$0xf]
  %v3936 = vld [vmem:[%s1100 + $0x84] sm:$0xff]
  %v3937 = vld [vmem:[%s1100 + $0x8c] sm:$0xf]
  %v3938 = vld [vmem:[%s1100 + $0x90] sm:$0xff]
  %v3939 = vld [vmem:[%s1100 + $0x98] sm:$0xf]
  %v3940 = vld [vmem:[%s1100 + $0x9c] sm:$0xff]
  %v3941 = vld [vmem:[%s1100 + $0xa4] sm:$0xf]
  %v3942 = vld [vmem:[%s1100 + $0xa8] sm:$0xff]
  %v3943 = vld [vmem:[%s1100 + $0xb0] sm:$0xf]
  %v3944 = vld [vmem:[%s1100 + $0xb4] sm:$0xff]
  %v3945 = vld [vmem:[%s1100 + $0xbc] sm:$0xf]
  %v3946 = vld [vmem:[%s1100 + $0xc0] sm:$0xff]
  %v3947 = vld [vmem:[%s1100 + $0xc8] sm:$0xf]
  %v3948 = vld [vmem:[%s1100 + $0xcc] sm:$0xff]
  %v3949 = vld [vmem:[%s1100 + $0xd4] sm:$0xf]
  %v3950 = vld [vmem:[%s1100 + $0xd8] sm:$0xff]
  %v3951 = vld [vmem:[%s1100 + $0xe0] sm:$0xf]
  %v3952 = vld [vmem:[%s1100 + $0xe4] sm:$0xff]
  %v3953 = vld [vmem:[%s1100 + $0xec] sm:$0xf]
  %v3954 = vld [vmem:[%s1100 + $0xf0] sm:$0xff]
  %v3955 = vld [vmem:[%s1100 + $0xf8] sm:$0xf]
  %v3956 = vld [vmem:[%s1100 + $0xfc] sm:$0xff]
  %v3957 = vld [vmem:[%s1100 + $0x104] sm:$0xf]
  %v3958 = vld [vmem:[%s1100 + $0x108] sm:$0xff]
  %v3959 = vld [vmem:[%s1100 + $0x110] sm:$0xf]
  %v3960 = vld [vmem:[%s1100 + $0x114] sm:$0xff]
  %v3961 = vld [vmem:[%s1100 + $0x11c] sm:$0xf]
  %v3962 = vld [vmem:[%s1100 + $0x120] sm:$0xff]
  %v3963 = vld [vmem:[%s1100 + $0x128] sm:$0xf]
  %v3964 = vld [vmem:[%s1100 + $0x12c] sm:$0xff]
  %v3965 = vld [vmem:[%s1100 + $0x134] sm:$0xf]
  %v3966 = vrot.slane %v2954, 1
  %v3967 = vrot.slane %v2956, 2
  %v3968 = vor.u32 %v3966, %v3967
  %v3969 = vrot.slane %v2961, 1
  %v3970 = vrot.slane %v2963, 2
  %v3971 = vor.u32 %v3969, %v3970
  %v4025 = vunpack.c.l.b16 %v3914
  %v4026 = vunpack.c.h.b16 %v3914
  %v4027 = vunpack.c.l.b16 %v3915
  %v4028 = vunpack.c.l.b16 %v3916
  %v4029 = vunpack.c.h.b16 %v3916
  %v4030 = vunpack.c.l.b16 %v3917
  %v4031 = vunpack.c.l.b16 %v3918
  %v4032 = vunpack.c.h.b16 %v3918
  %v4033 = vunpack.c.l.b16 %v3919
  %v4034 = vunpack.c.l.b16 %v3920
  %v4035 = vunpack.c.h.b16 %v3920
  %v4036 = vunpack.c.l.b16 %v3921
  %v4037 = vunpack.c.l.b16 %v3922
  %v4038 = vunpack.c.h.b16 %v3922
  %v4039 = vunpack.c.l.b16 %v3923
  %v4040 = vunpack.c.l.b16 %v3924
  %v4041 = vunpack.c.h.b16 %v3924
  %v4042 = vunpack.c.l.b16 %v3925
  %v4043 = vunpack.c.l.b16 %v3926
  %v4044 = vunpack.c.h.b16 %v3926
  %v4045 = vunpack.c.l.b16 %v3927
  %v4046 = vunpack.c.l.b16 %v3928
  %v4047 = vunpack.c.h.b16 %v3928
  %v4048 = vunpack.c.l.b16 %v3929
  %v4049 = vunpack.c.l.b16 %v3930
  %v4050 = vunpack.c.h.b16 %v3930
  %v4051 = vunpack.c.l.b16 %v3931
  %v4052 = vunpack.c.l.b16 %v3932
  %v4053 = vunpack.c.h.b16 %v3932
  %v4054 = vunpack.c.l.b16 %v3933
  %v4055 = vunpack.c.l.b16 %v3934
  %v4056 = vunpack.c.h.b16 %v3934
  %v4057 = vunpack.c.l.b16 %v3935
  %v4058 = vunpack.c.l.b16 %v3936
  %v4059 = vunpack.c.h.b16 %v3936
  %v4060 = vunpack.c.l.b16 %v3937
  %v4061 = vunpack.c.l.b16 %v3938
  %v4062 = vunpack.c.h.b16 %v3938
  %v4063 = vunpack.c.l.b16 %v3939
  %v4064 = vunpack.c.l.b16 %v3940
  %v4065 = vunpack.c.h.b16 %v3940
  %v4066 = vunpack.c.l.b16 %v3941
  %v4067 = vunpack.c.l.b16 %v3942
  %v4068 = vunpack.c.h.b16 %v3942
  %v4069 = vunpack.c.l.b16 %v3943
  %v4070 = vunpack.c.l.b16 %v3944
  %v4071 = vunpack.c.h.b16 %v3944
  %v4072 = vunpack.c.l.b16 %v3945
  %v4073 = vunpack.c.l.b16 %v3946
  %v4074 = vunpack.c.h.b16 %v3946
  %v4075 = vunpack.c.l.b16 %v3947
  %v4076 = vunpack.c.l.b16 %v3948
  %v4077 = vunpack.c.h.b16 %v3948
  %v4078 = vunpack.c.l.b16 %v3949
  %v4079 = vunpack.c.l.b16 %v3950
  %v4080 = vunpack.c.h.b16 %v3950
  %v4081 = vunpack.c.l.b16 %v3951
  %v4082 = vunpack.c.l.b16 %v3952
  %v4083 = vunpack.c.h.b16 %v3952
  %v4084 = vunpack.c.l.b16 %v3953
  %v4085 = vunpack.c.l.b16 %v3954
  %v4086 = vunpack.c.h.b16 %v3954
  %v4087 = vunpack.c.l.b16 %v3955
  %v4088 = vunpack.c.l.b16 %v3956
  %v4089 = vunpack.c.h.b16 %v3956
  %v4090 = vunpack.c.l.b16 %v3957
  %v4091 = vunpack.c.l.b16 %v3958
  %v4092 = vunpack.c.h.b16 %v3958
  %v4093 = vunpack.c.l.b16 %v3959
  %v4094 = vunpack.c.l.b16 %v3960
  %v4095 = vunpack.c.h.b16 %v3960
  %v4096 = vunpack.c.l.b16 %v3961
  %v4097 = vunpack.c.l.b16 %v3962
  %v4098 = vunpack.c.h.b16 %v3962
  %v4099 = vunpack.c.l.b16 %v3963
  %v4100 = vunpack.c.l.b16 %v3964
  %v4101 = vunpack.c.h.b16 %v3964
  %v4102 = vunpack.c.l.b16 %v3965
  %v4103 = vpack.c.b16 %v4028, %v4025
  %v4104 = vpack.c.b16 %v4029, %v4026
  %v4105 = vpack.c.b16 %v4030, %v4027
  %v4106 = vpack.c.b16 %v4034, %v4031
  %v4107 = vpack.c.b16 %v4035, %v4032
  %v4108 = vpack.c.b16 %v4036, %v4033
  %v4109 = vpack.c.b16 %v4040, %v4037
  %v4110 = vpack.c.b16 %v4041, %v4038
  %v4111 = vpack.c.b16 %v4042, %v4039
  %v4112 = vpack.c.b16 %v4046, %v4043
  %v4113 = vpack.c.b16 %v4047, %v4044
  %v4114 = vpack.c.b16 %v4048, %v4045
  %v4115 = vpack.c.b16 %v4052, %v4049
  %v4116 = vpack.c.b16 %v4053, %v4050
  %v4117 = vpack.c.b16 %v4054, %v4051
  %v4118 = vpack.c.b16 %v4058, %v4055
  %v4119 = vpack.c.b16 %v4059, %v4056
  %v4120 = vpack.c.b16 %v4060, %v4057
  %v4121 = vpack.c.b16 %v4064, %v4061
  %v4122 = vpack.c.b16 %v4065, %v4062
  %v4123 = vpack.c.b16 %v4066, %v4063
  %v4124 = vpack.c.b16 %v4070, %v4067
  %v4125 = vpack.c.b16 %v4071, %v4068
  %v4126 = vpack.c.b16 %v4072, %v4069
  %v4127 = vpack.c.b16 %v4076, %v4073
  %v4128 = vpack.c.b16 %v4077, %v4074
  %v4129 = vpack.c.b16 %v4078, %v4075
  %v4130 = vpack.c.b16 %v4082, %v4079
  %v4131 = vpack.c.b16 %v4083, %v4080
  %v4132 = vpack.c.b16 %v4084, %v4081
  %v4133 = vpack.c.b16 %v4088, %v4085
  %v4134 = vpack.c.b16 %v4089, %v4086
  %v4135 = vpack.c.b16 %v4090, %v4087
  %v4136 = vpack.c.b16 %v4094, %v4091
  %v4137 = vpack.c.b16 %v4095, %v4092
  %v4138 = vpack.c.b16 %v4096, %v4093
  %v4139 = vpack.c.b16 %v4100, %v4097
  %v4140 = vpack.c.b16 %v4101, %v4098
  %v4141 = vpack.c.b16 %v4102, %v4099
  %v4182 = vsel %vm360, %v3971, 0
  %4184 = vmatprep.subr.bf16.mxu0 %v4104
  %4185 = vmatpush1.bf16.msra.mxu0 %v4103
  %4186 = vmatprep.subr.bf16.mxu0 %v4107
  %4187 = vmatpush1.bf16.msra.mxu0 %v4106
  %4188 = vmatprep.subr.bf16.mxu0 %v4110
  %4189 = vmatpush1.bf16.msra.mxu0 %v4109
  %4190 = vmatprep.subr.bf16.mxu0 %v4113
  %4191 = vmatpush1.bf16.msra.mxu0 %v4112
  %4192 = vmatprep.subr.bf16.mxu0 %v4116
  %4193 = vmatpush1.bf16.msra.mxu0 %v4115
  %4194 = vmatprep.subr.bf16.mxu0 %v4119
  %4195 = vmatpush1.bf16.msra.mxu0 %v4118
  %4196 = vmatprep.subr.bf16.mxu0 %v4122
  %4197 = vmatpush1.bf16.msra.mxu0 %v4121
  %4198 = vmatprep.subr.bf16.mxu0 %v4125
  %4199 = vmatpush1.bf16.msra.mxu0 %v4124
  %4200 = vmatprep.subr.bf16.mxu0 %v4128
  %4201 = vmatpush1.bf16.msra.mxu0 %v4127
  %4202 = vmatprep.subr.bf16.mxu0 %v4131
  %4203 = vmatpush1.bf16.msra.mxu0 %v4130
  %4204 = vmatprep.subr.bf16.mxu0 %v4134
  %4205 = vmatpush1.bf16.msra.mxu0 %v4133
  %4206 = vmatprep.subr.bf16.mxu0 %v4137
  %4207 = vmatpush1.bf16.msra.mxu0 %v4136
  %4208 = vmatprep.subr.bf16.mxu0 %v4140
  %4209 = vmatpush1.bf16.msra.mxu0 %v4139
  %4210 = vmatprep.subr.bf16.mxu0 0
  %4211 = vmatpush1.bf16.msra.mxu0 0
  %4212 = vmatprep.subr.bf16.mxu0 0
  %4213 = vmatpush1.bf16.msra.mxu0 0
  %4214 = vmatprep.subr.bf16.mxu0 0
  %4215 = vmatpush1.bf16.msra.mxu0 0
  %4216 = vmatprep.mubr.bf16.mxu0 %v4182
  %4217 = vmatmul.mubr.bf16.gmra.mrb[0].mxu0 %v3968
  %v4218 = vpop.f32.mrb[0].mxu0
  %v4219 = vadd.f32 0.0, %v4218
  %v4220 = vpop.f32.mrb[0].mxu0
  %v4221 = vadd.f32 0.0, %v4220
  %v4222 = vpop.f32.mrb[0].mxu0
  %v4223 = vadd.f32 0.0, %v4222
  %v4224 = vpop.f32.mrb[0].mxu0
  %v4225 = vadd.f32 0.0, %v4224
  %4226 = vdwg.mxu0
  %4227 = vmatprep.subr.bf16.mxu0 0
  %4228 = vmatpush1.bf16.msra.mxu0 %v4105
  %4229 = vmatprep.subr.bf16.mxu0 0
  %4230 = vmatpush1.bf16.msra.mxu0 %v4108
  %4231 = vmatprep.subr.bf16.mxu0 0
  %4232 = vmatpush1.bf16.msra.mxu0 %v4111
  %4233 = vmatprep.subr.bf16.mxu0 0
  %4234 = vmatpush1.bf16.msra.mxu0 %v4114
  %4235 = vmatprep.subr.bf16.mxu0 0
  %4236 = vmatpush1.bf16.msra.mxu0 %v4117
  %4237 = vmatprep.subr.bf16.mxu0 0
  %4238 = vmatpush1.bf16.msra.mxu0 %v4120
  %4239 = vmatprep.subr.bf16.mxu0 0
  %4240 = vmatpush1.bf16.msra.mxu0 %v4123
  %4241 = vmatprep.subr.bf16.mxu0 0
  %4242 = vmatpush1.bf16.msra.mxu0 %v4126
  %4243 = vmatprep.subr.bf16.mxu0 0
  %4244 = vmatpush1.bf16.msra.mxu0 %v4129
  %4245 = vmatprep.subr.bf16.mxu0 0
  %4246 = vmatpush1.bf16.msra.mxu0 %v4132
  %4247 = vmatprep.subr.bf16.mxu0 0
  %4248 = vmatpush1.bf16.msra.mxu0 %v4135
  %4249 = vmatprep.subr.bf16.mxu0 0
  %4250 = vmatpush1.bf16.msra.mxu0 %v4138
  %4251 = vmatprep.subr.bf16.mxu0 0
  %4252 = vmatpush1.bf16.msra.mxu0 %v4141
  %4253 = vmatprep.subr.bf16.mxu0 0
  %4254 = vmatpush1.bf16.msra.mxu0 0
  %4255 = vmatprep.subr.bf16.mxu0 0
  %4256 = vmatpush1.bf16.msra.mxu0 0
  %4257 = vmatprep.subr.bf16.mxu0 0
  %4258 = vmatpush1.bf16.msra.mxu0 0
  %4259 = vmatprep.mubr.bf16.mxu0 %v4182
  %4260 = vmatmul.mubr.bf16.gmra.mrb[0].mxu0 %v3968
  %v4261 = vpop.f32.mrb[0].mxu0
  %v4262 = vadd.f32 0.0, %v4261
  %v4263 = vpop.f32.mrb[0].mxu0
  %v4264 = vpop.f32.mrb[0].mxu0
  %v4265 = vadd.f32 0.0, %v4264
  %v4266 = vpop.f32.mrb[0].mxu0
  %4267 = vdwg.mxu0
  %v4268 = vadd.f32 %v3908, %v4219
  %v4269 = vadd.f32 %v3909, %v4221
  %v4270 = vadd.f32 %v3910, %v4262
  %v4271 = vadd.f32 %v3911, %v4223
  %v4272 = vadd.f32 %v3912, %v4225
  %v4273 = vadd.f32 %v3913, %v4265
  %v4274 = vld [vmem:[%s1461] sm:$0xff]
  %v4275 = vld [vmem:[%s1461 + $0x8] sm:$0xf]
  %v4276 = vld [vmem:[%s1461 + $0xc] sm:$0xff]
  %v4277 = vld [vmem:[%s1461 + $0x14] sm:$0xf]
  %v4278 = vld [vmem:[%s1461 + $0x18] sm:$0xff]
  %v4279 = vld [vmem:[%s1461 + $0x20] sm:$0xf]
  %v4280 = vld [vmem:[%s1461 + $0x24] sm:$0xff]
  %v4281 = vld [vmem:[%s1461 + $0x2c] sm:$0xf]
  %v4282 = vld [vmem:[%s1461 + $0x30] sm:$0xff]
  %v4283 = vld [vmem:[%s1461 + $0x38] sm:$0xf]
  %v4284 = vld [vmem:[%s1461 + $0x3c] sm:$0xff]
  %v4285 = vld [vmem:[%s1461 + $0x44] sm:$0xf]
  %v4286 = vld [vmem:[%s1461 + $0x48] sm:$0xff]
  %v4287 = vld [vmem:[%s1461 + $0x50] sm:$0xf]
  %v4288 = vld [vmem:[%s1461 + $0x54] sm:$0xff]
  %v4289 = vld [vmem:[%s1461 + $0x5c] sm:$0xf]
  %v4290 = vld [vmem:[%s1461 + $0x60] sm:$0xff]
  %v4291 = vld [vmem:[%s1461 + $0x68] sm:$0xf]
  %v4292 = vld [vmem:[%s1461 + $0x6c] sm:$0xff]
  %v4293 = vld [vmem:[%s1461 + $0x74] sm:$0xf]
  %v4294 = vld [vmem:[%s1461 + $0x78] sm:$0xff]
  %v4295 = vld [vmem:[%s1461 + $0x80] sm:$0xf]
  %v4296 = vld [vmem:[%s1461 + $0x84] sm:$0xff]
  %v4297 = vld [vmem:[%s1461 + $0x8c] sm:$0xf]
  %v4298 = vld [vmem:[%s1461 + $0x90] sm:$0xff]
  %v4299 = vld [vmem:[%s1461 + $0x98] sm:$0xf]
  %v4300 = vld [vmem:[%s1461 + $0x9c] sm:$0xff]
  %v4301 = vld [vmem:[%s1461 + $0xa4] sm:$0xf]
  %v4302 = vld [vmem:[%s1461 + $0xa8] sm:$0xff]
  %v4303 = vld [vmem:[%s1461 + $0xb0] sm:$0xf]
  %v4304 = vld [vmem:[%s1461 + $0xb4] sm:$0xff]
  %v4305 = vld [vmem:[%s1461 + $0xbc] sm:$0xf]
  %v4306 = vld [vmem:[%s1461 + $0xc0] sm:$0xff]
  %v4307 = vld [vmem:[%s1461 + $0xc8] sm:$0xf]
  %v4308 = vld [vmem:[%s1461 + $0xcc] sm:$0xff]
  %v4309 = vld [vmem:[%s1461 + $0xd4] sm:$0xf]
  %v4310 = vld [vmem:[%s1461 + $0xd8] sm:$0xff]
  %v4311 = vld [vmem:[%s1461 + $0xe0] sm:$0xf]
  %v4312 = vld [vmem:[%s1461 + $0xe4] sm:$0xff]
  %v4313 = vld [vmem:[%s1461 + $0xec] sm:$0xf]
  %v4314 = vld [vmem:[%s1461 + $0xf0] sm:$0xff]
  %v4315 = vld [vmem:[%s1461 + $0xf8] sm:$0xf]
  %v4316 = vld [vmem:[%s1461 + $0xfc] sm:$0xff]
  %v4317 = vld [vmem:[%s1461 + $0x104] sm:$0xf]
  %v4318 = vld [vmem:[%s1461 + $0x108] sm:$0xff]
  %v4319 = vld [vmem:[%s1461 + $0x110] sm:$0xf]
  %v4320 = vld [vmem:[%s1461 + $0x114] sm:$0xff]
  %v4321 = vld [vmem:[%s1461 + $0x11c] sm:$0xf]
  %v4322 = vld [vmem:[%s1461 + $0x120] sm:$0xff]
  %v4323 = vld [vmem:[%s1461 + $0x128] sm:$0xf]
  %v4324 = vld [vmem:[%s1461 + $0x12c] sm:$0xff]
  %v4325 = vld [vmem:[%s1461 + $0x134] sm:$0xf]
  %v4326 = vrot.slane %v2951, 2
  %v4327 = vrot.slane %v2952, 2
  %v4381 = vunpack.c.l.b16 %v4274
  %v4382 = vunpack.c.h.b16 %v4274
  %v4383 = vunpack.c.l.b16 %v4275
  %v4384 = vunpack.c.l.b16 %v4276
  %v4385 = vunpack.c.h.b16 %v4276
  %v4386 = vunpack.c.l.b16 %v4277
  %v4387 = vunpack.c.l.b16 %v4278
  %v4388 = vunpack.c.h.b16 %v4278
  %v4389 = vunpack.c.l.b16 %v4279
  %v4390 = vunpack.c.l.b16 %v4280
  %v4391 = vunpack.c.h.b16 %v4280
  %v4392 = vunpack.c.l.b16 %v4281
  %v4393 = vunpack.c.l.b16 %v4282
  %v4394 = vunpack.c.h.b16 %v4282
  %v4395 = vunpack.c.l.b16 %v4283
  %v4396 = vunpack.c.l.b16 %v4284
  %v4397 = vunpack.c.h.b16 %v4284
  %v4398 = vunpack.c.l.b16 %v4285
  %v4399 = vunpack.c.l.b16 %v4286
  %v4400 = vunpack.c.h.b16 %v4286
  %v4401 = vunpack.c.l.b16 %v4287
  %v4402 = vunpack.c.l.b16 %v4288
  %v4403 = vunpack.c.h.b16 %v4288
  %v4404 = vunpack.c.l.b16 %v4289
  %v4405 = vunpack.c.l.b16 %v4290
  %v4406 = vunpack.c.h.b16 %v4290
  %v4407 = vunpack.c.l.b16 %v4291
  %v4408 = vunpack.c.l.b16 %v4292
  %v4409 = vunpack.c.h.b16 %v4292
  %v4410 = vunpack.c.l.b16 %v4293
  %v4411 = vunpack.c.l.b16 %v4294
  %v4412 = vunpack.c.h.b16 %v4294
  %v4413 = vunpack.c.l.b16 %v4295
  %v4414 = vunpack.c.l.b16 %v4296
  %v4415 = vunpack.c.h.b16 %v4296
  %v4416 = vunpack.c.l.b16 %v4297
  %v4417 = vunpack.c.l.b16 %v4298
  %v4418 = vunpack.c.h.b16 %v4298
  %v4419 = vunpack.c.l.b16 %v4299
  %v4420 = vunpack.c.l.b16 %v4300
  %v4421 = vunpack.c.h.b16 %v4300
  %v4422 = vunpack.c.l.b16 %v4301
  %v4423 = vunpack.c.l.b16 %v4302
  %v4424 = vunpack.c.h.b16 %v4302
  %v4425 = vunpack.c.l.b16 %v4303
  %v4426 = vunpack.c.l.b16 %v4304
  %v4427 = vunpack.c.h.b16 %v4304
  %v4428 = vunpack.c.l.b16 %v4305
  %v4429 = vunpack.c.l.b16 %v4306
  %v4430 = vunpack.c.h.b16 %v4306
  %v4431 = vunpack.c.l.b16 %v4307
  %v4432 = vunpack.c.l.b16 %v4308
  %v4433 = vunpack.c.h.b16 %v4308
  %v4434 = vunpack.c.l.b16 %v4309
  %v4435 = vunpack.c.l.b16 %v4310
  %v4436 = vunpack.c.h.b16 %v4310
  %v4437 = vunpack.c.l.b16 %v4311
  %v4438 = vunpack.c.l.b16 %v4312
  %v4439 = vunpack.c.h.b16 %v4312
  %v4440 = vunpack.c.l.b16 %v4313
  %v4441 = vunpack.c.l.b16 %v4314
  %v4442 = vunpack.c.h.b16 %v4314
  %v4443 = vunpack.c.l.b16 %v4315
  %v4444 = vunpack.c.l.b16 %v4316
  %v4445 = vunpack.c.h.b16 %v4316
  %v4446 = vunpack.c.l.b16 %v4317
  %v4447 = vunpack.c.l.b16 %v4318
  %v4448 = vunpack.c.h.b16 %v4318
  %v4449 = vunpack.c.l.b16 %v4319
  %v4450 = vunpack.c.l.b16 %v4320
  %v4451 = vunpack.c.h.b16 %v4320
  %v4452 = vunpack.c.l.b16 %v4321
  %v4453 = vunpack.c.l.b16 %v4322
  %v4454 = vunpack.c.h.b16 %v4322
  %v4455 = vunpack.c.l.b16 %v4323
  %v4456 = vunpack.c.l.b16 %v4324
  %v4457 = vunpack.c.h.b16 %v4324
  %v4458 = vunpack.c.l.b16 %v4325
  %v4459 = vpack.c.b16 %v4384, %v4381
  %v4460 = vpack.c.b16 %v4385, %v4382
  %v4461 = vpack.c.b16 %v4386, %v4383
  %v4462 = vpack.c.b16 %v4390, %v4387
  %v4463 = vpack.c.b16 %v4391, %v4388
  %v4464 = vpack.c.b16 %v4392, %v4389
  %v4465 = vpack.c.b16 %v4396, %v4393
  %v4466 = vpack.c.b16 %v4397, %v4394
  %v4467 = vpack.c.b16 %v4398, %v4395
  %v4468 = vpack.c.b16 %v4402, %v4399
  %v4469 = vpack.c.b16 %v4403, %v4400
  %v4470 = vpack.c.b16 %v4404, %v4401
  %v4471 = vpack.c.b16 %v4408, %v4405
  %v4472 = vpack.c.b16 %v4409, %v4406
  %v4473 = vpack.c.b16 %v4410, %v4407
  %v4474 = vpack.c.b16 %v4414, %v4411
  %v4475 = vpack.c.b16 %v4415, %v4412
  %v4476 = vpack.c.b16 %v4416, %v4413
  %v4477 = vpack.c.b16 %v4420, %v4417
  %v4478 = vpack.c.b16 %v4421, %v4418
  %v4479 = vpack.c.b16 %v4422, %v4419
  %v4480 = vpack.c.b16 %v4426, %v4423
  %v4481 = vpack.c.b16 %v4427, %v4424
  %v4482 = vpack.c.b16 %v4428, %v4425
  %v4483 = vpack.c.b16 %v4432, %v4429
  %v4484 = vpack.c.b16 %v4433, %v4430
  %v4485 = vpack.c.b16 %v4434, %v4431
  %v4486 = vpack.c.b16 %v4438, %v4435
  %v4487 = vpack.c.b16 %v4439, %v4436
  %v4488 = vpack.c.b16 %v4440, %v4437
  %v4489 = vpack.c.b16 %v4444, %v4441
  %v4490 = vpack.c.b16 %v4445, %v4442
  %v4491 = vpack.c.b16 %v4446, %v4443
  %v4492 = vpack.c.b16 %v4450, %v4447
  %v4493 = vpack.c.b16 %v4451, %v4448
  %v4494 = vpack.c.b16 %v4452, %v4449
  %v4495 = vpack.c.b16 %v4456, %v4453
  %v4496 = vpack.c.b16 %v4457, %v4454
  %v4497 = vpack.c.b16 %v4458, %v4455
  %v4538 = vsel %vm360, %v4327, 0
  %4540 = vmatprep.subr.bf16.mxu0 %v4460
  %4541 = vmatpush1.bf16.msra.mxu0 %v4459
  %4542 = vmatprep.subr.bf16.mxu0 %v4463
  %4543 = vmatpush1.bf16.msra.mxu0 %v4462
  %4544 = vmatprep.subr.bf16.mxu0 %v4466
  %4545 = vmatpush1.bf16.msra.mxu0 %v4465
  %4546 = vmatprep.subr.bf16.mxu0 %v4469
  %4547 = vmatpush1.bf16.msra.mxu0 %v4468
  %4548 = vmatprep.subr.bf16.mxu0 %v4472
  %4549 = vmatpush1.bf16.msra.mxu0 %v4471
  %4550 = vmatprep.subr.bf16.mxu0 %v4475
  %4551 = vmatpush1.bf16.msra.mxu0 %v4474
  %4552 = vmatprep.subr.bf16.mxu0 %v4478
  %4553 = vmatpush1.bf16.msra.mxu0 %v4477
  %4554 = vmatprep.subr.bf16.mxu0 %v4481
  %4555 = vmatpush1.bf16.msra.mxu0 %v4480
  %4556 = vmatprep.subr.bf16.mxu0 %v4484
  %4557 = vmatpush1.bf16.msra.mxu0 %v4483
  %4558 = vmatprep.subr.bf16.mxu0 %v4487
  %4559 = vmatpush1.bf16.msra.mxu0 %v4486
  %4560 = vmatprep.subr.bf16.mxu0 %v4490
  %4561 = vmatpush1.bf16.msra.mxu0 %v4489
  %4562 = vmatprep.subr.bf16.mxu0 %v4493
  %4563 = vmatpush1.bf16.msra.mxu0 %v4492
  %4564 = vmatprep.subr.bf16.mxu0 %v4496
  %4565 = vmatpush1.bf16.msra.mxu0 %v4495
  %4566 = vmatprep.subr.bf16.mxu0 0
  %4567 = vmatpush1.bf16.msra.mxu0 0
  %4568 = vmatprep.subr.bf16.mxu0 0
  %4569 = vmatpush1.bf16.msra.mxu0 0
  %4570 = vmatprep.subr.bf16.mxu0 0
  %4571 = vmatpush1.bf16.msra.mxu0 0
  %4572 = vmatprep.mubr.bf16.mxu0 %v4538
  %4573 = vmatmul.mubr.bf16.gmra.mrb[0].mxu0 %v4326
  %v4574 = vpop.f32.mrb[0].mxu0
  %v4575 = vadd.f32 0.0, %v4574
  %v4576 = vpop.f32.mrb[0].mxu0
  %v4577 = vadd.f32 0.0, %v4576
  %v4578 = vpop.f32.mrb[0].mxu0
  %v4579 = vadd.f32 0.0, %v4578
  %v4580 = vpop.f32.mrb[0].mxu0
  %v4581 = vadd.f32 0.0, %v4580
  %4582 = vdwg.mxu0
  %4583 = vmatprep.subr.bf16.mxu0 0
  %4584 = vmatpush1.bf16.msra.mxu0 %v4461
  %4585 = vmatprep.subr.bf16.mxu0 0
  %4586 = vmatpush1.bf16.msra.mxu0 %v4464
  %4587 = vmatprep.subr.bf16.mxu0 0
  %4588 = vmatpush1.bf16.msra.mxu0 %v4467
  %4589 = vmatprep.subr.bf16.mxu0 0
  %4590 = vmatpush1.bf16.msra.mxu0 %v4470
  %4591 = vmatprep.subr.bf16.mxu0 0
  %4592 = vmatpush1.bf16.msra.mxu0 %v4473
  %4593 = vmatprep.subr.bf16.mxu0 0
  %4594 = vmatpush1.bf16.msra.mxu0 %v4476
  %4595 = vmatprep.subr.bf16.mxu0 0
  %4596 = vmatpush1.bf16.msra.mxu0 %v4479
  %4597 = vmatprep.subr.bf16.mxu0 0
  %4598 = vmatpush1.bf16.msra.mxu0 %v4482
  %4599 = vmatprep.subr.bf16.mxu0 0
  %4600 = vmatpush1.bf16.msra.mxu0 %v4485
  %4601 = vmatprep.subr.bf16.mxu0 0
  %4602 = vmatpush1.bf16.msra.mxu0 %v4488
  %4603 = vmatprep.subr.bf16.mxu0 0
  %4604 = vmatpush1.bf16.msra.mxu0 %v4491
  %4605 = vmatprep.subr.bf16.mxu0 0
  %4606 = vmatpush1.bf16.msra.mxu0 %v4494
  %4607 = vmatprep.subr.bf16.mxu0 0
  %4608 = vmatpush1.bf16.msra.mxu0 %v4497
  %4609 = vmatprep.subr.bf16.mxu0 0
  %4610 = vmatpush1.bf16.msra.mxu0 0
  %4611 = vmatprep.subr.bf16.mxu0 0
  %4612 = vmatpush1.bf16.msra.mxu0 0
  %4613 = vmatprep.subr.bf16.mxu0 0
  %4614 = vmatpush1.bf16.msra.mxu0 0
  %4615 = vmatprep.mubr.bf16.mxu0 %v4538
  %4616 = vmatmul.mubr.bf16.gmra.mrb[0].mxu0 %v4326
  %v4617 = vpop.f32.mrb[0].mxu0
  %v4618 = vadd.f32 0.0, %v4617
  %v4619 = vpop.f32.mrb[0].mxu0
  %v4620 = vpop.f32.mrb[0].mxu0
  %v4621 = vadd.f32 0.0, %v4620
  %v4622 = vpop.f32.mrb[0].mxu0
  %4623 = vdwg.mxu0
  %v4624 = vadd.f32 %v4268, %v4575
  %v4625 = vadd.f32 %v4269, %v4577
  %v4626 = vadd.f32 %v4270, %v4618
  %v4627 = vadd.f32 %v4271, %v4579
  %v4628 = vadd.f32 %v4272, %v4581
  %v4629 = vadd.f32 %v4273, %v4621
  %v4630 = vadd.f32 %v4624, %v1822
  %v4631 = vadd.f32 %v4625, %v1826
  %v4632 = vadd.f32 %v4626, %v1830
  %v4633 = vadd.f32 %v4627, %v1822
  %v4634 = vadd.f32 %v4628, %v1826
  %v4635 = vadd.f32 %v4629, %v1830
  %v4636 = vmax.f32 %v4630, 0.0
  %v4637 = vmax.f32 %v4631, 0.0
  %v4638 = vmax.f32 %v4632, 0.0
  %v4639 = vmax.f32 %v4633, 0.0
  %v4640 = vmax.f32 %v4634, 0.0
  %v4641 = vmax.f32 %v4635, 0.0
  %v4642 = vld [vmem:[%s3] sm:$0xf]
  %v4644 = vsel %vm1847, %v4642, 0
  %v4647 = vsel %vm1851, %v4639, 0
  %v4650 = vsel %vm1851, %v4640, 0
  %v4653 = vsel %vm1851, %v4641, 0
  %4655 = vmatprep.subr.mxu0 %v4637
  %4656 = vmatpush1.msra.mxu0 %v4636
  %4657 = vmatprep.subr.mxu0 %v4650
  %4658 = vmatpush1.msra.mxu0 %v4647
  %4659 = vmatprep.subr.mxu0 0.0
  %4660 = vmatpush1.msra.mxu0 0.0
  %4661 = vmatprep.subr.mxu0 0.0
  %4662 = vmatpush1.msra.mxu0 0.0
  %4663 = vmatprep.subr.mxu0 0.0
  %4664 = vmatpush1.msra.mxu0 0.0
  %4665 = vmatprep.subr.mxu0 0.0
  %4666 = vmatpush1.msra.mxu0 0.0
  %4667 = vmatprep.subr.mxu0 0.0
  %4668 = vmatpush1.msra.mxu0 0.0
  %4669 = vmatprep.subr.mxu0 0.0
  %4670 = vmatpush1.msra.mxu0 0.0
  %4671 = vmatprep.subr.mxu0 0.0
  %4672 = vmatpush1.msra.mxu0 0.0
  %4673 = vmatprep.subr.mxu0 0.0
  %4674 = vmatpush1.msra.mxu0 0.0
  %4675 = vmatprep.subr.mxu0 0.0
  %4676 = vmatpush1.msra.mxu0 0.0
  %4677 = vmatprep.subr.mxu0 0.0
  %4678 = vmatpush1.msra.mxu0 0.0
  %4679 = vmatprep.subr.mxu0 0.0
  %4680 = vmatpush1.msra.mxu0 0.0
  %4681 = vmatprep.subr.mxu0 0.0
  %4682 = vmatpush1.msra.mxu0 0.0
  %4683 = vmatprep.subr.mxu0 0.0
  %4684 = vmatpush1.msra.mxu0 0.0
  %4685 = vmatprep.subr.mxu0 0.0
  %4686 = vmatpush1.msra.mxu0 0.0
  %4687 = vmatprep.subr.mxu0 0.0
  %4688 = vmatpush1.msra.mxu0 0.0
  %4689 = vmatprep.subr.mxu0 0.0
  %4690 = vmatpush1.msra.mxu0 0.0
  %4691 = vmatprep.subr.mxu0 0.0
  %4692 = vmatpush1.msra.mxu0 0.0
  %4693 = vmatprep.subr.mxu0 0.0
  %4694 = vmatpush1.msra.mxu0 0.0
  %4695 = vmatprep.subr.mxu0 0.0
  %4696 = vmatpush1.msra.mxu0 0.0
  %4697 = vmatprep.subr.mxu0 0.0
  %4698 = vmatpush1.msra.mxu0 0.0
  %4699 = vmatprep.subr.mxu0 0.0
  %4700 = vmatpush1.msra.mxu0 0.0
  %4701 = vmatprep.subr.mxu0 0.0
  %4702 = vmatpush1.msra.mxu0 0.0
  %4703 = vmatprep.subr.mxu0 0.0
  %4704 = vmatpush1.msra.mxu0 0.0
  %4705 = vmatprep.subr.mxu0 0.0
  %4706 = vmatpush1.msra.mxu0 0.0
  %4707 = vmatprep.subr.mxu0 0.0
  %4708 = vmatpush1.msra.mxu0 0.0
  %4709 = vmatprep.subr.mxu0 0.0
  %4710 = vmatpush1.msra.mxu0 0.0
  %4711 = vmatprep.subr.mxu0 0.0
  %4712 = vmatpush1.msra.mxu0 0.0
  %4713 = vmatprep.subr.mxu0 0.0
  %4714 = vmatpush1.msra.mxu0 0.0
  %4715 = vmatprep.subr.mxu0 0.0
  %4716 = vmatpush1.msra.mxu0 0.0
  %4717 = vmatprep.subr.mxu0 0.0
  %4718 = vmatpush1.msra.mxu0 0.0
  %4719 = vmatprep.mubr.f32.mxu0 0.0
  %4720 = vmatmul.mubr.f32.gmra.mrb[0].mxu0 %v4644
  %v4721 = vpop.f32.mrb[0].mxu0
  %v4722 = vadd.f32 0.0, %v4721
  %v4723 = vpop.f32.mrb[0].mxu0
  %v4724 = vadd.f32 0.0, %v4723
  %4725 = vdwg.mxu0
  %4726 = vmatprep.subr.mxu0 0.0
  %4727 = vmatpush1.msra.mxu0 %v4638
  %4728 = vmatprep.subr.mxu0 0.0
  %4729 = vmatpush1.msra.mxu0 %v4653
  %4730 = vmatprep.subr.mxu0 0.0
  %4731 = vmatpush1.msra.mxu0 0.0
  %4732 = vmatprep.subr.mxu0 0.0
  %4733 = vmatpush1.msra.mxu0 0.0
  %4734 = vmatprep.subr.mxu0 0.0
  %4735 = vmatpush1.msra.mxu0 0.0
  %4736 = vmatprep.subr.mxu0 0.0
  %4737 = vmatpush1.msra.mxu0 0.0
  %4738 = vmatprep.subr.mxu0 0.0
  %4739 = vmatpush1.msra.mxu0 0.0
  %4740 = vmatprep.subr.mxu0 0.0
  %4741 = vmatpush1.msra.mxu0 0.0
  %4742 = vmatprep.subr.mxu0 0.0
  %4743 = vmatpush1.msra.mxu0 0.0
  %4744 = vmatprep.subr.mxu0 0.0
  %4745 = vmatpush1.msra.mxu0 0.0
  %4746 = vmatprep.subr.mxu0 0.0
  %4747 = vmatpush1.msra.mxu0 0.0
  %4748 = vmatprep.subr.mxu0 0.0
  %4749 = vmatpush1.msra.mxu0 0.0
  %4750 = vmatprep.subr.mxu0 0.0
  %4751 = vmatpush1.msra.mxu0 0.0
  %4752 = vmatprep.subr.mxu0 0.0
  %4753 = vmatpush1.msra.mxu0 0.0
  %4754 = vmatprep.subr.mxu0 0.0
  %4755 = vmatpush1.msra.mxu0 0.0
  %4756 = vmatprep.subr.mxu0 0.0
  %4757 = vmatpush1.msra.mxu0 0.0
  %4758 = vmatprep.subr.mxu0 0.0
  %4759 = vmatpush1.msra.mxu0 0.0
  %4760 = vmatprep.subr.mxu0 0.0
  %4761 = vmatpush1.msra.mxu0 0.0
  %4762 = vmatprep.subr.mxu0 0.0
  %4763 = vmatpush1.msra.mxu0 0.0
  %4764 = vmatprep.subr.mxu0 0.0
  %4765 = vmatpush1.msra.mxu0 0.0
  %4766 = vmatprep.subr.mxu0 0.0
  %4767 = vmatpush1.msra.mxu0 0.0
  %4768 = vmatprep.subr.mxu0 0.0
  %4769 = vmatpush1.msra.mxu0 0.0
  %4770 = vmatprep.subr.mxu0 0.0
  %4771 = vmatpush1.msra.mxu0 0.0
  %4772 = vmatprep.subr.mxu0 0.0
  %4773 = vmatpush1.msra.mxu0 0.0
  %4774 = vmatprep.subr.mxu0 0.0
  %4775 = vmatpush1.msra.mxu0 0.0
  %4776 = vmatprep.subr.mxu0 0.0
  %4777 = vmatpush1.msra.mxu0 0.0
  %4778 = vmatprep.subr.mxu0 0.0
  %4779 = vmatpush1.msra.mxu0 0.0
  %4780 = vmatprep.subr.mxu0 0.0
  %4781 = vmatpush1.msra.mxu0 0.0
  %4782 = vmatprep.subr.mxu0 0.0
  %4783 = vmatpush1.msra.mxu0 0.0
  %4784 = vmatprep.subr.mxu0 0.0
  %4785 = vmatpush1.msra.mxu0 0.0
  %4786 = vmatprep.subr.mxu0 0.0
  %4787 = vmatpush1.msra.mxu0 0.0
  %4788 = vmatprep.subr.mxu0 0.0
  %4789 = vmatpush1.msra.mxu0 0.0
  %4790 = vmatprep.mubr.f32.mxu0 0.0
  %4791 = vmatmul.mubr.f32.gmra.mrb[0].mxu0 %v4644
  %v4792 = vpop.f32.mrb[0].mxu0
  %v4793 = vadd.f32 0.0, %v4792
  %v4794 = vpop.f32.mrb[0].mxu0
  %4795 = vdwg.mxu0
  %v4796 = vld [vmem:[%s2002] sm:$0xf]
  %v4798 = vsel %vm1847, %v4796, 0
  %4800 = vmatprep.subr.mxu0 %v4637
  %4801 = vmatpush1.msra.mxu0 %v4636
  %4802 = vmatprep.subr.mxu0 %v4650
  %4803 = vmatpush1.msra.mxu0 %v4647
  %4804 = vmatprep.subr.mxu0 0.0
  %4805 = vmatpush1.msra.mxu0 0.0
  %4806 = vmatprep.subr.mxu0 0.0
  %4807 = vmatpush1.msra.mxu0 0.0
  %4808 = vmatprep.subr.mxu0 0.0
  %4809 = vmatpush1.msra.mxu0 0.0
  %4810 = vmatprep.subr.mxu0 0.0
  %4811 = vmatpush1.msra.mxu0 0.0
  %4812 = vmatprep.subr.mxu0 0.0
  %4813 = vmatpush1.msra.mxu0 0.0
  %4814 = vmatprep.subr.mxu0 0.0
  %4815 = vmatpush1.msra.mxu0 0.0
  %4816 = vmatprep.subr.mxu0 0.0
  %4817 = vmatpush1.msra.mxu0 0.0
  %4818 = vmatprep.subr.mxu0 0.0
  %4819 = vmatpush1.msra.mxu0 0.0
  %4820 = vmatprep.subr.mxu0 0.0
  %4821 = vmatpush1.msra.mxu0 0.0
  %4822 = vmatprep.subr.mxu0 0.0
  %4823 = vmatpush1.msra.mxu0 0.0
  %4824 = vmatprep.subr.mxu0 0.0
  %4825 = vmatpush1.msra.mxu0 0.0
  %4826 = vmatprep.subr.mxu0 0.0
  %4827 = vmatpush1.msra.mxu0 0.0
  %4828 = vmatprep.subr.mxu0 0.0
  %4829 = vmatpush1.msra.mxu0 0.0
  %4830 = vmatprep.subr.mxu0 0.0
  %4831 = vmatpush1.msra.mxu0 0.0
  %4832 = vmatprep.subr.mxu0 0.0
  %4833 = vmatpush1.msra.mxu0 0.0
  %4834 = vmatprep.subr.mxu0 0.0
  %4835 = vmatpush1.msra.mxu0 0.0
  %4836 = vmatprep.subr.mxu0 0.0
  %4837 = vmatpush1.msra.mxu0 0.0
  %4838 = vmatprep.subr.mxu0 0.0
  %4839 = vmatpush1.msra.mxu0 0.0
  %4840 = vmatprep.subr.mxu0 0.0
  %4841 = vmatpush1.msra.mxu0 0.0
  %4842 = vmatprep.subr.mxu0 0.0
  %4843 = vmatpush1.msra.mxu0 0.0
  %4844 = vmatprep.subr.mxu0 0.0
  %4845 = vmatpush1.msra.mxu0 0.0
  %4846 = vmatprep.subr.mxu0 0.0
  %4847 = vmatpush1.msra.mxu0 0.0
  %4848 = vmatprep.subr.mxu0 0.0
  %4849 = vmatpush1.msra.mxu0 0.0
  %4850 = vmatprep.subr.mxu0 0.0
  %4851 = vmatpush1.msra.mxu0 0.0
  %4852 = vmatprep.subr.mxu0 0.0
  %4853 = vmatpush1.msra.mxu0 0.0
  %4854 = vmatprep.subr.mxu0 0.0
  %4855 = vmatpush1.msra.mxu0 0.0
  %4856 = vmatprep.subr.mxu0 0.0
  %4857 = vmatpush1.msra.mxu0 0.0
  %4858 = vmatprep.subr.mxu0 0.0
  %4859 = vmatpush1.msra.mxu0 0.0
  %4860 = vmatprep.subr.mxu0 0.0
  %4861 = vmatpush1.msra.mxu0 0.0
  %4862 = vmatprep.subr.mxu0 0.0
  %4863 = vmatpush1.msra.mxu0 0.0
  %4864 = vmatprep.mubr.f32.mxu0 0.0
  %4865 = vmatmul.mubr.f32.gmra.mrb[0].mxu0 %v4798
  %v4866 = vpop.f32.mrb[0].mxu0
  %v4867 = vadd.f32 0.0, %v4866
  %v4868 = vpop.f32.mrb[0].mxu0
  %v4869 = vadd.f32 0.0, %v4868
  %4870 = vdwg.mxu0
  %4871 = vmatprep.subr.mxu0 0.0
  %4872 = vmatpush1.msra.mxu0 %v4638
  %4873 = vmatprep.subr.mxu0 0.0
  %4874 = vmatpush1.msra.mxu0 %v4653
  %4875 = vmatprep.subr.mxu0 0.0
  %4876 = vmatpush1.msra.mxu0 0.0
  %4877 = vmatprep.subr.mxu0 0.0
  %4878 = vmatpush1.msra.mxu0 0.0
  %4879 = vmatprep.subr.mxu0 0.0
  %4880 = vmatpush1.msra.mxu0 0.0
  %4881 = vmatprep.subr.mxu0 0.0
  %4882 = vmatpush1.msra.mxu0 0.0
  %4883 = vmatprep.subr.mxu0 0.0
  %4884 = vmatpush1.msra.mxu0 0.0
  %4885 = vmatprep.subr.mxu0 0.0
  %4886 = vmatpush1.msra.mxu0 0.0
  %4887 = vmatprep.subr.mxu0 0.0
  %4888 = vmatpush1.msra.mxu0 0.0
  %4889 = vmatprep.subr.mxu0 0.0
  %4890 = vmatpush1.msra.mxu0 0.0
  %4891 = vmatprep.subr.mxu0 0.0
  %4892 = vmatpush1.msra.mxu0 0.0
  %4893 = vmatprep.subr.mxu0 0.0
  %4894 = vmatpush1.msra.mxu0 0.0
  %4895 = vmatprep.subr.mxu0 0.0
  %4896 = vmatpush1.msra.mxu0 0.0
  %4897 = vmatprep.subr.mxu0 0.0
  %4898 = vmatpush1.msra.mxu0 0.0
  %4899 = vmatprep.subr.mxu0 0.0
  %4900 = vmatpush1.msra.mxu0 0.0
  %4901 = vmatprep.subr.mxu0 0.0
  %4902 = vmatpush1.msra.mxu0 0.0
  %4903 = vmatprep.subr.mxu0 0.0
  %4904 = vmatpush1.msra.mxu0 0.0
  %4905 = vmatprep.subr.mxu0 0.0
  %4906 = vmatpush1.msra.mxu0 0.0
  %4907 = vmatprep.subr.mxu0 0.0
  %4908 = vmatpush1.msra.mxu0 0.0
  %4909 = vmatprep.subr.mxu0 0.0
  %4910 = vmatpush1.msra.mxu0 0.0
  %4911 = vmatprep.subr.mxu0 0.0
  %4912 = vmatpush1.msra.mxu0 0.0
  %4913 = vmatprep.subr.mxu0 0.0
  %4914 = vmatpush1.msra.mxu0 0.0
  %4915 = vmatprep.subr.mxu0 0.0
  %4916 = vmatpush1.msra.mxu0 0.0
  %4917 = vmatprep.subr.mxu0 0.0
  %4918 = vmatpush1.msra.mxu0 0.0
  %4919 = vmatprep.subr.mxu0 0.0
  %4920 = vmatpush1.msra.mxu0 0.0
  %4921 = vmatprep.subr.mxu0 0.0
  %4922 = vmatpush1.msra.mxu0 0.0
  %4923 = vmatprep.subr.mxu0 0.0
  %4924 = vmatpush1.msra.mxu0 0.0
  %4925 = vmatprep.subr.mxu0 0.0
  %4926 = vmatpush1.msra.mxu0 0.0
  %4927 = vmatprep.subr.mxu0 0.0
  %4928 = vmatpush1.msra.mxu0 0.0
  %4929 = vmatprep.subr.mxu0 0.0
  %4930 = vmatpush1.msra.mxu0 0.0
  %4931 = vmatprep.subr.mxu0 0.0
  %4932 = vmatpush1.msra.mxu0 0.0
  %4933 = vmatprep.subr.mxu0 0.0
  %4934 = vmatpush1.msra.mxu0 0.0
  %4935 = vmatprep.mubr.f32.mxu0 0.0
  %4936 = vmatmul.mubr.f32.gmra.mrb[0].mxu0 %v4798
  %v4937 = vpop.f32.mrb[0].mxu0
  %v4938 = vadd.f32 0.0, %v4937
  %v4939 = vpop.f32.mrb[0].mxu0
  %4940 = vdwg.mxu0
  %v4941 = vmax.f32 %v4722, %v4867
  %v4942 = vmax.f32 %v4724, %v4869
  %v4943 = vmax.f32 %v4793, %v4938
  %v4944 = vld [vmem:[%s2151] sm:$0xf]
  %v4946 = vsel %vm1847, %v4944, 0
  %4948 = vmatprep.subr.mxu0 %v4637
  %4949 = vmatpush1.msra.mxu0 %v4636
  %4950 = vmatprep.subr.mxu0 %v4650
  %4951 = vmatpush1.msra.mxu0 %v4647
  %4952 = vmatprep.subr.mxu0 0.0
  %4953 = vmatpush1.msra.mxu0 0.0
  %4954 = vmatprep.subr.mxu0 0.0
  %4955 = vmatpush1.msra.mxu0 0.0
  %4956 = vmatprep.subr.mxu0 0.0
  %4957 = vmatpush1.msra.mxu0 0.0
  %4958 = vmatprep.subr.mxu0 0.0
  %4959 = vmatpush1.msra.mxu0 0.0
  %4960 = vmatprep.subr.mxu0 0.0
  %4961 = vmatpush1.msra.mxu0 0.0
  %4962 = vmatprep.subr.mxu0 0.0
  %4963 = vmatpush1.msra.mxu0 0.0
  %4964 = vmatprep.subr.mxu0 0.0
  %4965 = vmatpush1.msra.mxu0 0.0
  %4966 = vmatprep.subr.mxu0 0.0
  %4967 = vmatpush1.msra.mxu0 0.0
  %4968 = vmatprep.subr.mxu0 0.0
  %4969 = vmatpush1.msra.mxu0 0.0
  %4970 = vmatprep.subr.mxu0 0.0
  %4971 = vmatpush1.msra.mxu0 0.0
  %4972 = vmatprep.subr.mxu0 0.0
  %4973 = vmatpush1.msra.mxu0 0.0
  %4974 = vmatprep.subr.mxu0 0.0
  %4975 = vmatpush1.msra.mxu0 0.0
  %4976 = vmatprep.subr.mxu0 0.0
  %4977 = vmatpush1.msra.mxu0 0.0
  %4978 = vmatprep.subr.mxu0 0.0
  %4979 = vmatpush1.msra.mxu0 0.0
  %4980 = vmatprep.subr.mxu0 0.0
  %4981 = vmatpush1.msra.mxu0 0.0
  %4982 = vmatprep.subr.mxu0 0.0
  %4983 = vmatpush1.msra.mxu0 0.0
  %4984 = vmatprep.subr.mxu0 0.0
  %4985 = vmatpush1.msra.mxu0 0.0
  %4986 = vmatprep.subr.mxu0 0.0
  %4987 = vmatpush1.msra.mxu0 0.0
  %4988 = vmatprep.subr.mxu0 0.0
  %4989 = vmatpush1.msra.mxu0 0.0
  %4990 = vmatprep.subr.mxu0 0.0
  %4991 = vmatpush1.msra.mxu0 0.0
  %4992 = vmatprep.subr.mxu0 0.0
  %4993 = vmatpush1.msra.mxu0 0.0
  %4994 = vmatprep.subr.mxu0 0.0
  %4995 = vmatpush1.msra.mxu0 0.0
  %4996 = vmatprep.subr.mxu0 0.0
  %4997 = vmatpush1.msra.mxu0 0.0
  %4998 = vmatprep.subr.mxu0 0.0
  %4999 = vmatpush1.msra.mxu0 0.0
  %5000 = vmatprep.subr.mxu0 0.0
  %5001 = vmatpush1.msra.mxu0 0.0
  %5002 = vmatprep.subr.mxu0 0.0
  %5003 = vmatpush1.msra.mxu0 0.0
  %5004 = vmatprep.subr.mxu0 0.0
  %5005 = vmatpush1.msra.mxu0 0.0
  %5006 = vmatprep.subr.mxu0 0.0
  %5007 = vmatpush1.msra.mxu0 0.0
  %5008 = vmatprep.subr.mxu0 0.0
  %5009 = vmatpush1.msra.mxu0 0.0
  %5010 = vmatprep.subr.mxu0 0.0
  %5011 = vmatpush1.msra.mxu0 0.0
  %5012 = vmatprep.mubr.f32.mxu0 0.0
  %5013 = vmatmul.mubr.f32.gmra.mrb[0].mxu0 %v4946
  %v5014 = vpop.f32.mrb[0].mxu0
  %v5015 = vadd.f32 0.0, %v5014
  %v5016 = vpop.f32.mrb[0].mxu0
  %v5017 = vadd.f32 0.0, %v5016
  %5018 = vdwg.mxu0
  %5019 = vmatprep.subr.mxu0 0.0
  %5020 = vmatpush1.msra.mxu0 %v4638
  %5021 = vmatprep.subr.mxu0 0.0
  %5022 = vmatpush1.msra.mxu0 %v4653
  %5023 = vmatprep.subr.mxu0 0.0
  %5024 = vmatpush1.msra.mxu0 0.0
  %5025 = vmatprep.subr.mxu0 0.0
  %5026 = vmatpush1.msra.mxu0 0.0
  %5027 = vmatprep.subr.mxu0 0.0
  %5028 = vmatpush1.msra.mxu0 0.0
  %5029 = vmatprep.subr.mxu0 0.0
  %5030 = vmatpush1.msra.mxu0 0.0
  %5031 = vmatprep.subr.mxu0 0.0
  %5032 = vmatpush1.msra.mxu0 0.0
  %5033 = vmatprep.subr.mxu0 0.0
  %5034 = vmatpush1.msra.mxu0 0.0
  %5035 = vmatprep.subr.mxu0 0.0
  %5036 = vmatpush1.msra.mxu0 0.0
  %5037 = vmatprep.subr.mxu0 0.0
  %5038 = vmatpush1.msra.mxu0 0.0
  %5039 = vmatprep.subr.mxu0 0.0
  %5040 = vmatpush1.msra.mxu0 0.0
  %5041 = vmatprep.subr.mxu0 0.0
  %5042 = vmatpush1.msra.mxu0 0.0
  %5043 = vmatprep.subr.mxu0 0.0
  %5044 = vmatpush1.msra.mxu0 0.0
  %5045 = vmatprep.subr.mxu0 0.0
  %5046 = vmatpush1.msra.mxu0 0.0
  %5047 = vmatprep.subr.mxu0 0.0
  %5048 = vmatpush1.msra.mxu0 0.0
  %5049 = vmatprep.subr.mxu0 0.0
  %5050 = vmatpush1.msra.mxu0 0.0
  %5051 = vmatprep.subr.mxu0 0.0
  %5052 = vmatpush1.msra.mxu0 0.0
  %5053 = vmatprep.subr.mxu0 0.0
  %5054 = vmatpush1.msra.mxu0 0.0
  %5055 = vmatprep.subr.mxu0 0.0
  %5056 = vmatpush1.msra.mxu0 0.0
  %5057 = vmatprep.subr.mxu0 0.0
  %5058 = vmatpush1.msra.mxu0 0.0
  %5059 = vmatprep.subr.mxu0 0.0
  %5060 = vmatpush1.msra.mxu0 0.0
  %5061 = vmatprep.subr.mxu0 0.0
  %5062 = vmatpush1.msra.mxu0 0.0
  %5063 = vmatprep.subr.mxu0 0.0
  %5064 = vmatpush1.msra.mxu0 0.0
  %5065 = vmatprep.subr.mxu0 0.0
  %5066 = vmatpush1.msra.mxu0 0.0
  %5067 = vmatprep.subr.mxu0 0.0
  %5068 = vmatpush1.msra.mxu0 0.0
  %5069 = vmatprep.subr.mxu0 0.0
  %5070 = vmatpush1.msra.mxu0 0.0
  %5071 = vmatprep.subr.mxu0 0.0
  %5072 = vmatpush1.msra.mxu0 0.0
  %5073 = vmatprep.subr.mxu0 0.0
  %5074 = vmatpush1.msra.mxu0 0.0
  %5075 = vmatprep.subr.mxu0 0.0
  %5076 = vmatpush1.msra.mxu0 0.0
  %5077 = vmatprep.subr.mxu0 0.0
  %5078 = vmatpush1.msra.mxu0 0.0
  %5079 = vmatprep.subr.mxu0 0.0
  %5080 = vmatpush1.msra.mxu0 0.0
  %5081 = vmatprep.subr.mxu0 0.0
  %5082 = vmatpush1.msra.mxu0 0.0
  %5083 = vmatprep.mubr.f32.mxu0 0.0
  %5084 = vmatmul.mubr.f32.gmra.mrb[0].mxu0 %v4946
  %v5085 = vpop.f32.mrb[0].mxu0
  %v5086 = vadd.f32 0.0, %v5085
  %v5087 = vpop.f32.mrb[0].mxu0
  %5088 = vdwg.mxu0
  %v5089 = vmax.f32 %v4941, %v5015
  %v5090 = vmax.f32 %v4942, %v5017
  %v5091 = vmax.f32 %v4943, %v5086
  %v5092 = vld [vmem:[%s4] sm:$0xff]
  %v5093 = vld [vmem:[%s4 + $0x8] sm:$0xff]
  %v5094 = vld [vmem:[%s4 + $0x10] sm:$0xff]
  %v5095 = vld [vmem:[%s4 + $0x18] sm:$0xff]
  %v5096 = vld [vmem:[%s4 + $0x20] sm:$0xff]
  %v5097 = vld [vmem:[%s4 + $0x28] sm:$0xff]
  %v5098 = vld [vmem:[%s4 + $0x30] sm:$0xff]
  %v5099 = vld [vmem:[%s4 + $0x38] sm:$0xff]
  %v5100 = vld [vmem:[%s4 + $0x40] sm:$0xff]
  %v5101 = vld [vmem:[%s4 + $0x48] sm:$0xff]
  %v5102 = vld [vmem:[%s4 + $0x50] sm:$0xff]
  %v5103 = vld [vmem:[%s4 + $0x58] sm:$0xff]
  %v5104 = vld [vmem:[%s4 + $0x60] sm:$0xff]
  %v5105 = vld [vmem:[%s4 + $0x68] sm:$0xff]
  %v5106 = vld [vmem:[%s4 + $0x70] sm:$0xff]
  %v5107 = vld [vmem:[%s4 + $0x78] sm:$0xff]
  %v5108 = vld [vmem:[%s4 + $0x80] sm:$0xff]
  %v5109 = vld [vmem:[%s4 + $0x88] sm:$0xff]
  %v5110 = vld [vmem:[%s4 + $0x90] sm:$0xff]
  %v5111 = vld [vmem:[%s4 + $0x98] sm:$0xff]
  %v5112 = vld [vmem:[%s4 + $0xa0] sm:$0xff]
  %v5113 = vld [vmem:[%s4 + $0xa8] sm:$0xff]
  %v5114 = vld [vmem:[%s4 + $0xb0] sm:$0xff]
  %v5115 = vld [vmem:[%s4 + $0xb8] sm:$0xff]
  %v5116 = vld [vmem:[%s4 + $0xc0] sm:$0xff]
  %v5117 = vld [vmem:[%s4 + $0xc8] sm:$0xff]
  %v5118 = vld [vmem:[%s4 + $0xd0] sm:$0xff]
  %v5119 = vld [vmem:[%s4 + $0xd8] sm:$0xff]
  %v5120 = vld [vmem:[%s4 + $0xe0] sm:$0xff]
  %v5121 = vld [vmem:[%s4 + $0xe8] sm:$0xff]
  %v5122 = vld [vmem:[%s4 + $0xf0] sm:$0xff]
  %v5123 = vld [vmem:[%s4 + $0xf8] sm:$0xff]
  %v5124 = vld [vmem:[%s4 + $0x100] sm:$0xff]
  %v5125 = vld [vmem:[%s4 + $0x108] sm:$0xff]
  %v5126 = vld [vmem:[%s4 + $0x110] sm:$0xff]
  %v5127 = vld [vmem:[%s4 + $0x118] sm:$0xff]
  %v5129 = vsel %vm2336, %v5091, 0
  %5131 = vmatprep.subr.mxu0 0.0
  %5132 = vmatpush1.msra.mxu0 %v5092
  %5133 = vmatprep.subr.mxu0 0.0
  %5134 = vmatpush1.msra.mxu0 %v5093
  %5135 = vmatprep.subr.mxu0 0.0
  %5136 = vmatpush1.msra.mxu0 %v5094
  %5137 = vmatprep.subr.mxu0 0.0
  %5138 = vmatpush1.msra.mxu0 %v5095
  %5139 = vmatprep.subr.mxu0 0.0
  %5140 = vmatpush1.msra.mxu0 %v5096
  %5141 = vmatprep.subr.mxu0 0.0
  %5142 = vmatpush1.msra.mxu0 %v5097
  %5143 = vmatprep.subr.mxu0 0.0
  %5144 = vmatpush1.msra.mxu0 %v5098
  %5145 = vmatprep.subr.mxu0 0.0
  %5146 = vmatpush1.msra.mxu0 %v5099
  %5147 = vmatprep.subr.mxu0 0.0
  %5148 = vmatpush1.msra.mxu0 %v5100
  %5149 = vmatprep.subr.mxu0 0.0
  %5150 = vmatpush1.msra.mxu0 %v5101
  %5151 = vmatprep.subr.mxu0 0.0
  %5152 = vmatpush1.msra.mxu0 %v5102
  %5153 = vmatprep.subr.mxu0 0.0
  %5154 = vmatpush1.msra.mxu0 %v5103
  %5155 = vmatprep.subr.mxu0 0.0
  %5156 = vmatpush1.msra.mxu0 %v5104
  %5157 = vmatprep.subr.mxu0 0.0
  %5158 = vmatpush1.msra.mxu0 %v5105
  %5159 = vmatprep.subr.mxu0 0.0
  %5160 = vmatpush1.msra.mxu0 %v5106
  %5161 = vmatprep.subr.mxu0 0.0
  %5162 = vmatpush1.msra.mxu0 %v5107
  %5163 = vmatprep.subr.mxu0 0.0
  %5164 = vmatpush1.msra.mxu0 %v5108
  %5165 = vmatprep.subr.mxu0 0.0
  %5166 = vmatpush1.msra.mxu0 %v5109
  %5167 = vmatprep.subr.mxu0 0.0
  %5168 = vmatpush1.msra.mxu0 %v5110
  %5169 = vmatprep.subr.mxu0 0.0
  %5170 = vmatpush1.msra.mxu0 %v5111
  %5171 = vmatprep.subr.mxu0 0.0
  %5172 = vmatpush1.msra.mxu0 %v5112
  %5173 = vmatprep.subr.mxu0 0.0
  %5174 = vmatpush1.msra.mxu0 %v5113
  %5175 = vmatprep.subr.mxu0 0.0
  %5176 = vmatpush1.msra.mxu0 %v5114
  %5177 = vmatprep.subr.mxu0 0.0
  %5178 = vmatpush1.msra.mxu0 %v5115
  %5179 = vmatprep.subr.mxu0 0.0
  %5180 = vmatpush1.msra.mxu0 %v5116
  %5181 = vmatprep.subr.mxu0 0.0
  %5182 = vmatpush1.msra.mxu0 %v5117
  %5183 = vmatprep.subr.mxu0 0.0
  %5184 = vmatpush1.msra.mxu0 %v5118
  %5185 = vmatprep.subr.mxu0 0.0
  %5186 = vmatpush1.msra.mxu0 %v5119
  %5187 = vmatprep.subr.mxu0 0.0
  %5188 = vmatpush1.msra.mxu0 %v5120
  %5189 = vmatprep.subr.mxu0 0.0
  %5190 = vmatpush1.msra.mxu0 %v5121
  %5191 = vmatprep.subr.mxu0 0.0
  %5192 = vmatpush1.msra.mxu0 %v5122
  %5193 = vmatprep.subr.mxu0 0.0
  %5194 = vmatpush1.msra.mxu0 %v5123
  %5195 = vmatprep.mubr.f32.mxu0 %v5090
  %5196 = vmatmul.mubr.f32.gmra.mrb[0].mxu0 %v5089
  %v5197 = vpop.f32.mrb[0].mxu0
  %v5198 = vadd.f32 0.0, %v5197
  %v5199 = vpop.f32.mrb[0].mxu0
  %5200 = vdwg.mxu0
  %5201 = vmatprep.subr.mxu0 0.0
  %5202 = vmatpush1.msra.mxu0 %v5124
  %5203 = vmatprep.subr.mxu0 0.0
  %5204 = vmatpush1.msra.mxu0 %v5125
  %5205 = vmatprep.subr.mxu0 0.0
  %5206 = vmatpush1.msra.mxu0 %v5126
  %5207 = vmatprep.subr.mxu0 0.0
  %5208 = vmatpush1.msra.mxu0 %v5127
  %5209 = vmatprep.subr.mxu0 0.0
  %5210 = vmatpush1.msra.mxu0 0.0
  %5211 = vmatprep.subr.mxu0 0.0
  %5212 = vmatpush1.msra.mxu0 0.0
  %5213 = vmatprep.subr.mxu0 0.0
  %5214 = vmatpush1.msra.mxu0 0.0
  %5215 = vmatprep.subr.mxu0 0.0
  %5216 = vmatpush1.msra.mxu0 0.0
  %5217 = vmatprep.subr.mxu0 0.0
  %5218 = vmatpush1.msra.mxu0 0.0
  %5219 = vmatprep.subr.mxu0 0.0
  %5220 = vmatpush1.msra.mxu0 0.0
  %5221 = vmatprep.subr.mxu0 0.0
  %5222 = vmatpush1.msra.mxu0 0.0
  %5223 = vmatprep.subr.mxu0 0.0
  %5224 = vmatpush1.msra.mxu0 0.0
  %5225 = vmatprep.subr.mxu0 0.0
  %5226 = vmatpush1.msra.mxu0 0.0
  %5227 = vmatprep.subr.mxu0 0.0
  %5228 = vmatpush1.msra.mxu0 0.0
  %5229 = vmatprep.subr.mxu0 0.0
  %5230 = vmatpush1.msra.mxu0 0.0
  %5231 = vmatprep.subr.mxu0 0.0
  %5232 = vmatpush1.msra.mxu0 0.0
  %5233 = vmatprep.subr.mxu0 0.0
  %5234 = vmatpush1.msra.mxu0 0.0
  %5235 = vmatprep.subr.mxu0 0.0
  %5236 = vmatpush1.msra.mxu0 0.0
  %5237 = vmatprep.subr.mxu0 0.0
  %5238 = vmatpush1.msra.mxu0 0.0
  %5239 = vmatprep.subr.mxu0 0.0
  %5240 = vmatpush1.msra.mxu0 0.0
  %5241 = vmatprep.subr.mxu0 0.0
  %5242 = vmatpush1.msra.mxu0 0.0
  %5243 = vmatprep.subr.mxu0 0.0
  %5244 = vmatpush1.msra.mxu0 0.0
  %5245 = vmatprep.subr.mxu0 0.0
  %5246 = vmatpush1.msra.mxu0 0.0
  %5247 = vmatprep.subr.mxu0 0.0
  %5248 = vmatpush1.msra.mxu0 0.0
  %5249 = vmatprep.subr.mxu0 0.0
  %5250 = vmatpush1.msra.mxu0 0.0
  %5251 = vmatprep.subr.mxu0 0.0
  %5252 = vmatpush1.msra.mxu0 0.0
  %5253 = vmatprep.subr.mxu0 0.0
  %5254 = vmatpush1.msra.mxu0 0.0
  %5255 = vmatprep.subr.mxu0 0.0
  %5256 = vmatpush1.msra.mxu0 0.0
  %5257 = vmatprep.subr.mxu0 0.0
  %5258 = vmatpush1.msra.mxu0 0.0
  %5259 = vmatprep.subr.mxu0 0.0
  %5260 = vmatpush1.msra.mxu0 0.0
  %5261 = vmatprep.subr.mxu0 0.0
  %5262 = vmatpush1.msra.mxu0 0.0
  %5263 = vmatprep.subr.mxu0 0.0
  %5264 = vmatpush1.msra.mxu0 0.0
  %5265 = vmatprep.mubr.f32.mxu0 0.0
  %5266 = vmatmul.mubr.f32.gmra.mrb[0].mxu0 %v5129
  %v5267 = vpop.f32.mrb[0].mxu0
  %v5268 = vadd.f32 %v5198, %v5267
  %v5269 = vpop.f32.mrb[0].mxu0
  %5270 = vdwg.mxu0
  %v5271 = vld [vmem:[%s2480] sm:$0xff]
  %v5272 = vld [vmem:[%s2480 + $0x8] sm:$0xff]
  %v5273 = vld [vmem:[%s2480 + $0x10] sm:$0xff]
  %v5274 = vld [vmem:[%s2480 + $0x18] sm:$0xff]
  %v5275 = vld [vmem:[%s2480 + $0x20] sm:$0xff]
  %v5276 = vld [vmem:[%s2480 + $0x28] sm:$0xff]
  %v5277 = vld [vmem:[%s2480 + $0x30] sm:$0xff]
  %v5278 = vld [vmem:[%s2480 + $0x38] sm:$0xff]
  %v5279 = vld [vmem:[%s2480 + $0x40] sm:$0xff]
  %v5280 = vld [vmem:[%s2480 + $0x48] sm:$0xff]
  %v5281 = vld [vmem:[%s2480 + $0x50] sm:$0xff]
  %v5282 = vld [vmem:[%s2480 + $0x58] sm:$0xff]
  %v5283 = vld [vmem:[%s2480 + $0x60] sm:$0xff]
  %v5284 = vld [vmem:[%s2480 + $0x68] sm:$0xff]
  %v5285 = vld [vmem:[%s2480 + $0x70] sm:$0xff]
  %v5286 = vld [vmem:[%s2480 + $0x78] sm:$0xff]
  %v5287 = vld [vmem:[%s2480 + $0x80] sm:$0xff]
  %v5288 = vld [vmem:[%s2480 + $0x88] sm:$0xff]
  %v5289 = vld [vmem:[%s2480 + $0x90] sm:$0xff]
  %v5290 = vld [vmem:[%s2480 + $0x98] sm:$0xff]
  %v5291 = vld [vmem:[%s2480 + $0xa0] sm:$0xff]
  %v5292 = vld [vmem:[%s2480 + $0xa8] sm:$0xff]
  %v5293 = vld [vmem:[%s2480 + $0xb0] sm:$0xff]
  %v5294 = vld [vmem:[%s2480 + $0xb8] sm:$0xff]
  %v5295 = vld [vmem:[%s2480 + $0xc0] sm:$0xff]
  %v5296 = vld [vmem:[%s2480 + $0xc8] sm:$0xff]
  %v5297 = vld [vmem:[%s2480 + $0xd0] sm:$0xff]
  %v5298 = vld [vmem:[%s2480 + $0xd8] sm:$0xff]
  %v5299 = vld [vmem:[%s2480 + $0xe0] sm:$0xff]
  %v5300 = vld [vmem:[%s2480 + $0xe8] sm:$0xff]
  %v5301 = vld [vmem:[%s2480 + $0xf0] sm:$0xff]
  %v5302 = vld [vmem:[%s2480 + $0xf8] sm:$0xff]
  %v5303 = vld [vmem:[%s2480 + $0x100] sm:$0xff]
  %v5304 = vld [vmem:[%s2480 + $0x108] sm:$0xff]
  %v5305 = vld [vmem:[%s2480 + $0x110] sm:$0xff]
  %v5306 = vld [vmem:[%s2480 + $0x118] sm:$0xff]
  %5307 = vmatprep.subr.mxu0 0.0
  %5308 = vmatpush1.msra.mxu0 %v5271
  %5309 = vmatprep.subr.mxu0 0.0
  %5310 = vmatpush1.msra.mxu0 %v5272
  %5311 = vmatprep.subr.mxu0 0.0
  %5312 = vmatpush1.msra.mxu0 %v5273
  %5313 = vmatprep.subr.mxu0 0.0
  %5314 = vmatpush1.msra.mxu0 %v5274
  %5315 = vmatprep.subr.mxu0 0.0
  %5316 = vmatpush1.msra.mxu0 %v5275
  %5317 = vmatprep.subr.mxu0 0.0
  %5318 = vmatpush1.msra.mxu0 %v5276
  %5319 = vmatprep.subr.mxu0 0.0
  %5320 = vmatpush1.msra.mxu0 %v5277
  %5321 = vmatprep.subr.mxu0 0.0
  %5322 = vmatpush1.msra.mxu0 %v5278
  %5323 = vmatprep.subr.mxu0 0.0
  %5324 = vmatpush1.msra.mxu0 %v5279
  %5325 = vmatprep.subr.mxu0 0.0
  %5326 = vmatpush1.msra.mxu0 %v5280
  %5327 = vmatprep.subr.mxu0 0.0
  %5328 = vmatpush1.msra.mxu0 %v5281
  %5329 = vmatprep.subr.mxu0 0.0
  %5330 = vmatpush1.msra.mxu0 %v5282
  %5331 = vmatprep.subr.mxu0 0.0
  %5332 = vmatpush1.msra.mxu0 %v5283
  %5333 = vmatprep.subr.mxu0 0.0
  %5334 = vmatpush1.msra.mxu0 %v5284
  %5335 = vmatprep.subr.mxu0 0.0
  %5336 = vmatpush1.msra.mxu0 %v5285
  %5337 = vmatprep.subr.mxu0 0.0
  %5338 = vmatpush1.msra.mxu0 %v5286
  %5339 = vmatprep.subr.mxu0 0.0
  %5340 = vmatpush1.msra.mxu0 %v5287
  %5341 = vmatprep.subr.mxu0 0.0
  %5342 = vmatpush1.msra.mxu0 %v5288
  %5343 = vmatprep.subr.mxu0 0.0
  %5344 = vmatpush1.msra.mxu0 %v5289
  %5345 = vmatprep.subr.mxu0 0.0
  %5346 = vmatpush1.msra.mxu0 %v5290
  %5347 = vmatprep.subr.mxu0 0.0
  %5348 = vmatpush1.msra.mxu0 %v5291
  %5349 = vmatprep.subr.mxu0 0.0
  %5350 = vmatpush1.msra.mxu0 %v5292
  %5351 = vmatprep.subr.mxu0 0.0
  %5352 = vmatpush1.msra.mxu0 %v5293
  %5353 = vmatprep.subr.mxu0 0.0
  %5354 = vmatpush1.msra.mxu0 %v5294
  %5355 = vmatprep.subr.mxu0 0.0
  %5356 = vmatpush1.msra.mxu0 %v5295
  %5357 = vmatprep.subr.mxu0 0.0
  %5358 = vmatpush1.msra.mxu0 %v5296
  %5359 = vmatprep.subr.mxu0 0.0
  %5360 = vmatpush1.msra.mxu0 %v5297
  %5361 = vmatprep.subr.mxu0 0.0
  %5362 = vmatpush1.msra.mxu0 %v5298
  %5363 = vmatprep.subr.mxu0 0.0
  %5364 = vmatpush1.msra.mxu0 %v5299
  %5365 = vmatprep.subr.mxu0 0.0
  %5366 = vmatpush1.msra.mxu0 %v5300
  %5367 = vmatprep.subr.mxu0 0.0
  %5368 = vmatpush1.msra.mxu0 %v5301
  %5369 = vmatprep.subr.mxu0 0.0
  %5370 = vmatpush1.msra.mxu0 %v5302
  %5371 = vmatprep.mubr.f32.mxu0 %v5090
  %5372 = vmatmul.mubr.f32.gmra.mrb[0].mxu0 %v5089
  %v5373 = vpop.f32.mrb[0].mxu0
  %v5374 = vadd.f32 0.0, %v5373
  %v5375 = vpop.f32.mrb[0].mxu0
  %5376 = vdwg.mxu0
  %5377 = vmatprep.subr.mxu0 0.0
  %5378 = vmatpush1.msra.mxu0 %v5303
  %5379 = vmatprep.subr.mxu0 0.0
  %5380 = vmatpush1.msra.mxu0 %v5304
  %5381 = vmatprep.subr.mxu0 0.0
  %5382 = vmatpush1.msra.mxu0 %v5305
  %5383 = vmatprep.subr.mxu0 0.0
  %5384 = vmatpush1.msra.mxu0 %v5306
  %5385 = vmatprep.subr.mxu0 0.0
  %5386 = vmatpush1.msra.mxu0 0.0
  %5387 = vmatprep.subr.mxu0 0.0
  %5388 = vmatpush1.msra.mxu0 0.0
  %5389 = vmatprep.subr.mxu0 0.0
  %5390 = vmatpush1.msra.mxu0 0.0
  %5391 = vmatprep.subr.mxu0 0.0
  %5392 = vmatpush1.msra.mxu0 0.0
  %5393 = vmatprep.subr.mxu0 0.0
  %5394 = vmatpush1.msra.mxu0 0.0
  %5395 = vmatprep.subr.mxu0 0.0
  %5396 = vmatpush1.msra.mxu0 0.0
  %5397 = vmatprep.subr.mxu0 0.0
  %5398 = vmatpush1.msra.mxu0 0.0
  %5399 = vmatprep.subr.mxu0 0.0
  %5400 = vmatpush1.msra.mxu0 0.0
  %5401 = vmatprep.subr.mxu0 0.0
  %5402 = vmatpush1.msra.mxu0 0.0
  %5403 = vmatprep.subr.mxu0 0.0
  %5404 = vmatpush1.msra.mxu0 0.0
  %5405 = vmatprep.subr.mxu0 0.0
  %5406 = vmatpush1.msra.mxu0 0.0
  %5407 = vmatprep.subr.mxu0 0.0
  %5408 = vmatpush1.msra.mxu0 0.0
  %5409 = vmatprep.subr.mxu0 0.0
  %5410 = vmatpush1.msra.mxu0 0.0
  %5411 = vmatprep.subr.mxu0 0.0
  %5412 = vmatpush1.msra.mxu0 0.0
  %5413 = vmatprep.subr.mxu0 0.0
  %5414 = vmatpush1.msra.mxu0 0.0
  %5415 = vmatprep.subr.mxu0 0.0
  %5416 = vmatpush1.msra.mxu0 0.0
  %5417 = vmatprep.subr.mxu0 0.0
  %5418 = vmatpush1.msra.mxu0 0.0
  %5419 = vmatprep.subr.mxu0 0.0
  %5420 = vmatpush1.msra.mxu0 0.0
  %5421 = vmatprep.subr.mxu0 0.0
  %5422 = vmatpush1.msra.mxu0 0.0
  %5423 = vmatprep.subr.mxu0 0.0
  %5424 = vmatpush1.msra.mxu0 0.0
  %5425 = vmatprep.subr.mxu0 0.0
  %5426 = vmatpush1.msra.mxu0 0.0
  %5427 = vmatprep.subr.mxu0 0.0
  %5428 = vmatpush1.msra.mxu0 0.0
  %5429 = vmatprep.subr.mxu0 0.0
  %5430 = vmatpush1.msra.mxu0 0.0
  %5431 = vmatprep.subr.mxu0 0.0
  %5432 = vmatpush1.msra.mxu0 0.0
  %5433 = vmatprep.subr.mxu0 0.0
  %5434 = vmatpush1.msra.mxu0 0.0
  %5435 = vmatprep.subr.mxu0 0.0
  %5436 = vmatpush1.msra.mxu0 0.0
  %5437 = vmatprep.subr.mxu0 0.0
  %5438 = vmatpush1.msra.mxu0 0.0
  %5439 = vmatprep.subr.mxu0 0.0
  %5440 = vmatpush1.msra.mxu0 0.0
  %5441 = vmatprep.mubr.f32.mxu0 0.0
  %5442 = vmatmul.mubr.f32.gmra.mrb[0].mxu0 %v5129
  %v5443 = vpop.f32.mrb[0].mxu0
  %v5444 = vadd.f32 %v5374, %v5443
  %v5445 = vpop.f32.mrb[0].mxu0
  %5446 = vdwg.mxu0
  %v5447 = vmax.f32 %v5268, %v5444
  %v5448 = vld [vmem:[%s2658] sm:$0xff]
  %v5449 = vld [vmem:[%s2658 + $0x8] sm:$0xff]
  %v5450 = vld [vmem:[%s2658 + $0x10] sm:$0xff]
  %v5451 = vld [vmem:[%s2658 + $0x18] sm:$0xff]
  %v5452 = vld [vmem:[%s2658 + $0x20] sm:$0xff]
  %v5453 = vld [vmem:[%s2658 + $0x28] sm:$0xff]
  %v5454 = vld [vmem:[%s2658 + $0x30] sm:$0xff]
  %v5455 = vld [vmem:[%s2658 + $0x38] sm:$0xff]
  %v5456 = vld [vmem:[%s2658 + $0x40] sm:$0xff]
  %v5457 = vld [vmem:[%s2658 + $0x48] sm:$0xff]
  %v5458 = vld [vmem:[%s2658 + $0x50] sm:$0xff]
  %v5459 = vld [vmem:[%s2658 + $0x58] sm:$0xff]
  %v5460 = vld [vmem:[%s2658 + $0x60] sm:$0xff]
  %v5461 = vld [vmem:[%s2658 + $0x68] sm:$0xff]
  %v5462 = vld [vmem:[%s2658 + $0x70] sm:$0xff]
  %v5463 = vld [vmem:[%s2658 + $0x78] sm:$0xff]
  %v5464 = vld [vmem:[%s2658 + $0x80] sm:$0xff]
  %v5465 = vld [vmem:[%s2658 + $0x88] sm:$0xff]
  %v5466 = vld [vmem:[%s2658 + $0x90] sm:$0xff]
  %v5467 = vld [vmem:[%s2658 + $0x98] sm:$0xff]
  %v5468 = vld [vmem:[%s2658 + $0xa0] sm:$0xff]
  %v5469 = vld [vmem:[%s2658 + $0xa8] sm:$0xff]
  %v5470 = vld [vmem:[%s2658 + $0xb0] sm:$0xff]
  %v5471 = vld [vmem:[%s2658 + $0xb8] sm:$0xff]
  %v5472 = vld [vmem:[%s2658 + $0xc0] sm:$0xff]
  %v5473 = vld [vmem:[%s2658 + $0xc8] sm:$0xff]
  %v5474 = vld [vmem:[%s2658 + $0xd0] sm:$0xff]
  %v5475 = vld [vmem:[%s2658 + $0xd8] sm:$0xff]
  %v5476 = vld [vmem:[%s2658 + $0xe0] sm:$0xff]
  %v5477 = vld [vmem:[%s2658 + $0xe8] sm:$0xff]
  %v5478 = vld [vmem:[%s2658 + $0xf0] sm:$0xff]
  %v5479 = vld [vmem:[%s2658 + $0xf8] sm:$0xff]
  %v5480 = vld [vmem:[%s2658 + $0x100] sm:$0xff]
  %v5481 = vld [vmem:[%s2658 + $0x108] sm:$0xff]
  %v5482 = vld [vmem:[%s2658 + $0x110] sm:$0xff]
  %v5483 = vld [vmem:[%s2658 + $0x118] sm:$0xff]
  %5484 = vmatprep.subr.mxu0 0.0
  %5485 = vmatpush1.msra.mxu0 %v5448
  %5486 = vmatprep.subr.mxu0 0.0
  %5487 = vmatpush1.msra.mxu0 %v5449
  %5488 = vmatprep.subr.mxu0 0.0
  %5489 = vmatpush1.msra.mxu0 %v5450
  %5490 = vmatprep.subr.mxu0 0.0
  %5491 = vmatpush1.msra.mxu0 %v5451
  %5492 = vmatprep.subr.mxu0 0.0
  %5493 = vmatpush1.msra.mxu0 %v5452
  %5494 = vmatprep.subr.mxu0 0.0
  %5495 = vmatpush1.msra.mxu0 %v5453
  %5496 = vmatprep.subr.mxu0 0.0
  %5497 = vmatpush1.msra.mxu0 %v5454
  %5498 = vmatprep.subr.mxu0 0.0
  %5499 = vmatpush1.msra.mxu0 %v5455
  %5500 = vmatprep.subr.mxu0 0.0
  %5501 = vmatpush1.msra.mxu0 %v5456
  %5502 = vmatprep.subr.mxu0 0.0
  %5503 = vmatpush1.msra.mxu0 %v5457
  %5504 = vmatprep.subr.mxu0 0.0
  %5505 = vmatpush1.msra.mxu0 %v5458
  %5506 = vmatprep.subr.mxu0 0.0
  %5507 = vmatpush1.msra.mxu0 %v5459
  %5508 = vmatprep.subr.mxu0 0.0
  %5509 = vmatpush1.msra.mxu0 %v5460
  %5510 = vmatprep.subr.mxu0 0.0
  %5511 = vmatpush1.msra.mxu0 %v5461
  %5512 = vmatprep.subr.mxu0 0.0
  %5513 = vmatpush1.msra.mxu0 %v5462
  %5514 = vmatprep.subr.mxu0 0.0
  %5515 = vmatpush1.msra.mxu0 %v5463
  %5516 = vmatprep.subr.mxu0 0.0
  %5517 = vmatpush1.msra.mxu0 %v5464
  %5518 = vmatprep.subr.mxu0 0.0
  %5519 = vmatpush1.msra.mxu0 %v5465
  %5520 = vmatprep.subr.mxu0 0.0
  %5521 = vmatpush1.msra.mxu0 %v5466
  %5522 = vmatprep.subr.mxu0 0.0
  %5523 = vmatpush1.msra.mxu0 %v5467
  %5524 = vmatprep.subr.mxu0 0.0
  %5525 = vmatpush1.msra.mxu0 %v5468
  %5526 = vmatprep.subr.mxu0 0.0
  %5527 = vmatpush1.msra.mxu0 %v5469
  %5528 = vmatprep.subr.mxu0 0.0
  %5529 = vmatpush1.msra.mxu0 %v5470
  %5530 = vmatprep.subr.mxu0 0.0
  %5531 = vmatpush1.msra.mxu0 %v5471
  %5532 = vmatprep.subr.mxu0 0.0
  %5533 = vmatpush1.msra.mxu0 %v5472
  %5534 = vmatprep.subr.mxu0 0.0
  %5535 = vmatpush1.msra.mxu0 %v5473
  %5536 = vmatprep.subr.mxu0 0.0
  %5537 = vmatpush1.msra.mxu0 %v5474
  %5538 = vmatprep.subr.mxu0 0.0
  %5539 = vmatpush1.msra.mxu0 %v5475
  %5540 = vmatprep.subr.mxu0 0.0
  %5541 = vmatpush1.msra.mxu0 %v5476
  %5542 = vmatprep.subr.mxu0 0.0
  %5543 = vmatpush1.msra.mxu0 %v5477
  %5544 = vmatprep.subr.mxu0 0.0
  %5545 = vmatpush1.msra.mxu0 %v5478
  %5546 = vmatprep.subr.mxu0 0.0
  %5547 = vmatpush1.msra.mxu0 %v5479
  %5548 = vmatprep.mubr.f32.mxu0 %v5090
  %5549 = vmatmul.mubr.f32.gmra.mrb[0].mxu0 %v5089
  %v5550 = vpop.f32.mrb[0].mxu0
  %v5551 = vadd.f32 0.0, %v5550
  %v5552 = vpop.f32.mrb[0].mxu0
  %5553 = vdwg.mxu0
  %5554 = vmatprep.subr.mxu0 0.0
  %5555 = vmatpush1.msra.mxu0 %v5480
  %5556 = vmatprep.subr.mxu0 0.0
  %5557 = vmatpush1.msra.mxu0 %v5481
  %5558 = vmatprep.subr.mxu0 0.0
  %5559 = vmatpush1.msra.mxu0 %v5482
  %5560 = vmatprep.subr.mxu0 0.0
  %5561 = vmatpush1.msra.mxu0 %v5483
  %5562 = vmatprep.subr.mxu0 0.0
  %5563 = vmatpush1.msra.mxu0 0.0
  %5564 = vmatprep.subr.mxu0 0.0
  %5565 = vmatpush1.msra.mxu0 0.0
  %5566 = vmatprep.subr.mxu0 0.0
  %5567 = vmatpush1.msra.mxu0 0.0
  %5568 = vmatprep.subr.mxu0 0.0
  %5569 = vmatpush1.msra.mxu0 0.0
  %5570 = vmatprep.subr.mxu0 0.0
  %5571 = vmatpush1.msra.mxu0 0.0
  %5572 = vmatprep.subr.mxu0 0.0
  %5573 = vmatpush1.msra.mxu0 0.0
  %5574 = vmatprep.subr.mxu0 0.0
  %5575 = vmatpush1.msra.mxu0 0.0
  %5576 = vmatprep.subr.mxu0 0.0
  %5577 = vmatpush1.msra.mxu0 0.0
  %5578 = vmatprep.subr.mxu0 0.0
  %5579 = vmatpush1.msra.mxu0 0.0
  %5580 = vmatprep.subr.mxu0 0.0
  %5581 = vmatpush1.msra.mxu0 0.0
  %5582 = vmatprep.subr.mxu0 0.0
  %5583 = vmatpush1.msra.mxu0 0.0
  %5584 = vmatprep.subr.mxu0 0.0
  %5585 = vmatpush1.msra.mxu0 0.0
  %5586 = vmatprep.subr.mxu0 0.0
  %5587 = vmatpush1.msra.mxu0 0.0
  %5588 = vmatprep.subr.mxu0 0.0
  %5589 = vmatpush1.msra.mxu0 0.0
  %5590 = vmatprep.subr.mxu0 0.0
  %5591 = vmatpush1.msra.mxu0 0.0
  %5592 = vmatprep.subr.mxu0 0.0
  %5593 = vmatpush1.msra.mxu0 0.0
  %5594 = vmatprep.subr.mxu0 0.0
  %5595 = vmatpush1.msra.mxu0 0.0
  %5596 = vmatprep.subr.mxu0 0.0
  %5597 = vmatpush1.msra.mxu0 0.0
  %5598 = vmatprep.subr.mxu0 0.0
  %5599 = vmatpush1.msra.mxu0 0.0
  %5600 = vmatprep.subr.mxu0 0.0
  %5601 = vmatpush1.msra.mxu0 0.0
  %5602 = vmatprep.subr.mxu0 0.0
  %5603 = vmatpush1.msra.mxu0 0.0
  %5604 = vmatprep.subr.mxu0 0.0
  %5605 = vmatpush1.msra.mxu0 0.0
  %5606 = vmatprep.subr.mxu0 0.0
  %5607 = vmatpush1.msra.mxu0 0.0
  %5608 = vmatprep.subr.mxu0 0.0
  %5609 = vmatpush1.msra.mxu0 0.0
  %5610 = vmatprep.subr.mxu0 0.0
  %5611 = vmatpush1.msra.mxu0 0.0
  %5612 = vmatprep.subr.mxu0 0.0
  %5613 = vmatpush1.msra.mxu0 0.0
  %5614 = vmatprep.subr.mxu0 0.0
  %5615 = vmatpush1.msra.mxu0 0.0
  %5616 = vmatprep.subr.mxu0 0.0
  %5617 = vmatpush1.msra.mxu0 0.0
  %5618 = vmatprep.mubr.f32.mxu0 0.0
  %5619 = vmatmul.mubr.f32.gmra.mrb[0].mxu0 %v5129
  %v5620 = vpop.f32.mrb[0].mxu0
  %v5621 = vadd.f32 %v5551, %v5620
  %v5622 = vpop.f32.mrb[0].mxu0
  %5623 = vdwg.mxu0
  %v5624 = vmax.f32 %v5447, %v5621
  %v5625 = vpack.c.bf16 %v5624, %v5624
  %s5626 = scalar_lea.vmem %s5, 2
  %5627 = vst [vmem:[%s5626] sm:$0x3] %v5625
  // Predicated region
  $region22: #{convolutional_model_forward.4} parent=0 // pred_check
    _
  $region23: #{convolutional_model_forward.4} parent=0 // pred_check_branch
    %5629 = sbr.rel (0) target = $region25
  $region24: #{convolutional_model_forward.4} parent=0 // pred_region
    _
  $region25: #{convolutional_model_forward.4} parent=0 // pred_fallthru
    _
  // Predicated region
  $region26: #{convolutional_model_forward.4} parent=0 // pred_check
    _
  $region27: #{convolutional_model_forward.4} parent=0 // pred_check_branch
    %5631 = sbr.rel (0) target = $region29
  $region28: #{convolutional_model_forward.4} parent=0 // pred_region
    _
  $region29: #{convolutional_model_forward.4} parent=0 // pred_fallthru
    _

</llo_original>
